<compile_context>
chip_gen: v7x
topology: tpu7x:2x2x1
jax: 0.10.0
libtpu: 0.0.40
codegen_flags: <defaults>
</compile_context>

<pallas_src>
import functools

import jax
import jax.numpy as jnp
from jax.experimental import pallas as pl
from jax.experimental.pallas import tpu as pltpu


def _ck_mlp_kernel(x_ref, w1_ref, b1_ref, w2_ref, b2_ref, w3_ref, b3_ref, o_ref):
    """One row-tile of the 3-layer MLP. bf16 MXU matmuls, f32 accumulation/elementwise."""
    x = x_ref[...]                                               # already bf16

    h1 = jnp.dot(x, w1_ref[...], preferred_element_type=jnp.float32) + b1_ref[...]
    h1 = jnp.maximum(h1, 0.0).astype(jnp.bfloat16)               # ReLU (f32) -> bf16 for MXU

    h2 = jnp.dot(h1, w2_ref[...], preferred_element_type=jnp.float32) + b2_ref[...]
    h2 = jnp.maximum(h2, 0.0).astype(jnp.bfloat16)               # ReLU (f32) -> bf16 for MXU

    logits = jnp.dot(h2, w3_ref[...], preferred_element_type=jnp.float32) + b3_ref[...]
    o_ref[...] = logits.astype(o_ref.dtype)                      # lane-dense (padded) store


def _round_up(x, m):
    return ((x + m - 1) // m) * m


def _resident_spec(shape):
    """Grid-invariant (whole-array) BlockSpec, single-buffered when supported."""
    full = lambda i: (0, 0)
    try:
        return pl.BlockSpec(shape, full, pipeline_mode=pl.Buffered(1))
    except (TypeError, AttributeError):
        # Older jax without pipeline_mode/Buffered: fall back to default buffering.
        return pl.BlockSpec(shape, full)


def _vmem_limit_bytes(tile_m, hidden_size, inter_dim, hid_dim, labels_p):
    """Size the scoped-VMEM request from the actual resident buffers (~2x headroom)."""
    bf16, f32 = 2, 4
    # double-buffered streaming x tile + output tile
    stream = 2 * tile_m * hidden_size * bf16 + 2 * tile_m * labels_p * f32
    # grid-invariant weights/biases: single-buffered (pl.Buffered(1))
    weights = ((hidden_size * inter_dim + inter_dim * hid_dim + hid_dim * labels_p) * bf16
               + (inter_dim + hid_dim + labels_p) * f32)
    # in-kernel f32 intermediates (h1, h2, logits)
    interm = tile_m * (inter_dim + hid_dim + labels_p) * f32
    total = stream + weights + interm
    # ~2x headroom, small floor for compiler scratch, well under v7x's 64 MiB/TC.
    return int(min(max(2 * total, 16 << 20), 48 << 20))


def prepare_params(params):
    """One-time weight preparation (outside the per-call path): bf16 cast + label padding.

    Returns (prepared_params, num_labels). Doing this once avoids re-casting ~10 MiB of
    f32 weights to bf16 (and re-padding W3/b3) on every forward call.
    """
    num_labels = params["w3"].shape[1]
    labels_p = _round_up(num_labels, 128)
    pad_l = labels_p - num_labels
    prepared = {
        "w1": params["w1"].astype(jnp.bfloat16),
        "b1": params["b1"].reshape(1, -1).astype(jnp.float32),
        "w2": params["w2"].astype(jnp.bfloat16),
        "b2": params["b2"].reshape(1, -1).astype(jnp.float32),
        "w3": jnp.pad(params["w3"], ((0, 0), (0, pad_l))).astype(jnp.bfloat16),
        "b3": jnp.pad(params["b3"], ((0, pad_l),)).reshape(1, -1).astype(jnp.float32),
    }
    return prepared, num_labels


@functools.partial(jax.jit, static_argnames=("num_labels", "tile_m"))
def ck_classifier_forward(hidden_states, prepared, num_labels, tile_m=512):
    """Pallas implementation of CKClassifier.forward(hidden_states, labels=None).

    hidden_states: [..., hidden_size]  -> returns logits [..., num_labels] (f32)
    `prepared` comes from prepare_params() (bf16 weights, 128-padded label columns).
    """
    w1, b1 = prepared["w1"], prepared["b1"]
    w2, b2 = prepared["w2"], prepared["b2"]
    w3, b3 = prepared["w3"], prepared["b3"]
    hidden_size = w1.shape[0]
    inter_dim = w1.shape[1]
    hid_dim = w2.shape[1]
    labels_p = w3.shape[1]

    # TODO(synk): for much larger intermediate_dim/hidden_dim the fully-resident-weight
    # design exceeds v7x's 64 MiB VMEM; switch to a K-tiled ("arbitrary") grid axis with
    # an f32 accumulator in that regime.

    lead_shape = hidden_states.shape[:-1]
    # Cast to bf16 BEFORE padding (half the pad/copy traffic vs pad-then-cast).
    x = hidden_states.reshape(-1, hidden_size).astype(jnp.bfloat16)
    n = x.shape[0]

    # Adaptive row tile: big enough to amortize the ~0.35us/step pipeline overhead,
    # but never padding a tiny input up to a huge dead tile.
    tile_m_eff = min(tile_m, _round_up(max(n, 1), 256))
    n_pad = _round_up(max(n, 1), tile_m_eff)
    # Keep the grid length >= 2 when the input is large enough, so the "parallel"
    # axis can shard across v7x's two TensorCores (no-op on v5e/v6e).
    if n_pad // tile_m_eff == 1 and tile_m_eff >= 512:
        tile_m_eff //= 2
        n_pad = _round_up(n, tile_m_eff)

    if n_pad != n:
        x = jnp.pad(x, ((0, n_pad - n), (0, 0)))

    grid = (n_pad // tile_m_eff,)

    logits_p = pl.pallas_call(
        _ck_mlp_kernel,
        out_shape=jax.ShapeDtypeStruct((n_pad, labels_p), jnp.float32),
        grid_spec=pltpu.PrefetchScalarGridSpec(
            num_scalar_prefetch=0,
            grid=grid,
            in_specs=[
                pl.BlockSpec((tile_m_eff, hidden_size), lambda i: (i, 0)),  # x row tile (bf16)
                _resident_spec(w1.shape),                                   # W1 [H, I]  (bf16)
                _resident_spec(b1.shape),                                   # b1 [1, I]  (f32)
                _resident_spec(w2.shape),                                   # W2 [I, D]  (bf16)
                _resident_spec(b2.shape),                                   # b2 [1, D]  (f32)
                _resident_spec(w3.shape),                                   # W3 [D, Lp] (bf16)
                _resident_spec(b3.shape),                                   # b3 [1, Lp] (f32)
            ],
            out_specs=pl.BlockSpec((tile_m_eff, labels_p), lambda i: (i, 0)),
        ),
        compiler_params=pltpu.CompilerParams(
            dimension_semantics=("parallel",),
            vmem_limit_bytes=_vmem_limit_bytes(
                tile_m_eff, hidden_size, inter_dim, hid_dim, labels_p),
        ),
    )(x, w1, b1, w2, b2, w3, b3)

    # Strip the row/label padding and restore leading dims.
    logits = logits_p[:n, :num_labels]
    return logits.reshape(*lead_shape, num_labels)


def init_params(key, hidden_size, num_labels, intermediate_dim=1024, hidden_dim=1024):
    """Deterministic synthetic parameters (shapes match CKClassifier.__init__)."""
    k1, k2, k3, k4, k5, k6 = jax.random.split(key, 6)
    s1 = 1.0 / jnp.sqrt(hidden_size)
    s2 = 1.0 / jnp.sqrt(intermediate_dim)
    s3 = 1.0 / jnp.sqrt(hidden_dim)
    return {
        # stored as [in, out] (transpose of torch's [out, in])
        "w1": jax.random.uniform(k1, (hidden_size, intermediate_dim), jnp.float32, -s1, s1),
        "b1": jax.random.uniform(k2, (intermediate_dim,), jnp.float32, -s1, s1),
        "w2": jax.random.uniform(k3, (intermediate_dim, hidden_dim), jnp.float32, -s2, s2),
        "b2": jax.random.uniform(k4, (hidden_dim,), jnp.float32, -s2, s2),
        "w3": jax.random.uniform(k5, (hidden_dim, num_labels), jnp.float32, -s3, s3),
        "b3": jax.random.uniform(k6, (num_labels,), jnp.float32, -s3, s3),
    }


def _reference_forward(hidden_states, params):
    """Plain-JAX f32 reference of the same forward (for verification)."""
    x = hidden_states
    h1 = jnp.maximum(x @ params["w1"] + params["b1"], 0.0)
    h2 = jnp.maximum(h1 @ params["w2"] + params["b2"], 0.0)
    return h2 @ params["w3"] + params["b3"]


if __name__ == "__main__":
    # Small shapes: batch=2, seq=8 (flattened to 16 rows), hidden_size=32, num_labels=4.
    batch, seq, hidden_size, num_labels = 2, 8, 32, 4

    key = jax.random.PRNGKey(0)
    pkey, xkey = jax.random.split(key)
    params = init_params(pkey, hidden_size, num_labels)

    hidden_states = jax.random.normal(xkey, (batch, seq, hidden_size), jnp.float32)

    # One-time weight preparation (bf16 cast + lane padding), cached outside the hot path.
    prepared, n_labels = prepare_params(params)
    prepared = jax.tree_util.tree_map(jax.block_until_ready, prepared)

    logits = ck_classifier_forward(hidden_states, prepared, n_labels)
    logits = jax.block_until_ready(logits)

    ref = _reference_forward(hidden_states, params)
    assert logits.shape == (batch, seq, num_labels)
    # bf16 matmul operands with f32 accumulation -> ~0.5% relative deviation vs the
    # pure-f32 reference; tolerance sized accordingly.
    assert jnp.allclose(logits, ref, atol=3e-2, rtol=3e-2), "mismatch vs reference"

    # TODO(synk): CrossEntropyLoss branch (labels is not None) is plain-JAX glue,
    # not part of the hot path; omitted since the demo calls forward with labels=None.
    print("KERNEL_OK")
</pallas_src>

<mosaic_0001>
module attributes {stable_mosaic.version = 11 : i64} {
  func.func @_ck_mlp_kernel(%arg0: i32, %arg1: memref<256x32xbf16, #tpu.memory_space<vmem>>, %arg2: memref<32x1024xbf16, #tpu.memory_space<vmem>>, %arg3: memref<1x1024xf32, #tpu.memory_space<vmem>>, %arg4: memref<1024x1024xbf16, #tpu.memory_space<vmem>>, %arg5: memref<1x1024xf32, #tpu.memory_space<vmem>>, %arg6: memref<1024x128xbf16, #tpu.memory_space<vmem>>, %arg7: memref<1x128xf32, #tpu.memory_space<vmem>>, %arg8: memref<256x128xf32, #tpu.memory_space<vmem>>) attributes {dimension_semantics = [#tpu.dimension_semantics<parallel>], iteration_bounds = array<i64: 1>, scalar_prefetch = 0 : i64, scratch_operands = 0 : i64, tpu.core_type = #tpu.core_type<tc>, window_params = [{transform_indices = @transform_0, window_bounds = array<i64: 256, 32>}, {pipeline_mode = #tpu.pipeline_mode<synchronous>, transform_indices = @transform_1, window_bounds = array<i64: 32, 1024>}, {pipeline_mode = #tpu.pipeline_mode<synchronous>, transform_indices = @transform_2, window_bounds = array<i64: 1, 1024>}, {pipeline_mode = #tpu.pipeline_mode<synchronous>, transform_indices = @transform_3, window_bounds = array<i64: 1024, 1024>}, {pipeline_mode = #tpu.pipeline_mode<synchronous>, transform_indices = @transform_4, window_bounds = array<i64: 1, 1024>}, {pipeline_mode = #tpu.pipeline_mode<synchronous>, transform_indices = @transform_5, window_bounds = array<i64: 1024, 128>}, {pipeline_mode = #tpu.pipeline_mode<synchronous>, transform_indices = @transform_6, window_bounds = array<i64: 1, 128>}, {transform_indices = @transform_7, window_bounds = array<i64: 256, 128>}]} {
    %c0 = arith.constant 0 : index
    %c0_0 = arith.constant 0 : index
    %0 = vector.load %arg1[%c0, %c0_0] : memref<256x32xbf16, #tpu.memory_space<vmem>>, vector<256x32xbf16>
    %c0_1 = arith.constant 0 : index
    %c0_2 = arith.constant 0 : index
    %1 = vector.load %arg2[%c0_1, %c0_2] : memref<32x1024xbf16, #tpu.memory_space<vmem>>, vector<32x1024xbf16>
    %cst = arith.constant dense<0.000000e+00> : vector<256x1024xf32>
    %2 = tpu.matmul %0, %1, %cst {dimension_numbers = #tpu.dot_dimension_numbers<[1], [0], [0], [1], [0, 0, 1, 1], [], []>} : vector<256x32xbf16>, vector<32x1024xbf16>, vector<256x1024xf32> -> vector<256x1024xf32>
    %c0_3 = arith.constant 0 : index
    %c0_4 = arith.constant 0 : index
    %3 = vector.load %arg3[%c0_3, %c0_4] : memref<1x1024xf32, #tpu.memory_space<vmem>>, vector<1x1024xf32>
    %4 = vector.broadcast %3 : vector<1x1024xf32> to vector<256x1024xf32>
    %5 = arith.addf %2, %4 : vector<256x1024xf32>
    %cst_5 = arith.constant 0.000000e+00 : f32
    %6 = vector.broadcast %cst_5 : f32 to vector<256x1024xf32>
    %7 = arith.maximumf %5, %6 : vector<256x1024xf32>
    %8 = arith.truncf %7 : vector<256x1024xf32> to vector<256x1024xbf16>
    %c0_6 = arith.constant 0 : index
    %c0_7 = arith.constant 0 : index
    %9 = vector.load %arg4[%c0_6, %c0_7] : memref<1024x1024xbf16, #tpu.memory_space<vmem>>, vector<1024x1024xbf16>
    %cst_8 = arith.constant dense<0.000000e+00> : vector<256x1024xf32>
    %10 = tpu.matmul %8, %9, %cst_8 {dimension_numbers = #tpu.dot_dimension_numbers<[1], [0], [0], [1], [0, 0, 1, 1], [], []>} : vector<256x1024xbf16>, vector<1024x1024xbf16>, vector<256x1024xf32> -> vector<256x1024xf32>
    %c0_9 = arith.constant 0 : index
    %c0_10 = arith.constant 0 : index
    %11 = vector.load %arg5[%c0_9, %c0_10] : memref<1x1024xf32, #tpu.memory_space<vmem>>, vector<1x1024xf32>
    %12 = vector.broadcast %11 : vector<1x1024xf32> to vector<256x1024xf32>
    %13 = arith.addf %10, %12 : vector<256x1024xf32>
    %cst_11 = arith.constant 0.000000e+00 : f32
    %14 = vector.broadcast %cst_11 : f32 to vector<256x1024xf32>
    %15 = arith.maximumf %13, %14 : vector<256x1024xf32>
    %16 = arith.truncf %15 : vector<256x1024xf32> to vector<256x1024xbf16>
    %c0_12 = arith.constant 0 : index
    %c0_13 = arith.constant 0 : index
    %17 = vector.load %arg6[%c0_12, %c0_13] : memref<1024x128xbf16, #tpu.memory_space<vmem>>, vector<1024x128xbf16>
    %cst_14 = arith.constant dense<0.000000e+00> : vector<256x128xf32>
    %18 = tpu.matmul %16, %17, %cst_14 {dimension_numbers = #tpu.dot_dimension_numbers<[1], [0], [0], [1], [0, 0, 1, 1], [], []>} : vector<256x1024xbf16>, vector<1024x128xbf16>, vector<256x128xf32> -> vector<256x128xf32>
    %c0_15 = arith.constant 0 : index
    %c0_16 = arith.constant 0 : index
    %19 = vector.load %arg7[%c0_15, %c0_16] : memref<1x128xf32, #tpu.memory_space<vmem>>, vector<1x128xf32>
    %20 = vector.broadcast %19 : vector<1x128xf32> to vector<256x128xf32>
    %21 = arith.addf %18, %20 : vector<256x128xf32>
    %c0_17 = arith.constant 0 : index
    %c0_18 = arith.constant 0 : index
    %22 = vector.load %arg8[%c0_17, %c0_18] : memref<256x128xf32, #tpu.memory_space<vmem>>, vector<256x128xf32>
    tpu.vector_store %arg8[%c0_17, %c0_18], %21 {strides = array<i32>} : memref<256x128xf32, #tpu.memory_space<vmem>>, vector<256x128xf32>,
    return
  }
  func.func @transform_0(%arg0: i32) -> (i32, i32) {
    %c0_i32 = arith.constant 0 : i32
    %c0_i32_0 = arith.constant 0 : i32
    return %arg0, %c0_i32 : i32, i32
  }
  func.func @transform_1(%arg0: i32) -> (i32, i32) {
    %c0_i32 = arith.constant 0 : i32
    %c0_i32_0 = arith.constant 0 : i32
    %c0_i32_1 = arith.constant 0 : i32
    return %c0_i32, %c0_i32_0 : i32, i32
  }
  func.func @transform_2(%arg0: i32) -> (i32, i32) {
    %c0_i32 = arith.constant 0 : i32
    %c0_i32_0 = arith.constant 0 : i32
    %c0_i32_1 = arith.constant 0 : i32
    return %c0_i32, %c0_i32_0 : i32, i32
  }
  func.func @transform_3(%arg0: i32) -> (i32, i32) {
    %c0_i32 = arith.constant 0 : i32
    %c0_i32_0 = arith.constant 0 : i32
    %c0_i32_1 = arith.constant 0 : i32
    return %c0_i32, %c0_i32_0 : i32, i32
  }
  func.func @transform_4(%arg0: i32) -> (i32, i32) {
    %c0_i32 = arith.constant 0 : i32
    %c0_i32_0 = arith.constant 0 : i32
    %c0_i32_1 = arith.constant 0 : i32
    return %c0_i32, %c0_i32_0 : i32, i32
  }
  func.func @transform_5(%arg0: i32) -> (i32, i32) {
    %c0_i32 = arith.constant 0 : i32
    %c0_i32_0 = arith.constant 0 : i32
    %c0_i32_1 = arith.constant 0 : i32
    return %c0_i32, %c0_i32_0 : i32, i32
  }
  func.func @transform_6(%arg0: i32) -> (i32, i32) {
    %c0_i32 = arith.constant 0 : i32
    %c0_i32_0 = arith.constant 0 : i32
    %c0_i32_1 = arith.constant 0 : i32
    return %c0_i32, %c0_i32_0 : i32, i32
  }
  func.func @transform_7(%arg0: i32) -> (i32, i32) {
    %c0_i32 = arith.constant 0 : i32
    %c0_i32_0 = arith.constant 0 : i32
    return %arg0, %c0_i32 : i32, i32
  }
}

</mosaic_0001>

<llo_original>
// kernel: ck_classifier_forward.1
$region0: #{ck_classifier_forward.1}
  #allocation0 [shape = 'u32[]', space=smem, size = 0x4, offset = 0x4, fixed_abs, tag = 'smem constant byte address 0x4 - core index']
  #allocation1 [shape = 'u32[144,128]{1,0:T(1,128)}', space=vmem, size = 0x12000, scoped, tag = 'internal scratch']
  %s0 = inlined_call_operand.vmem [shape: bf16[256,32], index: 0, kind: input, shape index: {}]
  %s1 = inlined_call_operand.hbm [shape: bf16[32,1024], index: 1, kind: input, shape index: {}]
  %s2 = inlined_call_operand.hbm [shape: f32[1,1024], index: 2, kind: input, shape index: {}]
  %s3 = inlined_call_operand.hbm [shape: bf16[1024,1024], index: 3, kind: input, shape index: {}]
  %s4 = inlined_call_operand.hbm [shape: f32[1,1024], index: 4, kind: input, shape index: {}]
  %s5 = inlined_call_operand.hbm [shape: bf16[1024,128], index: 5, kind: input, shape index: {}]
  %s6 = inlined_call_operand.hbm [shape: f32[1,128], index: 6, kind: input, shape index: {}]
  %s7 = inlined_call_operand.vmem [shape: f32[256,128], index: 7, kind: output, shape index: {}]
  %s8 = sld [smem:[#allocation0]]
  $region62: #{ck_classifier_forward.1} parent=0
    _
  %s10 = ssub.s32 1, %s8
  %s11 = scalar_select 0, %s10, %s8
  $region1: #{ck_classifier_forward.1} parent=0
    #allocation2 [shape = 'u8[65536]{0}', space=vmem, size = 0x10000, scoped, tag = 'input window, operand 1, single buffered']
    #allocation3 [shape = 's32[1]{0}', space=sflag, size = 0x4, scoped, tag = 'scoped memory for ck_classifier_forward.1']
    #allocation4 [shape = 'u8[4096]{0}', space=vmem, size = 0x1000, scoped, tag = 'input window, operand 2, single buffered']
    #allocation5 [shape = 's32[1]{0}', space=sflag, size = 0x4, scoped, tag = 'scoped memory for ck_classifier_forward.1']
    #allocation6 [shape = 'u8[2097152]{0}', space=vmem, size = 0x200000, scoped, tag = 'input window, operand 3, single buffered']
    #allocation7 [shape = 'u8[4096]{0}', space=vmem, size = 0x1000, scoped, tag = 'input window, operand 4, single buffered']
    #allocation8 [shape = 's32[1]{0}', space=sflag, size = 0x4, scoped, tag = 'scoped memory for ck_classifier_forward.1']
    #allocation9 [shape = 'u8[262144]{0}', space=vmem, size = 0x40000, scoped, tag = 'input window, operand 5, single buffered']
    #allocation10 [shape = 'u8[512]{0}', space=vmem, size = 0x400, scoped, tag = 'input window, operand 6, single buffered']
    #allocation11 [shape = 's32[1]{0}', space=sflag, size = 0x4, scoped, tag = 'scoped memory for ck_classifier_forward.1']
    %12 = vsyncpa [#allocation3], 0
    %13 = vsyncpa [#allocation5], 0
    %14 = vsyncpa [#allocation8], 0
    %15 = vsyncpa [#allocation11], 0
    // Predicated region
    $region2: #{ck_classifier_forward.1} parent=1 // pred_check
      _
    $region3: #{ck_classifier_forward.1} parent=1 // pred_check_branch
      %17 = sbr.rel (0) target = $region5
    $region4: #{ck_classifier_forward.1} parent=1 // pred_region
      _
    $region5: #{ck_classifier_forward.1} parent=1 // pred_fallthru
      _
    // Predicated region
    $region6: #{ck_classifier_forward.1} parent=1 // pred_check
      _
    $region7: #{ck_classifier_forward.1} parent=1 // pred_check_branch
      %19 = sbr.rel (0) target = $region9
    $region8: #{ck_classifier_forward.1} parent=1 // pred_region
      %s21 = ssub.s32 2048, 2048
      %22 = vsyncadd [#allocation3], %s21
      %s23 = sshll.u32 [#allocation2], 4
      %s24 = int_to_ptr.vmem [resolvable:$true] %s23
      %29 = dma.hbm_to_vmem [thread:$0]  %s1, 2048, %s24, [#allocation3], 512, 512, 32
    $region9: #{ck_classifier_forward.1} parent=1 // pred_fallthru
      _
    // Predicated region
    $region10: #{ck_classifier_forward.1} parent=1 // pred_check
      _
    $region11: #{ck_classifier_forward.1} parent=1 // pred_check_branch
      %31 = sbr.rel (0) target = $region13
    $region12: #{ck_classifier_forward.1} parent=1 // pred_region
      %s33 = ssub.s32 128, 128
      %34 = vsyncadd [#allocation5], %s33
      %s36 = sshll.u32 [#allocation4], 4
      %s37 = int_to_ptr.vmem [resolvable:$true] %s36
      %39 = dma.hbm_to_vmem [thread:$0]  %s2, 128, %s37, [#allocation5]
    $region13: #{ck_classifier_forward.1} parent=1 // pred_fallthru
      _
    // Predicated region
    $region14: #{ck_classifier_forward.1} parent=1 // pred_check
      _
    $region15: #{ck_classifier_forward.1} parent=1 // pred_check_branch
      %41 = sbr.rel (0) target = $region17
    $region16: #{ck_classifier_forward.1} parent=1 // pred_region
      %s43 = ssub.s32 65536, 65536
      %44 = vsyncadd [#allocation5], %s43
      %s45 = sshll.u32 [#allocation6], 4
      %s46 = int_to_ptr.vmem [resolvable:$true] %s45
      %51 = dma.hbm_to_vmem [thread:$0]  %s3, 65536, %s46, [#allocation5], 512, 512, 32
    $region17: #{ck_classifier_forward.1} parent=1 // pred_fallthru
      _
    // Predicated region
    $region18: #{ck_classifier_forward.1} parent=1 // pred_check
      _
    $region19: #{ck_classifier_forward.1} parent=1 // pred_check_branch
      %53 = sbr.rel (0) target = $region21
    $region20: #{ck_classifier_forward.1} parent=1 // pred_region
      %s55 = ssub.s32 128, 128
      %56 = vsyncadd [#allocation8], %s55
      %s58 = sshll.u32 [#allocation7], 4
      %s59 = int_to_ptr.vmem [resolvable:$true] %s58
      %61 = dma.hbm_to_vmem [thread:$0]  %s4, 128, %s59, [#allocation8]
    $region21: #{ck_classifier_forward.1} parent=1 // pred_fallthru
      _
    // Predicated region
    $region22: #{ck_classifier_forward.1} parent=1 // pred_check
      _
    $region23: #{ck_classifier_forward.1} parent=1 // pred_check_branch
      %63 = sbr.rel (0) target = $region25
    $region24: #{ck_classifier_forward.1} parent=1 // pred_region
      %s65 = ssub.s32 8192, 8192
      %66 = vsyncadd [#allocation8], %s65
      %s67 = sshll.u32 [#allocation9], 4
      %s68 = int_to_ptr.vmem [resolvable:$true] %s67
      %73 = dma.hbm_to_vmem [thread:$0]  %s5, 8192, %s68, [#allocation8], 64, 64, 4
    $region25: #{ck_classifier_forward.1} parent=1 // pred_fallthru
      _
    // Predicated region
    $region26: #{ck_classifier_forward.1} parent=1 // pred_check
      _
    $region27: #{ck_classifier_forward.1} parent=1 // pred_check_branch
      %75 = sbr.rel (0) target = $region29
    $region28: #{ck_classifier_forward.1} parent=1 // pred_region
      %s77 = ssub.s32 16, 16
      %78 = vsyncadd [#allocation11], %s77
      %s80 = sshll.u32 [#allocation10], 4
      %s81 = int_to_ptr.vmem [resolvable:$true] %s80
      %83 = dma.hbm_to_vmem [thread:$0]  %s6, 16, %s81, [#allocation11]
    $region29: #{ck_classifier_forward.1} parent=1 // pred_fallthru
      _
    // Predicated region
    $region30: #{ck_classifier_forward.1} parent=1 // pred_check
      _
    $region31: #{ck_classifier_forward.1} parent=1 // pred_check_branch
      %85 = sbr.rel (0) target = $region33
    $region32: #{ck_classifier_forward.1} parent=1 // pred_region
      %86 = dma.done [#allocation3], 2048
    $region33: #{ck_classifier_forward.1} parent=1 // pred_fallthru
      _
    // Predicated region
    $region34: #{ck_classifier_forward.1} parent=1 // pred_check
      _
    $region35: #{ck_classifier_forward.1} parent=1 // pred_check_branch
      %88 = sbr.rel (0) target = $region37
    $region36: #{ck_classifier_forward.1} parent=1 // pred_region
      %89 = dma.done [#allocation5], 128
    $region37: #{ck_classifier_forward.1} parent=1 // pred_fallthru
      _
    // Predicated region
    $region38: #{ck_classifier_forward.1} parent=1 // pred_check
      _
    $region39: #{ck_classifier_forward.1} parent=1 // pred_check_branch
      %91 = sbr.rel (0) target = $region41
    $region40: #{ck_classifier_forward.1} parent=1 // pred_region
      %92 = dma.done [#allocation5], 65536
    $region41: #{ck_classifier_forward.1} parent=1 // pred_fallthru
      _
    // Predicated region
    $region42: #{ck_classifier_forward.1} parent=1 // pred_check
      _
    $region43: #{ck_classifier_forward.1} parent=1 // pred_check_branch
      %94 = sbr.rel (0) target = $region45
    $region44: #{ck_classifier_forward.1} parent=1 // pred_region
      %95 = dma.done [#allocation8], 128
    $region45: #{ck_classifier_forward.1} parent=1 // pred_fallthru
      _
    // Predicated region
    $region46: #{ck_classifier_forward.1} parent=1 // pred_check
      _
    $region47: #{ck_classifier_forward.1} parent=1 // pred_check_branch
      %97 = sbr.rel (0) target = $region49
    $region48: #{ck_classifier_forward.1} parent=1 // pred_region
      %98 = dma.done [#allocation8], 8192
    $region49: #{ck_classifier_forward.1} parent=1 // pred_fallthru
      _
    // Predicated region
    $region50: #{ck_classifier_forward.1} parent=1 // pred_check
      _
    $region51: #{ck_classifier_forward.1} parent=1 // pred_check_branch
      %100 = sbr.rel (0) target = $region53
    $region52: #{ck_classifier_forward.1} parent=1 // pred_region
      %101 = dma.done [#allocation11], 16
    $region53: #{ck_classifier_forward.1} parent=1 // pred_fallthru
      _
    %v103 = vld [vmem:[%s0] sm:$0xf]
    %v104 = vld [vmem:[%s0 + $0x4] sm:$0xf]
    %v105 = vld [vmem:[%s0 + $0x8] sm:$0xf]
    %v106 = vld [vmem:[%s0 + $0xc] sm:$0xf]
    %v107 = vld [vmem:[%s0 + $0x10] sm:$0xf]
    %v108 = vld [vmem:[%s0 + $0x14] sm:$0xf]
    %v109 = vld [vmem:[%s0 + $0x18] sm:$0xf]
    %v110 = vld [vmem:[%s0 + $0x1c] sm:$0xf]
    %v111 = vld [vmem:[%s0 + $0x20] sm:$0xf]
    %v112 = vld [vmem:[%s0 + $0x24] sm:$0xf]
    %v113 = vld [vmem:[%s0 + $0x28] sm:$0xf]
    %v114 = vld [vmem:[%s0 + $0x2c] sm:$0xf]
    %v115 = vld [vmem:[%s0 + $0x30] sm:$0xf]
    %v116 = vld [vmem:[%s0 + $0x34] sm:$0xf]
    %v117 = vld [vmem:[%s0 + $0x38] sm:$0xf]
    %v118 = vld [vmem:[%s0 + $0x3c] sm:$0xf]
    %v119 = vld [vmem:[%s0 + $0x40] sm:$0xf]
    %v120 = vld [vmem:[%s0 + $0x44] sm:$0xf]
    %v121 = vld [vmem:[%s0 + $0x48] sm:$0xf]
    %v122 = vld [vmem:[%s0 + $0x4c] sm:$0xf]
    %v123 = vld [vmem:[%s0 + $0x50] sm:$0xf]
    %v124 = vld [vmem:[%s0 + $0x54] sm:$0xf]
    %v125 = vld [vmem:[%s0 + $0x58] sm:$0xf]
    %v126 = vld [vmem:[%s0 + $0x5c] sm:$0xf]
    %v127 = vld [vmem:[%s0 + $0x60] sm:$0xf]
    %v128 = vld [vmem:[%s0 + $0x64] sm:$0xf]
    %v129 = vld [vmem:[%s0 + $0x68] sm:$0xf]
    %v130 = vld [vmem:[%s0 + $0x6c] sm:$0xf]
    %v131 = vld [vmem:[%s0 + $0x70] sm:$0xf]
    %v132 = vld [vmem:[%s0 + $0x74] sm:$0xf]
    %v133 = vld [vmem:[%s0 + $0x78] sm:$0xf]
    %v134 = vld [vmem:[%s0 + $0x7c] sm:$0xf]
    %v135 = vld [vmem:[#allocation2] sm:$0xff]
    %v136 = vld [vmem:[#allocation2 + $0x8] sm:$0xff]
    %v137 = vld [vmem:[#allocation2 + $0x10] sm:$0xff]
    %v138 = vld [vmem:[#allocation2 + $0x18] sm:$0xff]
    %v139 = vld [vmem:[#allocation2 + $0x20] sm:$0xff]
    %v140 = vld [vmem:[#allocation2 + $0x28] sm:$0xff]
    %v141 = vld [vmem:[#allocation2 + $0x30] sm:$0xff]
    %v142 = vld [vmem:[#allocation2 + $0x38] sm:$0xff]
    %v143 = vld [vmem:[#allocation2 + $0x40] sm:$0xff]
    %v144 = vld [vmem:[#allocation2 + $0x48] sm:$0xff]
    %v145 = vld [vmem:[#allocation2 + $0x50] sm:$0xff]
    %v146 = vld [vmem:[#allocation2 + $0x58] sm:$0xff]
    %v147 = vld [vmem:[#allocation2 + $0x60] sm:$0xff]
    %v148 = vld [vmem:[#allocation2 + $0x68] sm:$0xff]
    %v149 = vld [vmem:[#allocation2 + $0x70] sm:$0xff]
    %v150 = vld [vmem:[#allocation2 + $0x78] sm:$0xff]
    %v151 = vld [vmem:[#allocation4] sm:$0xff]
    %v153 = vlaneseq
    %v154 = vshrl.u32 %v153, 7
    %v155 = vsub.s32 0, %v154
    %v156 = vrot.slane %v151, %v155
    %v157 = vlaneseq
    %v158 = vshrl.u32 %v157, 7
    %v159 = vsub.s32 1, %v158
    %v160 = vrot.slane %v151, %v159
    %v161 = vlaneseq
    %v162 = vshrl.u32 %v161, 7
    %v163 = vsub.s32 2, %v162
    %v164 = vrot.slane %v151, %v163
    %v165 = vlaneseq
    %v166 = vshrl.u32 %v165, 7
    %v167 = vsub.s32 3, %v166
    %v168 = vrot.slane %v151, %v167
    %v169 = vlaneseq
    %v170 = vshrl.u32 %v169, 7
    %v171 = vsub.s32 4, %v170
    %v172 = vrot.slane %v151, %v171
    %v173 = vlaneseq
    %v174 = vshrl.u32 %v173, 7
    %v175 = vsub.s32 5, %v174
    %v176 = vrot.slane %v151, %v175
    %v177 = vlaneseq
    %v178 = vshrl.u32 %v177, 7
    %v179 = vsub.s32 6, %v178
    %v180 = vrot.slane %v151, %v179
    %v181 = vlaneseq
    %v182 = vshrl.u32 %v181, 7
    %v183 = vsub.s32 7, %v182
    %v184 = vrot.slane %v151, %v183
    %v225 = vunpack.c.l.b16 %v103
    %v226 = vunpack.c.l.b16 %v104
    %v227 = vunpack.c.l.b16 %v105
    %v228 = vunpack.c.l.b16 %v106
    %v229 = vunpack.c.l.b16 %v107
    %v230 = vunpack.c.l.b16 %v108
    %v231 = vunpack.c.l.b16 %v109
    %v232 = vunpack.c.l.b16 %v110
    %v233 = vunpack.c.l.b16 %v111
    %v234 = vunpack.c.l.b16 %v112
    %v235 = vunpack.c.l.b16 %v113
    %v236 = vunpack.c.l.b16 %v114
    %v237 = vunpack.c.l.b16 %v115
    %v238 = vunpack.c.l.b16 %v116
    %v239 = vunpack.c.l.b16 %v117
    %v240 = vunpack.c.l.b16 %v118
    %v241 = vunpack.c.l.b16 %v119
    %v242 = vunpack.c.l.b16 %v120
    %v243 = vunpack.c.l.b16 %v121
    %v244 = vunpack.c.l.b16 %v122
    %v245 = vunpack.c.l.b16 %v123
    %v246 = vunpack.c.l.b16 %v124
    %v247 = vunpack.c.l.b16 %v125
    %v248 = vunpack.c.l.b16 %v126
    %v249 = vunpack.c.l.b16 %v127
    %v250 = vunpack.c.l.b16 %v128
    %v251 = vunpack.c.l.b16 %v129
    %v252 = vunpack.c.l.b16 %v130
    %v253 = vunpack.c.l.b16 %v131
    %v254 = vunpack.c.l.b16 %v132
    %v255 = vunpack.c.l.b16 %v133
    %v256 = vunpack.c.l.b16 %v134
    %v257 = vpack.c.b16 %v226, %v225
    %v258 = vpack.c.b16 %v228, %v227
    %v259 = vpack.c.b16 %v230, %v229
    %v260 = vpack.c.b16 %v232, %v231
    %v261 = vpack.c.b16 %v234, %v233
    %v262 = vpack.c.b16 %v236, %v235
    %v263 = vpack.c.b16 %v238, %v237
    %v264 = vpack.c.b16 %v240, %v239
    %v265 = vpack.c.b16 %v242, %v241
    %v266 = vpack.c.b16 %v244, %v243
    %v267 = vpack.c.b16 %v246, %v245
    %v268 = vpack.c.b16 %v248, %v247
    %v269 = vpack.c.b16 %v250, %v249
    %v270 = vpack.c.b16 %v252, %v251
    %v271 = vpack.c.b16 %v254, %v253
    %v272 = vpack.c.b16 %v256, %v255
    %v289 = vunpack.c.l.b16 %v135
    %v290 = vunpack.c.h.b16 %v135
    %v291 = vunpack.c.l.b16 %v136
    %v292 = vunpack.c.h.b16 %v136
    %v293 = vunpack.c.l.b16 %v137
    %v294 = vunpack.c.h.b16 %v137
    %v295 = vunpack.c.l.b16 %v138
    %v296 = vunpack.c.h.b16 %v138
    %v297 = vunpack.c.l.b16 %v139
    %v298 = vunpack.c.h.b16 %v139
    %v299 = vunpack.c.l.b16 %v140
    %v300 = vunpack.c.h.b16 %v140
    %v301 = vunpack.c.l.b16 %v141
    %v302 = vunpack.c.h.b16 %v141
    %v303 = vunpack.c.l.b16 %v142
    %v304 = vunpack.c.h.b16 %v142
    %v305 = vunpack.c.l.b16 %v143
    %v306 = vunpack.c.h.b16 %v143
    %v307 = vunpack.c.l.b16 %v144
    %v308 = vunpack.c.h.b16 %v144
    %v309 = vunpack.c.l.b16 %v145
    %v310 = vunpack.c.h.b16 %v145
    %v311 = vunpack.c.l.b16 %v146
    %v312 = vunpack.c.h.b16 %v146
    %v313 = vunpack.c.l.b16 %v147
    %v314 = vunpack.c.h.b16 %v147
    %v315 = vunpack.c.l.b16 %v148
    %v316 = vunpack.c.h.b16 %v148
    %v317 = vunpack.c.l.b16 %v149
    %v318 = vunpack.c.h.b16 %v149
    %v319 = vunpack.c.l.b16 %v150
    %v320 = vunpack.c.h.b16 %v150
    %v321 = vpack.c.b16 %v297, %v289
    %v322 = vpack.c.b16 %v298, %v290
    %v323 = vpack.c.b16 %v299, %v291
    %v324 = vpack.c.b16 %v300, %v292
    %v325 = vpack.c.b16 %v301, %v293
    %v326 = vpack.c.b16 %v302, %v294
    %v327 = vpack.c.b16 %v303, %v295
    %v328 = vpack.c.b16 %v304, %v296
    %v329 = vpack.c.b16 %v313, %v305
    %v330 = vpack.c.b16 %v314, %v306
    %v331 = vpack.c.b16 %v315, %v307
    %v332 = vpack.c.b16 %v316, %v308
    %v333 = vpack.c.b16 %v317, %v309
    %v334 = vpack.c.b16 %v318, %v310
    %v335 = vpack.c.b16 %v319, %v311
    %v336 = vpack.c.b16 %v320, %v312
    %vm353 = vcmask 261120
    %v355 = vsel %vm353, %v257, 0
    %v358 = vsel %vm353, %v258, 0
    %v361 = vsel %vm353, %v259, 0
    %v364 = vsel %vm353, %v260, 0
    %v367 = vsel %vm353, %v261, 0
    %v370 = vsel %vm353, %v262, 0
    %v373 = vsel %vm353, %v263, 0
    %v376 = vsel %vm353, %v264, 0
    %v379 = vsel %vm353, %v265, 0
    %v382 = vsel %vm353, %v266, 0
    %v385 = vsel %vm353, %v267, 0
    %v388 = vsel %vm353, %v268, 0
    %v391 = vsel %vm353, %v269, 0
    %v394 = vsel %vm353, %v270, 0
    %v397 = vsel %vm353, %v271, 0
    %v400 = vsel %vm353, %v272, 0
    %402 = vmatprep.subr.bf16.mxu0 %v322
    %403 = vmatpush1.bf16.msra.mxu0 %v321
    %404 = vmatprep.subr.bf16.mxu0 %v330
    %405 = vmatpush1.bf16.msra.mxu0 %v329
    %406 = vmatprep.subr.bf16.mxu0 0
    %407 = vmatpush1.bf16.msra.mxu0 0
    %408 = vmatprep.subr.bf16.mxu0 0
    %409 = vmatpush1.bf16.msra.mxu0 0
    %410 = vmatprep.subr.bf16.mxu0 0
    %411 = vmatpush1.bf16.msra.mxu0 0
    %412 = vmatprep.subr.bf16.mxu0 0
    %413 = vmatpush1.bf16.msra.mxu0 0
    %414 = vmatprep.subr.bf16.mxu0 0
    %415 = vmatpush1.bf16.msra.mxu0 0
    %416 = vmatprep.subr.bf16.mxu0 0
    %417 = vmatpush1.bf16.msra.mxu0 0
    %418 = vmatprep.subr.bf16.mxu0 0
    %419 = vmatpush1.bf16.msra.mxu0 0
    %420 = vmatprep.subr.bf16.mxu0 0
    %421 = vmatpush1.bf16.msra.mxu0 0
    %422 = vmatprep.subr.bf16.mxu0 0
    %423 = vmatpush1.bf16.msra.mxu0 0
    %424 = vmatprep.subr.bf16.mxu0 0
    %425 = vmatpush1.bf16.msra.mxu0 0
    %426 = vmatprep.subr.bf16.mxu0 0
    %427 = vmatpush1.bf16.msra.mxu0 0
    %428 = vmatprep.subr.bf16.mxu0 0
    %429 = vmatpush1.bf16.msra.mxu0 0
    %430 = vmatprep.subr.bf16.mxu0 0
    %431 = vmatpush1.bf16.msra.mxu0 0
    %432 = vmatprep.subr.bf16.mxu0 0
    %433 = vmatpush1.bf16.msra.mxu0 0
    %434 = vmatprep.mubr.bf16.mxu0 0
    %435 = vmatmul.mubr.bf16.gmra.mrb[0].mxu0 %v355
    %v436 = vpop.f32.mrb[0].mxu0
    %v437 = vadd.f32 %v156, %v436
    %v438 = vpop.f32.mrb[0].mxu0
    %v439 = vadd.f32 %v160, %v438
    %v440 = vpop.f32.mrb[0].mxu0
    %v441 = vadd.f32 %v156, %v440
    %v442 = vpop.f32.mrb[0].mxu0
    %v443 = vadd.f32 %v160, %v442
    %444 = vmatprep.mubr.bf16.mxu0 0
    %445 = vmatmul.mubr.bf16.gmra.mrb[0].mxu0 %v358
    %v446 = vpop.f32.mrb[0].mxu0
    %v447 = vadd.f32 %v156, %v446
    %v448 = vpop.f32.mrb[0].mxu0
    %v449 = vadd.f32 %v160, %v448
    %v450 = vpop.f32.mrb[0].mxu0
    %v451 = vadd.f32 %v156, %v450
    %v452 = vpop.f32.mrb[0].mxu0
    %v453 = vadd.f32 %v160, %v452
    %454 = vmatprep.mubr.bf16.mxu0 0
    %455 = vmatmul.mubr.bf16.gmra.mrb[0].mxu0 %v361
    %v456 = vpop.f32.mrb[0].mxu0
    %v457 = vadd.f32 %v156, %v456
    %v458 = vpop.f32.mrb[0].mxu0
    %v459 = vadd.f32 %v160, %v458
    %v460 = vpop.f32.mrb[0].mxu0
    %v461 = vadd.f32 %v156, %v460
    %v462 = vpop.f32.mrb[0].mxu0
    %v463 = vadd.f32 %v160, %v462
    %464 = vmatprep.mubr.bf16.mxu0 0
    %465 = vmatmul.mubr.bf16.gmra.mrb[0].mxu0 %v364
    %v466 = vpop.f32.mrb[0].mxu0
    %v467 = vadd.f32 %v156, %v466
    %v468 = vpop.f32.mrb[0].mxu0
    %v469 = vadd.f32 %v160, %v468
    %v470 = vpop.f32.mrb[0].mxu0
    %v471 = vadd.f32 %v156, %v470
    %v472 = vpop.f32.mrb[0].mxu0
    %v473 = vadd.f32 %v160, %v472
    %474 = vmatprep.mubr.bf16.mxu0 0
    %475 = vmatmul.mubr.bf16.gmra.mrb[0].mxu0 %v367
    %v476 = vpop.f32.mrb[0].mxu0
    %v477 = vadd.f32 %v156, %v476
    %v478 = vpop.f32.mrb[0].mxu0
    %v479 = vadd.f32 %v160, %v478
    %v480 = vpop.f32.mrb[0].mxu0
    %v481 = vadd.f32 %v156, %v480
    %v482 = vpop.f32.mrb[0].mxu0
    %v483 = vadd.f32 %v160, %v482
    %484 = vmatprep.mubr.bf16.mxu0 0
    %485 = vmatmul.mubr.bf16.gmra.mrb[0].mxu0 %v370
    %v486 = vpop.f32.mrb[0].mxu0
    %v487 = vadd.f32 %v156, %v486
    %v488 = vpop.f32.mrb[0].mxu0
    %v489 = vadd.f32 %v160, %v488
    %v490 = vpop.f32.mrb[0].mxu0
    %v491 = vadd.f32 %v156, %v490
    %v492 = vpop.f32.mrb[0].mxu0
    %v493 = vadd.f32 %v160, %v492
    %494 = vmatprep.mubr.bf16.mxu0 0
    %495 = vmatmul.mubr.bf16.gmra.mrb[0].mxu0 %v373
    %v496 = vpop.f32.mrb[0].mxu0
    %v497 = vadd.f32 %v156, %v496
    %v498 = vpop.f32.mrb[0].mxu0
    %v499 = vadd.f32 %v160, %v498
    %v500 = vpop.f32.mrb[0].mxu0
    %v501 = vadd.f32 %v156, %v500
    %v502 = vpop.f32.mrb[0].mxu0
    %v503 = vadd.f32 %v160, %v502
    %504 = vmatprep.mubr.bf16.mxu0 0
    %505 = vmatmul.mubr.bf16.gmra.mrb[0].mxu0 %v376
    %v506 = vpop.f32.mrb[0].mxu0
    %v507 = vadd.f32 %v156, %v506
    %v508 = vpop.f32.mrb[0].mxu0
    %v509 = vadd.f32 %v160, %v508
    %v510 = vpop.f32.mrb[0].mxu0
    %v511 = vadd.f32 %v156, %v510
    %v512 = vpop.f32.mrb[0].mxu0
    %v513 = vadd.f32 %v160, %v512
    %514 = vmatprep.mubr.bf16.mxu0 0
    %515 = vmatmul.mubr.bf16.gmra.mrb[0].mxu0 %v379
    %v516 = vpop.f32.mrb[0].mxu0
    %v517 = vadd.f32 %v156, %v516
    %v518 = vpop.f32.mrb[0].mxu0
    %v519 = vadd.f32 %v160, %v518
    %v520 = vpop.f32.mrb[0].mxu0
    %v521 = vadd.f32 %v156, %v520
    %v522 = vpop.f32.mrb[0].mxu0
    %v523 = vadd.f32 %v160, %v522
    %524 = vmatprep.mubr.bf16.mxu0 0
    %525 = vmatmul.mubr.bf16.gmra.mrb[0].mxu0 %v382
    %v526 = vpop.f32.mrb[0].mxu0
    %v527 = vadd.f32 %v156, %v526
    %v528 = vpop.f32.mrb[0].mxu0
    %v529 = vadd.f32 %v160, %v528
    %v530 = vpop.f32.mrb[0].mxu0
    %v531 = vadd.f32 %v156, %v530
    %v532 = vpop.f32.mrb[0].mxu0
    %v533 = vadd.f32 %v160, %v532
    %534 = vmatprep.mubr.bf16.mxu0 0
    %535 = vmatmul.mubr.bf16.gmra.mrb[0].mxu0 %v385
    %v536 = vpop.f32.mrb[0].mxu0
    %v537 = vadd.f32 %v156, %v536
    %v538 = vpop.f32.mrb[0].mxu0
    %v539 = vadd.f32 %v160, %v538
    %v540 = vpop.f32.mrb[0].mxu0
    %v541 = vadd.f32 %v156, %v540
    %v542 = vpop.f32.mrb[0].mxu0
    %v543 = vadd.f32 %v160, %v542
    %544 = vmatprep.mubr.bf16.mxu0 0
    %545 = vmatmul.mubr.bf16.gmra.mrb[0].mxu0 %v388
    %v546 = vpop.f32.mrb[0].mxu0
    %v547 = vadd.f32 %v156, %v546
    %v548 = vpop.f32.mrb[0].mxu0
    %v549 = vadd.f32 %v160, %v548
    %v550 = vpop.f32.mrb[0].mxu0
    %v551 = vadd.f32 %v156, %v550
    %v552 = vpop.f32.mrb[0].mxu0
    %v553 = vadd.f32 %v160, %v552
    %554 = vmatprep.mubr.bf16.mxu0 0
    %555 = vmatmul.mubr.bf16.gmra.mrb[0].mxu0 %v391
    %v556 = vpop.f32.mrb[0].mxu0
    %v557 = vadd.f32 %v156, %v556
    %v558 = vpop.f32.mrb[0].mxu0
    %v559 = vadd.f32 %v160, %v558
    %v560 = vpop.f32.mrb[0].mxu0
    %v561 = vadd.f32 %v156, %v560
    %v562 = vpop.f32.mrb[0].mxu0
    %v563 = vadd.f32 %v160, %v562
    %564 = vmatprep.mubr.bf16.mxu0 0
    %565 = vmatmul.mubr.bf16.gmra.mrb[0].mxu0 %v394
    %v566 = vpop.f32.mrb[0].mxu0
    %v567 = vadd.f32 %v156, %v566
    %v568 = vpop.f32.mrb[0].mxu0
    %v569 = vadd.f32 %v160, %v568
    %v570 = vpop.f32.mrb[0].mxu0
    %v571 = vadd.f32 %v156, %v570
    %v572 = vpop.f32.mrb[0].mxu0
    %v573 = vadd.f32 %v160, %v572
    %574 = vmatprep.mubr.bf16.mxu0 0
    %575 = vmatmul.mubr.bf16.gmra.mrb[0].mxu0 %v397
    %v576 = vpop.f32.mrb[0].mxu0
    %v577 = vadd.f32 %v156, %v576
    %v578 = vpop.f32.mrb[0].mxu0
    %v579 = vadd.f32 %v160, %v578
    %v580 = vpop.f32.mrb[0].mxu0
    %v581 = vadd.f32 %v156, %v580
    %v582 = vpop.f32.mrb[0].mxu0
    %v583 = vadd.f32 %v160, %v582
    %584 = vmatprep.mubr.bf16.mxu0 0
    %585 = vmatmul.mubr.bf16.gmra.mrb[0].mxu0 %v400
    %v586 = vpop.f32.mrb[0].mxu0
    %v587 = vadd.f32 %v156, %v586
    %v588 = vpop.f32.mrb[0].mxu0
    %v589 = vadd.f32 %v160, %v588
    %v590 = vpop.f32.mrb[0].mxu0
    %v591 = vadd.f32 %v156, %v590
    %v592 = vpop.f32.mrb[0].mxu0
    %v593 = vadd.f32 %v160, %v592
    %594 = vdwg.mxu0
    %595 = vmatprep.subr.bf16.mxu0 %v324
    %596 = vmatpush1.bf16.msra.mxu0 %v323
    %597 = vmatprep.subr.bf16.mxu0 %v332
    %598 = vmatpush1.bf16.msra.mxu0 %v331
    %599 = vmatprep.subr.bf16.mxu0 0
    %600 = vmatpush1.bf16.msra.mxu0 0
    %601 = vmatprep.subr.bf16.mxu0 0
    %602 = vmatpush1.bf16.msra.mxu0 0
    %603 = vmatprep.subr.bf16.mxu0 0
    %604 = vmatpush1.bf16.msra.mxu0 0
    %605 = vmatprep.subr.bf16.mxu0 0
    %606 = vmatpush1.bf16.msra.mxu0 0
    %607 = vmatprep.subr.bf16.mxu0 0
    %608 = vmatpush1.bf16.msra.mxu0 0
    %609 = vmatprep.subr.bf16.mxu0 0
    %610 = vmatpush1.bf16.msra.mxu0 0
    %611 = vmatprep.subr.bf16.mxu0 0
    %612 = vmatpush1.bf16.msra.mxu0 0
    %613 = vmatprep.subr.bf16.mxu0 0
    %614 = vmatpush1.bf16.msra.mxu0 0
    %615 = vmatprep.subr.bf16.mxu0 0
    %616 = vmatpush1.bf16.msra.mxu0 0
    %617 = vmatprep.subr.bf16.mxu0 0
    %618 = vmatpush1.bf16.msra.mxu0 0
    %619 = vmatprep.subr.bf16.mxu0 0
    %620 = vmatpush1.bf16.msra.mxu0 0
    %621 = vmatprep.subr.bf16.mxu0 0
    %622 = vmatpush1.bf16.msra.mxu0 0
    %623 = vmatprep.subr.bf16.mxu0 0
    %624 = vmatpush1.bf16.msra.mxu0 0
    %625 = vmatprep.subr.bf16.mxu0 0
    %626 = vmatpush1.bf16.msra.mxu0 0
    %627 = vmatprep.mubr.bf16.mxu0 0
    %628 = vmatmul.mubr.bf16.gmra.mrb[0].mxu0 %v355
    %v629 = vpop.f32.mrb[0].mxu0
    %v630 = vadd.f32 %v164, %v629
    %v631 = vpop.f32.mrb[0].mxu0
    %v632 = vadd.f32 %v168, %v631
    %v633 = vpop.f32.mrb[0].mxu0
    %v634 = vadd.f32 %v164, %v633
    %v635 = vpop.f32.mrb[0].mxu0
    %v636 = vadd.f32 %v168, %v635
    %637 = vmatprep.mubr.bf16.mxu0 0
    %638 = vmatmul.mubr.bf16.gmra.mrb[0].mxu0 %v358
    %v639 = vpop.f32.mrb[0].mxu0
    %v640 = vadd.f32 %v164, %v639
    %v641 = vpop.f32.mrb[0].mxu0
    %v642 = vadd.f32 %v168, %v641
    %v643 = vpop.f32.mrb[0].mxu0
    %v644 = vadd.f32 %v164, %v643
    %v645 = vpop.f32.mrb[0].mxu0
    %v646 = vadd.f32 %v168, %v645
    %647 = vmatprep.mubr.bf16.mxu0 0
    %648 = vmatmul.mubr.bf16.gmra.mrb[0].mxu0 %v361
    %v649 = vpop.f32.mrb[0].mxu0
    %v650 = vadd.f32 %v164, %v649
    %v651 = vpop.f32.mrb[0].mxu0
    %v652 = vadd.f32 %v168, %v651
    %v653 = vpop.f32.mrb[0].mxu0
    %v654 = vadd.f32 %v164, %v653
    %v655 = vpop.f32.mrb[0].mxu0
    %v656 = vadd.f32 %v168, %v655
    %657 = vmatprep.mubr.bf16.mxu0 0
    %658 = vmatmul.mubr.bf16.gmra.mrb[0].mxu0 %v364
    %v659 = vpop.f32.mrb[0].mxu0
    %v660 = vadd.f32 %v164, %v659
    %v661 = vpop.f32.mrb[0].mxu0
    %v662 = vadd.f32 %v168, %v661
    %v663 = vpop.f32.mrb[0].mxu0
    %v664 = vadd.f32 %v164, %v663
    %v665 = vpop.f32.mrb[0].mxu0
    %v666 = vadd.f32 %v168, %v665
    %667 = vmatprep.mubr.bf16.mxu0 0
    %668 = vmatmul.mubr.bf16.gmra.mrb[0].mxu0 %v367
    %v669 = vpop.f32.mrb[0].mxu0
    %v670 = vadd.f32 %v164, %v669
    %v671 = vpop.f32.mrb[0].mxu0
    %v672 = vadd.f32 %v168, %v671
    %v673 = vpop.f32.mrb[0].mxu0
    %v674 = vadd.f32 %v164, %v673
    %v675 = vpop.f32.mrb[0].mxu0
    %v676 = vadd.f32 %v168, %v675
    %677 = vmatprep.mubr.bf16.mxu0 0
    %678 = vmatmul.mubr.bf16.gmra.mrb[0].mxu0 %v370
    %v679 = vpop.f32.mrb[0].mxu0
    %v680 = vadd.f32 %v164, %v679
    %v681 = vpop.f32.mrb[0].mxu0
    %v682 = vadd.f32 %v168, %v681
    %v683 = vpop.f32.mrb[0].mxu0
    %v684 = vadd.f32 %v164, %v683
    %v685 = vpop.f32.mrb[0].mxu0
    %v686 = vadd.f32 %v168, %v685
    %687 = vmatprep.mubr.bf16.mxu0 0
    %688 = vmatmul.mubr.bf16.gmra.mrb[0].mxu0 %v373
    %v689 = vpop.f32.mrb[0].mxu0
    %v690 = vadd.f32 %v164, %v689
    %v691 = vpop.f32.mrb[0].mxu0
    %v692 = vadd.f32 %v168, %v691
    %v693 = vpop.f32.mrb[0].mxu0
    %v694 = vadd.f32 %v164, %v693
    %v695 = vpop.f32.mrb[0].mxu0
    %v696 = vadd.f32 %v168, %v695
    %697 = vmatprep.mubr.bf16.mxu0 0
    %698 = vmatmul.mubr.bf16.gmra.mrb[0].mxu0 %v376
    %v699 = vpop.f32.mrb[0].mxu0
    %v700 = vadd.f32 %v164, %v699
    %v701 = vpop.f32.mrb[0].mxu0
    %v702 = vadd.f32 %v168, %v701
    %v703 = vpop.f32.mrb[0].mxu0
    %v704 = vadd.f32 %v164, %v703
    %v705 = vpop.f32.mrb[0].mxu0
    %v706 = vadd.f32 %v168, %v705
    %707 = vmatprep.mubr.bf16.mxu0 0
    %708 = vmatmul.mubr.bf16.gmra.mrb[0].mxu0 %v379
    %v709 = vpop.f32.mrb[0].mxu0
    %v710 = vadd.f32 %v164, %v709
    %v711 = vpop.f32.mrb[0].mxu0
    %v712 = vadd.f32 %v168, %v711
    %v713 = vpop.f32.mrb[0].mxu0
    %v714 = vadd.f32 %v164, %v713
    %v715 = vpop.f32.mrb[0].mxu0
    %v716 = vadd.f32 %v168, %v715
    %717 = vmatprep.mubr.bf16.mxu0 0
    %718 = vmatmul.mubr.bf16.gmra.mrb[0].mxu0 %v382
    %v719 = vpop.f32.mrb[0].mxu0
    %v720 = vadd.f32 %v164, %v719
    %v721 = vpop.f32.mrb[0].mxu0
    %v722 = vadd.f32 %v168, %v721
    %v723 = vpop.f32.mrb[0].mxu0
    %v724 = vadd.f32 %v164, %v723
    %v725 = vpop.f32.mrb[0].mxu0
    %v726 = vadd.f32 %v168, %v725
    %727 = vmatprep.mubr.bf16.mxu0 0
    %728 = vmatmul.mubr.bf16.gmra.mrb[0].mxu0 %v385
    %v729 = vpop.f32.mrb[0].mxu0
    %v730 = vadd.f32 %v164, %v729
    %v731 = vpop.f32.mrb[0].mxu0
    %v732 = vadd.f32 %v168, %v731
    %v733 = vpop.f32.mrb[0].mxu0
    %v734 = vadd.f32 %v164, %v733
    %v735 = vpop.f32.mrb[0].mxu0
    %v736 = vadd.f32 %v168, %v735
    %737 = vmatprep.mubr.bf16.mxu0 0
    %738 = vmatmul.mubr.bf16.gmra.mrb[0].mxu0 %v388
    %v739 = vpop.f32.mrb[0].mxu0
    %v740 = vadd.f32 %v164, %v739
    %v741 = vpop.f32.mrb[0].mxu0
    %v742 = vadd.f32 %v168, %v741
    %v743 = vpop.f32.mrb[0].mxu0
    %v744 = vadd.f32 %v164, %v743
    %v745 = vpop.f32.mrb[0].mxu0
    %v746 = vadd.f32 %v168, %v745
    %747 = vmatprep.mubr.bf16.mxu0 0
    %748 = vmatmul.mubr.bf16.gmra.mrb[0].mxu0 %v391
    %v749 = vpop.f32.mrb[0].mxu0
    %v750 = vadd.f32 %v164, %v749
    %v751 = vpop.f32.mrb[0].mxu0
    %v752 = vadd.f32 %v168, %v751
    %v753 = vpop.f32.mrb[0].mxu0
    %v754 = vadd.f32 %v164, %v753
    %v755 = vpop.f32.mrb[0].mxu0
    %v756 = vadd.f32 %v168, %v755
    %757 = vmatprep.mubr.bf16.mxu0 0
    %758 = vmatmul.mubr.bf16.gmra.mrb[0].mxu0 %v394
    %v759 = vpop.f32.mrb[0].mxu0
    %v760 = vadd.f32 %v164, %v759
    %v761 = vpop.f32.mrb[0].mxu0
    %v762 = vadd.f32 %v168, %v761
    %v763 = vpop.f32.mrb[0].mxu0
    %v764 = vadd.f32 %v164, %v763
    %v765 = vpop.f32.mrb[0].mxu0
    %v766 = vadd.f32 %v168, %v765
    %767 = vmatprep.mubr.bf16.mxu0 0
    %768 = vmatmul.mubr.bf16.gmra.mrb[0].mxu0 %v397
    %v769 = vpop.f32.mrb[0].mxu0
    %v770 = vadd.f32 %v164, %v769
    %v771 = vpop.f32.mrb[0].mxu0
    %v772 = vadd.f32 %v168, %v771
    %v773 = vpop.f32.mrb[0].mxu0
    %v774 = vadd.f32 %v164, %v773
    %v775 = vpop.f32.mrb[0].mxu0
    %v776 = vadd.f32 %v168, %v775
    %777 = vmatprep.mubr.bf16.mxu0 0
    %778 = vmatmul.mubr.bf16.gmra.mrb[0].mxu0 %v400
    %v779 = vpop.f32.mrb[0].mxu0
    %v780 = vadd.f32 %v164, %v779
    %v781 = vpop.f32.mrb[0].mxu0
    %v782 = vadd.f32 %v168, %v781
    %v783 = vpop.f32.mrb[0].mxu0
    %v784 = vadd.f32 %v164, %v783
    %v785 = vpop.f32.mrb[0].mxu0
    %v786 = vadd.f32 %v168, %v785
    %787 = vdwg.mxu0
    %788 = vmatprep.subr.bf16.mxu0 %v326
    %789 = vmatpush1.bf16.msra.mxu0 %v325
    %790 = vmatprep.subr.bf16.mxu0 %v334
    %791 = vmatpush1.bf16.msra.mxu0 %v333
    %792 = vmatprep.subr.bf16.mxu0 0
    %793 = vmatpush1.bf16.msra.mxu0 0
    %794 = vmatprep.subr.bf16.mxu0 0
    %795 = vmatpush1.bf16.msra.mxu0 0
    %796 = vmatprep.subr.bf16.mxu0 0
    %797 = vmatpush1.bf16.msra.mxu0 0
    %798 = vmatprep.subr.bf16.mxu0 0
    %799 = vmatpush1.bf16.msra.mxu0 0
    %800 = vmatprep.subr.bf16.mxu0 0
    %801 = vmatpush1.bf16.msra.mxu0 0
    %802 = vmatprep.subr.bf16.mxu0 0
    %803 = vmatpush1.bf16.msra.mxu0 0
    %804 = vmatprep.subr.bf16.mxu0 0
    %805 = vmatpush1.bf16.msra.mxu0 0
    %806 = vmatprep.subr.bf16.mxu0 0
    %807 = vmatpush1.bf16.msra.mxu0 0
    %808 = vmatprep.subr.bf16.mxu0 0
    %809 = vmatpush1.bf16.msra.mxu0 0
    %810 = vmatprep.subr.bf16.mxu0 0
    %811 = vmatpush1.bf16.msra.mxu0 0
    %812 = vmatprep.subr.bf16.mxu0 0
    %813 = vmatpush1.bf16.msra.mxu0 0
    %814 = vmatprep.subr.bf16.mxu0 0
    %815 = vmatpush1.bf16.msra.mxu0 0
    %816 = vmatprep.subr.bf16.mxu0 0
    %817 = vmatpush1.bf16.msra.mxu0 0
    %818 = vmatprep.subr.bf16.mxu0 0
    %819 = vmatpush1.bf16.msra.mxu0 0
    %820 = vmatprep.mubr.bf16.mxu0 0
    %821 = vmatmul.mubr.bf16.gmra.mrb[0].mxu0 %v355
    %v822 = vpop.f32.mrb[0].mxu0
    %v823 = vadd.f32 %v172, %v822
    %v824 = vpop.f32.mrb[0].mxu0
    %v825 = vadd.f32 %v176, %v824
    %v826 = vpop.f32.mrb[0].mxu0
    %v827 = vadd.f32 %v172, %v826
    %v828 = vpop.f32.mrb[0].mxu0
    %v829 = vadd.f32 %v176, %v828
    %830 = vmatprep.mubr.bf16.mxu0 0
    %831 = vmatmul.mubr.bf16.gmra.mrb[0].mxu0 %v358
    %v832 = vpop.f32.mrb[0].mxu0
    %v833 = vadd.f32 %v172, %v832
    %v834 = vpop.f32.mrb[0].mxu0
    %v835 = vadd.f32 %v176, %v834
    %v836 = vpop.f32.mrb[0].mxu0
    %v837 = vadd.f32 %v172, %v836
    %v838 = vpop.f32.mrb[0].mxu0
    %v839 = vadd.f32 %v176, %v838
    %840 = vmatprep.mubr.bf16.mxu0 0
    %841 = vmatmul.mubr.bf16.gmra.mrb[0].mxu0 %v361
    %v842 = vpop.f32.mrb[0].mxu0
    %v843 = vadd.f32 %v172, %v842
    %v844 = vpop.f32.mrb[0].mxu0
    %v845 = vadd.f32 %v176, %v844
    %v846 = vpop.f32.mrb[0].mxu0
    %v847 = vadd.f32 %v172, %v846
    %v848 = vpop.f32.mrb[0].mxu0
    %v849 = vadd.f32 %v176, %v848
    %850 = vmatprep.mubr.bf16.mxu0 0
    %851 = vmatmul.mubr.bf16.gmra.mrb[0].mxu0 %v364
    %v852 = vpop.f32.mrb[0].mxu0
    %v853 = vadd.f32 %v172, %v852
    %v854 = vpop.f32.mrb[0].mxu0
    %v855 = vadd.f32 %v176, %v854
    %v856 = vpop.f32.mrb[0].mxu0
    %v857 = vadd.f32 %v172, %v856
    %v858 = vpop.f32.mrb[0].mxu0
    %v859 = vadd.f32 %v176, %v858
    %860 = vmatprep.mubr.bf16.mxu0 0
    %861 = vmatmul.mubr.bf16.gmra.mrb[0].mxu0 %v367
    %v862 = vpop.f32.mrb[0].mxu0
    %v863 = vadd.f32 %v172, %v862
    %v864 = vpop.f32.mrb[0].mxu0
    %v865 = vadd.f32 %v176, %v864
    %v866 = vpop.f32.mrb[0].mxu0
    %v867 = vadd.f32 %v172, %v866
    %v868 = vpop.f32.mrb[0].mxu0
    %v869 = vadd.f32 %v176, %v868
    %870 = vmatprep.mubr.bf16.mxu0 0
    %871 = vmatmul.mubr.bf16.gmra.mrb[0].mxu0 %v370
    %v872 = vpop.f32.mrb[0].mxu0
    %v873 = vadd.f32 %v172, %v872
    %v874 = vpop.f32.mrb[0].mxu0
    %v875 = vadd.f32 %v176, %v874
    %v876 = vpop.f32.mrb[0].mxu0
    %v877 = vadd.f32 %v172, %v876
    %v878 = vpop.f32.mrb[0].mxu0
    %v879 = vadd.f32 %v176, %v878
    %880 = vmatprep.mubr.bf16.mxu0 0
    %881 = vmatmul.mubr.bf16.gmra.mrb[0].mxu0 %v373
    %v882 = vpop.f32.mrb[0].mxu0
    %v883 = vadd.f32 %v172, %v882
    %v884 = vpop.f32.mrb[0].mxu0
    %v885 = vadd.f32 %v176, %v884
    %v886 = vpop.f32.mrb[0].mxu0
    %v887 = vadd.f32 %v172, %v886
    %v888 = vpop.f32.mrb[0].mxu0
    %v889 = vadd.f32 %v176, %v888
    %890 = vmatprep.mubr.bf16.mxu0 0
    %891 = vmatmul.mubr.bf16.gmra.mrb[0].mxu0 %v376
    %v892 = vpop.f32.mrb[0].mxu0
    %v893 = vadd.f32 %v172, %v892
    %v894 = vpop.f32.mrb[0].mxu0
    %v895 = vadd.f32 %v176, %v894
    %v896 = vpop.f32.mrb[0].mxu0
    %v897 = vadd.f32 %v172, %v896
    %v898 = vpop.f32.mrb[0].mxu0
    %v899 = vadd.f32 %v176, %v898
    %900 = vmatprep.mubr.bf16.mxu0 0
    %901 = vmatmul.mubr.bf16.gmra.mrb[0].mxu0 %v379
    %v902 = vpop.f32.mrb[0].mxu0
    %v903 = vadd.f32 %v172, %v902
    %v904 = vpop.f32.mrb[0].mxu0
    %v905 = vadd.f32 %v176, %v904
    %v906 = vpop.f32.mrb[0].mxu0
    %v907 = vadd.f32 %v172, %v906
    %v908 = vpop.f32.mrb[0].mxu0
    %v909 = vadd.f32 %v176, %v908
    %910 = vmatprep.mubr.bf16.mxu0 0
    %911 = vmatmul.mubr.bf16.gmra.mrb[0].mxu0 %v382
    %v912 = vpop.f32.mrb[0].mxu0
    %v913 = vadd.f32 %v172, %v912
    %v914 = vpop.f32.mrb[0].mxu0
    %v915 = vadd.f32 %v176, %v914
    %v916 = vpop.f32.mrb[0].mxu0
    %v917 = vadd.f32 %v172, %v916
    %v918 = vpop.f32.mrb[0].mxu0
    %v919 = vadd.f32 %v176, %v918
    %920 = vmatprep.mubr.bf16.mxu0 0
    %921 = vmatmul.mubr.bf16.gmra.mrb[0].mxu0 %v385
    %v922 = vpop.f32.mrb[0].mxu0
    %v923 = vadd.f32 %v172, %v922
    %v924 = vpop.f32.mrb[0].mxu0
    %v925 = vadd.f32 %v176, %v924
    %v926 = vpop.f32.mrb[0].mxu0
    %v927 = vadd.f32 %v172, %v926
    %v928 = vpop.f32.mrb[0].mxu0
    %v929 = vadd.f32 %v176, %v928
    %930 = vmatprep.mubr.bf16.mxu0 0
    %931 = vmatmul.mubr.bf16.gmra.mrb[0].mxu0 %v388
    %v932 = vpop.f32.mrb[0].mxu0
    %v933 = vadd.f32 %v172, %v932
    %v934 = vpop.f32.mrb[0].mxu0
    %v935 = vadd.f32 %v176, %v934
    %v936 = vpop.f32.mrb[0].mxu0
    %v937 = vadd.f32 %v172, %v936
    %v938 = vpop.f32.mrb[0].mxu0
    %v939 = vadd.f32 %v176, %v938
    %940 = vmatprep.mubr.bf16.mxu0 0
    %941 = vmatmul.mubr.bf16.gmra.mrb[0].mxu0 %v391
    %v942 = vpop.f32.mrb[0].mxu0
    %v943 = vadd.f32 %v172, %v942
    %v944 = vpop.f32.mrb[0].mxu0
    %v945 = vadd.f32 %v176, %v944
    %v946 = vpop.f32.mrb[0].mxu0
    %v947 = vadd.f32 %v172, %v946
    %v948 = vpop.f32.mrb[0].mxu0
    %v949 = vadd.f32 %v176, %v948
    %950 = vmatprep.mubr.bf16.mxu0 0
    %951 = vmatmul.mubr.bf16.gmra.mrb[0].mxu0 %v394
    %v952 = vpop.f32.mrb[0].mxu0
    %v953 = vadd.f32 %v172, %v952
    %v954 = vpop.f32.mrb[0].mxu0
    %v955 = vadd.f32 %v176, %v954
    %v956 = vpop.f32.mrb[0].mxu0
    %v957 = vadd.f32 %v172, %v956
    %v958 = vpop.f32.mrb[0].mxu0
    %v959 = vadd.f32 %v176, %v958
    %960 = vmatprep.mubr.bf16.mxu0 0
    %961 = vmatmul.mubr.bf16.gmra.mrb[0].mxu0 %v397
    %v962 = vpop.f32.mrb[0].mxu0
    %v963 = vadd.f32 %v172, %v962
    %v964 = vpop.f32.mrb[0].mxu0
    %v965 = vadd.f32 %v176, %v964
    %v966 = vpop.f32.mrb[0].mxu0
    %v967 = vadd.f32 %v172, %v966
    %v968 = vpop.f32.mrb[0].mxu0
    %v969 = vadd.f32 %v176, %v968
    %970 = vmatprep.mubr.bf16.mxu0 0
    %971 = vmatmul.mubr.bf16.gmra.mrb[0].mxu0 %v400
    %v972 = vpop.f32.mrb[0].mxu0
    %v973 = vadd.f32 %v172, %v972
    %v974 = vpop.f32.mrb[0].mxu0
    %v975 = vadd.f32 %v176, %v974
    %v976 = vpop.f32.mrb[0].mxu0
    %v977 = vadd.f32 %v172, %v976
    %v978 = vpop.f32.mrb[0].mxu0
    %v979 = vadd.f32 %v176, %v978
    %980 = vdwg.mxu0
    %981 = vmatprep.subr.bf16.mxu0 %v328
    %982 = vmatpush1.bf16.msra.mxu0 %v327
    %983 = vmatprep.subr.bf16.mxu0 %v336
    %984 = vmatpush1.bf16.msra.mxu0 %v335
    %985 = vmatprep.subr.bf16.mxu0 0
    %986 = vmatpush1.bf16.msra.mxu0 0
    %987 = vmatprep.subr.bf16.mxu0 0
    %988 = vmatpush1.bf16.msra.mxu0 0
    %989 = vmatprep.subr.bf16.mxu0 0
    %990 = vmatpush1.bf16.msra.mxu0 0
    %991 = vmatprep.subr.bf16.mxu0 0
    %992 = vmatpush1.bf16.msra.mxu0 0
    %993 = vmatprep.subr.bf16.mxu0 0
    %994 = vmatpush1.bf16.msra.mxu0 0
    %995 = vmatprep.subr.bf16.mxu0 0
    %996 = vmatpush1.bf16.msra.mxu0 0
    %997 = vmatprep.subr.bf16.mxu0 0
    %998 = vmatpush1.bf16.msra.mxu0 0
    %999 = vmatprep.subr.bf16.mxu0 0
    %1000 = vmatpush1.bf16.msra.mxu0 0
    %1001 = vmatprep.subr.bf16.mxu0 0
    %1002 = vmatpush1.bf16.msra.mxu0 0
    %1003 = vmatprep.subr.bf16.mxu0 0
    %1004 = vmatpush1.bf16.msra.mxu0 0
    %1005 = vmatprep.subr.bf16.mxu0 0
    %1006 = vmatpush1.bf16.msra.mxu0 0
    %1007 = vmatprep.subr.bf16.mxu0 0
    %1008 = vmatpush1.bf16.msra.mxu0 0
    %1009 = vmatprep.subr.bf16.mxu0 0
    %1010 = vmatpush1.bf16.msra.mxu0 0
    %1011 = vmatprep.subr.bf16.mxu0 0
    %1012 = vmatpush1.bf16.msra.mxu0 0
    %1013 = vmatprep.mubr.bf16.mxu0 0
    %1014 = vmatmul.mubr.bf16.gmra.mrb[0].mxu0 %v355
    %v1015 = vpop.f32.mrb[0].mxu0
    %v1016 = vadd.f32 %v180, %v1015
    %v1017 = vpop.f32.mrb[0].mxu0
    %v1018 = vadd.f32 %v184, %v1017
    %v1019 = vpop.f32.mrb[0].mxu0
    %v1020 = vadd.f32 %v180, %v1019
    %v1021 = vpop.f32.mrb[0].mxu0
    %v1022 = vadd.f32 %v184, %v1021
    %1023 = vmatprep.mubr.bf16.mxu0 0
    %1024 = vmatmul.mubr.bf16.gmra.mrb[0].mxu0 %v358
    %v1025 = vpop.f32.mrb[0].mxu0
    %v1026 = vadd.f32 %v180, %v1025
    %v1027 = vpop.f32.mrb[0].mxu0
    %v1028 = vadd.f32 %v184, %v1027
    %v1029 = vpop.f32.mrb[0].mxu0
    %v1030 = vadd.f32 %v180, %v1029
    %v1031 = vpop.f32.mrb[0].mxu0
    %v1032 = vadd.f32 %v184, %v1031
    %1033 = vmatprep.mubr.bf16.mxu0 0
    %1034 = vmatmul.mubr.bf16.gmra.mrb[0].mxu0 %v361
    %v1035 = vpop.f32.mrb[0].mxu0
    %v1036 = vadd.f32 %v180, %v1035
    %v1037 = vpop.f32.mrb[0].mxu0
    %v1038 = vadd.f32 %v184, %v1037
    %v1039 = vpop.f32.mrb[0].mxu0
    %v1040 = vadd.f32 %v180, %v1039
    %v1041 = vpop.f32.mrb[0].mxu0
    %v1042 = vadd.f32 %v184, %v1041
    %1043 = vmatprep.mubr.bf16.mxu0 0
    %1044 = vmatmul.mubr.bf16.gmra.mrb[0].mxu0 %v364
    %v1045 = vpop.f32.mrb[0].mxu0
    %v1046 = vadd.f32 %v180, %v1045
    %v1047 = vpop.f32.mrb[0].mxu0
    %v1048 = vadd.f32 %v184, %v1047
    %v1049 = vpop.f32.mrb[0].mxu0
    %v1050 = vadd.f32 %v180, %v1049
    %v1051 = vpop.f32.mrb[0].mxu0
    %v1052 = vadd.f32 %v184, %v1051
    %1053 = vmatprep.mubr.bf16.mxu0 0
    %1054 = vmatmul.mubr.bf16.gmra.mrb[0].mxu0 %v367
    %v1055 = vpop.f32.mrb[0].mxu0
    %v1056 = vadd.f32 %v180, %v1055
    %v1057 = vpop.f32.mrb[0].mxu0
    %v1058 = vadd.f32 %v184, %v1057
    %v1059 = vpop.f32.mrb[0].mxu0
    %v1060 = vadd.f32 %v180, %v1059
    %v1061 = vpop.f32.mrb[0].mxu0
    %v1062 = vadd.f32 %v184, %v1061
    %1063 = vmatprep.mubr.bf16.mxu0 0
    %1064 = vmatmul.mubr.bf16.gmra.mrb[0].mxu0 %v370
    %v1065 = vpop.f32.mrb[0].mxu0
    %v1066 = vadd.f32 %v180, %v1065
    %v1067 = vpop.f32.mrb[0].mxu0
    %v1068 = vadd.f32 %v184, %v1067
    %v1069 = vpop.f32.mrb[0].mxu0
    %v1070 = vadd.f32 %v180, %v1069
    %v1071 = vpop.f32.mrb[0].mxu0
    %v1072 = vadd.f32 %v184, %v1071
    %1073 = vmatprep.mubr.bf16.mxu0 0
    %1074 = vmatmul.mubr.bf16.gmra.mrb[0].mxu0 %v373
    %v1075 = vpop.f32.mrb[0].mxu0
    %v1076 = vadd.f32 %v180, %v1075
    %v1077 = vpop.f32.mrb[0].mxu0
    %v1078 = vadd.f32 %v184, %v1077
    %v1079 = vpop.f32.mrb[0].mxu0
    %v1080 = vadd.f32 %v180, %v1079
    %v1081 = vpop.f32.mrb[0].mxu0
    %v1082 = vadd.f32 %v184, %v1081
    %1083 = vmatprep.mubr.bf16.mxu0 0
    %1084 = vmatmul.mubr.bf16.gmra.mrb[0].mxu0 %v376
    %v1085 = vpop.f32.mrb[0].mxu0
    %v1086 = vadd.f32 %v180, %v1085
    %v1087 = vpop.f32.mrb[0].mxu0
    %v1088 = vadd.f32 %v184, %v1087
    %v1089 = vpop.f32.mrb[0].mxu0
    %v1090 = vadd.f32 %v180, %v1089
    %v1091 = vpop.f32.mrb[0].mxu0
    %v1092 = vadd.f32 %v184, %v1091
    %1093 = vmatprep.mubr.bf16.mxu0 0
    %1094 = vmatmul.mubr.bf16.gmra.mrb[0].mxu0 %v379
    %v1095 = vpop.f32.mrb[0].mxu0
    %v1096 = vadd.f32 %v180, %v1095
    %v1097 = vpop.f32.mrb[0].mxu0
    %v1098 = vadd.f32 %v184, %v1097
    %v1099 = vpop.f32.mrb[0].mxu0
    %v1100 = vadd.f32 %v180, %v1099
    %v1101 = vpop.f32.mrb[0].mxu0
    %v1102 = vadd.f32 %v184, %v1101
    %1103 = vmatprep.mubr.bf16.mxu0 0
    %1104 = vmatmul.mubr.bf16.gmra.mrb[0].mxu0 %v382
    %v1105 = vpop.f32.mrb[0].mxu0
    %v1106 = vadd.f32 %v180, %v1105
    %v1107 = vpop.f32.mrb[0].mxu0
    %v1108 = vadd.f32 %v184, %v1107
    %v1109 = vpop.f32.mrb[0].mxu0
    %v1110 = vadd.f32 %v180, %v1109
    %v1111 = vpop.f32.mrb[0].mxu0
    %v1112 = vadd.f32 %v184, %v1111
    %1113 = vmatprep.mubr.bf16.mxu0 0
    %1114 = vmatmul.mubr.bf16.gmra.mrb[0].mxu0 %v385
    %v1115 = vpop.f32.mrb[0].mxu0
    %v1116 = vadd.f32 %v180, %v1115
    %v1117 = vpop.f32.mrb[0].mxu0
    %v1118 = vadd.f32 %v184, %v1117
    %v1119 = vpop.f32.mrb[0].mxu0
    %v1120 = vadd.f32 %v180, %v1119
    %v1121 = vpop.f32.mrb[0].mxu0
    %v1122 = vadd.f32 %v184, %v1121
    %1123 = vmatprep.mubr.bf16.mxu0 0
    %1124 = vmatmul.mubr.bf16.gmra.mrb[0].mxu0 %v388
    %v1125 = vpop.f32.mrb[0].mxu0
    %v1126 = vadd.f32 %v180, %v1125
    %v1127 = vpop.f32.mrb[0].mxu0
    %v1128 = vadd.f32 %v184, %v1127
    %v1129 = vpop.f32.mrb[0].mxu0
    %v1130 = vadd.f32 %v180, %v1129
    %v1131 = vpop.f32.mrb[0].mxu0
    %v1132 = vadd.f32 %v184, %v1131
    %1133 = vmatprep.mubr.bf16.mxu0 0
    %1134 = vmatmul.mubr.bf16.gmra.mrb[0].mxu0 %v391
    %v1135 = vpop.f32.mrb[0].mxu0
    %v1136 = vadd.f32 %v180, %v1135
    %v1137 = vpop.f32.mrb[0].mxu0
    %v1138 = vadd.f32 %v184, %v1137
    %v1139 = vpop.f32.mrb[0].mxu0
    %v1140 = vadd.f32 %v180, %v1139
    %v1141 = vpop.f32.mrb[0].mxu0
    %v1142 = vadd.f32 %v184, %v1141
    %1143 = vmatprep.mubr.bf16.mxu0 0
    %1144 = vmatmul.mubr.bf16.gmra.mrb[0].mxu0 %v394
    %v1145 = vpop.f32.mrb[0].mxu0
    %v1146 = vadd.f32 %v180, %v1145
    %v1147 = vpop.f32.mrb[0].mxu0
    %v1148 = vadd.f32 %v184, %v1147
    %v1149 = vpop.f32.mrb[0].mxu0
    %v1150 = vadd.f32 %v180, %v1149
    %v1151 = vpop.f32.mrb[0].mxu0
    %v1152 = vadd.f32 %v184, %v1151
    %1153 = vmatprep.mubr.bf16.mxu0 0
    %1154 = vmatmul.mubr.bf16.gmra.mrb[0].mxu0 %v397
    %v1155 = vpop.f32.mrb[0].mxu0
    %v1156 = vadd.f32 %v180, %v1155
    %v1157 = vpop.f32.mrb[0].mxu0
    %v1158 = vadd.f32 %v184, %v1157
    %v1159 = vpop.f32.mrb[0].mxu0
    %v1160 = vadd.f32 %v180, %v1159
    %v1161 = vpop.f32.mrb[0].mxu0
    %v1162 = vadd.f32 %v184, %v1161
    %1163 = vmatprep.mubr.bf16.mxu0 0
    %1164 = vmatmul.mubr.bf16.gmra.mrb[0].mxu0 %v400
    %v1165 = vpop.f32.mrb[0].mxu0
    %v1166 = vadd.f32 %v180, %v1165
    %v1167 = vpop.f32.mrb[0].mxu0
    %v1168 = vadd.f32 %v184, %v1167
    %v1169 = vpop.f32.mrb[0].mxu0
    %v1170 = vadd.f32 %v180, %v1169
    %v1171 = vpop.f32.mrb[0].mxu0
    %v1172 = vadd.f32 %v184, %v1171
    %1173 = vdwg.mxu0
    %v1174 = vmax.f32 %v437, 0.0
    %v1175 = vmax.f32 %v439, 0.0
    %v1176 = vmax.f32 %v630, 0.0
    %v1177 = vmax.f32 %v632, 0.0
    %v1178 = vmax.f32 %v823, 0.0
    %v1179 = vmax.f32 %v825, 0.0
    %v1180 = vmax.f32 %v1016, 0.0
    %v1181 = vmax.f32 %v1018, 0.0
    %v1182 = vmax.f32 %v441, 0.0
    %v1183 = vmax.f32 %v443, 0.0
    %v1184 = vmax.f32 %v634, 0.0
    %v1185 = vmax.f32 %v636, 0.0
    %v1186 = vmax.f32 %v827, 0.0
    %v1187 = vmax.f32 %v829, 0.0
    %v1188 = vmax.f32 %v1020, 0.0
    %v1189 = vmax.f32 %v1022, 0.0
    %v1190 = vmax.f32 %v447, 0.0
    %v1191 = vmax.f32 %v449, 0.0
    %v1192 = vmax.f32 %v640, 0.0
    %v1193 = vmax.f32 %v642, 0.0
    %v1194 = vmax.f32 %v833, 0.0
    %v1195 = vmax.f32 %v835, 0.0
    %v1196 = vmax.f32 %v1026, 0.0
    %v1197 = vmax.f32 %v1028, 0.0
    %v1198 = vmax.f32 %v451, 0.0
    %v1199 = vmax.f32 %v453, 0.0
    %v1200 = vmax.f32 %v644, 0.0
    %v1201 = vmax.f32 %v646, 0.0
    %v1202 = vmax.f32 %v837, 0.0
    %v1203 = vmax.f32 %v839, 0.0
    %v1204 = vmax.f32 %v1030, 0.0
    %v1205 = vmax.f32 %v1032, 0.0
    %v1206 = vmax.f32 %v457, 0.0
    %v1207 = vmax.f32 %v459, 0.0
    %v1208 = vmax.f32 %v650, 0.0
    %v1209 = vmax.f32 %v652, 0.0
    %v1210 = vmax.f32 %v843, 0.0
    %v1211 = vmax.f32 %v845, 0.0
    %v1212 = vmax.f32 %v1036, 0.0
    %v1213 = vmax.f32 %v1038, 0.0
    %v1214 = vmax.f32 %v461, 0.0
    %v1215 = vmax.f32 %v463, 0.0
    %v1216 = vmax.f32 %v654, 0.0
    %v1217 = vmax.f32 %v656, 0.0
    %v1218 = vmax.f32 %v847, 0.0
    %v1219 = vmax.f32 %v849, 0.0
    %v1220 = vmax.f32 %v1040, 0.0
    %v1221 = vmax.f32 %v1042, 0.0
    %v1222 = vmax.f32 %v467, 0.0
    %v1223 = vmax.f32 %v469, 0.0
    %v1224 = vmax.f32 %v660, 0.0
    %v1225 = vmax.f32 %v662, 0.0
    %v1226 = vmax.f32 %v853, 0.0
    %v1227 = vmax.f32 %v855, 0.0
    %v1228 = vmax.f32 %v1046, 0.0
    %v1229 = vmax.f32 %v1048, 0.0
    %v1230 = vmax.f32 %v471, 0.0
    %v1231 = vmax.f32 %v473, 0.0
    %v1232 = vmax.f32 %v664, 0.0
    %v1233 = vmax.f32 %v666, 0.0
    %v1234 = vmax.f32 %v857, 0.0
    %v1235 = vmax.f32 %v859, 0.0
    %v1236 = vmax.f32 %v1050, 0.0
    %v1237 = vmax.f32 %v1052, 0.0
    %v1238 = vmax.f32 %v477, 0.0
    %v1239 = vmax.f32 %v479, 0.0
    %v1240 = vmax.f32 %v670, 0.0
    %v1241 = vmax.f32 %v672, 0.0
    %v1242 = vmax.f32 %v863, 0.0
    %v1243 = vmax.f32 %v865, 0.0
    %v1244 = vmax.f32 %v1056, 0.0
    %v1245 = vmax.f32 %v1058, 0.0
    %v1246 = vmax.f32 %v481, 0.0
    %v1247 = vmax.f32 %v483, 0.0
    %v1248 = vmax.f32 %v674, 0.0
    %v1249 = vmax.f32 %v676, 0.0
    %v1250 = vmax.f32 %v867, 0.0
    %v1251 = vmax.f32 %v869, 0.0
    %v1252 = vmax.f32 %v1060, 0.0
    %v1253 = vmax.f32 %v1062, 0.0
    %v1254 = vmax.f32 %v487, 0.0
    %v1255 = vmax.f32 %v489, 0.0
    %v1256 = vmax.f32 %v680, 0.0
    %v1257 = vmax.f32 %v682, 0.0
    %v1258 = vmax.f32 %v873, 0.0
    %v1259 = vmax.f32 %v875, 0.0
    %v1260 = vmax.f32 %v1066, 0.0
    %v1261 = vmax.f32 %v1068, 0.0
    %v1262 = vmax.f32 %v491, 0.0
    %v1263 = vmax.f32 %v493, 0.0
    %v1264 = vmax.f32 %v684, 0.0
    %v1265 = vmax.f32 %v686, 0.0
    %v1266 = vmax.f32 %v877, 0.0
    %v1267 = vmax.f32 %v879, 0.0
    %v1268 = vmax.f32 %v1070, 0.0
    %v1269 = vmax.f32 %v1072, 0.0
    %v1270 = vmax.f32 %v497, 0.0
    %v1271 = vmax.f32 %v499, 0.0
    %v1272 = vmax.f32 %v690, 0.0
    %v1273 = vmax.f32 %v692, 0.0
    %v1274 = vmax.f32 %v883, 0.0
    %v1275 = vmax.f32 %v885, 0.0
    %v1276 = vmax.f32 %v1076, 0.0
    %v1277 = vmax.f32 %v1078, 0.0
    %v1278 = vmax.f32 %v501, 0.0
    %v1279 = vmax.f32 %v503, 0.0
    %v1280 = vmax.f32 %v694, 0.0
    %v1281 = vmax.f32 %v696, 0.0
    %v1282 = vmax.f32 %v887, 0.0
    %v1283 = vmax.f32 %v889, 0.0
    %v1284 = vmax.f32 %v1080, 0.0
    %v1285 = vmax.f32 %v1082, 0.0
    %v1286 = vmax.f32 %v507, 0.0
    %v1287 = vmax.f32 %v509, 0.0
    %v1288 = vmax.f32 %v700, 0.0
    %v1289 = vmax.f32 %v702, 0.0
    %v1290 = vmax.f32 %v893, 0.0
    %v1291 = vmax.f32 %v895, 0.0
    %v1292 = vmax.f32 %v1086, 0.0
    %v1293 = vmax.f32 %v1088, 0.0
    %v1294 = vmax.f32 %v511, 0.0
    %v1295 = vmax.f32 %v513, 0.0
    %v1296 = vmax.f32 %v704, 0.0
    %v1297 = vmax.f32 %v706, 0.0
    %v1298 = vmax.f32 %v897, 0.0
    %v1299 = vmax.f32 %v899, 0.0
    %v1300 = vmax.f32 %v1090, 0.0
    %v1301 = vmax.f32 %v1092, 0.0
    %v1302 = vmax.f32 %v517, 0.0
    %v1303 = vmax.f32 %v519, 0.0
    %v1304 = vmax.f32 %v710, 0.0
    %v1305 = vmax.f32 %v712, 0.0
    %v1306 = vmax.f32 %v903, 0.0
    %v1307 = vmax.f32 %v905, 0.0
    %v1308 = vmax.f32 %v1096, 0.0
    %v1309 = vmax.f32 %v1098, 0.0
    %v1310 = vmax.f32 %v521, 0.0
    %v1311 = vmax.f32 %v523, 0.0
    %v1312 = vmax.f32 %v714, 0.0
    %v1313 = vmax.f32 %v716, 0.0
    %v1314 = vmax.f32 %v907, 0.0
    %v1315 = vmax.f32 %v909, 0.0
    %v1316 = vmax.f32 %v1100, 0.0
    %v1317 = vmax.f32 %v1102, 0.0
    %v1318 = vmax.f32 %v527, 0.0
    %v1319 = vmax.f32 %v529, 0.0
    %v1320 = vmax.f32 %v720, 0.0
    %v1321 = vmax.f32 %v722, 0.0
    %v1322 = vmax.f32 %v913, 0.0
    %v1323 = vmax.f32 %v915, 0.0
    %v1324 = vmax.f32 %v1106, 0.0
    %v1325 = vmax.f32 %v1108, 0.0
    %v1326 = vmax.f32 %v531, 0.0
    %v1327 = vmax.f32 %v533, 0.0
    %v1328 = vmax.f32 %v724, 0.0
    %v1329 = vmax.f32 %v726, 0.0
    %v1330 = vmax.f32 %v917, 0.0
    %v1331 = vmax.f32 %v919, 0.0
    %v1332 = vmax.f32 %v1110, 0.0
    %v1333 = vmax.f32 %v1112, 0.0
    %v1334 = vmax.f32 %v537, 0.0
    %v1335 = vmax.f32 %v539, 0.0
    %v1336 = vmax.f32 %v730, 0.0
    %v1337 = vmax.f32 %v732, 0.0
    %v1338 = vmax.f32 %v923, 0.0
    %v1339 = vmax.f32 %v925, 0.0
    %v1340 = vmax.f32 %v1116, 0.0
    %v1341 = vmax.f32 %v1118, 0.0
    %v1342 = vmax.f32 %v541, 0.0
    %v1343 = vmax.f32 %v543, 0.0
    %v1344 = vmax.f32 %v734, 0.0
    %v1345 = vmax.f32 %v736, 0.0
    %v1346 = vmax.f32 %v927, 0.0
    %v1347 = vmax.f32 %v929, 0.0
    %v1348 = vmax.f32 %v1120, 0.0
    %v1349 = vmax.f32 %v1122, 0.0
    %v1350 = vmax.f32 %v547, 0.0
    %v1351 = vmax.f32 %v549, 0.0
    %v1352 = vmax.f32 %v740, 0.0
    %v1353 = vmax.f32 %v742, 0.0
    %v1354 = vmax.f32 %v933, 0.0
    %v1355 = vmax.f32 %v935, 0.0
    %v1356 = vmax.f32 %v1126, 0.0
    %v1357 = vmax.f32 %v1128, 0.0
    %v1358 = vmax.f32 %v551, 0.0
    %v1359 = vmax.f32 %v553, 0.0
    %v1360 = vmax.f32 %v744, 0.0
    %v1361 = vmax.f32 %v746, 0.0
    %v1362 = vmax.f32 %v937, 0.0
    %v1363 = vmax.f32 %v939, 0.0
    %v1364 = vmax.f32 %v1130, 0.0
    %v1365 = vmax.f32 %v1132, 0.0
    %v1366 = vmax.f32 %v557, 0.0
    %v1367 = vmax.f32 %v559, 0.0
    %v1368 = vmax.f32 %v750, 0.0
    %v1369 = vmax.f32 %v752, 0.0
    %v1370 = vmax.f32 %v943, 0.0
    %v1371 = vmax.f32 %v945, 0.0
    %v1372 = vmax.f32 %v1136, 0.0
    %v1373 = vmax.f32 %v1138, 0.0
    %v1374 = vmax.f32 %v561, 0.0
    %v1375 = vmax.f32 %v563, 0.0
    %v1376 = vmax.f32 %v754, 0.0
    %v1377 = vmax.f32 %v756, 0.0
    %v1378 = vmax.f32 %v947, 0.0
    %v1379 = vmax.f32 %v949, 0.0
    %v1380 = vmax.f32 %v1140, 0.0
    %v1381 = vmax.f32 %v1142, 0.0
    %v1382 = vmax.f32 %v567, 0.0
    %v1383 = vmax.f32 %v569, 0.0
    %v1384 = vmax.f32 %v760, 0.0
    %v1385 = vmax.f32 %v762, 0.0
    %v1386 = vmax.f32 %v953, 0.0
    %v1387 = vmax.f32 %v955, 0.0
    %v1388 = vmax.f32 %v1146, 0.0
    %v1389 = vmax.f32 %v1148, 0.0
    %v1390 = vmax.f32 %v571, 0.0
    %v1391 = vmax.f32 %v573, 0.0
    %v1392 = vmax.f32 %v764, 0.0
    %v1393 = vmax.f32 %v766, 0.0
    %v1394 = vmax.f32 %v957, 0.0
    %v1395 = vmax.f32 %v959, 0.0
    %v1396 = vmax.f32 %v1150, 0.0
    %v1397 = vmax.f32 %v1152, 0.0
    %v1398 = vmax.f32 %v577, 0.0
    %v1399 = vmax.f32 %v579, 0.0
    %v1400 = vmax.f32 %v770, 0.0
    %v1401 = vmax.f32 %v772, 0.0
    %v1402 = vmax.f32 %v963, 0.0
    %v1403 = vmax.f32 %v965, 0.0
    %v1404 = vmax.f32 %v1156, 0.0
    %v1405 = vmax.f32 %v1158, 0.0
    %v1406 = vmax.f32 %v581, 0.0
    %v1407 = vmax.f32 %v583, 0.0
    %v1408 = vmax.f32 %v774, 0.0
    %v1409 = vmax.f32 %v776, 0.0
    %v1410 = vmax.f32 %v967, 0.0
    %v1411 = vmax.f32 %v969, 0.0
    %v1412 = vmax.f32 %v1160, 0.0
    %v1413 = vmax.f32 %v1162, 0.0
    %v1414 = vmax.f32 %v587, 0.0
    %v1415 = vmax.f32 %v589, 0.0
    %v1416 = vmax.f32 %v780, 0.0
    %v1417 = vmax.f32 %v782, 0.0
    %v1418 = vmax.f32 %v973, 0.0
    %v1419 = vmax.f32 %v975, 0.0
    %v1420 = vmax.f32 %v1166, 0.0
    %v1421 = vmax.f32 %v1168, 0.0
    %v1422 = vmax.f32 %v591, 0.0
    %v1423 = vmax.f32 %v593, 0.0
    %v1424 = vmax.f32 %v784, 0.0
    %v1425 = vmax.f32 %v786, 0.0
    %v1426 = vmax.f32 %v977, 0.0
    %v1427 = vmax.f32 %v979, 0.0
    %v1428 = vmax.f32 %v1170, 0.0
    %v1429 = vmax.f32 %v1172, 0.0
    %v1430 = vpack.c.bf16 %v1182, %v1174
    %v1431 = vpack.c.bf16 %v1183, %v1175
    %v1432 = vpack.c.bf16 %v1184, %v1176
    %v1433 = vpack.c.bf16 %v1185, %v1177
    %v1434 = vpack.c.bf16 %v1186, %v1178
    %v1435 = vpack.c.bf16 %v1187, %v1179
    %v1436 = vpack.c.bf16 %v1188, %v1180
    %v1437 = vpack.c.bf16 %v1189, %v1181
    %v1438 = vpack.c.bf16 %v1198, %v1190
    %v1439 = vpack.c.bf16 %v1199, %v1191
    %v1440 = vpack.c.bf16 %v1200, %v1192
    %v1441 = vpack.c.bf16 %v1201, %v1193
    %v1442 = vpack.c.bf16 %v1202, %v1194
    %v1443 = vpack.c.bf16 %v1203, %v1195
    %v1444 = vpack.c.bf16 %v1204, %v1196
    %v1445 = vpack.c.bf16 %v1205, %v1197
    %v1446 = vpack.c.bf16 %v1214, %v1206
    %v1447 = vpack.c.bf16 %v1215, %v1207
    %v1448 = vpack.c.bf16 %v1216, %v1208
    %v1449 = vpack.c.bf16 %v1217, %v1209
    %v1450 = vpack.c.bf16 %v1218, %v1210
    %v1451 = vpack.c.bf16 %v1219, %v1211
    %v1452 = vpack.c.bf16 %v1220, %v1212
    %v1453 = vpack.c.bf16 %v1221, %v1213
    %v1454 = vpack.c.bf16 %v1230, %v1222
    %v1455 = vpack.c.bf16 %v1231, %v1223
    %v1456 = vpack.c.bf16 %v1232, %v1224
    %v1457 = vpack.c.bf16 %v1233, %v1225
    %v1458 = vpack.c.bf16 %v1234, %v1226
    %v1459 = vpack.c.bf16 %v1235, %v1227
    %v1460 = vpack.c.bf16 %v1236, %v1228
    %v1461 = vpack.c.bf16 %v1237, %v1229
    %v1462 = vpack.c.bf16 %v1246, %v1238
    %v1463 = vpack.c.bf16 %v1247, %v1239
    %v1464 = vpack.c.bf16 %v1248, %v1240
    %v1465 = vpack.c.bf16 %v1249, %v1241
    %v1466 = vpack.c.bf16 %v1250, %v1242
    %v1467 = vpack.c.bf16 %v1251, %v1243
    %v1468 = vpack.c.bf16 %v1252, %v1244
    %v1469 = vpack.c.bf16 %v1253, %v1245
    %v1470 = vpack.c.bf16 %v1262, %v1254
    %v1471 = vpack.c.bf16 %v1263, %v1255
    %v1472 = vpack.c.bf16 %v1264, %v1256
    %v1473 = vpack.c.bf16 %v1265, %v1257
    %v1474 = vpack.c.bf16 %v1266, %v1258
    %v1475 = vpack.c.bf16 %v1267, %v1259
    %v1476 = vpack.c.bf16 %v1268, %v1260
    %v1477 = vpack.c.bf16 %v1269, %v1261
    %v1478 = vpack.c.bf16 %v1278, %v1270
    %v1479 = vpack.c.bf16 %v1279, %v1271
    %v1480 = vpack.c.bf16 %v1280, %v1272
    %v1481 = vpack.c.bf16 %v1281, %v1273
    %v1482 = vpack.c.bf16 %v1282, %v1274
    %v1483 = vpack.c.bf16 %v1283, %v1275
    %v1484 = vpack.c.bf16 %v1284, %v1276
    %v1485 = vpack.c.bf16 %v1285, %v1277
    %v1486 = vpack.c.bf16 %v1294, %v1286
    %v1487 = vpack.c.bf16 %v1295, %v1287
    %v1488 = vpack.c.bf16 %v1296, %v1288
    %v1489 = vpack.c.bf16 %v1297, %v1289
    %v1490 = vpack.c.bf16 %v1298, %v1290
    %v1491 = vpack.c.bf16 %v1299, %v1291
    %v1492 = vpack.c.bf16 %v1300, %v1292
    %v1493 = vpack.c.bf16 %v1301, %v1293
    %v1494 = vpack.c.bf16 %v1310, %v1302
    %v1495 = vpack.c.bf16 %v1311, %v1303
    %v1496 = vpack.c.bf16 %v1312, %v1304
    %v1497 = vpack.c.bf16 %v1313, %v1305
    %v1498 = vpack.c.bf16 %v1314, %v1306
    %v1499 = vpack.c.bf16 %v1315, %v1307
    %v1500 = vpack.c.bf16 %v1316, %v1308
    %v1501 = vpack.c.bf16 %v1317, %v1309
    %v1502 = vpack.c.bf16 %v1326, %v1318
    %v1503 = vpack.c.bf16 %v1327, %v1319
    %v1504 = vpack.c.bf16 %v1328, %v1320
    %v1505 = vpack.c.bf16 %v1329, %v1321
    %v1506 = vpack.c.bf16 %v1330, %v1322
    %v1507 = vpack.c.bf16 %v1331, %v1323
    %v1508 = vpack.c.bf16 %v1332, %v1324
    %v1509 = vpack.c.bf16 %v1333, %v1325
    %v1510 = vpack.c.bf16 %v1342, %v1334
    %v1511 = vpack.c.bf16 %v1343, %v1335
    %v1512 = vpack.c.bf16 %v1344, %v1336
    %v1513 = vpack.c.bf16 %v1345, %v1337
    %v1514 = vpack.c.bf16 %v1346, %v1338
    %v1515 = vpack.c.bf16 %v1347, %v1339
    %v1516 = vpack.c.bf16 %v1348, %v1340
    %v1517 = vpack.c.bf16 %v1349, %v1341
    %v1518 = vpack.c.bf16 %v1358, %v1350
    %v1519 = vpack.c.bf16 %v1359, %v1351
    %v1520 = vpack.c.bf16 %v1360, %v1352
    %v1521 = vpack.c.bf16 %v1361, %v1353
    %v1522 = vpack.c.bf16 %v1362, %v1354
    %v1523 = vpack.c.bf16 %v1363, %v1355
    %v1524 = vpack.c.bf16 %v1364, %v1356
    %v1525 = vpack.c.bf16 %v1365, %v1357
    %v1526 = vpack.c.bf16 %v1374, %v1366
    %v1527 = vpack.c.bf16 %v1375, %v1367
    %v1528 = vpack.c.bf16 %v1376, %v1368
    %v1529 = vpack.c.bf16 %v1377, %v1369
    %v1530 = vpack.c.bf16 %v1378, %v1370
    %v1531 = vpack.c.bf16 %v1379, %v1371
    %v1532 = vpack.c.bf16 %v1380, %v1372
    %v1533 = vpack.c.bf16 %v1381, %v1373
    %v1534 = vpack.c.bf16 %v1390, %v1382
    %v1535 = vpack.c.bf16 %v1391, %v1383
    %v1536 = vpack.c.bf16 %v1392, %v1384
    %v1537 = vpack.c.bf16 %v1393, %v1385
    %v1538 = vpack.c.bf16 %v1394, %v1386
    %v1539 = vpack.c.bf16 %v1395, %v1387
    %v1540 = vpack.c.bf16 %v1396, %v1388
    %v1541 = vpack.c.bf16 %v1397, %v1389
    %v1542 = vpack.c.bf16 %v1406, %v1398
    %v1543 = vpack.c.bf16 %v1407, %v1399
    %v1544 = vpack.c.bf16 %v1408, %v1400
    %v1545 = vpack.c.bf16 %v1409, %v1401
    %v1546 = vpack.c.bf16 %v1410, %v1402
    %v1547 = vpack.c.bf16 %v1411, %v1403
    %v1548 = vpack.c.bf16 %v1412, %v1404
    %v1549 = vpack.c.bf16 %v1413, %v1405
    %v1550 = vpack.c.bf16 %v1422, %v1414
    %v1551 = vpack.c.bf16 %v1423, %v1415
    %v1552 = vpack.c.bf16 %v1424, %v1416
    %v1553 = vpack.c.bf16 %v1425, %v1417
    %v1554 = vpack.c.bf16 %v1426, %v1418
    %v1555 = vpack.c.bf16 %v1427, %v1419
    %v1556 = vpack.c.bf16 %v1428, %v1420
    %v1557 = vpack.c.bf16 %v1429, %v1421
    %v1558 = vld [vmem:[#allocation6] sm:$0xff]
    %v1559 = vld [vmem:[#allocation6 + $0x8] sm:$0xff]
    %v1560 = vld [vmem:[#allocation6 + $0x10] sm:$0xff]
    %v1561 = vld [vmem:[#allocation6 + $0x18] sm:$0xff]
    %v1562 = vld [vmem:[#allocation6 + $0x20] sm:$0xff]
    %v1563 = vld [vmem:[#allocation6 + $0x28] sm:$0xff]
    %v1564 = vld [vmem:[#allocation6 + $0x30] sm:$0xff]
    %v1565 = vld [vmem:[#allocation6 + $0x38] sm:$0xff]
    %v1566 = vld [vmem:[#allocation6 + $0x40] sm:$0xff]
    %v1567 = vld [vmem:[#allocation6 + $0x48] sm:$0xff]
    %v1568 = vld [vmem:[#allocation6 + $0x50] sm:$0xff]
    %v1569 = vld [vmem:[#allocation6 + $0x58] sm:$0xff]
    %v1570 = vld [vmem:[#allocation6 + $0x60] sm:$0xff]
    %v1571 = vld [vmem:[#allocation6 + $0x68] sm:$0xff]
    %v1572 = vld [vmem:[#allocation6 + $0x70] sm:$0xff]
    %v1573 = vld [vmem:[#allocation6 + $0x78] sm:$0xff]
    %v1574 = vld [vmem:[#allocation6 + $0x80] sm:$0xff]
    %v1575 = vld [vmem:[#allocation6 + $0x88] sm:$0xff]
    %v1576 = vld [vmem:[#allocation6 + $0x90] sm:$0xff]
    %v1577 = vld [vmem:[#allocation6 + $0x98] sm:$0xff]
    %v1578 = vld [vmem:[#allocation6 + $0xa0] sm:$0xff]
    %v1579 = vld [vmem:[#allocation6 + $0xa8] sm:$0xff]
    %v1580 = vld [vmem:[#allocation6 + $0xb0] sm:$0xff]
    %v1581 = vld [vmem:[#allocation6 + $0xb8] sm:$0xff]
    %v1582 = vld [vmem:[#allocation6 + $0xc0] sm:$0xff]
    %v1583 = vld [vmem:[#allocation6 + $0xc8] sm:$0xff]
    %v1584 = vld [vmem:[#allocation6 + $0xd0] sm:$0xff]
    %v1585 = vld [vmem:[#allocation6 + $0xd8] sm:$0xff]
    %v1586 = vld [vmem:[#allocation6 + $0xe0] sm:$0xff]
    %v1587 = vld [vmem:[#allocation6 + $0xe8] sm:$0xff]
    %v1588 = vld [vmem:[#allocation6 + $0xf0] sm:$0xff]
    %v1589 = vld [vmem:[#allocation6 + $0xf8] sm:$0xff]
    %v1590 = vld [vmem:[#allocation6 + $0x100] sm:$0xff]
    %v1591 = vld [vmem:[#allocation6 + $0x108] sm:$0xff]
    %v1592 = vld [vmem:[#allocation6 + $0x110] sm:$0xff]
    %v1593 = vld [vmem:[#allocation6 + $0x118] sm:$0xff]
    %v1594 = vld [vmem:[#allocation6 + $0x120] sm:$0xff]
    %v1595 = vld [vmem:[#allocation6 + $0x128] sm:$0xff]
    %v1596 = vld [vmem:[#allocation6 + $0x130] sm:$0xff]
    %v1597 = vld [vmem:[#allocation6 + $0x138] sm:$0xff]
    %v1598 = vld [vmem:[#allocation6 + $0x140] sm:$0xff]
    %v1599 = vld [vmem:[#allocation6 + $0x148] sm:$0xff]
    %v1600 = vld [vmem:[#allocation6 + $0x150] sm:$0xff]
    %v1601 = vld [vmem:[#allocation6 + $0x158] sm:$0xff]
    %v1602 = vld [vmem:[#allocation6 + $0x160] sm:$0xff]
    %v1603 = vld [vmem:[#allocation6 + $0x168] sm:$0xff]
    %v1604 = vld [vmem:[#allocation6 + $0x170] sm:$0xff]
    %v1605 = vld [vmem:[#allocation6 + $0x178] sm:$0xff]
    %v1606 = vld [vmem:[#allocation6 + $0x180] sm:$0xff]
    %v1607 = vld [vmem:[#allocation6 + $0x188] sm:$0xff]
    %v1608 = vld [vmem:[#allocation6 + $0x190] sm:$0xff]
    %v1609 = vld [vmem:[#allocation6 + $0x198] sm:$0xff]
    %v1610 = vld [vmem:[#allocation6 + $0x1a0] sm:$0xff]
    %v1611 = vld [vmem:[#allocation6 + $0x1a8] sm:$0xff]
    %v1612 = vld [vmem:[#allocation6 + $0x1b0] sm:$0xff]
    %v1613 = vld [vmem:[#allocation6 + $0x1b8] sm:$0xff]
    %v1614 = vld [vmem:[#allocation6 + $0x1c0] sm:$0xff]
    %v1615 = vld [vmem:[#allocation6 + $0x1c8] sm:$0xff]
    %v1616 = vld [vmem:[#allocation6 + $0x1d0] sm:$0xff]
    %v1617 = vld [vmem:[#allocation6 + $0x1d8] sm:$0xff]
    %v1618 = vld [vmem:[#allocation6 + $0x1e0] sm:$0xff]
    %v1619 = vld [vmem:[#allocation6 + $0x1e8] sm:$0xff]
    %v1620 = vld [vmem:[#allocation6 + $0x1f0] sm:$0xff]
    %v1621 = vld [vmem:[#allocation6 + $0x1f8] sm:$0xff]
    %v1622 = vld [vmem:[#allocation6 + $0x200] sm:$0xff]
    %v1623 = vld [vmem:[#allocation6 + $0x208] sm:$0xff]
    %v1624 = vld [vmem:[#allocation6 + $0x210] sm:$0xff]
    %v1625 = vld [vmem:[#allocation6 + $0x218] sm:$0xff]
    %v1626 = vld [vmem:[#allocation6 + $0x220] sm:$0xff]
    %v1627 = vld [vmem:[#allocation6 + $0x228] sm:$0xff]
    %v1628 = vld [vmem:[#allocation6 + $0x230] sm:$0xff]
    %v1629 = vld [vmem:[#allocation6 + $0x238] sm:$0xff]
    %v1630 = vld [vmem:[#allocation6 + $0x240] sm:$0xff]
    %v1631 = vld [vmem:[#allocation6 + $0x248] sm:$0xff]
    %v1632 = vld [vmem:[#allocation6 + $0x250] sm:$0xff]
    %v1633 = vld [vmem:[#allocation6 + $0x258] sm:$0xff]
    %v1634 = vld [vmem:[#allocation6 + $0x260] sm:$0xff]
    %v1635 = vld [vmem:[#allocation6 + $0x268] sm:$0xff]
    %v1636 = vld [vmem:[#allocation6 + $0x270] sm:$0xff]
    %v1637 = vld [vmem:[#allocation6 + $0x278] sm:$0xff]
    %v1638 = vld [vmem:[#allocation6 + $0x280] sm:$0xff]
    %v1639 = vld [vmem:[#allocation6 + $0x288] sm:$0xff]
    %v1640 = vld [vmem:[#allocation6 + $0x290] sm:$0xff]
    %v1641 = vld [vmem:[#allocation6 + $0x298] sm:$0xff]
    %v1642 = vld [vmem:[#allocation6 + $0x2a0] sm:$0xff]
    %v1643 = vld [vmem:[#allocation6 + $0x2a8] sm:$0xff]
    %v1644 = vld [vmem:[#allocation6 + $0x2b0] sm:$0xff]
    %v1645 = vld [vmem:[#allocation6 + $0x2b8] sm:$0xff]
    %v1646 = vld [vmem:[#allocation6 + $0x2c0] sm:$0xff]
    %v1647 = vld [vmem:[#allocation6 + $0x2c8] sm:$0xff]
    %v1648 = vld [vmem:[#allocation6 + $0x2d0] sm:$0xff]
    %v1649 = vld [vmem:[#allocation6 + $0x2d8] sm:$0xff]
    %v1650 = vld [vmem:[#allocation6 + $0x2e0] sm:$0xff]
    %v1651 = vld [vmem:[#allocation6 + $0x2e8] sm:$0xff]
    %v1652 = vld [vmem:[#allocation6 + $0x2f0] sm:$0xff]
    %v1653 = vld [vmem:[#allocation6 + $0x2f8] sm:$0xff]
    %v1654 = vld [vmem:[#allocation6 + $0x300] sm:$0xff]
    %v1655 = vld [vmem:[#allocation6 + $0x308] sm:$0xff]
    %v1656 = vld [vmem:[#allocation6 + $0x310] sm:$0xff]
    %v1657 = vld [vmem:[#allocation6 + $0x318] sm:$0xff]
    %v1658 = vld [vmem:[#allocation6 + $0x320] sm:$0xff]
    %v1659 = vld [vmem:[#allocation6 + $0x328] sm:$0xff]
    %v1660 = vld [vmem:[#allocation6 + $0x330] sm:$0xff]
    %v1661 = vld [vmem:[#allocation6 + $0x338] sm:$0xff]
    %v1662 = vld [vmem:[#allocation6 + $0x340] sm:$0xff]
    %v1663 = vld [vmem:[#allocation6 + $0x348] sm:$0xff]
    %v1664 = vld [vmem:[#allocation6 + $0x350] sm:$0xff]
    %v1665 = vld [vmem:[#allocation6 + $0x358] sm:$0xff]
    %v1666 = vld [vmem:[#allocation6 + $0x360] sm:$0xff]
    %v1667 = vld [vmem:[#allocation6 + $0x368] sm:$0xff]
    %v1668 = vld [vmem:[#allocation6 + $0x370] sm:$0xff]
    %v1669 = vld [vmem:[#allocation6 + $0x378] sm:$0xff]
    %v1670 = vld [vmem:[#allocation6 + $0x380] sm:$0xff]
    %v1671 = vld [vmem:[#allocation6 + $0x388] sm:$0xff]
    %v1672 = vld [vmem:[#allocation6 + $0x390] sm:$0xff]
    %v1673 = vld [vmem:[#allocation6 + $0x398] sm:$0xff]
    %v1674 = vld [vmem:[#allocation6 + $0x3a0] sm:$0xff]
    %v1675 = vld [vmem:[#allocation6 + $0x3a8] sm:$0xff]
    %v1676 = vld [vmem:[#allocation6 + $0x3b0] sm:$0xff]
    %v1677 = vld [vmem:[#allocation6 + $0x3b8] sm:$0xff]
    %v1678 = vld [vmem:[#allocation6 + $0x3c0] sm:$0xff]
    %v1679 = vld [vmem:[#allocation6 + $0x3c8] sm:$0xff]
    %v1680 = vld [vmem:[#allocation6 + $0x3d0] sm:$0xff]
    %v1681 = vld [vmem:[#allocation6 + $0x3d8] sm:$0xff]
    %v1682 = vld [vmem:[#allocation6 + $0x3e0] sm:$0xff]
    %v1683 = vld [vmem:[#allocation6 + $0x3e8] sm:$0xff]
    %v1684 = vld [vmem:[#allocation6 + $0x3f0] sm:$0xff]
    %v1685 = vld [vmem:[#allocation6 + $0x3f8] sm:$0xff]
    %v1686 = vld [vmem:[#allocation6 + $0x400] sm:$0xff]
    %v1687 = vld [vmem:[#allocation6 + $0x408] sm:$0xff]
    %v1688 = vld [vmem:[#allocation6 + $0x410] sm:$0xff]
    %v1689 = vld [vmem:[#allocation6 + $0x418] sm:$0xff]
    %v1690 = vld [vmem:[#allocation6 + $0x420] sm:$0xff]
    %v1691 = vld [vmem:[#allocation6 + $0x428] sm:$0xff]
    %v1692 = vld [vmem:[#allocation6 + $0x430] sm:$0xff]
    %v1693 = vld [vmem:[#allocation6 + $0x438] sm:$0xff]
    %v1694 = vld [vmem:[#allocation6 + $0x440] sm:$0xff]
    %v1695 = vld [vmem:[#allocation6 + $0x448] sm:$0xff]
    %v1696 = vld [vmem:[#allocation6 + $0x450] sm:$0xff]
    %v1697 = vld [vmem:[#allocation6 + $0x458] sm:$0xff]
    %v1698 = vld [vmem:[#allocation6 + $0x460] sm:$0xff]
    %v1699 = vld [vmem:[#allocation6 + $0x468] sm:$0xff]
    %v1700 = vld [vmem:[#allocation6 + $0x470] sm:$0xff]
    %v1701 = vld [vmem:[#allocation6 + $0x478] sm:$0xff]
    %v1702 = vld [vmem:[#allocation6 + $0x480] sm:$0xff]
    %v1703 = vld [vmem:[#allocation6 + $0x488] sm:$0xff]
    %v1704 = vld [vmem:[#allocation6 + $0x490] sm:$0xff]
    %v1705 = vld [vmem:[#allocation6 + $0x498] sm:$0xff]
    %v1706 = vld [vmem:[#allocation6 + $0x4a0] sm:$0xff]
    %v1707 = vld [vmem:[#allocation6 + $0x4a8] sm:$0xff]
    %v1708 = vld [vmem:[#allocation6 + $0x4b0] sm:$0xff]
    %v1709 = vld [vmem:[#allocation6 + $0x4b8] sm:$0xff]
    %v1710 = vld [vmem:[#allocation6 + $0x4c0] sm:$0xff]
    %v1711 = vld [vmem:[#allocation6 + $0x4c8] sm:$0xff]
    %v1712 = vld [vmem:[#allocation6 + $0x4d0] sm:$0xff]
    %v1713 = vld [vmem:[#allocation6 + $0x4d8] sm:$0xff]
    %v1714 = vld [vmem:[#allocation6 + $0x4e0] sm:$0xff]
    %v1715 = vld [vmem:[#allocation6 + $0x4e8] sm:$0xff]
    %v1716 = vld [vmem:[#allocation6 + $0x4f0] sm:$0xff]
    %v1717 = vld [vmem:[#allocation6 + $0x4f8] sm:$0xff]
    %v1718 = vld [vmem:[#allocation6 + $0x500] sm:$0xff]
    %v1719 = vld [vmem:[#allocation6 + $0x508] sm:$0xff]
    %v1720 = vld [vmem:[#allocation6 + $0x510] sm:$0xff]
    %v1721 = vld [vmem:[#allocation6 + $0x518] sm:$0xff]
    %v1722 = vld [vmem:[#allocation6 + $0x520] sm:$0xff]
    %v1723 = vld [vmem:[#allocation6 + $0x528] sm:$0xff]
    %v1724 = vld [vmem:[#allocation6 + $0x530] sm:$0xff]
    %v1725 = vld [vmem:[#allocation6 + $0x538] sm:$0xff]
    %v1726 = vld [vmem:[#allocation6 + $0x540] sm:$0xff]
    %v1727 = vld [vmem:[#allocation6 + $0x548] sm:$0xff]
    %v1728 = vld [vmem:[#allocation6 + $0x550] sm:$0xff]
    %v1729 = vld [vmem:[#allocation6 + $0x558] sm:$0xff]
    %v1730 = vld [vmem:[#allocation6 + $0x560] sm:$0xff]
    %v1731 = vld [vmem:[#allocation6 + $0x568] sm:$0xff]
    %v1732 = vld [vmem:[#allocation6 + $0x570] sm:$0xff]
    %v1733 = vld [vmem:[#allocation6 + $0x578] sm:$0xff]
    %v1734 = vld [vmem:[#allocation6 + $0x580] sm:$0xff]
    %v1735 = vld [vmem:[#allocation6 + $0x588] sm:$0xff]
    %v1736 = vld [vmem:[#allocation6 + $0x590] sm:$0xff]
    %v1737 = vld [vmem:[#allocation6 + $0x598] sm:$0xff]
    %v1738 = vld [vmem:[#allocation6 + $0x5a0] sm:$0xff]
    %v1739 = vld [vmem:[#allocation6 + $0x5a8] sm:$0xff]
    %v1740 = vld [vmem:[#allocation6 + $0x5b0] sm:$0xff]
    %v1741 = vld [vmem:[#allocation6 + $0x5b8] sm:$0xff]
    %v1742 = vld [vmem:[#allocation6 + $0x5c0] sm:$0xff]
    %v1743 = vld [vmem:[#allocation6 + $0x5c8] sm:$0xff]
    %v1744 = vld [vmem:[#allocation6 + $0x5d0] sm:$0xff]
    %v1745 = vld [vmem:[#allocation6 + $0x5d8] sm:$0xff]
    %v1746 = vld [vmem:[#allocation6 + $0x5e0] sm:$0xff]
    %v1747 = vld [vmem:[#allocation6 + $0x5e8] sm:$0xff]
    %v1748 = vld [vmem:[#allocation6 + $0x5f0] sm:$0xff]
    %v1749 = vld [vmem:[#allocation6 + $0x5f8] sm:$0xff]
    %v1750 = vld [vmem:[#allocation6 + $0x600] sm:$0xff]
    %v1751 = vld [vmem:[#allocation6 + $0x608] sm:$0xff]
    %v1752 = vld [vmem:[#allocation6 + $0x610] sm:$0xff]
    %v1753 = vld [vmem:[#allocation6 + $0x618] sm:$0xff]
    %v1754 = vld [vmem:[#allocation6 + $0x620] sm:$0xff]
    %v1755 = vld [vmem:[#allocation6 + $0x628] sm:$0xff]
    %v1756 = vld [vmem:[#allocation6 + $0x630] sm:$0xff]
    %v1757 = vld [vmem:[#allocation6 + $0x638] sm:$0xff]
    %v1758 = vld [vmem:[#allocation6 + $0x640] sm:$0xff]
    %v1759 = vld [vmem:[#allocation6 + $0x648] sm:$0xff]
    %v1760 = vld [vmem:[#allocation6 + $0x650] sm:$0xff]
    %v1761 = vld [vmem:[#allocation6 + $0x658] sm:$0xff]
    %v1762 = vld [vmem:[#allocation6 + $0x660] sm:$0xff]
    %v1763 = vld [vmem:[#allocation6 + $0x668] sm:$0xff]
    %v1764 = vld [vmem:[#allocation6 + $0x670] sm:$0xff]
    %v1765 = vld [vmem:[#allocation6 + $0x678] sm:$0xff]
    %v1766 = vld [vmem:[#allocation6 + $0x680] sm:$0xff]
    %v1767 = vld [vmem:[#allocation6 + $0x688] sm:$0xff]
    %v1768 = vld [vmem:[#allocation6 + $0x690] sm:$0xff]
    %v1769 = vld [vmem:[#allocation6 + $0x698] sm:$0xff]
    %v1770 = vld [vmem:[#allocation6 + $0x6a0] sm:$0xff]
    %v1771 = vld [vmem:[#allocation6 + $0x6a8] sm:$0xff]
    %v1772 = vld [vmem:[#allocation6 + $0x6b0] sm:$0xff]
    %v1773 = vld [vmem:[#allocation6 + $0x6b8] sm:$0xff]
    %v1774 = vld [vmem:[#allocation6 + $0x6c0] sm:$0xff]
    %v1775 = vld [vmem:[#allocation6 + $0x6c8] sm:$0xff]
    %v1776 = vld [vmem:[#allocation6 + $0x6d0] sm:$0xff]
    %v1777 = vld [vmem:[#allocation6 + $0x6d8] sm:$0xff]
    %v1778 = vld [vmem:[#allocation6 + $0x6e0] sm:$0xff]
    %v1779 = vld [vmem:[#allocation6 + $0x6e8] sm:$0xff]
    %v1780 = vld [vmem:[#allocation6 + $0x6f0] sm:$0xff]
    %v1781 = vld [vmem:[#allocation6 + $0x6f8] sm:$0xff]
    %v1782 = vld [vmem:[#allocation6 + $0x700] sm:$0xff]
    %v1783 = vld [vmem:[#allocation6 + $0x708] sm:$0xff]
    %v1784 = vld [vmem:[#allocation6 + $0x710] sm:$0xff]
    %v1785 = vld [vmem:[#allocation6 + $0x718] sm:$0xff]
    %v1786 = vld [vmem:[#allocation6 + $0x720] sm:$0xff]
    %v1787 = vld [vmem:[#allocation6 + $0x728] sm:$0xff]
    %v1788 = vld [vmem:[#allocation6 + $0x730] sm:$0xff]
    %v1789 = vld [vmem:[#allocation6 + $0x738] sm:$0xff]
    %v1790 = vld [vmem:[#allocation6 + $0x740] sm:$0xff]
    %v1791 = vld [vmem:[#allocation6 + $0x748] sm:$0xff]
    %v1792 = vld [vmem:[#allocation6 + $0x750] sm:$0xff]
    %v1793 = vld [vmem:[#allocation6 + $0x758] sm:$0xff]
    %v1794 = vld [vmem:[#allocation6 + $0x760] sm:$0xff]
    %v1795 = vld [vmem:[#allocation6 + $0x768] sm:$0xff]
    %v1796 = vld [vmem:[#allocation6 + $0x770] sm:$0xff]
    %v1797 = vld [vmem:[#allocation6 + $0x778] sm:$0xff]
    %v1798 = vld [vmem:[#allocation6 + $0x780] sm:$0xff]
    %v1799 = vld [vmem:[#allocation6 + $0x788] sm:$0xff]
    %v1800 = vld [vmem:[#allocation6 + $0x790] sm:$0xff]
    %v1801 = vld [vmem:[#allocation6 + $0x798] sm:$0xff]
    %v1802 = vld [vmem:[#allocation6 + $0x7a0] sm:$0xff]
    %v1803 = vld [vmem:[#allocation6 + $0x7a8] sm:$0xff]
    %v1804 = vld [vmem:[#allocation6 + $0x7b0] sm:$0xff]
    %v1805 = vld [vmem:[#allocation6 + $0x7b8] sm:$0xff]
    %v1806 = vld [vmem:[#allocation6 + $0x7c0] sm:$0xff]
    %v1807 = vld [vmem:[#allocation6 + $0x7c8] sm:$0xff]
    %v1808 = vld [vmem:[#allocation6 + $0x7d0] sm:$0xff]
    %v1809 = vld [vmem:[#allocation6 + $0x7d8] sm:$0xff]
    %v1810 = vld [vmem:[#allocation6 + $0x7e0] sm:$0xff]
    %v1811 = vld [vmem:[#allocation6 + $0x7e8] sm:$0xff]
    %v1812 = vld [vmem:[#allocation6 + $0x7f0] sm:$0xff]
    %v1813 = vld [vmem:[#allocation6 + $0x7f8] sm:$0xff]
    %v1814 = vld [vmem:[#allocation6 + $0x800] sm:$0xff]
    %v1815 = vld [vmem:[#allocation6 + $0x808] sm:$0xff]
    %v1816 = vld [vmem:[#allocation6 + $0x810] sm:$0xff]
    %v1817 = vld [vmem:[#allocation6 + $0x818] sm:$0xff]
    %v1818 = vld [vmem:[#allocation6 + $0x820] sm:$0xff]
    %v1819 = vld [vmem:[#allocation6 + $0x828] sm:$0xff]
    %v1820 = vld [vmem:[#allocation6 + $0x830] sm:$0xff]
    %v1821 = vld [vmem:[#allocation6 + $0x838] sm:$0xff]
    %v1822 = vld [vmem:[#allocation6 + $0x840] sm:$0xff]
    %v1823 = vld [vmem:[#allocation6 + $0x848] sm:$0xff]
    %v1824 = vld [vmem:[#allocation6 + $0x850] sm:$0xff]
    %v1825 = vld [vmem:[#allocation6 + $0x858] sm:$0xff]
    %v1826 = vld [vmem:[#allocation6 + $0x860] sm:$0xff]
    %v1827 = vld [vmem:[#allocation6 + $0x868] sm:$0xff]
    %v1828 = vld [vmem:[#allocation6 + $0x870] sm:$0xff]
    %v1829 = vld [vmem:[#allocation6 + $0x878] sm:$0xff]
    %v1830 = vld [vmem:[#allocation6 + $0x880] sm:$0xff]
    %v1831 = vld [vmem:[#allocation6 + $0x888] sm:$0xff]
    %v1832 = vld [vmem:[#allocation6 + $0x890] sm:$0xff]
    %v1833 = vld [vmem:[#allocation6 + $0x898] sm:$0xff]
    %v1834 = vld [vmem:[#allocation6 + $0x8a0] sm:$0xff]
    %v1835 = vld [vmem:[#allocation6 + $0x8a8] sm:$0xff]
    %v1836 = vld [vmem:[#allocation6 + $0x8b0] sm:$0xff]
    %v1837 = vld [vmem:[#allocation6 + $0x8b8] sm:$0xff]
    %v1838 = vld [vmem:[#allocation6 + $0x8c0] sm:$0xff]
    %v1839 = vld [vmem:[#allocation6 + $0x8c8] sm:$0xff]
    %v1840 = vld [vmem:[#allocation6 + $0x8d0] sm:$0xff]
    %v1841 = vld [vmem:[#allocation6 + $0x8d8] sm:$0xff]
    %v1842 = vld [vmem:[#allocation6 + $0x8e0] sm:$0xff]
    %v1843 = vld [vmem:[#allocation6 + $0x8e8] sm:$0xff]
    %v1844 = vld [vmem:[#allocation6 + $0x8f0] sm:$0xff]
    %v1845 = vld [vmem:[#allocation6 + $0x8f8] sm:$0xff]
    %v1846 = vld [vmem:[#allocation6 + $0x900] sm:$0xff]
    %v1847 = vld [vmem:[#allocation6 + $0x908] sm:$0xff]
    %v1848 = vld [vmem:[#allocation6 + $0x910] sm:$0xff]
    %v1849 = vld [vmem:[#allocation6 + $0x918] sm:$0xff]
    %v1850 = vld [vmem:[#allocation6 + $0x920] sm:$0xff]
    %v1851 = vld [vmem:[#allocation6 + $0x928] sm:$0xff]
    %v1852 = vld [vmem:[#allocation6 + $0x930] sm:$0xff]
    %v1853 = vld [vmem:[#allocation6 + $0x938] sm:$0xff]
    %v1854 = vld [vmem:[#allocation6 + $0x940] sm:$0xff]
    %v1855 = vld [vmem:[#allocation6 + $0x948] sm:$0xff]
    %v1856 = vld [vmem:[#allocation6 + $0x950] sm:$0xff]
    %v1857 = vld [vmem:[#allocation6 + $0x958] sm:$0xff]
    %v1858 = vld [vmem:[#allocation6 + $0x960] sm:$0xff]
    %v1859 = vld [vmem:[#allocation6 + $0x968] sm:$0xff]
    %v1860 = vld [vmem:[#allocation6 + $0x970] sm:$0xff]
    %v1861 = vld [vmem:[#allocation6 + $0x978] sm:$0xff]
    %v1862 = vld [vmem:[#allocation6 + $0x980] sm:$0xff]
    %v1863 = vld [vmem:[#allocation6 + $0x988] sm:$0xff]
    %v1864 = vld [vmem:[#allocation6 + $0x990] sm:$0xff]
    %v1865 = vld [vmem:[#allocation6 + $0x998] sm:$0xff]
    %v1866 = vld [vmem:[#allocation6 + $0x9a0] sm:$0xff]
    %v1867 = vld [vmem:[#allocation6 + $0x9a8] sm:$0xff]
    %v1868 = vld [vmem:[#allocation6 + $0x9b0] sm:$0xff]
    %v1869 = vld [vmem:[#allocation6 + $0x9b8] sm:$0xff]
    %v1870 = vld [vmem:[#allocation6 + $0x9c0] sm:$0xff]
    %v1871 = vld [vmem:[#allocation6 + $0x9c8] sm:$0xff]
    %v1872 = vld [vmem:[#allocation6 + $0x9d0] sm:$0xff]
    %v1873 = vld [vmem:[#allocation6 + $0x9d8] sm:$0xff]
    %v1874 = vld [vmem:[#allocation6 + $0x9e0] sm:$0xff]
    %v1875 = vld [vmem:[#allocation6 + $0x9e8] sm:$0xff]
    %v1876 = vld [vmem:[#allocation6 + $0x9f0] sm:$0xff]
    %v1877 = vld [vmem:[#allocation6 + $0x9f8] sm:$0xff]
    %v1878 = vld [vmem:[#allocation6 + $0xa00] sm:$0xff]
    %v1879 = vld [vmem:[#allocation6 + $0xa08] sm:$0xff]
    %v1880 = vld [vmem:[#allocation6 + $0xa10] sm:$0xff]
    %v1881 = vld [vmem:[#allocation6 + $0xa18] sm:$0xff]
    %v1882 = vld [vmem:[#allocation6 + $0xa20] sm:$0xff]
    %v1883 = vld [vmem:[#allocation6 + $0xa28] sm:$0xff]
    %v1884 = vld [vmem:[#allocation6 + $0xa30] sm:$0xff]
    %v1885 = vld [vmem:[#allocation6 + $0xa38] sm:$0xff]
    %v1886 = vld [vmem:[#allocation6 + $0xa40] sm:$0xff]
    %v1887 = vld [vmem:[#allocation6 + $0xa48] sm:$0xff]
    %v1888 = vld [vmem:[#allocation6 + $0xa50] sm:$0xff]
    %v1889 = vld [vmem:[#allocation6 + $0xa58] sm:$0xff]
    %v1890 = vld [vmem:[#allocation6 + $0xa60] sm:$0xff]
    %v1891 = vld [vmem:[#allocation6 + $0xa68] sm:$0xff]
    %v1892 = vld [vmem:[#allocation6 + $0xa70] sm:$0xff]
    %v1893 = vld [vmem:[#allocation6 + $0xa78] sm:$0xff]
    %v1894 = vld [vmem:[#allocation6 + $0xa80] sm:$0xff]
    %v1895 = vld [vmem:[#allocation6 + $0xa88] sm:$0xff]
    %v1896 = vld [vmem:[#allocation6 + $0xa90] sm:$0xff]
    %v1897 = vld [vmem:[#allocation6 + $0xa98] sm:$0xff]
    %v1898 = vld [vmem:[#allocation6 + $0xaa0] sm:$0xff]
    %v1899 = vld [vmem:[#allocation6 + $0xaa8] sm:$0xff]
    %v1900 = vld [vmem:[#allocation6 + $0xab0] sm:$0xff]
    %v1901 = vld [vmem:[#allocation6 + $0xab8] sm:$0xff]
    %v1902 = vld [vmem:[#allocation6 + $0xac0] sm:$0xff]
    %v1903 = vld [vmem:[#allocation6 + $0xac8] sm:$0xff]
    %v1904 = vld [vmem:[#allocation6 + $0xad0] sm:$0xff]
    %v1905 = vld [vmem:[#allocation6 + $0xad8] sm:$0xff]
    %v1906 = vld [vmem:[#allocation6 + $0xae0] sm:$0xff]
    %v1907 = vld [vmem:[#allocation6 + $0xae8] sm:$0xff]
    %v1908 = vld [vmem:[#allocation6 + $0xaf0] sm:$0xff]
    %v1909 = vld [vmem:[#allocation6 + $0xaf8] sm:$0xff]
    %v1910 = vld [vmem:[#allocation6 + $0xb00] sm:$0xff]
    %v1911 = vld [vmem:[#allocation6 + $0xb08] sm:$0xff]
    %v1912 = vld [vmem:[#allocation6 + $0xb10] sm:$0xff]
    %v1913 = vld [vmem:[#allocation6 + $0xb18] sm:$0xff]
    %v1914 = vld [vmem:[#allocation6 + $0xb20] sm:$0xff]
    %v1915 = vld [vmem:[#allocation6 + $0xb28] sm:$0xff]
    %v1916 = vld [vmem:[#allocation6 + $0xb30] sm:$0xff]
    %v1917 = vld [vmem:[#allocation6 + $0xb38] sm:$0xff]
    %v1918 = vld [vmem:[#allocation6 + $0xb40] sm:$0xff]
    %v1919 = vld [vmem:[#allocation6 + $0xb48] sm:$0xff]
    %v1920 = vld [vmem:[#allocation6 + $0xb50] sm:$0xff]
    %v1921 = vld [vmem:[#allocation6 + $0xb58] sm:$0xff]
    %v1922 = vld [vmem:[#allocation6 + $0xb60] sm:$0xff]
    %v1923 = vld [vmem:[#allocation6 + $0xb68] sm:$0xff]
    %v1924 = vld [vmem:[#allocation6 + $0xb70] sm:$0xff]
    %v1925 = vld [vmem:[#allocation6 + $0xb78] sm:$0xff]
    %v1926 = vld [vmem:[#allocation6 + $0xb80] sm:$0xff]
    %v1927 = vld [vmem:[#allocation6 + $0xb88] sm:$0xff]
    %v1928 = vld [vmem:[#allocation6 + $0xb90] sm:$0xff]
    %v1929 = vld [vmem:[#allocation6 + $0xb98] sm:$0xff]
    %v1930 = vld [vmem:[#allocation6 + $0xba0] sm:$0xff]
    %v1931 = vld [vmem:[#allocation6 + $0xba8] sm:$0xff]
    %v1932 = vld [vmem:[#allocation6 + $0xbb0] sm:$0xff]
    %v1933 = vld [vmem:[#allocation6 + $0xbb8] sm:$0xff]
    %v1934 = vld [vmem:[#allocation6 + $0xbc0] sm:$0xff]
    %v1935 = vld [vmem:[#allocation6 + $0xbc8] sm:$0xff]
    %v1936 = vld [vmem:[#allocation6 + $0xbd0] sm:$0xff]
    %v1937 = vld [vmem:[#allocation6 + $0xbd8] sm:$0xff]
    %v1938 = vld [vmem:[#allocation6 + $0xbe0] sm:$0xff]
    %v1939 = vld [vmem:[#allocation6 + $0xbe8] sm:$0xff]
    %v1940 = vld [vmem:[#allocation6 + $0xbf0] sm:$0xff]
    %v1941 = vld [vmem:[#allocation6 + $0xbf8] sm:$0xff]
    %v1942 = vld [vmem:[#allocation6 + $0xc00] sm:$0xff]
    %v1943 = vld [vmem:[#allocation6 + $0xc08] sm:$0xff]
    %v1944 = vld [vmem:[#allocation6 + $0xc10] sm:$0xff]
    %v1945 = vld [vmem:[#allocation6 + $0xc18] sm:$0xff]
    %v1946 = vld [vmem:[#allocation6 + $0xc20] sm:$0xff]
    %v1947 = vld [vmem:[#allocation6 + $0xc28] sm:$0xff]
    %v1948 = vld [vmem:[#allocation6 + $0xc30] sm:$0xff]
    %v1949 = vld [vmem:[#allocation6 + $0xc38] sm:$0xff]
    %v1950 = vld [vmem:[#allocation6 + $0xc40] sm:$0xff]
    %v1951 = vld [vmem:[#allocation6 + $0xc48] sm:$0xff]
    %v1952 = vld [vmem:[#allocation6 + $0xc50] sm:$0xff]
    %v1953 = vld [vmem:[#allocation6 + $0xc58] sm:$0xff]
    %v1954 = vld [vmem:[#allocation6 + $0xc60] sm:$0xff]
    %v1955 = vld [vmem:[#allocation6 + $0xc68] sm:$0xff]
    %v1956 = vld [vmem:[#allocation6 + $0xc70] sm:$0xff]
    %v1957 = vld [vmem:[#allocation6 + $0xc78] sm:$0xff]
    %v1958 = vld [vmem:[#allocation6 + $0xc80] sm:$0xff]
    %v1959 = vld [vmem:[#allocation6 + $0xc88] sm:$0xff]
    %v1960 = vld [vmem:[#allocation6 + $0xc90] sm:$0xff]
    %v1961 = vld [vmem:[#allocation6 + $0xc98] sm:$0xff]
    %v1962 = vld [vmem:[#allocation6 + $0xca0] sm:$0xff]
    %v1963 = vld [vmem:[#allocation6 + $0xca8] sm:$0xff]
    %v1964 = vld [vmem:[#allocation6 + $0xcb0] sm:$0xff]
    %v1965 = vld [vmem:[#allocation6 + $0xcb8] sm:$0xff]
    %v1966 = vld [vmem:[#allocation6 + $0xcc0] sm:$0xff]
    %v1967 = vld [vmem:[#allocation6 + $0xcc8] sm:$0xff]
    %v1968 = vld [vmem:[#allocation6 + $0xcd0] sm:$0xff]
    %v1969 = vld [vmem:[#allocation6 + $0xcd8] sm:$0xff]
    %v1970 = vld [vmem:[#allocation6 + $0xce0] sm:$0xff]
    %v1971 = vld [vmem:[#allocation6 + $0xce8] sm:$0xff]
    %v1972 = vld [vmem:[#allocation6 + $0xcf0] sm:$0xff]
    %v1973 = vld [vmem:[#allocation6 + $0xcf8] sm:$0xff]
    %v1974 = vld [vmem:[#allocation6 + $0xd00] sm:$0xff]
    %v1975 = vld [vmem:[#allocation6 + $0xd08] sm:$0xff]
    %v1976 = vld [vmem:[#allocation6 + $0xd10] sm:$0xff]
    %v1977 = vld [vmem:[#allocation6 + $0xd18] sm:$0xff]
    %v1978 = vld [vmem:[#allocation6 + $0xd20] sm:$0xff]
    %v1979 = vld [vmem:[#allocation6 + $0xd28] sm:$0xff]
    %v1980 = vld [vmem:[#allocation6 + $0xd30] sm:$0xff]
    %v1981 = vld [vmem:[#allocation6 + $0xd38] sm:$0xff]
    %v1982 = vld [vmem:[#allocation6 + $0xd40] sm:$0xff]
    %v1983 = vld [vmem:[#allocation6 + $0xd48] sm:$0xff]
    %v1984 = vld [vmem:[#allocation6 + $0xd50] sm:$0xff]
    %v1985 = vld [vmem:[#allocation6 + $0xd58] sm:$0xff]
    %v1986 = vld [vmem:[#allocation6 + $0xd60] sm:$0xff]
    %v1987 = vld [vmem:[#allocation6 + $0xd68] sm:$0xff]
    %v1988 = vld [vmem:[#allocation6 + $0xd70] sm:$0xff]
    %v1989 = vld [vmem:[#allocation6 + $0xd78] sm:$0xff]
    %v1990 = vld [vmem:[#allocation6 + $0xd80] sm:$0xff]
    %v1991 = vld [vmem:[#allocation6 + $0xd88] sm:$0xff]
    %v1992 = vld [vmem:[#allocation6 + $0xd90] sm:$0xff]
    %v1993 = vld [vmem:[#allocation6 + $0xd98] sm:$0xff]
    %v1994 = vld [vmem:[#allocation6 + $0xda0] sm:$0xff]
    %v1995 = vld [vmem:[#allocation6 + $0xda8] sm:$0xff]
    %v1996 = vld [vmem:[#allocation6 + $0xdb0] sm:$0xff]
    %v1997 = vld [vmem:[#allocation6 + $0xdb8] sm:$0xff]
    %v1998 = vld [vmem:[#allocation6 + $0xdc0] sm:$0xff]
    %v1999 = vld [vmem:[#allocation6 + $0xdc8] sm:$0xff]
    %v2000 = vld [vmem:[#allocation6 + $0xdd0] sm:$0xff]
    %v2001 = vld [vmem:[#allocation6 + $0xdd8] sm:$0xff]
    %v2002 = vld [vmem:[#allocation6 + $0xde0] sm:$0xff]
    %v2003 = vld [vmem:[#allocation6 + $0xde8] sm:$0xff]
    %v2004 = vld [vmem:[#allocation6 + $0xdf0] sm:$0xff]
    %v2005 = vld [vmem:[#allocation6 + $0xdf8] sm:$0xff]
    %v2006 = vld [vmem:[#allocation6 + $0xe00] sm:$0xff]
    %v2007 = vld [vmem:[#allocation6 + $0xe08] sm:$0xff]
    %v2008 = vld [vmem:[#allocation6 + $0xe10] sm:$0xff]
    %v2009 = vld [vmem:[#allocation6 + $0xe18] sm:$0xff]
    %v2010 = vld [vmem:[#allocation6 + $0xe20] sm:$0xff]
    %v2011 = vld [vmem:[#allocation6 + $0xe28] sm:$0xff]
    %v2012 = vld [vmem:[#allocation6 + $0xe30] sm:$0xff]
    %v2013 = vld [vmem:[#allocation6 + $0xe38] sm:$0xff]
    %v2014 = vld [vmem:[#allocation6 + $0xe40] sm:$0xff]
    %v2015 = vld [vmem:[#allocation6 + $0xe48] sm:$0xff]
    %v2016 = vld [vmem:[#allocation6 + $0xe50] sm:$0xff]
    %v2017 = vld [vmem:[#allocation6 + $0xe58] sm:$0xff]
    %v2018 = vld [vmem:[#allocation6 + $0xe60] sm:$0xff]
    %v2019 = vld [vmem:[#allocation6 + $0xe68] sm:$0xff]
    %v2020 = vld [vmem:[#allocation6 + $0xe70] sm:$0xff]
    %v2021 = vld [vmem:[#allocation6 + $0xe78] sm:$0xff]
    %v2022 = vld [vmem:[#allocation6 + $0xe80] sm:$0xff]
    %v2023 = vld [vmem:[#allocation6 + $0xe88] sm:$0xff]
    %v2024 = vld [vmem:[#allocation6 + $0xe90] sm:$0xff]
    %v2025 = vld [vmem:[#allocation6 + $0xe98] sm:$0xff]
    %v2026 = vld [vmem:[#allocation6 + $0xea0] sm:$0xff]
    %v2027 = vld [vmem:[#allocation6 + $0xea8] sm:$0xff]
    %v2028 = vld [vmem:[#allocation6 + $0xeb0] sm:$0xff]
    %v2029 = vld [vmem:[#allocation6 + $0xeb8] sm:$0xff]
    %v2030 = vld [vmem:[#allocation6 + $0xec0] sm:$0xff]
    %v2031 = vld [vmem:[#allocation6 + $0xec8] sm:$0xff]
    %v2032 = vld [vmem:[#allocation6 + $0xed0] sm:$0xff]
    %v2033 = vld [vmem:[#allocation6 + $0xed8] sm:$0xff]
    %v2034 = vld [vmem:[#allocation6 + $0xee0] sm:$0xff]
    %v2035 = vld [vmem:[#allocation6 + $0xee8] sm:$0xff]
    %v2036 = vld [vmem:[#allocation6 + $0xef0] sm:$0xff]
    %v2037 = vld [vmem:[#allocation6 + $0xef8] sm:$0xff]
    %v2038 = vld [vmem:[#allocation6 + $0xf00] sm:$0xff]
    %v2039 = vld [vmem:[#allocation6 + $0xf08] sm:$0xff]
    %v2040 = vld [vmem:[#allocation6 + $0xf10] sm:$0xff]
    %v2041 = vld [vmem:[#allocation6 + $0xf18] sm:$0xff]
    %v2042 = vld [vmem:[#allocation6 + $0xf20] sm:$0xff]
    %v2043 = vld [vmem:[#allocation6 + $0xf28] sm:$0xff]
    %v2044 = vld [vmem:[#allocation6 + $0xf30] sm:$0xff]
    %v2045 = vld [vmem:[#allocation6 + $0xf38] sm:$0xff]
    %v2046 = vld [vmem:[#allocation6 + $0xf40] sm:$0xff]
    %v2047 = vld [vmem:[#allocation6 + $0xf48] sm:$0xff]
    %v2048 = vld [vmem:[#allocation6 + $0xf50] sm:$0xff]
    %v2049 = vld [vmem:[#allocation6 + $0xf58] sm:$0xff]
    %v2050 = vld [vmem:[#allocation6 + $0xf60] sm:$0xff]
    %v2051 = vld [vmem:[#allocation6 + $0xf68] sm:$0xff]
    %v2052 = vld [vmem:[#allocation6 + $0xf70] sm:$0xff]
    %v2053 = vld [vmem:[#allocation6 + $0xf78] sm:$0xff]
    %v2054 = vld [vmem:[#allocation6 + $0xf80] sm:$0xff]
    %v2055 = vld [vmem:[#allocation6 + $0xf88] sm:$0xff]
    %v2056 = vld [vmem:[#allocation6 + $0xf90] sm:$0xff]
    %v2057 = vld [vmem:[#allocation6 + $0xf98] sm:$0xff]
    %v2058 = vld [vmem:[#allocation6 + $0xfa0] sm:$0xff]
    %v2059 = vld [vmem:[#allocation6 + $0xfa8] sm:$0xff]
    %v2060 = vld [vmem:[#allocation6 + $0xfb0] sm:$0xff]
    %v2061 = vld [vmem:[#allocation6 + $0xfb8] sm:$0xff]
    %v2062 = vld [vmem:[#allocation6 + $0xfc0] sm:$0xff]
    %v2063 = vld [vmem:[#allocation6 + $0xfc8] sm:$0xff]
    %v2064 = vld [vmem:[#allocation6 + $0xfd0] sm:$0xff]
    %v2065 = vld [vmem:[#allocation6 + $0xfd8] sm:$0xff]
    %v2066 = vld [vmem:[#allocation6 + $0xfe0] sm:$0xff]
    %v2067 = vld [vmem:[#allocation6 + $0xfe8] sm:$0xff]
    %v2068 = vld [vmem:[#allocation6 + $0xff0] sm:$0xff]
    %v2069 = vld [vmem:[#allocation6 + $0xff8] sm:$0xff]
    %v2070 = vld [vmem:[#allocation7] sm:$0xff]
    %v2072 = vlaneseq
    %v2073 = vshrl.u32 %v2072, 7
    %v2074 = vsub.s32 0, %v2073
    %v2075 = vrot.slane %v2070, %v2074
    %v2076 = vlaneseq
    %v2077 = vshrl.u32 %v2076, 7
    %v2078 = vsub.s32 1, %v2077
    %v2079 = vrot.slane %v2070, %v2078
    %v2080 = vlaneseq
    %v2081 = vshrl.u32 %v2080, 7
    %v2082 = vsub.s32 2, %v2081
    %v2083 = vrot.slane %v2070, %v2082
    %v2084 = vlaneseq
    %v2085 = vshrl.u32 %v2084, 7
    %v2086 = vsub.s32 3, %v2085
    %v2087 = vrot.slane %v2070, %v2086
    %v2088 = vlaneseq
    %v2089 = vshrl.u32 %v2088, 7
    %v2090 = vsub.s32 4, %v2089
    %v2091 = vrot.slane %v2070, %v2090
    %v2092 = vlaneseq
    %v2093 = vshrl.u32 %v2092, 7
    %v2094 = vsub.s32 5, %v2093
    %v2095 = vrot.slane %v2070, %v2094
    %v2096 = vlaneseq
    %v2097 = vshrl.u32 %v2096, 7
    %v2098 = vsub.s32 6, %v2097
    %v2099 = vrot.slane %v2070, %v2098
    %v2100 = vlaneseq
    %v2101 = vshrl.u32 %v2100, 7
    %v2102 = vsub.s32 7, %v2101
    %v2103 = vrot.slane %v2070, %v2102
    %v2624 = vunpack.c.l.b16 %v1558
    %v2625 = vunpack.c.h.b16 %v1558
    %v2626 = vunpack.c.l.b16 %v1559
    %v2627 = vunpack.c.h.b16 %v1559
    %v2628 = vunpack.c.l.b16 %v1560
    %v2629 = vunpack.c.h.b16 %v1560
    %v2630 = vunpack.c.l.b16 %v1561
    %v2631 = vunpack.c.h.b16 %v1561
    %v2632 = vunpack.c.l.b16 %v1562
    %v2633 = vunpack.c.h.b16 %v1562
    %v2634 = vunpack.c.l.b16 %v1563
    %v2635 = vunpack.c.h.b16 %v1563
    %v2636 = vunpack.c.l.b16 %v1564
    %v2637 = vunpack.c.h.b16 %v1564
    %v2638 = vunpack.c.l.b16 %v1565
    %v2639 = vunpack.c.h.b16 %v1565
    %v2640 = vunpack.c.l.b16 %v1566
    %v2641 = vunpack.c.h.b16 %v1566
    %v2642 = vunpack.c.l.b16 %v1567
    %v2643 = vunpack.c.h.b16 %v1567
    %v2644 = vunpack.c.l.b16 %v1568
    %v2645 = vunpack.c.h.b16 %v1568
    %v2646 = vunpack.c.l.b16 %v1569
    %v2647 = vunpack.c.h.b16 %v1569
    %v2648 = vunpack.c.l.b16 %v1570
    %v2649 = vunpack.c.h.b16 %v1570
    %v2650 = vunpack.c.l.b16 %v1571
    %v2651 = vunpack.c.h.b16 %v1571
    %v2652 = vunpack.c.l.b16 %v1572
    %v2653 = vunpack.c.h.b16 %v1572
    %v2654 = vunpack.c.l.b16 %v1573
    %v2655 = vunpack.c.h.b16 %v1573
    %v2656 = vunpack.c.l.b16 %v1574
    %v2657 = vunpack.c.h.b16 %v1574
    %v2658 = vunpack.c.l.b16 %v1575
    %v2659 = vunpack.c.h.b16 %v1575
    %v2660 = vunpack.c.l.b16 %v1576
    %v2661 = vunpack.c.h.b16 %v1576
    %v2662 = vunpack.c.l.b16 %v1577
    %v2663 = vunpack.c.h.b16 %v1577
    %v2664 = vunpack.c.l.b16 %v1578
    %v2665 = vunpack.c.h.b16 %v1578
    %v2666 = vunpack.c.l.b16 %v1579
    %v2667 = vunpack.c.h.b16 %v1579
    %v2668 = vunpack.c.l.b16 %v1580
    %v2669 = vunpack.c.h.b16 %v1580
    %v2670 = vunpack.c.l.b16 %v1581
    %v2671 = vunpack.c.h.b16 %v1581
    %v2672 = vunpack.c.l.b16 %v1582
    %v2673 = vunpack.c.h.b16 %v1582
    %v2674 = vunpack.c.l.b16 %v1583
    %v2675 = vunpack.c.h.b16 %v1583
    %v2676 = vunpack.c.l.b16 %v1584
    %v2677 = vunpack.c.h.b16 %v1584
    %v2678 = vunpack.c.l.b16 %v1585
    %v2679 = vunpack.c.h.b16 %v1585
    %v2680 = vunpack.c.l.b16 %v1586
    %v2681 = vunpack.c.h.b16 %v1586
    %v2682 = vunpack.c.l.b16 %v1587
    %v2683 = vunpack.c.h.b16 %v1587
    %v2684 = vunpack.c.l.b16 %v1588
    %v2685 = vunpack.c.h.b16 %v1588
    %v2686 = vunpack.c.l.b16 %v1589
    %v2687 = vunpack.c.h.b16 %v1589
    %v2688 = vunpack.c.l.b16 %v1590
    %v2689 = vunpack.c.h.b16 %v1590
    %v2690 = vunpack.c.l.b16 %v1591
    %v2691 = vunpack.c.h.b16 %v1591
    %v2692 = vunpack.c.l.b16 %v1592
    %v2693 = vunpack.c.h.b16 %v1592
    %v2694 = vunpack.c.l.b16 %v1593
    %v2695 = vunpack.c.h.b16 %v1593
    %v2696 = vunpack.c.l.b16 %v1594
    %v2697 = vunpack.c.h.b16 %v1594
    %v2698 = vunpack.c.l.b16 %v1595
    %v2699 = vunpack.c.h.b16 %v1595
    %v2700 = vunpack.c.l.b16 %v1596
    %v2701 = vunpack.c.h.b16 %v1596
    %v2702 = vunpack.c.l.b16 %v1597
    %v2703 = vunpack.c.h.b16 %v1597
    %v2704 = vunpack.c.l.b16 %v1598
    %v2705 = vunpack.c.h.b16 %v1598
    %v2706 = vunpack.c.l.b16 %v1599
    %v2707 = vunpack.c.h.b16 %v1599
    %v2708 = vunpack.c.l.b16 %v1600
    %v2709 = vunpack.c.h.b16 %v1600
    %v2710 = vunpack.c.l.b16 %v1601
    %v2711 = vunpack.c.h.b16 %v1601
    %v2712 = vunpack.c.l.b16 %v1602
    %v2713 = vunpack.c.h.b16 %v1602
    %v2714 = vunpack.c.l.b16 %v1603
    %v2715 = vunpack.c.h.b16 %v1603
    %v2716 = vunpack.c.l.b16 %v1604
    %v2717 = vunpack.c.h.b16 %v1604
    %v2718 = vunpack.c.l.b16 %v1605
    %v2719 = vunpack.c.h.b16 %v1605
    %v2720 = vunpack.c.l.b16 %v1606
    %v2721 = vunpack.c.h.b16 %v1606
    %v2722 = vunpack.c.l.b16 %v1607
    %v2723 = vunpack.c.h.b16 %v1607
    %v2724 = vunpack.c.l.b16 %v1608
    %v2725 = vunpack.c.h.b16 %v1608
    %v2726 = vunpack.c.l.b16 %v1609
    %v2727 = vunpack.c.h.b16 %v1609
    %v2728 = vunpack.c.l.b16 %v1610
    %v2729 = vunpack.c.h.b16 %v1610
    %v2730 = vunpack.c.l.b16 %v1611
    %v2731 = vunpack.c.h.b16 %v1611
    %v2732 = vunpack.c.l.b16 %v1612
    %v2733 = vunpack.c.h.b16 %v1612
    %v2734 = vunpack.c.l.b16 %v1613
    %v2735 = vunpack.c.h.b16 %v1613
    %v2736 = vunpack.c.l.b16 %v1614
    %v2737 = vunpack.c.h.b16 %v1614
    %v2738 = vunpack.c.l.b16 %v1615
    %v2739 = vunpack.c.h.b16 %v1615
    %v2740 = vunpack.c.l.b16 %v1616
    %v2741 = vunpack.c.h.b16 %v1616
    %v2742 = vunpack.c.l.b16 %v1617
    %v2743 = vunpack.c.h.b16 %v1617
    %v2744 = vunpack.c.l.b16 %v1618
    %v2745 = vunpack.c.h.b16 %v1618
    %v2746 = vunpack.c.l.b16 %v1619
    %v2747 = vunpack.c.h.b16 %v1619
    %v2748 = vunpack.c.l.b16 %v1620
    %v2749 = vunpack.c.h.b16 %v1620
    %v2750 = vunpack.c.l.b16 %v1621
    %v2751 = vunpack.c.h.b16 %v1621
    %v2752 = vunpack.c.l.b16 %v1622
    %v2753 = vunpack.c.h.b16 %v1622
    %v2754 = vunpack.c.l.b16 %v1623
    %v2755 = vunpack.c.h.b16 %v1623
    %v2756 = vunpack.c.l.b16 %v1624
    %v2757 = vunpack.c.h.b16 %v1624
    %v2758 = vunpack.c.l.b16 %v1625
    %v2759 = vunpack.c.h.b16 %v1625
    %v2760 = vunpack.c.l.b16 %v1626
    %v2761 = vunpack.c.h.b16 %v1626
    %v2762 = vunpack.c.l.b16 %v1627
    %v2763 = vunpack.c.h.b16 %v1627
    %v2764 = vunpack.c.l.b16 %v1628
    %v2765 = vunpack.c.h.b16 %v1628
    %v2766 = vunpack.c.l.b16 %v1629
    %v2767 = vunpack.c.h.b16 %v1629
    %v2768 = vunpack.c.l.b16 %v1630
    %v2769 = vunpack.c.h.b16 %v1630
    %v2770 = vunpack.c.l.b16 %v1631
    %v2771 = vunpack.c.h.b16 %v1631
    %v2772 = vunpack.c.l.b16 %v1632
    %v2773 = vunpack.c.h.b16 %v1632
    %v2774 = vunpack.c.l.b16 %v1633
    %v2775 = vunpack.c.h.b16 %v1633
    %v2776 = vunpack.c.l.b16 %v1634
    %v2777 = vunpack.c.h.b16 %v1634
    %v2778 = vunpack.c.l.b16 %v1635
    %v2779 = vunpack.c.h.b16 %v1635
    %v2780 = vunpack.c.l.b16 %v1636
    %v2781 = vunpack.c.h.b16 %v1636
    %v2782 = vunpack.c.l.b16 %v1637
    %v2783 = vunpack.c.h.b16 %v1637
    %v2784 = vunpack.c.l.b16 %v1638
    %v2785 = vunpack.c.h.b16 %v1638
    %v2786 = vunpack.c.l.b16 %v1639
    %v2787 = vunpack.c.h.b16 %v1639
    %v2788 = vunpack.c.l.b16 %v1640
    %v2789 = vunpack.c.h.b16 %v1640
    %v2790 = vunpack.c.l.b16 %v1641
    %v2791 = vunpack.c.h.b16 %v1641
    %v2792 = vunpack.c.l.b16 %v1642
    %v2793 = vunpack.c.h.b16 %v1642
    %v2794 = vunpack.c.l.b16 %v1643
    %v2795 = vunpack.c.h.b16 %v1643
    %v2796 = vunpack.c.l.b16 %v1644
    %v2797 = vunpack.c.h.b16 %v1644
    %v2798 = vunpack.c.l.b16 %v1645
    %v2799 = vunpack.c.h.b16 %v1645
    %v2800 = vunpack.c.l.b16 %v1646
    %v2801 = vunpack.c.h.b16 %v1646
    %v2802 = vunpack.c.l.b16 %v1647
    %v2803 = vunpack.c.h.b16 %v1647
    %v2804 = vunpack.c.l.b16 %v1648
    %v2805 = vunpack.c.h.b16 %v1648
    %v2806 = vunpack.c.l.b16 %v1649
    %v2807 = vunpack.c.h.b16 %v1649
    %v2808 = vunpack.c.l.b16 %v1650
    %v2809 = vunpack.c.h.b16 %v1650
    %v2810 = vunpack.c.l.b16 %v1651
    %v2811 = vunpack.c.h.b16 %v1651
    %v2812 = vunpack.c.l.b16 %v1652
    %v2813 = vunpack.c.h.b16 %v1652
    %v2814 = vunpack.c.l.b16 %v1653
    %v2815 = vunpack.c.h.b16 %v1653
    %v2816 = vunpack.c.l.b16 %v1654
    %v2817 = vunpack.c.h.b16 %v1654
    %v2818 = vunpack.c.l.b16 %v1655
    %v2819 = vunpack.c.h.b16 %v1655
    %v2820 = vunpack.c.l.b16 %v1656
    %v2821 = vunpack.c.h.b16 %v1656
    %v2822 = vunpack.c.l.b16 %v1657
    %v2823 = vunpack.c.h.b16 %v1657
    %v2824 = vunpack.c.l.b16 %v1658
    %v2825 = vunpack.c.h.b16 %v1658
    %v2826 = vunpack.c.l.b16 %v1659
    %v2827 = vunpack.c.h.b16 %v1659
    %v2828 = vunpack.c.l.b16 %v1660
    %v2829 = vunpack.c.h.b16 %v1660
    %v2830 = vunpack.c.l.b16 %v1661
    %v2831 = vunpack.c.h.b16 %v1661
    %v2832 = vunpack.c.l.b16 %v1662
    %v2833 = vunpack.c.h.b16 %v1662
    %v2834 = vunpack.c.l.b16 %v1663
    %v2835 = vunpack.c.h.b16 %v1663
    %v2836 = vunpack.c.l.b16 %v1664
    %v2837 = vunpack.c.h.b16 %v1664
    %v2838 = vunpack.c.l.b16 %v1665
    %v2839 = vunpack.c.h.b16 %v1665
    %v2840 = vunpack.c.l.b16 %v1666
    %v2841 = vunpack.c.h.b16 %v1666
    %v2842 = vunpack.c.l.b16 %v1667
    %v2843 = vunpack.c.h.b16 %v1667
    %v2844 = vunpack.c.l.b16 %v1668
    %v2845 = vunpack.c.h.b16 %v1668
    %v2846 = vunpack.c.l.b16 %v1669
    %v2847 = vunpack.c.h.b16 %v1669
    %v2848 = vunpack.c.l.b16 %v1670
    %v2849 = vunpack.c.h.b16 %v1670
    %v2850 = vunpack.c.l.b16 %v1671
    %v2851 = vunpack.c.h.b16 %v1671
    %v2852 = vunpack.c.l.b16 %v1672
    %v2853 = vunpack.c.h.b16 %v1672
    %v2854 = vunpack.c.l.b16 %v1673
    %v2855 = vunpack.c.h.b16 %v1673
    %v2856 = vunpack.c.l.b16 %v1674
    %v2857 = vunpack.c.h.b16 %v1674
    %v2858 = vunpack.c.l.b16 %v1675
    %v2859 = vunpack.c.h.b16 %v1675
    %v2860 = vunpack.c.l.b16 %v1676
    %v2861 = vunpack.c.h.b16 %v1676
    %v2862 = vunpack.c.l.b16 %v1677
    %v2863 = vunpack.c.h.b16 %v1677
    %v2864 = vunpack.c.l.b16 %v1678
    %v2865 = vunpack.c.h.b16 %v1678
    %v2866 = vunpack.c.l.b16 %v1679
    %v2867 = vunpack.c.h.b16 %v1679
    %v2868 = vunpack.c.l.b16 %v1680
    %v2869 = vunpack.c.h.b16 %v1680
    %v2870 = vunpack.c.l.b16 %v1681
    %v2871 = vunpack.c.h.b16 %v1681
    %v2872 = vunpack.c.l.b16 %v1682
    %v2873 = vunpack.c.h.b16 %v1682
    %v2874 = vunpack.c.l.b16 %v1683
    %v2875 = vunpack.c.h.b16 %v1683
    %v2876 = vunpack.c.l.b16 %v1684
    %v2877 = vunpack.c.h.b16 %v1684
    %v2878 = vunpack.c.l.b16 %v1685
    %v2879 = vunpack.c.h.b16 %v1685
    %v2880 = vunpack.c.l.b16 %v1686
    %v2881 = vunpack.c.h.b16 %v1686
    %v2882 = vunpack.c.l.b16 %v1687
    %v2883 = vunpack.c.h.b16 %v1687
    %v2884 = vunpack.c.l.b16 %v1688
    %v2885 = vunpack.c.h.b16 %v1688
    %v2886 = vunpack.c.l.b16 %v1689
    %v2887 = vunpack.c.h.b16 %v1689
    %v2888 = vunpack.c.l.b16 %v1690
    %v2889 = vunpack.c.h.b16 %v1690
    %v2890 = vunpack.c.l.b16 %v1691
    %v2891 = vunpack.c.h.b16 %v1691
    %v2892 = vunpack.c.l.b16 %v1692
    %v2893 = vunpack.c.h.b16 %v1692
    %v2894 = vunpack.c.l.b16 %v1693
    %v2895 = vunpack.c.h.b16 %v1693
    %v2896 = vunpack.c.l.b16 %v1694
    %v2897 = vunpack.c.h.b16 %v1694
    %v2898 = vunpack.c.l.b16 %v1695
    %v2899 = vunpack.c.h.b16 %v1695
    %v2900 = vunpack.c.l.b16 %v1696
    %v2901 = vunpack.c.h.b16 %v1696
    %v2902 = vunpack.c.l.b16 %v1697
    %v2903 = vunpack.c.h.b16 %v1697
    %v2904 = vunpack.c.l.b16 %v1698
    %v2905 = vunpack.c.h.b16 %v1698
    %v2906 = vunpack.c.l.b16 %v1699
    %v2907 = vunpack.c.h.b16 %v1699
    %v2908 = vunpack.c.l.b16 %v1700
    %v2909 = vunpack.c.h.b16 %v1700
    %v2910 = vunpack.c.l.b16 %v1701
    %v2911 = vunpack.c.h.b16 %v1701
    %v2912 = vunpack.c.l.b16 %v1702
    %v2913 = vunpack.c.h.b16 %v1702
    %v2914 = vunpack.c.l.b16 %v1703
    %v2915 = vunpack.c.h.b16 %v1703
    %v2916 = vunpack.c.l.b16 %v1704
    %v2917 = vunpack.c.h.b16 %v1704
    %v2918 = vunpack.c.l.b16 %v1705
    %v2919 = vunpack.c.h.b16 %v1705
    %v2920 = vunpack.c.l.b16 %v1706
    %v2921 = vunpack.c.h.b16 %v1706
    %v2922 = vunpack.c.l.b16 %v1707
    %v2923 = vunpack.c.h.b16 %v1707
    %v2924 = vunpack.c.l.b16 %v1708
    %v2925 = vunpack.c.h.b16 %v1708
    %v2926 = vunpack.c.l.b16 %v1709
    %v2927 = vunpack.c.h.b16 %v1709
    %v2928 = vunpack.c.l.b16 %v1710
    %v2929 = vunpack.c.h.b16 %v1710
    %v2930 = vunpack.c.l.b16 %v1711
    %v2931 = vunpack.c.h.b16 %v1711
    %v2932 = vunpack.c.l.b16 %v1712
    %v2933 = vunpack.c.h.b16 %v1712
    %v2934 = vunpack.c.l.b16 %v1713
    %v2935 = vunpack.c.h.b16 %v1713
    %v2936 = vunpack.c.l.b16 %v1714
    %v2937 = vunpack.c.h.b16 %v1714
    %v2938 = vunpack.c.l.b16 %v1715
    %v2939 = vunpack.c.h.b16 %v1715
    %v2940 = vunpack.c.l.b16 %v1716
    %v2941 = vunpack.c.h.b16 %v1716
    %v2942 = vunpack.c.l.b16 %v1717
    %v2943 = vunpack.c.h.b16 %v1717
    %v2944 = vunpack.c.l.b16 %v1718
    %v2945 = vunpack.c.h.b16 %v1718
    %v2946 = vunpack.c.l.b16 %v1719
    %v2947 = vunpack.c.h.b16 %v1719
    %v2948 = vunpack.c.l.b16 %v1720
    %v2949 = vunpack.c.h.b16 %v1720
    %v2950 = vunpack.c.l.b16 %v1721
    %v2951 = vunpack.c.h.b16 %v1721
    %v2952 = vunpack.c.l.b16 %v1722
    %v2953 = vunpack.c.h.b16 %v1722
    %v2954 = vunpack.c.l.b16 %v1723
    %v2955 = vunpack.c.h.b16 %v1723
    %v2956 = vunpack.c.l.b16 %v1724
    %v2957 = vunpack.c.h.b16 %v1724
    %v2958 = vunpack.c.l.b16 %v1725
    %v2959 = vunpack.c.h.b16 %v1725
    %v2960 = vunpack.c.l.b16 %v1726
    %v2961 = vunpack.c.h.b16 %v1726
    %v2962 = vunpack.c.l.b16 %v1727
    %v2963 = vunpack.c.h.b16 %v1727
    %v2964 = vunpack.c.l.b16 %v1728
    %v2965 = vunpack.c.h.b16 %v1728
    %v2966 = vunpack.c.l.b16 %v1729
    %v2967 = vunpack.c.h.b16 %v1729
    %v2968 = vunpack.c.l.b16 %v1730
    %v2969 = vunpack.c.h.b16 %v1730
    %v2970 = vunpack.c.l.b16 %v1731
    %v2971 = vunpack.c.h.b16 %v1731
    %v2972 = vunpack.c.l.b16 %v1732
    %v2973 = vunpack.c.h.b16 %v1732
    %v2974 = vunpack.c.l.b16 %v1733
    %v2975 = vunpack.c.h.b16 %v1733
    %v2976 = vunpack.c.l.b16 %v1734
    %v2977 = vunpack.c.h.b16 %v1734
    %v2978 = vunpack.c.l.b16 %v1735
    %v2979 = vunpack.c.h.b16 %v1735
    %v2980 = vunpack.c.l.b16 %v1736
    %v2981 = vunpack.c.h.b16 %v1736
    %v2982 = vunpack.c.l.b16 %v1737
    %v2983 = vunpack.c.h.b16 %v1737
    %v2984 = vunpack.c.l.b16 %v1738
    %v2985 = vunpack.c.h.b16 %v1738
    %v2986 = vunpack.c.l.b16 %v1739
    %v2987 = vunpack.c.h.b16 %v1739
    %v2988 = vunpack.c.l.b16 %v1740
    %v2989 = vunpack.c.h.b16 %v1740
    %v2990 = vunpack.c.l.b16 %v1741
    %v2991 = vunpack.c.h.b16 %v1741
    %v2992 = vunpack.c.l.b16 %v1742
    %v2993 = vunpack.c.h.b16 %v1742
    %v2994 = vunpack.c.l.b16 %v1743
    %v2995 = vunpack.c.h.b16 %v1743
    %v2996 = vunpack.c.l.b16 %v1744
    %v2997 = vunpack.c.h.b16 %v1744
    %v2998 = vunpack.c.l.b16 %v1745
    %v2999 = vunpack.c.h.b16 %v1745
    %v3000 = vunpack.c.l.b16 %v1746
    %v3001 = vunpack.c.h.b16 %v1746
    %v3002 = vunpack.c.l.b16 %v1747
    %v3003 = vunpack.c.h.b16 %v1747
    %v3004 = vunpack.c.l.b16 %v1748
    %v3005 = vunpack.c.h.b16 %v1748
    %v3006 = vunpack.c.l.b16 %v1749
    %v3007 = vunpack.c.h.b16 %v1749
    %v3008 = vunpack.c.l.b16 %v1750
    %v3009 = vunpack.c.h.b16 %v1750
    %v3010 = vunpack.c.l.b16 %v1751
    %v3011 = vunpack.c.h.b16 %v1751
    %v3012 = vunpack.c.l.b16 %v1752
    %v3013 = vunpack.c.h.b16 %v1752
    %v3014 = vunpack.c.l.b16 %v1753
    %v3015 = vunpack.c.h.b16 %v1753
    %v3016 = vunpack.c.l.b16 %v1754
    %v3017 = vunpack.c.h.b16 %v1754
    %v3018 = vunpack.c.l.b16 %v1755
    %v3019 = vunpack.c.h.b16 %v1755
    %v3020 = vunpack.c.l.b16 %v1756
    %v3021 = vunpack.c.h.b16 %v1756
    %v3022 = vunpack.c.l.b16 %v1757
    %v3023 = vunpack.c.h.b16 %v1757
    %v3024 = vunpack.c.l.b16 %v1758
    %v3025 = vunpack.c.h.b16 %v1758
    %v3026 = vunpack.c.l.b16 %v1759
    %v3027 = vunpack.c.h.b16 %v1759
    %v3028 = vunpack.c.l.b16 %v1760
    %v3029 = vunpack.c.h.b16 %v1760
    %v3030 = vunpack.c.l.b16 %v1761
    %v3031 = vunpack.c.h.b16 %v1761
    %v3032 = vunpack.c.l.b16 %v1762
    %v3033 = vunpack.c.h.b16 %v1762
    %v3034 = vunpack.c.l.b16 %v1763
    %v3035 = vunpack.c.h.b16 %v1763
    %v3036 = vunpack.c.l.b16 %v1764
    %v3037 = vunpack.c.h.b16 %v1764
    %v3038 = vunpack.c.l.b16 %v1765
    %v3039 = vunpack.c.h.b16 %v1765
    %v3040 = vunpack.c.l.b16 %v1766
    %v3041 = vunpack.c.h.b16 %v1766
    %v3042 = vunpack.c.l.b16 %v1767
    %v3043 = vunpack.c.h.b16 %v1767
    %v3044 = vunpack.c.l.b16 %v1768
    %v3045 = vunpack.c.h.b16 %v1768
    %v3046 = vunpack.c.l.b16 %v1769
    %v3047 = vunpack.c.h.b16 %v1769
    %v3048 = vunpack.c.l.b16 %v1770
    %v3049 = vunpack.c.h.b16 %v1770
    %v3050 = vunpack.c.l.b16 %v1771
    %v3051 = vunpack.c.h.b16 %v1771
    %v3052 = vunpack.c.l.b16 %v1772
    %v3053 = vunpack.c.h.b16 %v1772
    %v3054 = vunpack.c.l.b16 %v1773
    %v3055 = vunpack.c.h.b16 %v1773
    %v3056 = vunpack.c.l.b16 %v1774
    %v3057 = vunpack.c.h.b16 %v1774
    %v3058 = vunpack.c.l.b16 %v1775
    %v3059 = vunpack.c.h.b16 %v1775
    %v3060 = vunpack.c.l.b16 %v1776
    %v3061 = vunpack.c.h.b16 %v1776
    %v3062 = vunpack.c.l.b16 %v1777
    %v3063 = vunpack.c.h.b16 %v1777
    %v3064 = vunpack.c.l.b16 %v1778
    %v3065 = vunpack.c.h.b16 %v1778
    %v3066 = vunpack.c.l.b16 %v1779
    %v3067 = vunpack.c.h.b16 %v1779
    %v3068 = vunpack.c.l.b16 %v1780
    %v3069 = vunpack.c.h.b16 %v1780
    %v3070 = vunpack.c.l.b16 %v1781
    %v3071 = vunpack.c.h.b16 %v1781
    %v3072 = vunpack.c.l.b16 %v1782
    %v3073 = vunpack.c.h.b16 %v1782
    %v3074 = vunpack.c.l.b16 %v1783
    %v3075 = vunpack.c.h.b16 %v1783
    %v3076 = vunpack.c.l.b16 %v1784
    %v3077 = vunpack.c.h.b16 %v1784
    %v3078 = vunpack.c.l.b16 %v1785
    %v3079 = vunpack.c.h.b16 %v1785
    %v3080 = vunpack.c.l.b16 %v1786
    %v3081 = vunpack.c.h.b16 %v1786
    %v3082 = vunpack.c.l.b16 %v1787
    %v3083 = vunpack.c.h.b16 %v1787
    %v3084 = vunpack.c.l.b16 %v1788
    %v3085 = vunpack.c.h.b16 %v1788
    %v3086 = vunpack.c.l.b16 %v1789
    %v3087 = vunpack.c.h.b16 %v1789
    %v3088 = vunpack.c.l.b16 %v1790
    %v3089 = vunpack.c.h.b16 %v1790
    %v3090 = vunpack.c.l.b16 %v1791
    %v3091 = vunpack.c.h.b16 %v1791
    %v3092 = vunpack.c.l.b16 %v1792
    %v3093 = vunpack.c.h.b16 %v1792
    %v3094 = vunpack.c.l.b16 %v1793
    %v3095 = vunpack.c.h.b16 %v1793
    %v3096 = vunpack.c.l.b16 %v1794
    %v3097 = vunpack.c.h.b16 %v1794
    %v3098 = vunpack.c.l.b16 %v1795
    %v3099 = vunpack.c.h.b16 %v1795
    %v3100 = vunpack.c.l.b16 %v1796
    %v3101 = vunpack.c.h.b16 %v1796
    %v3102 = vunpack.c.l.b16 %v1797
    %v3103 = vunpack.c.h.b16 %v1797
    %v3104 = vunpack.c.l.b16 %v1798
    %v3105 = vunpack.c.h.b16 %v1798
    %v3106 = vunpack.c.l.b16 %v1799
    %v3107 = vunpack.c.h.b16 %v1799
    %v3108 = vunpack.c.l.b16 %v1800
    %v3109 = vunpack.c.h.b16 %v1800
    %v3110 = vunpack.c.l.b16 %v1801
    %v3111 = vunpack.c.h.b16 %v1801
    %v3112 = vunpack.c.l.b16 %v1802
    %v3113 = vunpack.c.h.b16 %v1802
    %v3114 = vunpack.c.l.b16 %v1803
    %v3115 = vunpack.c.h.b16 %v1803
    %v3116 = vunpack.c.l.b16 %v1804
    %v3117 = vunpack.c.h.b16 %v1804
    %v3118 = vunpack.c.l.b16 %v1805
    %v3119 = vunpack.c.h.b16 %v1805
    %v3120 = vunpack.c.l.b16 %v1806
    %v3121 = vunpack.c.h.b16 %v1806
    %v3122 = vunpack.c.l.b16 %v1807
    %v3123 = vunpack.c.h.b16 %v1807
    %v3124 = vunpack.c.l.b16 %v1808
    %v3125 = vunpack.c.h.b16 %v1808
    %v3126 = vunpack.c.l.b16 %v1809
    %v3127 = vunpack.c.h.b16 %v1809
    %v3128 = vunpack.c.l.b16 %v1810
    %v3129 = vunpack.c.h.b16 %v1810
    %v3130 = vunpack.c.l.b16 %v1811
    %v3131 = vunpack.c.h.b16 %v1811
    %v3132 = vunpack.c.l.b16 %v1812
    %v3133 = vunpack.c.h.b16 %v1812
    %v3134 = vunpack.c.l.b16 %v1813
    %v3135 = vunpack.c.h.b16 %v1813
    %v3136 = vunpack.c.l.b16 %v1814
    %v3137 = vunpack.c.h.b16 %v1814
    %v3138 = vunpack.c.l.b16 %v1815
    %v3139 = vunpack.c.h.b16 %v1815
    %v3140 = vunpack.c.l.b16 %v1816
    %v3141 = vunpack.c.h.b16 %v1816
    %v3142 = vunpack.c.l.b16 %v1817
    %v3143 = vunpack.c.h.b16 %v1817
    %v3144 = vunpack.c.l.b16 %v1818
    %v3145 = vunpack.c.h.b16 %v1818
    %v3146 = vunpack.c.l.b16 %v1819
    %v3147 = vunpack.c.h.b16 %v1819
    %v3148 = vunpack.c.l.b16 %v1820
    %v3149 = vunpack.c.h.b16 %v1820
    %v3150 = vunpack.c.l.b16 %v1821
    %v3151 = vunpack.c.h.b16 %v1821
    %v3152 = vunpack.c.l.b16 %v1822
    %v3153 = vunpack.c.h.b16 %v1822
    %v3154 = vunpack.c.l.b16 %v1823
    %v3155 = vunpack.c.h.b16 %v1823
    %v3156 = vunpack.c.l.b16 %v1824
    %v3157 = vunpack.c.h.b16 %v1824
    %v3158 = vunpack.c.l.b16 %v1825
    %v3159 = vunpack.c.h.b16 %v1825
    %v3160 = vunpack.c.l.b16 %v1826
    %v3161 = vunpack.c.h.b16 %v1826
    %v3162 = vunpack.c.l.b16 %v1827
    %v3163 = vunpack.c.h.b16 %v1827
    %v3164 = vunpack.c.l.b16 %v1828
    %v3165 = vunpack.c.h.b16 %v1828
    %v3166 = vunpack.c.l.b16 %v1829
    %v3167 = vunpack.c.h.b16 %v1829
    %v3168 = vunpack.c.l.b16 %v1830
    %v3169 = vunpack.c.h.b16 %v1830
    %v3170 = vunpack.c.l.b16 %v1831
    %v3171 = vunpack.c.h.b16 %v1831
    %v3172 = vunpack.c.l.b16 %v1832
    %v3173 = vunpack.c.h.b16 %v1832
    %v3174 = vunpack.c.l.b16 %v1833
    %v3175 = vunpack.c.h.b16 %v1833
    %v3176 = vunpack.c.l.b16 %v1834
    %v3177 = vunpack.c.h.b16 %v1834
    %v3178 = vunpack.c.l.b16 %v1835
    %v3179 = vunpack.c.h.b16 %v1835
    %v3180 = vunpack.c.l.b16 %v1836
    %v3181 = vunpack.c.h.b16 %v1836
    %v3182 = vunpack.c.l.b16 %v1837
    %v3183 = vunpack.c.h.b16 %v1837
    %v3184 = vunpack.c.l.b16 %v1838
    %v3185 = vunpack.c.h.b16 %v1838
    %v3186 = vunpack.c.l.b16 %v1839
    %v3187 = vunpack.c.h.b16 %v1839
    %v3188 = vunpack.c.l.b16 %v1840
    %v3189 = vunpack.c.h.b16 %v1840
    %v3190 = vunpack.c.l.b16 %v1841
    %v3191 = vunpack.c.h.b16 %v1841
    %v3192 = vunpack.c.l.b16 %v1842
    %v3193 = vunpack.c.h.b16 %v1842
    %v3194 = vunpack.c.l.b16 %v1843
    %v3195 = vunpack.c.h.b16 %v1843
    %v3196 = vunpack.c.l.b16 %v1844
    %v3197 = vunpack.c.h.b16 %v1844
    %v3198 = vunpack.c.l.b16 %v1845
    %v3199 = vunpack.c.h.b16 %v1845
    %v3200 = vunpack.c.l.b16 %v1846
    %v3201 = vunpack.c.h.b16 %v1846
    %v3202 = vunpack.c.l.b16 %v1847
    %v3203 = vunpack.c.h.b16 %v1847
    %v3204 = vunpack.c.l.b16 %v1848
    %v3205 = vunpack.c.h.b16 %v1848
    %v3206 = vunpack.c.l.b16 %v1849
    %v3207 = vunpack.c.h.b16 %v1849
    %v3208 = vunpack.c.l.b16 %v1850
    %v3209 = vunpack.c.h.b16 %v1850
    %v3210 = vunpack.c.l.b16 %v1851
    %v3211 = vunpack.c.h.b16 %v1851
    %v3212 = vunpack.c.l.b16 %v1852
    %v3213 = vunpack.c.h.b16 %v1852
    %v3214 = vunpack.c.l.b16 %v1853
    %v3215 = vunpack.c.h.b16 %v1853
    %v3216 = vunpack.c.l.b16 %v1854
    %v3217 = vunpack.c.h.b16 %v1854
    %v3218 = vunpack.c.l.b16 %v1855
    %v3219 = vunpack.c.h.b16 %v1855
    %v3220 = vunpack.c.l.b16 %v1856
    %v3221 = vunpack.c.h.b16 %v1856
    %v3222 = vunpack.c.l.b16 %v1857
    %v3223 = vunpack.c.h.b16 %v1857
    %v3224 = vunpack.c.l.b16 %v1858
    %v3225 = vunpack.c.h.b16 %v1858
    %v3226 = vunpack.c.l.b16 %v1859
    %v3227 = vunpack.c.h.b16 %v1859
    %v3228 = vunpack.c.l.b16 %v1860
    %v3229 = vunpack.c.h.b16 %v1860
    %v3230 = vunpack.c.l.b16 %v1861
    %v3231 = vunpack.c.h.b16 %v1861
    %v3232 = vunpack.c.l.b16 %v1862
    %v3233 = vunpack.c.h.b16 %v1862
    %v3234 = vunpack.c.l.b16 %v1863
    %v3235 = vunpack.c.h.b16 %v1863
    %v3236 = vunpack.c.l.b16 %v1864
    %v3237 = vunpack.c.h.b16 %v1864
    %v3238 = vunpack.c.l.b16 %v1865
    %v3239 = vunpack.c.h.b16 %v1865
    %v3240 = vunpack.c.l.b16 %v1866
    %v3241 = vunpack.c.h.b16 %v1866
    %v3242 = vunpack.c.l.b16 %v1867
    %v3243 = vunpack.c.h.b16 %v1867
    %v3244 = vunpack.c.l.b16 %v1868
    %v3245 = vunpack.c.h.b16 %v1868
    %v3246 = vunpack.c.l.b16 %v1869
    %v3247 = vunpack.c.h.b16 %v1869
    %v3248 = vunpack.c.l.b16 %v1870
    %v3249 = vunpack.c.h.b16 %v1870
    %v3250 = vunpack.c.l.b16 %v1871
    %v3251 = vunpack.c.h.b16 %v1871
    %v3252 = vunpack.c.l.b16 %v1872
    %v3253 = vunpack.c.h.b16 %v1872
    %v3254 = vunpack.c.l.b16 %v1873
    %v3255 = vunpack.c.h.b16 %v1873
    %v3256 = vunpack.c.l.b16 %v1874
    %v3257 = vunpack.c.h.b16 %v1874
    %v3258 = vunpack.c.l.b16 %v1875
    %v3259 = vunpack.c.h.b16 %v1875
    %v3260 = vunpack.c.l.b16 %v1876
    %v3261 = vunpack.c.h.b16 %v1876
    %v3262 = vunpack.c.l.b16 %v1877
    %v3263 = vunpack.c.h.b16 %v1877
    %v3264 = vunpack.c.l.b16 %v1878
    %v3265 = vunpack.c.h.b16 %v1878
    %v3266 = vunpack.c.l.b16 %v1879
    %v3267 = vunpack.c.h.b16 %v1879
    %v3268 = vunpack.c.l.b16 %v1880
    %v3269 = vunpack.c.h.b16 %v1880
    %v3270 = vunpack.c.l.b16 %v1881
    %v3271 = vunpack.c.h.b16 %v1881
    %v3272 = vunpack.c.l.b16 %v1882
    %v3273 = vunpack.c.h.b16 %v1882
    %v3274 = vunpack.c.l.b16 %v1883
    %v3275 = vunpack.c.h.b16 %v1883
    %v3276 = vunpack.c.l.b16 %v1884
    %v3277 = vunpack.c.h.b16 %v1884
    %v3278 = vunpack.c.l.b16 %v1885
    %v3279 = vunpack.c.h.b16 %v1885
    %v3280 = vunpack.c.l.b16 %v1886
    %v3281 = vunpack.c.h.b16 %v1886
    %v3282 = vunpack.c.l.b16 %v1887
    %v3283 = vunpack.c.h.b16 %v1887
    %v3284 = vunpack.c.l.b16 %v1888
    %v3285 = vunpack.c.h.b16 %v1888
    %v3286 = vunpack.c.l.b16 %v1889
    %v3287 = vunpack.c.h.b16 %v1889
    %v3288 = vunpack.c.l.b16 %v1890
    %v3289 = vunpack.c.h.b16 %v1890
    %v3290 = vunpack.c.l.b16 %v1891
    %v3291 = vunpack.c.h.b16 %v1891
    %v3292 = vunpack.c.l.b16 %v1892
    %v3293 = vunpack.c.h.b16 %v1892
    %v3294 = vunpack.c.l.b16 %v1893
    %v3295 = vunpack.c.h.b16 %v1893
    %v3296 = vunpack.c.l.b16 %v1894
    %v3297 = vunpack.c.h.b16 %v1894
    %v3298 = vunpack.c.l.b16 %v1895
    %v3299 = vunpack.c.h.b16 %v1895
    %v3300 = vunpack.c.l.b16 %v1896
    %v3301 = vunpack.c.h.b16 %v1896
    %v3302 = vunpack.c.l.b16 %v1897
    %v3303 = vunpack.c.h.b16 %v1897
    %v3304 = vunpack.c.l.b16 %v1898
    %v3305 = vunpack.c.h.b16 %v1898
    %v3306 = vunpack.c.l.b16 %v1899
    %v3307 = vunpack.c.h.b16 %v1899
    %v3308 = vunpack.c.l.b16 %v1900
    %v3309 = vunpack.c.h.b16 %v1900
    %v3310 = vunpack.c.l.b16 %v1901
    %v3311 = vunpack.c.h.b16 %v1901
    %v3312 = vunpack.c.l.b16 %v1902
    %v3313 = vunpack.c.h.b16 %v1902
    %v3314 = vunpack.c.l.b16 %v1903
    %v3315 = vunpack.c.h.b16 %v1903
    %v3316 = vunpack.c.l.b16 %v1904
    %v3317 = vunpack.c.h.b16 %v1904
    %v3318 = vunpack.c.l.b16 %v1905
    %v3319 = vunpack.c.h.b16 %v1905
    %v3320 = vunpack.c.l.b16 %v1906
    %v3321 = vunpack.c.h.b16 %v1906
    %v3322 = vunpack.c.l.b16 %v1907
    %v3323 = vunpack.c.h.b16 %v1907
    %v3324 = vunpack.c.l.b16 %v1908
    %v3325 = vunpack.c.h.b16 %v1908
    %v3326 = vunpack.c.l.b16 %v1909
    %v3327 = vunpack.c.h.b16 %v1909
    %v3328 = vunpack.c.l.b16 %v1910
    %v3329 = vunpack.c.h.b16 %v1910
    %v3330 = vunpack.c.l.b16 %v1911
    %v3331 = vunpack.c.h.b16 %v1911
    %v3332 = vunpack.c.l.b16 %v1912
    %v3333 = vunpack.c.h.b16 %v1912
    %v3334 = vunpack.c.l.b16 %v1913
    %v3335 = vunpack.c.h.b16 %v1913
    %v3336 = vunpack.c.l.b16 %v1914
    %v3337 = vunpack.c.h.b16 %v1914
    %v3338 = vunpack.c.l.b16 %v1915
    %v3339 = vunpack.c.h.b16 %v1915
    %v3340 = vunpack.c.l.b16 %v1916
    %v3341 = vunpack.c.h.b16 %v1916
    %v3342 = vunpack.c.l.b16 %v1917
    %v3343 = vunpack.c.h.b16 %v1917
    %v3344 = vunpack.c.l.b16 %v1918
    %v3345 = vunpack.c.h.b16 %v1918
    %v3346 = vunpack.c.l.b16 %v1919
    %v3347 = vunpack.c.h.b16 %v1919
    %v3348 = vunpack.c.l.b16 %v1920
    %v3349 = vunpack.c.h.b16 %v1920
    %v3350 = vunpack.c.l.b16 %v1921
    %v3351 = vunpack.c.h.b16 %v1921
    %v3352 = vunpack.c.l.b16 %v1922
    %v3353 = vunpack.c.h.b16 %v1922
    %v3354 = vunpack.c.l.b16 %v1923
    %v3355 = vunpack.c.h.b16 %v1923
    %v3356 = vunpack.c.l.b16 %v1924
    %v3357 = vunpack.c.h.b16 %v1924
    %v3358 = vunpack.c.l.b16 %v1925
    %v3359 = vunpack.c.h.b16 %v1925
    %v3360 = vunpack.c.l.b16 %v1926
    %v3361 = vunpack.c.h.b16 %v1926
    %v3362 = vunpack.c.l.b16 %v1927
    %v3363 = vunpack.c.h.b16 %v1927
    %v3364 = vunpack.c.l.b16 %v1928
    %v3365 = vunpack.c.h.b16 %v1928
    %v3366 = vunpack.c.l.b16 %v1929
    %v3367 = vunpack.c.h.b16 %v1929
    %v3368 = vunpack.c.l.b16 %v1930
    %v3369 = vunpack.c.h.b16 %v1930
    %v3370 = vunpack.c.l.b16 %v1931
    %v3371 = vunpack.c.h.b16 %v1931
    %v3372 = vunpack.c.l.b16 %v1932
    %v3373 = vunpack.c.h.b16 %v1932
    %v3374 = vunpack.c.l.b16 %v1933
    %v3375 = vunpack.c.h.b16 %v1933
    %v3376 = vunpack.c.l.b16 %v1934
    %v3377 = vunpack.c.h.b16 %v1934
    %v3378 = vunpack.c.l.b16 %v1935
    %v3379 = vunpack.c.h.b16 %v1935
    %v3380 = vunpack.c.l.b16 %v1936
    %v3381 = vunpack.c.h.b16 %v1936
    %v3382 = vunpack.c.l.b16 %v1937
    %v3383 = vunpack.c.h.b16 %v1937
    %v3384 = vunpack.c.l.b16 %v1938
    %v3385 = vunpack.c.h.b16 %v1938
    %v3386 = vunpack.c.l.b16 %v1939
    %v3387 = vunpack.c.h.b16 %v1939
    %v3388 = vunpack.c.l.b16 %v1940
    %v3389 = vunpack.c.h.b16 %v1940
    %v3390 = vunpack.c.l.b16 %v1941
    %v3391 = vunpack.c.h.b16 %v1941
    %v3392 = vunpack.c.l.b16 %v1942
    %v3393 = vunpack.c.h.b16 %v1942
    %v3394 = vunpack.c.l.b16 %v1943
    %v3395 = vunpack.c.h.b16 %v1943
    %v3396 = vunpack.c.l.b16 %v1944
    %v3397 = vunpack.c.h.b16 %v1944
    %v3398 = vunpack.c.l.b16 %v1945
    %v3399 = vunpack.c.h.b16 %v1945
    %v3400 = vunpack.c.l.b16 %v1946
    %v3401 = vunpack.c.h.b16 %v1946
    %v3402 = vunpack.c.l.b16 %v1947
    %v3403 = vunpack.c.h.b16 %v1947
    %v3404 = vunpack.c.l.b16 %v1948
    %v3405 = vunpack.c.h.b16 %v1948
    %v3406 = vunpack.c.l.b16 %v1949
    %v3407 = vunpack.c.h.b16 %v1949
    %v3408 = vunpack.c.l.b16 %v1950
    %v3409 = vunpack.c.h.b16 %v1950
    %v3410 = vunpack.c.l.b16 %v1951
    %v3411 = vunpack.c.h.b16 %v1951
    %v3412 = vunpack.c.l.b16 %v1952
    %v3413 = vunpack.c.h.b16 %v1952
    %v3414 = vunpack.c.l.b16 %v1953
    %v3415 = vunpack.c.h.b16 %v1953
    %v3416 = vunpack.c.l.b16 %v1954
    %v3417 = vunpack.c.h.b16 %v1954
    %v3418 = vunpack.c.l.b16 %v1955
    %v3419 = vunpack.c.h.b16 %v1955
    %v3420 = vunpack.c.l.b16 %v1956
    %v3421 = vunpack.c.h.b16 %v1956
    %v3422 = vunpack.c.l.b16 %v1957
    %v3423 = vunpack.c.h.b16 %v1957
    %v3424 = vunpack.c.l.b16 %v1958
    %v3425 = vunpack.c.h.b16 %v1958
    %v3426 = vunpack.c.l.b16 %v1959
    %v3427 = vunpack.c.h.b16 %v1959
    %v3428 = vunpack.c.l.b16 %v1960
    %v3429 = vunpack.c.h.b16 %v1960
    %v3430 = vunpack.c.l.b16 %v1961
    %v3431 = vunpack.c.h.b16 %v1961
    %v3432 = vunpack.c.l.b16 %v1962
    %v3433 = vunpack.c.h.b16 %v1962
    %v3434 = vunpack.c.l.b16 %v1963
    %v3435 = vunpack.c.h.b16 %v1963
    %v3436 = vunpack.c.l.b16 %v1964
    %v3437 = vunpack.c.h.b16 %v1964
    %v3438 = vunpack.c.l.b16 %v1965
    %v3439 = vunpack.c.h.b16 %v1965
    %v3440 = vunpack.c.l.b16 %v1966
    %v3441 = vunpack.c.h.b16 %v1966
    %v3442 = vunpack.c.l.b16 %v1967
    %v3443 = vunpack.c.h.b16 %v1967
    %v3444 = vunpack.c.l.b16 %v1968
    %v3445 = vunpack.c.h.b16 %v1968
    %v3446 = vunpack.c.l.b16 %v1969
    %v3447 = vunpack.c.h.b16 %v1969
    %v3448 = vunpack.c.l.b16 %v1970
    %v3449 = vunpack.c.h.b16 %v1970
    %v3450 = vunpack.c.l.b16 %v1971
    %v3451 = vunpack.c.h.b16 %v1971
    %v3452 = vunpack.c.l.b16 %v1972
    %v3453 = vunpack.c.h.b16 %v1972
    %v3454 = vunpack.c.l.b16 %v1973
    %v3455 = vunpack.c.h.b16 %v1973
    %v3456 = vunpack.c.l.b16 %v1974
    %v3457 = vunpack.c.h.b16 %v1974
    %v3458 = vunpack.c.l.b16 %v1975
    %v3459 = vunpack.c.h.b16 %v1975
    %v3460 = vunpack.c.l.b16 %v1976
    %v3461 = vunpack.c.h.b16 %v1976
    %v3462 = vunpack.c.l.b16 %v1977
    %v3463 = vunpack.c.h.b16 %v1977
    %v3464 = vunpack.c.l.b16 %v1978
    %v3465 = vunpack.c.h.b16 %v1978
    %v3466 = vunpack.c.l.b16 %v1979
    %v3467 = vunpack.c.h.b16 %v1979
    %v3468 = vunpack.c.l.b16 %v1980
    %v3469 = vunpack.c.h.b16 %v1980
    %v3470 = vunpack.c.l.b16 %v1981
    %v3471 = vunpack.c.h.b16 %v1981
    %v3472 = vunpack.c.l.b16 %v1982
    %v3473 = vunpack.c.h.b16 %v1982
    %v3474 = vunpack.c.l.b16 %v1983
    %v3475 = vunpack.c.h.b16 %v1983
    %v3476 = vunpack.c.l.b16 %v1984
    %v3477 = vunpack.c.h.b16 %v1984
    %v3478 = vunpack.c.l.b16 %v1985
    %v3479 = vunpack.c.h.b16 %v1985
    %v3480 = vunpack.c.l.b16 %v1986
    %v3481 = vunpack.c.h.b16 %v1986
    %v3482 = vunpack.c.l.b16 %v1987
    %v3483 = vunpack.c.h.b16 %v1987
    %v3484 = vunpack.c.l.b16 %v1988
    %v3485 = vunpack.c.h.b16 %v1988
    %v3486 = vunpack.c.l.b16 %v1989
    %v3487 = vunpack.c.h.b16 %v1989
    %v3488 = vunpack.c.l.b16 %v1990
    %v3489 = vunpack.c.h.b16 %v1990
    %v3490 = vunpack.c.l.b16 %v1991
    %v3491 = vunpack.c.h.b16 %v1991
    %v3492 = vunpack.c.l.b16 %v1992
    %v3493 = vunpack.c.h.b16 %v1992
    %v3494 = vunpack.c.l.b16 %v1993
    %v3495 = vunpack.c.h.b16 %v1993
    %v3496 = vunpack.c.l.b16 %v1994
    %v3497 = vunpack.c.h.b16 %v1994
    %v3498 = vunpack.c.l.b16 %v1995
    %v3499 = vunpack.c.h.b16 %v1995
    %v3500 = vunpack.c.l.b16 %v1996
    %v3501 = vunpack.c.h.b16 %v1996
    %v3502 = vunpack.c.l.b16 %v1997
    %v3503 = vunpack.c.h.b16 %v1997
    %v3504 = vunpack.c.l.b16 %v1998
    %v3505 = vunpack.c.h.b16 %v1998
    %v3506 = vunpack.c.l.b16 %v1999
    %v3507 = vunpack.c.h.b16 %v1999
    %v3508 = vunpack.c.l.b16 %v2000
    %v3509 = vunpack.c.h.b16 %v2000
    %v3510 = vunpack.c.l.b16 %v2001
    %v3511 = vunpack.c.h.b16 %v2001
    %v3512 = vunpack.c.l.b16 %v2002
    %v3513 = vunpack.c.h.b16 %v2002
    %v3514 = vunpack.c.l.b16 %v2003
    %v3515 = vunpack.c.h.b16 %v2003
    %v3516 = vunpack.c.l.b16 %v2004
    %v3517 = vunpack.c.h.b16 %v2004
    %v3518 = vunpack.c.l.b16 %v2005
    %v3519 = vunpack.c.h.b16 %v2005
    %v3520 = vunpack.c.l.b16 %v2006
    %v3521 = vunpack.c.h.b16 %v2006
    %v3522 = vunpack.c.l.b16 %v2007
    %v3523 = vunpack.c.h.b16 %v2007
    %v3524 = vunpack.c.l.b16 %v2008
    %v3525 = vunpack.c.h.b16 %v2008
    %v3526 = vunpack.c.l.b16 %v2009
    %v3527 = vunpack.c.h.b16 %v2009
    %v3528 = vunpack.c.l.b16 %v2010
    %v3529 = vunpack.c.h.b16 %v2010
    %v3530 = vunpack.c.l.b16 %v2011
    %v3531 = vunpack.c.h.b16 %v2011
    %v3532 = vunpack.c.l.b16 %v2012
    %v3533 = vunpack.c.h.b16 %v2012
    %v3534 = vunpack.c.l.b16 %v2013
    %v3535 = vunpack.c.h.b16 %v2013
    %v3536 = vunpack.c.l.b16 %v2014
    %v3537 = vunpack.c.h.b16 %v2014
    %v3538 = vunpack.c.l.b16 %v2015
    %v3539 = vunpack.c.h.b16 %v2015
    %v3540 = vunpack.c.l.b16 %v2016
    %v3541 = vunpack.c.h.b16 %v2016
    %v3542 = vunpack.c.l.b16 %v2017
    %v3543 = vunpack.c.h.b16 %v2017
    %v3544 = vunpack.c.l.b16 %v2018
    %v3545 = vunpack.c.h.b16 %v2018
    %v3546 = vunpack.c.l.b16 %v2019
    %v3547 = vunpack.c.h.b16 %v2019
    %v3548 = vunpack.c.l.b16 %v2020
    %v3549 = vunpack.c.h.b16 %v2020
    %v3550 = vunpack.c.l.b16 %v2021
    %v3551 = vunpack.c.h.b16 %v2021
    %v3552 = vunpack.c.l.b16 %v2022
    %v3553 = vunpack.c.h.b16 %v2022
    %v3554 = vunpack.c.l.b16 %v2023
    %v3555 = vunpack.c.h.b16 %v2023
    %v3556 = vunpack.c.l.b16 %v2024
    %v3557 = vunpack.c.h.b16 %v2024
    %v3558 = vunpack.c.l.b16 %v2025
    %v3559 = vunpack.c.h.b16 %v2025
    %v3560 = vunpack.c.l.b16 %v2026
    %v3561 = vunpack.c.h.b16 %v2026
    %v3562 = vunpack.c.l.b16 %v2027
    %v3563 = vunpack.c.h.b16 %v2027
    %v3564 = vunpack.c.l.b16 %v2028
    %v3565 = vunpack.c.h.b16 %v2028
    %v3566 = vunpack.c.l.b16 %v2029
    %v3567 = vunpack.c.h.b16 %v2029
    %v3568 = vunpack.c.l.b16 %v2030
    %v3569 = vunpack.c.h.b16 %v2030
    %v3570 = vunpack.c.l.b16 %v2031
    %v3571 = vunpack.c.h.b16 %v2031
    %v3572 = vunpack.c.l.b16 %v2032
    %v3573 = vunpack.c.h.b16 %v2032
    %v3574 = vunpack.c.l.b16 %v2033
    %v3575 = vunpack.c.h.b16 %v2033
    %v3576 = vunpack.c.l.b16 %v2034
    %v3577 = vunpack.c.h.b16 %v2034
    %v3578 = vunpack.c.l.b16 %v2035
    %v3579 = vunpack.c.h.b16 %v2035
    %v3580 = vunpack.c.l.b16 %v2036
    %v3581 = vunpack.c.h.b16 %v2036
    %v3582 = vunpack.c.l.b16 %v2037
    %v3583 = vunpack.c.h.b16 %v2037
    %v3584 = vunpack.c.l.b16 %v2038
    %v3585 = vunpack.c.h.b16 %v2038
    %v3586 = vunpack.c.l.b16 %v2039
    %v3587 = vunpack.c.h.b16 %v2039
    %v3588 = vunpack.c.l.b16 %v2040
    %v3589 = vunpack.c.h.b16 %v2040
    %v3590 = vunpack.c.l.b16 %v2041
    %v3591 = vunpack.c.h.b16 %v2041
    %v3592 = vunpack.c.l.b16 %v2042
    %v3593 = vunpack.c.h.b16 %v2042
    %v3594 = vunpack.c.l.b16 %v2043
    %v3595 = vunpack.c.h.b16 %v2043
    %v3596 = vunpack.c.l.b16 %v2044
    %v3597 = vunpack.c.h.b16 %v2044
    %v3598 = vunpack.c.l.b16 %v2045
    %v3599 = vunpack.c.h.b16 %v2045
    %v3600 = vunpack.c.l.b16 %v2046
    %v3601 = vunpack.c.h.b16 %v2046
    %v3602 = vunpack.c.l.b16 %v2047
    %v3603 = vunpack.c.h.b16 %v2047
    %v3604 = vunpack.c.l.b16 %v2048
    %v3605 = vunpack.c.h.b16 %v2048
    %v3606 = vunpack.c.l.b16 %v2049
    %v3607 = vunpack.c.h.b16 %v2049
    %v3608 = vunpack.c.l.b16 %v2050
    %v3609 = vunpack.c.h.b16 %v2050
    %v3610 = vunpack.c.l.b16 %v2051
    %v3611 = vunpack.c.h.b16 %v2051
    %v3612 = vunpack.c.l.b16 %v2052
    %v3613 = vunpack.c.h.b16 %v2052
    %v3614 = vunpack.c.l.b16 %v2053
    %v3615 = vunpack.c.h.b16 %v2053
    %v3616 = vunpack.c.l.b16 %v2054
    %v3617 = vunpack.c.h.b16 %v2054
    %v3618 = vunpack.c.l.b16 %v2055
    %v3619 = vunpack.c.h.b16 %v2055
    %v3620 = vunpack.c.l.b16 %v2056
    %v3621 = vunpack.c.h.b16 %v2056
    %v3622 = vunpack.c.l.b16 %v2057
    %v3623 = vunpack.c.h.b16 %v2057
    %v3624 = vunpack.c.l.b16 %v2058
    %v3625 = vunpack.c.h.b16 %v2058
    %v3626 = vunpack.c.l.b16 %v2059
    %v3627 = vunpack.c.h.b16 %v2059
    %v3628 = vunpack.c.l.b16 %v2060
    %v3629 = vunpack.c.h.b16 %v2060
    %v3630 = vunpack.c.l.b16 %v2061
    %v3631 = vunpack.c.h.b16 %v2061
    %v3632 = vunpack.c.l.b16 %v2062
    %v3633 = vunpack.c.h.b16 %v2062
    %v3634 = vunpack.c.l.b16 %v2063
    %v3635 = vunpack.c.h.b16 %v2063
    %v3636 = vunpack.c.l.b16 %v2064
    %v3637 = vunpack.c.h.b16 %v2064
    %v3638 = vunpack.c.l.b16 %v2065
    %v3639 = vunpack.c.h.b16 %v2065
    %v3640 = vunpack.c.l.b16 %v2066
    %v3641 = vunpack.c.h.b16 %v2066
    %v3642 = vunpack.c.l.b16 %v2067
    %v3643 = vunpack.c.h.b16 %v2067
    %v3644 = vunpack.c.l.b16 %v2068
    %v3645 = vunpack.c.h.b16 %v2068
    %v3646 = vunpack.c.l.b16 %v2069
    %v3647 = vunpack.c.h.b16 %v2069
    %v3648 = vpack.c.b16 %v2632, %v2624
    %v3649 = vpack.c.b16 %v2633, %v2625
    %v3650 = vpack.c.b16 %v2634, %v2626
    %v3651 = vpack.c.b16 %v2635, %v2627
    %v3652 = vpack.c.b16 %v2636, %v2628
    %v3653 = vpack.c.b16 %v2637, %v2629
    %v3654 = vpack.c.b16 %v2638, %v2630
    %v3655 = vpack.c.b16 %v2639, %v2631
    %v3656 = vpack.c.b16 %v2648, %v2640
    %v3657 = vpack.c.b16 %v2649, %v2641
    %v3658 = vpack.c.b16 %v2650, %v2642
    %v3659 = vpack.c.b16 %v2651, %v2643
    %v3660 = vpack.c.b16 %v2652, %v2644
    %v3661 = vpack.c.b16 %v2653, %v2645
    %v3662 = vpack.c.b16 %v2654, %v2646
    %v3663 = vpack.c.b16 %v2655, %v2647
    %v3664 = vpack.c.b16 %v2664, %v2656
    %v3665 = vpack.c.b16 %v2665, %v2657
    %v3666 = vpack.c.b16 %v2666, %v2658
    %v3667 = vpack.c.b16 %v2667, %v2659
    %v3668 = vpack.c.b16 %v2668, %v2660
    %v3669 = vpack.c.b16 %v2669, %v2661
    %v3670 = vpack.c.b16 %v2670, %v2662
    %v3671 = vpack.c.b16 %v2671, %v2663
    %v3672 = vpack.c.b16 %v2680, %v2672
    %v3673 = vpack.c.b16 %v2681, %v2673
    %v3674 = vpack.c.b16 %v2682, %v2674
    %v3675 = vpack.c.b16 %v2683, %v2675
    %v3676 = vpack.c.b16 %v2684, %v2676
    %v3677 = vpack.c.b16 %v2685, %v2677
    %v3678 = vpack.c.b16 %v2686, %v2678
    %v3679 = vpack.c.b16 %v2687, %v2679
    %v3680 = vpack.c.b16 %v2696, %v2688
    %v3681 = vpack.c.b16 %v2697, %v2689
    %v3682 = vpack.c.b16 %v2698, %v2690
    %v3683 = vpack.c.b16 %v2699, %v2691
    %v3684 = vpack.c.b16 %v2700, %v2692
    %v3685 = vpack.c.b16 %v2701, %v2693
    %v3686 = vpack.c.b16 %v2702, %v2694
    %v3687 = vpack.c.b16 %v2703, %v2695
    %v3688 = vpack.c.b16 %v2712, %v2704
    %v3689 = vpack.c.b16 %v2713, %v2705
    %v3690 = vpack.c.b16 %v2714, %v2706
    %v3691 = vpack.c.b16 %v2715, %v2707
    %v3692 = vpack.c.b16 %v2716, %v2708
    %v3693 = vpack.c.b16 %v2717, %v2709
    %v3694 = vpack.c.b16 %v2718, %v2710
    %v3695 = vpack.c.b16 %v2719, %v2711
    %v3696 = vpack.c.b16 %v2728, %v2720
    %v3697 = vpack.c.b16 %v2729, %v2721
    %v3698 = vpack.c.b16 %v2730, %v2722
    %v3699 = vpack.c.b16 %v2731, %v2723
    %v3700 = vpack.c.b16 %v2732, %v2724
    %v3701 = vpack.c.b16 %v2733, %v2725
    %v3702 = vpack.c.b16 %v2734, %v2726
    %v3703 = vpack.c.b16 %v2735, %v2727
    %v3704 = vpack.c.b16 %v2744, %v2736
    %v3705 = vpack.c.b16 %v2745, %v2737
    %v3706 = vpack.c.b16 %v2746, %v2738
    %v3707 = vpack.c.b16 %v2747, %v2739
    %v3708 = vpack.c.b16 %v2748, %v2740
    %v3709 = vpack.c.b16 %v2749, %v2741
    %v3710 = vpack.c.b16 %v2750, %v2742
    %v3711 = vpack.c.b16 %v2751, %v2743
    %v3712 = vpack.c.b16 %v2760, %v2752
    %v3713 = vpack.c.b16 %v2761, %v2753
    %v3714 = vpack.c.b16 %v2762, %v2754
    %v3715 = vpack.c.b16 %v2763, %v2755
    %v3716 = vpack.c.b16 %v2764, %v2756
    %v3717 = vpack.c.b16 %v2765, %v2757
    %v3718 = vpack.c.b16 %v2766, %v2758
    %v3719 = vpack.c.b16 %v2767, %v2759
    %v3720 = vpack.c.b16 %v2776, %v2768
    %v3721 = vpack.c.b16 %v2777, %v2769
    %v3722 = vpack.c.b16 %v2778, %v2770
    %v3723 = vpack.c.b16 %v2779, %v2771
    %v3724 = vpack.c.b16 %v2780, %v2772
    %v3725 = vpack.c.b16 %v2781, %v2773
    %v3726 = vpack.c.b16 %v2782, %v2774
    %v3727 = vpack.c.b16 %v2783, %v2775
    %v3728 = vpack.c.b16 %v2792, %v2784
    %v3729 = vpack.c.b16 %v2793, %v2785
    %v3730 = vpack.c.b16 %v2794, %v2786
    %v3731 = vpack.c.b16 %v2795, %v2787
    %v3732 = vpack.c.b16 %v2796, %v2788
    %v3733 = vpack.c.b16 %v2797, %v2789
    %v3734 = vpack.c.b16 %v2798, %v2790
    %v3735 = vpack.c.b16 %v2799, %v2791
    %v3736 = vpack.c.b16 %v2808, %v2800
    %v3737 = vpack.c.b16 %v2809, %v2801
    %v3738 = vpack.c.b16 %v2810, %v2802
    %v3739 = vpack.c.b16 %v2811, %v2803
    %v3740 = vpack.c.b16 %v2812, %v2804
    %v3741 = vpack.c.b16 %v2813, %v2805
    %v3742 = vpack.c.b16 %v2814, %v2806
    %v3743 = vpack.c.b16 %v2815, %v2807
    %v3744 = vpack.c.b16 %v2824, %v2816
    %v3745 = vpack.c.b16 %v2825, %v2817
    %v3746 = vpack.c.b16 %v2826, %v2818
    %v3747 = vpack.c.b16 %v2827, %v2819
    %v3748 = vpack.c.b16 %v2828, %v2820
    %v3749 = vpack.c.b16 %v2829, %v2821
    %v3750 = vpack.c.b16 %v2830, %v2822
    %v3751 = vpack.c.b16 %v2831, %v2823
    %v3752 = vpack.c.b16 %v2840, %v2832
    %v3753 = vpack.c.b16 %v2841, %v2833
    %v3754 = vpack.c.b16 %v2842, %v2834
    %v3755 = vpack.c.b16 %v2843, %v2835
    %v3756 = vpack.c.b16 %v2844, %v2836
    %v3757 = vpack.c.b16 %v2845, %v2837
    %v3758 = vpack.c.b16 %v2846, %v2838
    %v3759 = vpack.c.b16 %v2847, %v2839
    %v3760 = vpack.c.b16 %v2856, %v2848
    %v3761 = vpack.c.b16 %v2857, %v2849
    %v3762 = vpack.c.b16 %v2858, %v2850
    %v3763 = vpack.c.b16 %v2859, %v2851
    %v3764 = vpack.c.b16 %v2860, %v2852
    %v3765 = vpack.c.b16 %v2861, %v2853
    %v3766 = vpack.c.b16 %v2862, %v2854
    %v3767 = vpack.c.b16 %v2863, %v2855
    %v3768 = vpack.c.b16 %v2872, %v2864
    %v3769 = vpack.c.b16 %v2873, %v2865
    %v3770 = vpack.c.b16 %v2874, %v2866
    %v3771 = vpack.c.b16 %v2875, %v2867
    %v3772 = vpack.c.b16 %v2876, %v2868
    %v3773 = vpack.c.b16 %v2877, %v2869
    %v3774 = vpack.c.b16 %v2878, %v2870
    %v3775 = vpack.c.b16 %v2879, %v2871
    %v3776 = vpack.c.b16 %v2888, %v2880
    %v3777 = vpack.c.b16 %v2889, %v2881
    %v3778 = vpack.c.b16 %v2890, %v2882
    %v3779 = vpack.c.b16 %v2891, %v2883
    %v3780 = vpack.c.b16 %v2892, %v2884
    %v3781 = vpack.c.b16 %v2893, %v2885
    %v3782 = vpack.c.b16 %v2894, %v2886
    %v3783 = vpack.c.b16 %v2895, %v2887
    %v3784 = vpack.c.b16 %v2904, %v2896
    %v3785 = vpack.c.b16 %v2905, %v2897
    %v3786 = vpack.c.b16 %v2906, %v2898
    %v3787 = vpack.c.b16 %v2907, %v2899
    %v3788 = vpack.c.b16 %v2908, %v2900
    %v3789 = vpack.c.b16 %v2909, %v2901
    %v3790 = vpack.c.b16 %v2910, %v2902
    %v3791 = vpack.c.b16 %v2911, %v2903
    %v3792 = vpack.c.b16 %v2920, %v2912
    %v3793 = vpack.c.b16 %v2921, %v2913
    %v3794 = vpack.c.b16 %v2922, %v2914
    %v3795 = vpack.c.b16 %v2923, %v2915
    %v3796 = vpack.c.b16 %v2924, %v2916
    %v3797 = vpack.c.b16 %v2925, %v2917
    %v3798 = vpack.c.b16 %v2926, %v2918
    %v3799 = vpack.c.b16 %v2927, %v2919
    %v3800 = vpack.c.b16 %v2936, %v2928
    %v3801 = vpack.c.b16 %v2937, %v2929
    %v3802 = vpack.c.b16 %v2938, %v2930
    %v3803 = vpack.c.b16 %v2939, %v2931
    %v3804 = vpack.c.b16 %v2940, %v2932
    %v3805 = vpack.c.b16 %v2941, %v2933
    %v3806 = vpack.c.b16 %v2942, %v2934
    %v3807 = vpack.c.b16 %v2943, %v2935
    %v3808 = vpack.c.b16 %v2952, %v2944
    %v3809 = vpack.c.b16 %v2953, %v2945
    %v3810 = vpack.c.b16 %v2954, %v2946
    %v3811 = vpack.c.b16 %v2955, %v2947
    %v3812 = vpack.c.b16 %v2956, %v2948
    %v3813 = vpack.c.b16 %v2957, %v2949
    %v3814 = vpack.c.b16 %v2958, %v2950
    %v3815 = vpack.c.b16 %v2959, %v2951
    %v3816 = vpack.c.b16 %v2968, %v2960
    %v3817 = vpack.c.b16 %v2969, %v2961
    %v3818 = vpack.c.b16 %v2970, %v2962
    %v3819 = vpack.c.b16 %v2971, %v2963
    %v3820 = vpack.c.b16 %v2972, %v2964
    %v3821 = vpack.c.b16 %v2973, %v2965
    %v3822 = vpack.c.b16 %v2974, %v2966
    %v3823 = vpack.c.b16 %v2975, %v2967
    %v3824 = vpack.c.b16 %v2984, %v2976
    %v3825 = vpack.c.b16 %v2985, %v2977
    %v3826 = vpack.c.b16 %v2986, %v2978
    %v3827 = vpack.c.b16 %v2987, %v2979
    %v3828 = vpack.c.b16 %v2988, %v2980
    %v3829 = vpack.c.b16 %v2989, %v2981
    %v3830 = vpack.c.b16 %v2990, %v2982
    %v3831 = vpack.c.b16 %v2991, %v2983
    %v3832 = vpack.c.b16 %v3000, %v2992
    %v3833 = vpack.c.b16 %v3001, %v2993
    %v3834 = vpack.c.b16 %v3002, %v2994
    %v3835 = vpack.c.b16 %v3003, %v2995
    %v3836 = vpack.c.b16 %v3004, %v2996
    %v3837 = vpack.c.b16 %v3005, %v2997
    %v3838 = vpack.c.b16 %v3006, %v2998
    %v3839 = vpack.c.b16 %v3007, %v2999
    %v3840 = vpack.c.b16 %v3016, %v3008
    %v3841 = vpack.c.b16 %v3017, %v3009
    %v3842 = vpack.c.b16 %v3018, %v3010
    %v3843 = vpack.c.b16 %v3019, %v3011
    %v3844 = vpack.c.b16 %v3020, %v3012
    %v3845 = vpack.c.b16 %v3021, %v3013
    %v3846 = vpack.c.b16 %v3022, %v3014
    %v3847 = vpack.c.b16 %v3023, %v3015
    %v3848 = vpack.c.b16 %v3032, %v3024
    %v3849 = vpack.c.b16 %v3033, %v3025
    %v3850 = vpack.c.b16 %v3034, %v3026
    %v3851 = vpack.c.b16 %v3035, %v3027
    %v3852 = vpack.c.b16 %v3036, %v3028
    %v3853 = vpack.c.b16 %v3037, %v3029
    %v3854 = vpack.c.b16 %v3038, %v3030
    %v3855 = vpack.c.b16 %v3039, %v3031
    %v3856 = vpack.c.b16 %v3048, %v3040
    %v3857 = vpack.c.b16 %v3049, %v3041
    %v3858 = vpack.c.b16 %v3050, %v3042
    %v3859 = vpack.c.b16 %v3051, %v3043
    %v3860 = vpack.c.b16 %v3052, %v3044
    %v3861 = vpack.c.b16 %v3053, %v3045
    %v3862 = vpack.c.b16 %v3054, %v3046
    %v3863 = vpack.c.b16 %v3055, %v3047
    %v3864 = vpack.c.b16 %v3064, %v3056
    %v3865 = vpack.c.b16 %v3065, %v3057
    %v3866 = vpack.c.b16 %v3066, %v3058
    %v3867 = vpack.c.b16 %v3067, %v3059
    %v3868 = vpack.c.b16 %v3068, %v3060
    %v3869 = vpack.c.b16 %v3069, %v3061
    %v3870 = vpack.c.b16 %v3070, %v3062
    %v3871 = vpack.c.b16 %v3071, %v3063
    %v3872 = vpack.c.b16 %v3080, %v3072
    %v3873 = vpack.c.b16 %v3081, %v3073
    %v3874 = vpack.c.b16 %v3082, %v3074
    %v3875 = vpack.c.b16 %v3083, %v3075
    %v3876 = vpack.c.b16 %v3084, %v3076
    %v3877 = vpack.c.b16 %v3085, %v3077
    %v3878 = vpack.c.b16 %v3086, %v3078
    %v3879 = vpack.c.b16 %v3087, %v3079
    %v3880 = vpack.c.b16 %v3096, %v3088
    %v3881 = vpack.c.b16 %v3097, %v3089
    %v3882 = vpack.c.b16 %v3098, %v3090
    %v3883 = vpack.c.b16 %v3099, %v3091
    %v3884 = vpack.c.b16 %v3100, %v3092
    %v3885 = vpack.c.b16 %v3101, %v3093
    %v3886 = vpack.c.b16 %v3102, %v3094
    %v3887 = vpack.c.b16 %v3103, %v3095
    %v3888 = vpack.c.b16 %v3112, %v3104
    %v3889 = vpack.c.b16 %v3113, %v3105
    %v3890 = vpack.c.b16 %v3114, %v3106
    %v3891 = vpack.c.b16 %v3115, %v3107
    %v3892 = vpack.c.b16 %v3116, %v3108
    %v3893 = vpack.c.b16 %v3117, %v3109
    %v3894 = vpack.c.b16 %v3118, %v3110
    %v3895 = vpack.c.b16 %v3119, %v3111
    %v3896 = vpack.c.b16 %v3128, %v3120
    %v3897 = vpack.c.b16 %v3129, %v3121
    %v3898 = vpack.c.b16 %v3130, %v3122
    %v3899 = vpack.c.b16 %v3131, %v3123
    %v3900 = vpack.c.b16 %v3132, %v3124
    %v3901 = vpack.c.b16 %v3133, %v3125
    %v3902 = vpack.c.b16 %v3134, %v3126
    %v3903 = vpack.c.b16 %v3135, %v3127
    %v3904 = vpack.c.b16 %v3144, %v3136
    %v3905 = vpack.c.b16 %v3145, %v3137
    %v3906 = vpack.c.b16 %v3146, %v3138
    %v3907 = vpack.c.b16 %v3147, %v3139
    %v3908 = vpack.c.b16 %v3148, %v3140
    %v3909 = vpack.c.b16 %v3149, %v3141
    %v3910 = vpack.c.b16 %v3150, %v3142
    %v3911 = vpack.c.b16 %v3151, %v3143
    %v3912 = vpack.c.b16 %v3160, %v3152
    %v3913 = vpack.c.b16 %v3161, %v3153
    %v3914 = vpack.c.b16 %v3162, %v3154
    %v3915 = vpack.c.b16 %v3163, %v3155
    %v3916 = vpack.c.b16 %v3164, %v3156
    %v3917 = vpack.c.b16 %v3165, %v3157
    %v3918 = vpack.c.b16 %v3166, %v3158
    %v3919 = vpack.c.b16 %v3167, %v3159
    %v3920 = vpack.c.b16 %v3176, %v3168
    %v3921 = vpack.c.b16 %v3177, %v3169
    %v3922 = vpack.c.b16 %v3178, %v3170
    %v3923 = vpack.c.b16 %v3179, %v3171
    %v3924 = vpack.c.b16 %v3180, %v3172
    %v3925 = vpack.c.b16 %v3181, %v3173
    %v3926 = vpack.c.b16 %v3182, %v3174
    %v3927 = vpack.c.b16 %v3183, %v3175
    %v3928 = vpack.c.b16 %v3192, %v3184
    %v3929 = vpack.c.b16 %v3193, %v3185
    %v3930 = vpack.c.b16 %v3194, %v3186
    %v3931 = vpack.c.b16 %v3195, %v3187
    %v3932 = vpack.c.b16 %v3196, %v3188
    %v3933 = vpack.c.b16 %v3197, %v3189
    %v3934 = vpack.c.b16 %v3198, %v3190
    %v3935 = vpack.c.b16 %v3199, %v3191
    %v3936 = vpack.c.b16 %v3208, %v3200
    %v3937 = vpack.c.b16 %v3209, %v3201
    %v3938 = vpack.c.b16 %v3210, %v3202
    %v3939 = vpack.c.b16 %v3211, %v3203
    %v3940 = vpack.c.b16 %v3212, %v3204
    %v3941 = vpack.c.b16 %v3213, %v3205
    %v3942 = vpack.c.b16 %v3214, %v3206
    %v3943 = vpack.c.b16 %v3215, %v3207
    %v3944 = vpack.c.b16 %v3224, %v3216
    %v3945 = vpack.c.b16 %v3225, %v3217
    %v3946 = vpack.c.b16 %v3226, %v3218
    %v3947 = vpack.c.b16 %v3227, %v3219
    %v3948 = vpack.c.b16 %v3228, %v3220
    %v3949 = vpack.c.b16 %v3229, %v3221
    %v3950 = vpack.c.b16 %v3230, %v3222
    %v3951 = vpack.c.b16 %v3231, %v3223
    %v3952 = vpack.c.b16 %v3240, %v3232
    %v3953 = vpack.c.b16 %v3241, %v3233
    %v3954 = vpack.c.b16 %v3242, %v3234
    %v3955 = vpack.c.b16 %v3243, %v3235
    %v3956 = vpack.c.b16 %v3244, %v3236
    %v3957 = vpack.c.b16 %v3245, %v3237
    %v3958 = vpack.c.b16 %v3246, %v3238
    %v3959 = vpack.c.b16 %v3247, %v3239
    %v3960 = vpack.c.b16 %v3256, %v3248
    %v3961 = vpack.c.b16 %v3257, %v3249
    %v3962 = vpack.c.b16 %v3258, %v3250
    %v3963 = vpack.c.b16 %v3259, %v3251
    %v3964 = vpack.c.b16 %v3260, %v3252
    %v3965 = vpack.c.b16 %v3261, %v3253
    %v3966 = vpack.c.b16 %v3262, %v3254
    %v3967 = vpack.c.b16 %v3263, %v3255
    %v3968 = vpack.c.b16 %v3272, %v3264
    %v3969 = vpack.c.b16 %v3273, %v3265
    %v3970 = vpack.c.b16 %v3274, %v3266
    %v3971 = vpack.c.b16 %v3275, %v3267
    %v3972 = vpack.c.b16 %v3276, %v3268
    %v3973 = vpack.c.b16 %v3277, %v3269
    %v3974 = vpack.c.b16 %v3278, %v3270
    %v3975 = vpack.c.b16 %v3279, %v3271
    %v3976 = vpack.c.b16 %v3288, %v3280
    %v3977 = vpack.c.b16 %v3289, %v3281
    %v3978 = vpack.c.b16 %v3290, %v3282
    %v3979 = vpack.c.b16 %v3291, %v3283
    %v3980 = vpack.c.b16 %v3292, %v3284
    %v3981 = vpack.c.b16 %v3293, %v3285
    %v3982 = vpack.c.b16 %v3294, %v3286
    %v3983 = vpack.c.b16 %v3295, %v3287
    %v3984 = vpack.c.b16 %v3304, %v3296
    %v3985 = vpack.c.b16 %v3305, %v3297
    %v3986 = vpack.c.b16 %v3306, %v3298
    %v3987 = vpack.c.b16 %v3307, %v3299
    %v3988 = vpack.c.b16 %v3308, %v3300
    %v3989 = vpack.c.b16 %v3309, %v3301
    %v3990 = vpack.c.b16 %v3310, %v3302
    %v3991 = vpack.c.b16 %v3311, %v3303
    %v3992 = vpack.c.b16 %v3320, %v3312
    %v3993 = vpack.c.b16 %v3321, %v3313
    %v3994 = vpack.c.b16 %v3322, %v3314
    %v3995 = vpack.c.b16 %v3323, %v3315
    %v3996 = vpack.c.b16 %v3324, %v3316
    %v3997 = vpack.c.b16 %v3325, %v3317
    %v3998 = vpack.c.b16 %v3326, %v3318
    %v3999 = vpack.c.b16 %v3327, %v3319
    %v4000 = vpack.c.b16 %v3336, %v3328
    %v4001 = vpack.c.b16 %v3337, %v3329
    %v4002 = vpack.c.b16 %v3338, %v3330
    %v4003 = vpack.c.b16 %v3339, %v3331
    %v4004 = vpack.c.b16 %v3340, %v3332
    %v4005 = vpack.c.b16 %v3341, %v3333
    %v4006 = vpack.c.b16 %v3342, %v3334
    %v4007 = vpack.c.b16 %v3343, %v3335
    %v4008 = vpack.c.b16 %v3352, %v3344
    %v4009 = vpack.c.b16 %v3353, %v3345
    %v4010 = vpack.c.b16 %v3354, %v3346
    %v4011 = vpack.c.b16 %v3355, %v3347
    %v4012 = vpack.c.b16 %v3356, %v3348
    %v4013 = vpack.c.b16 %v3357, %v3349
    %v4014 = vpack.c.b16 %v3358, %v3350
    %v4015 = vpack.c.b16 %v3359, %v3351
    %v4016 = vpack.c.b16 %v3368, %v3360
    %v4017 = vpack.c.b16 %v3369, %v3361
    %v4018 = vpack.c.b16 %v3370, %v3362
    %v4019 = vpack.c.b16 %v3371, %v3363
    %v4020 = vpack.c.b16 %v3372, %v3364
    %v4021 = vpack.c.b16 %v3373, %v3365
    %v4022 = vpack.c.b16 %v3374, %v3366
    %v4023 = vpack.c.b16 %v3375, %v3367
    %v4024 = vpack.c.b16 %v3384, %v3376
    %v4025 = vpack.c.b16 %v3385, %v3377
    %v4026 = vpack.c.b16 %v3386, %v3378
    %v4027 = vpack.c.b16 %v3387, %v3379
    %v4028 = vpack.c.b16 %v3388, %v3380
    %v4029 = vpack.c.b16 %v3389, %v3381
    %v4030 = vpack.c.b16 %v3390, %v3382
    %v4031 = vpack.c.b16 %v3391, %v3383
    %v4032 = vpack.c.b16 %v3400, %v3392
    %v4033 = vpack.c.b16 %v3401, %v3393
    %v4034 = vpack.c.b16 %v3402, %v3394
    %v4035 = vpack.c.b16 %v3403, %v3395
    %v4036 = vpack.c.b16 %v3404, %v3396
    %v4037 = vpack.c.b16 %v3405, %v3397
    %v4038 = vpack.c.b16 %v3406, %v3398
    %v4039 = vpack.c.b16 %v3407, %v3399
    %v4040 = vpack.c.b16 %v3416, %v3408
    %v4041 = vpack.c.b16 %v3417, %v3409
    %v4042 = vpack.c.b16 %v3418, %v3410
    %v4043 = vpack.c.b16 %v3419, %v3411
    %v4044 = vpack.c.b16 %v3420, %v3412
    %v4045 = vpack.c.b16 %v3421, %v3413
    %v4046 = vpack.c.b16 %v3422, %v3414
    %v4047 = vpack.c.b16 %v3423, %v3415
    %v4048 = vpack.c.b16 %v3432, %v3424
    %v4049 = vpack.c.b16 %v3433, %v3425
    %v4050 = vpack.c.b16 %v3434, %v3426
    %v4051 = vpack.c.b16 %v3435, %v3427
    %v4052 = vpack.c.b16 %v3436, %v3428
    %v4053 = vpack.c.b16 %v3437, %v3429
    %v4054 = vpack.c.b16 %v3438, %v3430
    %v4055 = vpack.c.b16 %v3439, %v3431
    %v4056 = vpack.c.b16 %v3448, %v3440
    %v4057 = vpack.c.b16 %v3449, %v3441
    %v4058 = vpack.c.b16 %v3450, %v3442
    %v4059 = vpack.c.b16 %v3451, %v3443
    %v4060 = vpack.c.b16 %v3452, %v3444
    %v4061 = vpack.c.b16 %v3453, %v3445
    %v4062 = vpack.c.b16 %v3454, %v3446
    %v4063 = vpack.c.b16 %v3455, %v3447
    %v4064 = vpack.c.b16 %v3464, %v3456
    %v4065 = vpack.c.b16 %v3465, %v3457
    %v4066 = vpack.c.b16 %v3466, %v3458
    %v4067 = vpack.c.b16 %v3467, %v3459
    %v4068 = vpack.c.b16 %v3468, %v3460
    %v4069 = vpack.c.b16 %v3469, %v3461
    %v4070 = vpack.c.b16 %v3470, %v3462
    %v4071 = vpack.c.b16 %v3471, %v3463
    %v4072 = vpack.c.b16 %v3480, %v3472
    %v4073 = vpack.c.b16 %v3481, %v3473
    %v4074 = vpack.c.b16 %v3482, %v3474
    %v4075 = vpack.c.b16 %v3483, %v3475
    %v4076 = vpack.c.b16 %v3484, %v3476
    %v4077 = vpack.c.b16 %v3485, %v3477
    %v4078 = vpack.c.b16 %v3486, %v3478
    %v4079 = vpack.c.b16 %v3487, %v3479
    %v4080 = vpack.c.b16 %v3496, %v3488
    %v4081 = vpack.c.b16 %v3497, %v3489
    %v4082 = vpack.c.b16 %v3498, %v3490
    %v4083 = vpack.c.b16 %v3499, %v3491
    %v4084 = vpack.c.b16 %v3500, %v3492
    %v4085 = vpack.c.b16 %v3501, %v3493
    %v4086 = vpack.c.b16 %v3502, %v3494
    %v4087 = vpack.c.b16 %v3503, %v3495
    %v4088 = vpack.c.b16 %v3512, %v3504
    %v4089 = vpack.c.b16 %v3513, %v3505
    %v4090 = vpack.c.b16 %v3514, %v3506
    %v4091 = vpack.c.b16 %v3515, %v3507
    %v4092 = vpack.c.b16 %v3516, %v3508
    %v4093 = vpack.c.b16 %v3517, %v3509
    %v4094 = vpack.c.b16 %v3518, %v3510
    %v4095 = vpack.c.b16 %v3519, %v3511
    %v4096 = vpack.c.b16 %v3528, %v3520
    %v4097 = vpack.c.b16 %v3529, %v3521
    %v4098 = vpack.c.b16 %v3530, %v3522
    %v4099 = vpack.c.b16 %v3531, %v3523
    %v4100 = vpack.c.b16 %v3532, %v3524
    %v4101 = vpack.c.b16 %v3533, %v3525
    %v4102 = vpack.c.b16 %v3534, %v3526
    %v4103 = vpack.c.b16 %v3535, %v3527
    %v4104 = vpack.c.b16 %v3544, %v3536
    %v4105 = vpack.c.b16 %v3545, %v3537
    %v4106 = vpack.c.b16 %v3546, %v3538
    %v4107 = vpack.c.b16 %v3547, %v3539
    %v4108 = vpack.c.b16 %v3548, %v3540
    %v4109 = vpack.c.b16 %v3549, %v3541
    %v4110 = vpack.c.b16 %v3550, %v3542
    %v4111 = vpack.c.b16 %v3551, %v3543
    %v4112 = vpack.c.b16 %v3560, %v3552
    %v4113 = vpack.c.b16 %v3561, %v3553
    %v4114 = vpack.c.b16 %v3562, %v3554
    %v4115 = vpack.c.b16 %v3563, %v3555
    %v4116 = vpack.c.b16 %v3564, %v3556
    %v4117 = vpack.c.b16 %v3565, %v3557
    %v4118 = vpack.c.b16 %v3566, %v3558
    %v4119 = vpack.c.b16 %v3567, %v3559
    %v4120 = vpack.c.b16 %v3576, %v3568
    %v4121 = vpack.c.b16 %v3577, %v3569
    %v4122 = vpack.c.b16 %v3578, %v3570
    %v4123 = vpack.c.b16 %v3579, %v3571
    %v4124 = vpack.c.b16 %v3580, %v3572
    %v4125 = vpack.c.b16 %v3581, %v3573
    %v4126 = vpack.c.b16 %v3582, %v3574
    %v4127 = vpack.c.b16 %v3583, %v3575
    %v4128 = vpack.c.b16 %v3592, %v3584
    %v4129 = vpack.c.b16 %v3593, %v3585
    %v4130 = vpack.c.b16 %v3594, %v3586
    %v4131 = vpack.c.b16 %v3595, %v3587
    %v4132 = vpack.c.b16 %v3596, %v3588
    %v4133 = vpack.c.b16 %v3597, %v3589
    %v4134 = vpack.c.b16 %v3598, %v3590
    %v4135 = vpack.c.b16 %v3599, %v3591
    %v4136 = vpack.c.b16 %v3608, %v3600
    %v4137 = vpack.c.b16 %v3609, %v3601
    %v4138 = vpack.c.b16 %v3610, %v3602
    %v4139 = vpack.c.b16 %v3611, %v3603
    %v4140 = vpack.c.b16 %v3612, %v3604
    %v4141 = vpack.c.b16 %v3613, %v3605
    %v4142 = vpack.c.b16 %v3614, %v3606
    %v4143 = vpack.c.b16 %v3615, %v3607
    %v4144 = vpack.c.b16 %v3624, %v3616
    %v4145 = vpack.c.b16 %v3625, %v3617
    %v4146 = vpack.c.b16 %v3626, %v3618
    %v4147 = vpack.c.b16 %v3627, %v3619
    %v4148 = vpack.c.b16 %v3628, %v3620
    %v4149 = vpack.c.b16 %v3629, %v3621
    %v4150 = vpack.c.b16 %v3630, %v3622
    %v4151 = vpack.c.b16 %v3631, %v3623
    %v4152 = vpack.c.b16 %v3640, %v3632
    %v4153 = vpack.c.b16 %v3641, %v3633
    %v4154 = vpack.c.b16 %v3642, %v3634
    %v4155 = vpack.c.b16 %v3643, %v3635
    %v4156 = vpack.c.b16 %v3644, %v3636
    %v4157 = vpack.c.b16 %v3645, %v3637
    %v4158 = vpack.c.b16 %v3646, %v3638
    %v4159 = vpack.c.b16 %v3647, %v3639
    %4672 = vmatprep.subr.bf16.mxu0 %v3649
    %4673 = vmatpush1.bf16.msra.mxu0 %v3648
    %4674 = vmatprep.subr.bf16.mxu0 %v3657
    %4675 = vmatpush1.bf16.msra.mxu0 %v3656
    %4676 = vmatprep.subr.bf16.mxu0 %v3665
    %4677 = vmatpush1.bf16.msra.mxu0 %v3664
    %4678 = vmatprep.subr.bf16.mxu0 %v3673
    %4679 = vmatpush1.bf16.msra.mxu0 %v3672
    %4680 = vmatprep.subr.bf16.mxu0 %v3681
    %4681 = vmatpush1.bf16.msra.mxu0 %v3680
    %4682 = vmatprep.subr.bf16.mxu0 %v3689
    %4683 = vmatpush1.bf16.msra.mxu0 %v3688
    %4684 = vmatprep.subr.bf16.mxu0 %v3697
    %4685 = vmatpush1.bf16.msra.mxu0 %v3696
    %4686 = vmatprep.subr.bf16.mxu0 %v3705
    %4687 = vmatpush1.bf16.msra.mxu0 %v3704
    %4688 = vmatprep.subr.bf16.mxu0 %v3713
    %4689 = vmatpush1.bf16.msra.mxu0 %v3712
    %4690 = vmatprep.subr.bf16.mxu0 %v3721
    %4691 = vmatpush1.bf16.msra.mxu0 %v3720
    %4692 = vmatprep.subr.bf16.mxu0 %v3729
    %4693 = vmatpush1.bf16.msra.mxu0 %v3728
    %4694 = vmatprep.subr.bf16.mxu0 %v3737
    %4695 = vmatpush1.bf16.msra.mxu0 %v3736
    %4696 = vmatprep.subr.bf16.mxu0 %v3745
    %4697 = vmatpush1.bf16.msra.mxu0 %v3744
    %4698 = vmatprep.subr.bf16.mxu0 %v3753
    %4699 = vmatpush1.bf16.msra.mxu0 %v3752
    %4700 = vmatprep.subr.bf16.mxu0 %v3761
    %4701 = vmatpush1.bf16.msra.mxu0 %v3760
    %4702 = vmatprep.subr.bf16.mxu0 %v3769
    %4703 = vmatpush1.bf16.msra.mxu0 %v3768
    %4704 = vmatprep.mubr.bf16.mxu0 %v1431
    %4705 = vmatmul.mubr.bf16.gmra.mrb[0].mxu0 %v1430
    %v4706 = vpop.f32.mrb[0].mxu0
    %v4707 = vadd.f32 %v2075, %v4706
    %v4708 = vpop.f32.mrb[0].mxu0
    %v4709 = vadd.f32 %v2079, %v4708
    %v4710 = vpop.f32.mrb[0].mxu0
    %v4711 = vadd.f32 %v2075, %v4710
    %v4712 = vpop.f32.mrb[0].mxu0
    %v4713 = vadd.f32 %v2079, %v4712
    %4714 = vmatprep.mubr.bf16.mxu0 %v1439
    %4715 = vmatmul.mubr.bf16.gmra.mrb[0].mxu0 %v1438
    %v4716 = vpop.f32.mrb[0].mxu0
    %v4717 = vadd.f32 %v2075, %v4716
    %v4718 = vpop.f32.mrb[0].mxu0
    %v4719 = vadd.f32 %v2079, %v4718
    %v4720 = vpop.f32.mrb[0].mxu0
    %v4721 = vadd.f32 %v2075, %v4720
    %v4722 = vpop.f32.mrb[0].mxu0
    %v4723 = vadd.f32 %v2079, %v4722
    %4724 = vmatprep.mubr.bf16.mxu0 %v1447
    %4725 = vmatmul.mubr.bf16.gmra.mrb[0].mxu0 %v1446
    %v4726 = vpop.f32.mrb[0].mxu0
    %v4727 = vadd.f32 %v2075, %v4726
    %v4728 = vpop.f32.mrb[0].mxu0
    %v4729 = vadd.f32 %v2079, %v4728
    %v4730 = vpop.f32.mrb[0].mxu0
    %v4731 = vadd.f32 %v2075, %v4730
    %v4732 = vpop.f32.mrb[0].mxu0
    %v4733 = vadd.f32 %v2079, %v4732
    %4734 = vmatprep.mubr.bf16.mxu0 %v1455
    %4735 = vmatmul.mubr.bf16.gmra.mrb[0].mxu0 %v1454
    %v4736 = vpop.f32.mrb[0].mxu0
    %v4737 = vadd.f32 %v2075, %v4736
    %v4738 = vpop.f32.mrb[0].mxu0
    %v4739 = vadd.f32 %v2079, %v4738
    %v4740 = vpop.f32.mrb[0].mxu0
    %v4741 = vadd.f32 %v2075, %v4740
    %v4742 = vpop.f32.mrb[0].mxu0
    %v4743 = vadd.f32 %v2079, %v4742
    %4744 = vmatprep.mubr.bf16.mxu0 %v1463
    %4745 = vmatmul.mubr.bf16.gmra.mrb[0].mxu0 %v1462
    %v4746 = vpop.f32.mrb[0].mxu0
    %v4747 = vadd.f32 %v2075, %v4746
    %v4748 = vpop.f32.mrb[0].mxu0
    %v4749 = vadd.f32 %v2079, %v4748
    %v4750 = vpop.f32.mrb[0].mxu0
    %v4751 = vadd.f32 %v2075, %v4750
    %v4752 = vpop.f32.mrb[0].mxu0
    %v4753 = vadd.f32 %v2079, %v4752
    %4754 = vmatprep.mubr.bf16.mxu0 %v1471
    %4755 = vmatmul.mubr.bf16.gmra.mrb[0].mxu0 %v1470
    %v4756 = vpop.f32.mrb[0].mxu0
    %v4757 = vadd.f32 %v2075, %v4756
    %v4758 = vpop.f32.mrb[0].mxu0
    %v4759 = vadd.f32 %v2079, %v4758
    %v4760 = vpop.f32.mrb[0].mxu0
    %v4761 = vadd.f32 %v2075, %v4760
    %v4762 = vpop.f32.mrb[0].mxu0
    %v4763 = vadd.f32 %v2079, %v4762
    %4764 = vmatprep.mubr.bf16.mxu0 %v1479
    %4765 = vmatmul.mubr.bf16.gmra.mrb[0].mxu0 %v1478
    %v4766 = vpop.f32.mrb[0].mxu0
    %v4767 = vadd.f32 %v2075, %v4766
    %v4768 = vpop.f32.mrb[0].mxu0
    %v4769 = vadd.f32 %v2079, %v4768
    %v4770 = vpop.f32.mrb[0].mxu0
    %v4771 = vadd.f32 %v2075, %v4770
    %v4772 = vpop.f32.mrb[0].mxu0
    %v4773 = vadd.f32 %v2079, %v4772
    %4774 = vmatprep.mubr.bf16.mxu0 %v1487
    %4775 = vmatmul.mubr.bf16.gmra.mrb[0].mxu0 %v1486
    %v4776 = vpop.f32.mrb[0].mxu0
    %v4777 = vadd.f32 %v2075, %v4776
    %v4778 = vpop.f32.mrb[0].mxu0
    %v4779 = vadd.f32 %v2079, %v4778
    %v4780 = vpop.f32.mrb[0].mxu0
    %v4781 = vadd.f32 %v2075, %v4780
    %v4782 = vpop.f32.mrb[0].mxu0
    %v4783 = vadd.f32 %v2079, %v4782
    %4784 = vmatprep.mubr.bf16.mxu0 %v1495
    %4785 = vmatmul.mubr.bf16.gmra.mrb[0].mxu0 %v1494
    %v4786 = vpop.f32.mrb[0].mxu0
    %v4787 = vadd.f32 %v2075, %v4786
    %v4788 = vpop.f32.mrb[0].mxu0
    %v4789 = vadd.f32 %v2079, %v4788
    %v4790 = vpop.f32.mrb[0].mxu0
    %v4791 = vadd.f32 %v2075, %v4790
    %v4792 = vpop.f32.mrb[0].mxu0
    %v4793 = vadd.f32 %v2079, %v4792
    %4794 = vmatprep.mubr.bf16.mxu0 %v1503
    %4795 = vmatmul.mubr.bf16.gmra.mrb[0].mxu0 %v1502
    %v4796 = vpop.f32.mrb[0].mxu0
    %v4797 = vadd.f32 %v2075, %v4796
    %v4798 = vpop.f32.mrb[0].mxu0
    %v4799 = vadd.f32 %v2079, %v4798
    %v4800 = vpop.f32.mrb[0].mxu0
    %v4801 = vadd.f32 %v2075, %v4800
    %v4802 = vpop.f32.mrb[0].mxu0
    %v4803 = vadd.f32 %v2079, %v4802
    %4804 = vmatprep.mubr.bf16.mxu0 %v1511
    %4805 = vmatmul.mubr.bf16.gmra.mrb[0].mxu0 %v1510
    %v4806 = vpop.f32.mrb[0].mxu0
    %v4807 = vadd.f32 %v2075, %v4806
    %v4808 = vpop.f32.mrb[0].mxu0
    %v4809 = vadd.f32 %v2079, %v4808
    %v4810 = vpop.f32.mrb[0].mxu0
    %v4811 = vadd.f32 %v2075, %v4810
    %v4812 = vpop.f32.mrb[0].mxu0
    %v4813 = vadd.f32 %v2079, %v4812
    %4814 = vmatprep.mubr.bf16.mxu0 %v1519
    %4815 = vmatmul.mubr.bf16.gmra.mrb[0].mxu0 %v1518
    %v4816 = vpop.f32.mrb[0].mxu0
    %v4817 = vadd.f32 %v2075, %v4816
    %v4818 = vpop.f32.mrb[0].mxu0
    %v4819 = vadd.f32 %v2079, %v4818
    %v4820 = vpop.f32.mrb[0].mxu0
    %v4821 = vadd.f32 %v2075, %v4820
    %v4822 = vpop.f32.mrb[0].mxu0
    %v4823 = vadd.f32 %v2079, %v4822
    %4824 = vmatprep.mubr.bf16.mxu0 %v1527
    %4825 = vmatmul.mubr.bf16.gmra.mrb[0].mxu0 %v1526
    %v4826 = vpop.f32.mrb[0].mxu0
    %v4827 = vadd.f32 %v2075, %v4826
    %v4828 = vpop.f32.mrb[0].mxu0
    %v4829 = vadd.f32 %v2079, %v4828
    %v4830 = vpop.f32.mrb[0].mxu0
    %v4831 = vadd.f32 %v2075, %v4830
    %v4832 = vpop.f32.mrb[0].mxu0
    %v4833 = vadd.f32 %v2079, %v4832
    %4834 = vmatprep.mubr.bf16.mxu0 %v1535
    %4835 = vmatmul.mubr.bf16.gmra.mrb[0].mxu0 %v1534
    %v4836 = vpop.f32.mrb[0].mxu0
    %v4837 = vadd.f32 %v2075, %v4836
    %v4838 = vpop.f32.mrb[0].mxu0
    %v4839 = vadd.f32 %v2079, %v4838
    %v4840 = vpop.f32.mrb[0].mxu0
    %v4841 = vadd.f32 %v2075, %v4840
    %v4842 = vpop.f32.mrb[0].mxu0
    %v4843 = vadd.f32 %v2079, %v4842
    %4844 = vmatprep.mubr.bf16.mxu0 %v1543
    %4845 = vmatmul.mubr.bf16.gmra.mrb[0].mxu0 %v1542
    %v4846 = vpop.f32.mrb[0].mxu0
    %v4847 = vadd.f32 %v2075, %v4846
    %v4848 = vpop.f32.mrb[0].mxu0
    %v4849 = vadd.f32 %v2079, %v4848
    %v4850 = vpop.f32.mrb[0].mxu0
    %v4851 = vadd.f32 %v2075, %v4850
    %v4852 = vpop.f32.mrb[0].mxu0
    %v4853 = vadd.f32 %v2079, %v4852
    %4854 = vmatprep.mubr.bf16.mxu0 %v1551
    %4855 = vmatmul.mubr.bf16.gmra.mrb[0].mxu0 %v1550
    %v4856 = vpop.f32.mrb[0].mxu0
    %v4857 = vadd.f32 %v2075, %v4856
    %v4858 = vpop.f32.mrb[0].mxu0
    %v4859 = vadd.f32 %v2079, %v4858
    %v4860 = vpop.f32.mrb[0].mxu0
    %v4861 = vadd.f32 %v2075, %v4860
    %v4862 = vpop.f32.mrb[0].mxu0
    %v4863 = vadd.f32 %v2079, %v4862
    %4864 = vdwg.mxu0
    %4865 = vmatprep.subr.bf16.mxu0 %v3777
    %4866 = vmatpush1.bf16.msra.mxu0 %v3776
    %4867 = vmatprep.subr.bf16.mxu0 %v3785
    %4868 = vmatpush1.bf16.msra.mxu0 %v3784
    %4869 = vmatprep.subr.bf16.mxu0 %v3793
    %4870 = vmatpush1.bf16.msra.mxu0 %v3792
    %4871 = vmatprep.subr.bf16.mxu0 %v3801
    %4872 = vmatpush1.bf16.msra.mxu0 %v3800
    %4873 = vmatprep.subr.bf16.mxu0 %v3809
    %4874 = vmatpush1.bf16.msra.mxu0 %v3808
    %4875 = vmatprep.subr.bf16.mxu0 %v3817
    %4876 = vmatpush1.bf16.msra.mxu0 %v3816
    %4877 = vmatprep.subr.bf16.mxu0 %v3825
    %4878 = vmatpush1.bf16.msra.mxu0 %v3824
    %4879 = vmatprep.subr.bf16.mxu0 %v3833
    %4880 = vmatpush1.bf16.msra.mxu0 %v3832
    %4881 = vmatprep.subr.bf16.mxu0 %v3841
    %4882 = vmatpush1.bf16.msra.mxu0 %v3840
    %4883 = vmatprep.subr.bf16.mxu0 %v3849
    %4884 = vmatpush1.bf16.msra.mxu0 %v3848
    %4885 = vmatprep.subr.bf16.mxu0 %v3857
    %4886 = vmatpush1.bf16.msra.mxu0 %v3856
    %4887 = vmatprep.subr.bf16.mxu0 %v3865
    %4888 = vmatpush1.bf16.msra.mxu0 %v3864
    %4889 = vmatprep.subr.bf16.mxu0 %v3873
    %4890 = vmatpush1.bf16.msra.mxu0 %v3872
    %4891 = vmatprep.subr.bf16.mxu0 %v3881
    %4892 = vmatpush1.bf16.msra.mxu0 %v3880
    %4893 = vmatprep.subr.bf16.mxu0 %v3889
    %4894 = vmatpush1.bf16.msra.mxu0 %v3888
    %4895 = vmatprep.subr.bf16.mxu0 %v3897
    %4896 = vmatpush1.bf16.msra.mxu0 %v3896
    %4897 = vmatprep.mubr.bf16.mxu0 %v1433
    %4898 = vmatmul.mubr.bf16.gmra.mrb[0].mxu0 %v1432
    %v4899 = vpop.f32.mrb[0].mxu0
    %v4900 = vadd.f32 %v4707, %v4899
    %v4901 = vpop.f32.mrb[0].mxu0
    %v4902 = vadd.f32 %v4709, %v4901
    %v4903 = vpop.f32.mrb[0].mxu0
    %v4904 = vadd.f32 %v4711, %v4903
    %v4905 = vpop.f32.mrb[0].mxu0
    %v4906 = vadd.f32 %v4713, %v4905
    %4907 = vmatprep.mubr.bf16.mxu0 %v1441
    %4908 = vmatmul.mubr.bf16.gmra.mrb[0].mxu0 %v1440
    %v4909 = vpop.f32.mrb[0].mxu0
    %v4910 = vadd.f32 %v4717, %v4909
    %v4911 = vpop.f32.mrb[0].mxu0
    %v4912 = vadd.f32 %v4719, %v4911
    %v4913 = vpop.f32.mrb[0].mxu0
    %v4914 = vadd.f32 %v4721, %v4913
    %v4915 = vpop.f32.mrb[0].mxu0
    %v4916 = vadd.f32 %v4723, %v4915
    %4917 = vmatprep.mubr.bf16.mxu0 %v1449
    %4918 = vmatmul.mubr.bf16.gmra.mrb[0].mxu0 %v1448
    %v4919 = vpop.f32.mrb[0].mxu0
    %v4920 = vadd.f32 %v4727, %v4919
    %v4921 = vpop.f32.mrb[0].mxu0
    %v4922 = vadd.f32 %v4729, %v4921
    %v4923 = vpop.f32.mrb[0].mxu0
    %v4924 = vadd.f32 %v4731, %v4923
    %v4925 = vpop.f32.mrb[0].mxu0
    %v4926 = vadd.f32 %v4733, %v4925
    %4927 = vmatprep.mubr.bf16.mxu0 %v1457
    %4928 = vmatmul.mubr.bf16.gmra.mrb[0].mxu0 %v1456
    %v4929 = vpop.f32.mrb[0].mxu0
    %v4930 = vadd.f32 %v4737, %v4929
    %v4931 = vpop.f32.mrb[0].mxu0
    %v4932 = vadd.f32 %v4739, %v4931
    %v4933 = vpop.f32.mrb[0].mxu0
    %v4934 = vadd.f32 %v4741, %v4933
    %v4935 = vpop.f32.mrb[0].mxu0
    %v4936 = vadd.f32 %v4743, %v4935
    %4937 = vmatprep.mubr.bf16.mxu0 %v1465
    %4938 = vmatmul.mubr.bf16.gmra.mrb[0].mxu0 %v1464
    %v4939 = vpop.f32.mrb[0].mxu0
    %v4940 = vadd.f32 %v4747, %v4939
    %v4941 = vpop.f32.mrb[0].mxu0
    %v4942 = vadd.f32 %v4749, %v4941
    %v4943 = vpop.f32.mrb[0].mxu0
    %v4944 = vadd.f32 %v4751, %v4943
    %v4945 = vpop.f32.mrb[0].mxu0
    %v4946 = vadd.f32 %v4753, %v4945
    %4947 = vmatprep.mubr.bf16.mxu0 %v1473
    %4948 = vmatmul.mubr.bf16.gmra.mrb[0].mxu0 %v1472
    %v4949 = vpop.f32.mrb[0].mxu0
    %v4950 = vadd.f32 %v4757, %v4949
    %v4951 = vpop.f32.mrb[0].mxu0
    %v4952 = vadd.f32 %v4759, %v4951
    %v4953 = vpop.f32.mrb[0].mxu0
    %v4954 = vadd.f32 %v4761, %v4953
    %v4955 = vpop.f32.mrb[0].mxu0
    %v4956 = vadd.f32 %v4763, %v4955
    %4957 = vmatprep.mubr.bf16.mxu0 %v1481
    %4958 = vmatmul.mubr.bf16.gmra.mrb[0].mxu0 %v1480
    %v4959 = vpop.f32.mrb[0].mxu0
    %v4960 = vadd.f32 %v4767, %v4959
    %v4961 = vpop.f32.mrb[0].mxu0
    %v4962 = vadd.f32 %v4769, %v4961
    %v4963 = vpop.f32.mrb[0].mxu0
    %v4964 = vadd.f32 %v4771, %v4963
    %v4965 = vpop.f32.mrb[0].mxu0
    %v4966 = vadd.f32 %v4773, %v4965
    %4967 = vmatprep.mubr.bf16.mxu0 %v1489
    %4968 = vmatmul.mubr.bf16.gmra.mrb[0].mxu0 %v1488
    %v4969 = vpop.f32.mrb[0].mxu0
    %v4970 = vadd.f32 %v4777, %v4969
    %v4971 = vpop.f32.mrb[0].mxu0
    %v4972 = vadd.f32 %v4779, %v4971
    %v4973 = vpop.f32.mrb[0].mxu0
    %v4974 = vadd.f32 %v4781, %v4973
    %v4975 = vpop.f32.mrb[0].mxu0
    %v4976 = vadd.f32 %v4783, %v4975
    %4977 = vmatprep.mubr.bf16.mxu0 %v1497
    %4978 = vmatmul.mubr.bf16.gmra.mrb[0].mxu0 %v1496
    %v4979 = vpop.f32.mrb[0].mxu0
    %v4980 = vadd.f32 %v4787, %v4979
    %v4981 = vpop.f32.mrb[0].mxu0
    %v4982 = vadd.f32 %v4789, %v4981
    %v4983 = vpop.f32.mrb[0].mxu0
    %v4984 = vadd.f32 %v4791, %v4983
    %v4985 = vpop.f32.mrb[0].mxu0
    %v4986 = vadd.f32 %v4793, %v4985
    %4987 = vmatprep.mubr.bf16.mxu0 %v1505
    %4988 = vmatmul.mubr.bf16.gmra.mrb[0].mxu0 %v1504
    %v4989 = vpop.f32.mrb[0].mxu0
    %v4990 = vadd.f32 %v4797, %v4989
    %v4991 = vpop.f32.mrb[0].mxu0
    %v4992 = vadd.f32 %v4799, %v4991
    %v4993 = vpop.f32.mrb[0].mxu0
    %v4994 = vadd.f32 %v4801, %v4993
    %v4995 = vpop.f32.mrb[0].mxu0
    %v4996 = vadd.f32 %v4803, %v4995
    %4997 = vmatprep.mubr.bf16.mxu0 %v1513
    %4998 = vmatmul.mubr.bf16.gmra.mrb[0].mxu0 %v1512
    %v4999 = vpop.f32.mrb[0].mxu0
    %v5000 = vadd.f32 %v4807, %v4999
    %v5001 = vpop.f32.mrb[0].mxu0
    %v5002 = vadd.f32 %v4809, %v5001
    %v5003 = vpop.f32.mrb[0].mxu0
    %v5004 = vadd.f32 %v4811, %v5003
    %v5005 = vpop.f32.mrb[0].mxu0
    %v5006 = vadd.f32 %v4813, %v5005
    %5007 = vmatprep.mubr.bf16.mxu0 %v1521
    %5008 = vmatmul.mubr.bf16.gmra.mrb[0].mxu0 %v1520
    %v5009 = vpop.f32.mrb[0].mxu0
    %v5010 = vadd.f32 %v4817, %v5009
    %v5011 = vpop.f32.mrb[0].mxu0
    %v5012 = vadd.f32 %v4819, %v5011
    %v5013 = vpop.f32.mrb[0].mxu0
    %v5014 = vadd.f32 %v4821, %v5013
    %v5015 = vpop.f32.mrb[0].mxu0
    %v5016 = vadd.f32 %v4823, %v5015
    %5017 = vmatprep.mubr.bf16.mxu0 %v1529
    %5018 = vmatmul.mubr.bf16.gmra.mrb[0].mxu0 %v1528
    %v5019 = vpop.f32.mrb[0].mxu0
    %v5020 = vadd.f32 %v4827, %v5019
    %v5021 = vpop.f32.mrb[0].mxu0
    %v5022 = vadd.f32 %v4829, %v5021
    %v5023 = vpop.f32.mrb[0].mxu0
    %v5024 = vadd.f32 %v4831, %v5023
    %v5025 = vpop.f32.mrb[0].mxu0
    %v5026 = vadd.f32 %v4833, %v5025
    %5027 = vmatprep.mubr.bf16.mxu0 %v1537
    %5028 = vmatmul.mubr.bf16.gmra.mrb[0].mxu0 %v1536
    %v5029 = vpop.f32.mrb[0].mxu0
    %v5030 = vadd.f32 %v4837, %v5029
    %v5031 = vpop.f32.mrb[0].mxu0
    %v5032 = vadd.f32 %v4839, %v5031
    %v5033 = vpop.f32.mrb[0].mxu0
    %v5034 = vadd.f32 %v4841, %v5033
    %v5035 = vpop.f32.mrb[0].mxu0
    %v5036 = vadd.f32 %v4843, %v5035
    %5037 = vmatprep.mubr.bf16.mxu0 %v1545
    %5038 = vmatmul.mubr.bf16.gmra.mrb[0].mxu0 %v1544
    %v5039 = vpop.f32.mrb[0].mxu0
    %v5040 = vadd.f32 %v4847, %v5039
    %v5041 = vpop.f32.mrb[0].mxu0
    %v5042 = vadd.f32 %v4849, %v5041
    %v5043 = vpop.f32.mrb[0].mxu0
    %v5044 = vadd.f32 %v4851, %v5043
    %v5045 = vpop.f32.mrb[0].mxu0
    %v5046 = vadd.f32 %v4853, %v5045
    %5047 = vmatprep.mubr.bf16.mxu0 %v1553
    %5048 = vmatmul.mubr.bf16.gmra.mrb[0].mxu0 %v1552
    %v5049 = vpop.f32.mrb[0].mxu0
    %v5050 = vadd.f32 %v4857, %v5049
    %v5051 = vpop.f32.mrb[0].mxu0
    %v5052 = vadd.f32 %v4859, %v5051
    %v5053 = vpop.f32.mrb[0].mxu0
    %v5054 = vadd.f32 %v4861, %v5053
    %v5055 = vpop.f32.mrb[0].mxu0
    %v5056 = vadd.f32 %v4863, %v5055
    %5057 = vdwg.mxu0
    %5058 = vmatprep.subr.bf16.mxu0 %v3905
    %5059 = vmatpush1.bf16.msra.mxu0 %v3904
    %5060 = vmatprep.subr.bf16.mxu0 %v3913
    %5061 = vmatpush1.bf16.msra.mxu0 %v3912
    %5062 = vmatprep.subr.bf16.mxu0 %v3921
    %5063 = vmatpush1.bf16.msra.mxu0 %v3920
    %5064 = vmatprep.subr.bf16.mxu0 %v3929
    %5065 = vmatpush1.bf16.msra.mxu0 %v3928
    %5066 = vmatprep.subr.bf16.mxu0 %v3937
    %5067 = vmatpush1.bf16.msra.mxu0 %v3936
    %5068 = vmatprep.subr.bf16.mxu0 %v3945
    %5069 = vmatpush1.bf16.msra.mxu0 %v3944
    %5070 = vmatprep.subr.bf16.mxu0 %v3953
    %5071 = vmatpush1.bf16.msra.mxu0 %v3952
    %5072 = vmatprep.subr.bf16.mxu0 %v3961
    %5073 = vmatpush1.bf16.msra.mxu0 %v3960
    %5074 = vmatprep.subr.bf16.mxu0 %v3969
    %5075 = vmatpush1.bf16.msra.mxu0 %v3968
    %5076 = vmatprep.subr.bf16.mxu0 %v3977
    %5077 = vmatpush1.bf16.msra.mxu0 %v3976
    %5078 = vmatprep.subr.bf16.mxu0 %v3985
    %5079 = vmatpush1.bf16.msra.mxu0 %v3984
    %5080 = vmatprep.subr.bf16.mxu0 %v3993
    %5081 = vmatpush1.bf16.msra.mxu0 %v3992
    %5082 = vmatprep.subr.bf16.mxu0 %v4001
    %5083 = vmatpush1.bf16.msra.mxu0 %v4000
    %5084 = vmatprep.subr.bf16.mxu0 %v4009
    %5085 = vmatpush1.bf16.msra.mxu0 %v4008
    %5086 = vmatprep.subr.bf16.mxu0 %v4017
    %5087 = vmatpush1.bf16.msra.mxu0 %v4016
    %5088 = vmatprep.subr.bf16.mxu0 %v4025
    %5089 = vmatpush1.bf16.msra.mxu0 %v4024
    %5090 = vmatprep.mubr.bf16.mxu0 %v1435
    %5091 = vmatmul.mubr.bf16.gmra.mrb[0].mxu0 %v1434
    %v5092 = vpop.f32.mrb[0].mxu0
    %v5093 = vadd.f32 %v4900, %v5092
    %v5094 = vpop.f32.mrb[0].mxu0
    %v5095 = vadd.f32 %v4902, %v5094
    %v5096 = vpop.f32.mrb[0].mxu0
    %v5097 = vadd.f32 %v4904, %v5096
    %v5098 = vpop.f32.mrb[0].mxu0
    %v5099 = vadd.f32 %v4906, %v5098
    %5100 = vmatprep.mubr.bf16.mxu0 %v1443
    %5101 = vmatmul.mubr.bf16.gmra.mrb[0].mxu0 %v1442
    %v5102 = vpop.f32.mrb[0].mxu0
    %v5103 = vadd.f32 %v4910, %v5102
    %v5104 = vpop.f32.mrb[0].mxu0
    %v5105 = vadd.f32 %v4912, %v5104
    %v5106 = vpop.f32.mrb[0].mxu0
    %v5107 = vadd.f32 %v4914, %v5106
    %v5108 = vpop.f32.mrb[0].mxu0
    %v5109 = vadd.f32 %v4916, %v5108
    %5110 = vmatprep.mubr.bf16.mxu0 %v1451
    %5111 = vmatmul.mubr.bf16.gmra.mrb[0].mxu0 %v1450
    %v5112 = vpop.f32.mrb[0].mxu0
    %v5113 = vadd.f32 %v4920, %v5112
    %v5114 = vpop.f32.mrb[0].mxu0
    %v5115 = vadd.f32 %v4922, %v5114
    %v5116 = vpop.f32.mrb[0].mxu0
    %v5117 = vadd.f32 %v4924, %v5116
    %v5118 = vpop.f32.mrb[0].mxu0
    %v5119 = vadd.f32 %v4926, %v5118
    %5120 = vmatprep.mubr.bf16.mxu0 %v1459
    %5121 = vmatmul.mubr.bf16.gmra.mrb[0].mxu0 %v1458
    %v5122 = vpop.f32.mrb[0].mxu0
    %v5123 = vadd.f32 %v4930, %v5122
    %v5124 = vpop.f32.mrb[0].mxu0
    %v5125 = vadd.f32 %v4932, %v5124
    %v5126 = vpop.f32.mrb[0].mxu0
    %v5127 = vadd.f32 %v4934, %v5126
    %v5128 = vpop.f32.mrb[0].mxu0
    %v5129 = vadd.f32 %v4936, %v5128
    %5130 = vmatprep.mubr.bf16.mxu0 %v1467
    %5131 = vmatmul.mubr.bf16.gmra.mrb[0].mxu0 %v1466
    %v5132 = vpop.f32.mrb[0].mxu0
    %v5133 = vadd.f32 %v4940, %v5132
    %v5134 = vpop.f32.mrb[0].mxu0
    %v5135 = vadd.f32 %v4942, %v5134
    %v5136 = vpop.f32.mrb[0].mxu0
    %v5137 = vadd.f32 %v4944, %v5136
    %v5138 = vpop.f32.mrb[0].mxu0
    %v5139 = vadd.f32 %v4946, %v5138
    %5140 = vmatprep.mubr.bf16.mxu0 %v1475
    %5141 = vmatmul.mubr.bf16.gmra.mrb[0].mxu0 %v1474
    %v5142 = vpop.f32.mrb[0].mxu0
    %v5143 = vadd.f32 %v4950, %v5142
    %v5144 = vpop.f32.mrb[0].mxu0
    %v5145 = vadd.f32 %v4952, %v5144
    %v5146 = vpop.f32.mrb[0].mxu0
    %v5147 = vadd.f32 %v4954, %v5146
    %v5148 = vpop.f32.mrb[0].mxu0
    %v5149 = vadd.f32 %v4956, %v5148
    %5150 = vmatprep.mubr.bf16.mxu0 %v1483
    %5151 = vmatmul.mubr.bf16.gmra.mrb[0].mxu0 %v1482
    %v5152 = vpop.f32.mrb[0].mxu0
    %v5153 = vadd.f32 %v4960, %v5152
    %v5154 = vpop.f32.mrb[0].mxu0
    %v5155 = vadd.f32 %v4962, %v5154
    %v5156 = vpop.f32.mrb[0].mxu0
    %v5157 = vadd.f32 %v4964, %v5156
    %v5158 = vpop.f32.mrb[0].mxu0
    %v5159 = vadd.f32 %v4966, %v5158
    %5160 = vmatprep.mubr.bf16.mxu0 %v1491
    %5161 = vmatmul.mubr.bf16.gmra.mrb[0].mxu0 %v1490
    %v5162 = vpop.f32.mrb[0].mxu0
    %v5163 = vadd.f32 %v4970, %v5162
    %v5164 = vpop.f32.mrb[0].mxu0
    %v5165 = vadd.f32 %v4972, %v5164
    %v5166 = vpop.f32.mrb[0].mxu0
    %v5167 = vadd.f32 %v4974, %v5166
    %v5168 = vpop.f32.mrb[0].mxu0
    %v5169 = vadd.f32 %v4976, %v5168
    %5170 = vmatprep.mubr.bf16.mxu0 %v1499
    %5171 = vmatmul.mubr.bf16.gmra.mrb[0].mxu0 %v1498
    %v5172 = vpop.f32.mrb[0].mxu0
    %v5173 = vadd.f32 %v4980, %v5172
    %v5174 = vpop.f32.mrb[0].mxu0
    %v5175 = vadd.f32 %v4982, %v5174
    %v5176 = vpop.f32.mrb[0].mxu0
    %v5177 = vadd.f32 %v4984, %v5176
    %v5178 = vpop.f32.mrb[0].mxu0
    %v5179 = vadd.f32 %v4986, %v5178
    %5180 = vmatprep.mubr.bf16.mxu0 %v1507
    %5181 = vmatmul.mubr.bf16.gmra.mrb[0].mxu0 %v1506
    %v5182 = vpop.f32.mrb[0].mxu0
    %v5183 = vadd.f32 %v4990, %v5182
    %v5184 = vpop.f32.mrb[0].mxu0
    %v5185 = vadd.f32 %v4992, %v5184
    %v5186 = vpop.f32.mrb[0].mxu0
    %v5187 = vadd.f32 %v4994, %v5186
    %v5188 = vpop.f32.mrb[0].mxu0
    %v5189 = vadd.f32 %v4996, %v5188
    %5190 = vmatprep.mubr.bf16.mxu0 %v1515
    %5191 = vmatmul.mubr.bf16.gmra.mrb[0].mxu0 %v1514
    %v5192 = vpop.f32.mrb[0].mxu0
    %v5193 = vadd.f32 %v5000, %v5192
    %v5194 = vpop.f32.mrb[0].mxu0
    %v5195 = vadd.f32 %v5002, %v5194
    %v5196 = vpop.f32.mrb[0].mxu0
    %v5197 = vadd.f32 %v5004, %v5196
    %v5198 = vpop.f32.mrb[0].mxu0
    %v5199 = vadd.f32 %v5006, %v5198
    %5200 = vmatprep.mubr.bf16.mxu0 %v1523
    %5201 = vmatmul.mubr.bf16.gmra.mrb[0].mxu0 %v1522
    %v5202 = vpop.f32.mrb[0].mxu0
    %v5203 = vadd.f32 %v5010, %v5202
    %v5204 = vpop.f32.mrb[0].mxu0
    %v5205 = vadd.f32 %v5012, %v5204
    %v5206 = vpop.f32.mrb[0].mxu0
    %v5207 = vadd.f32 %v5014, %v5206
    %v5208 = vpop.f32.mrb[0].mxu0
    %v5209 = vadd.f32 %v5016, %v5208
    %5210 = vmatprep.mubr.bf16.mxu0 %v1531
    %5211 = vmatmul.mubr.bf16.gmra.mrb[0].mxu0 %v1530
    %v5212 = vpop.f32.mrb[0].mxu0
    %v5213 = vadd.f32 %v5020, %v5212
    %v5214 = vpop.f32.mrb[0].mxu0
    %v5215 = vadd.f32 %v5022, %v5214
    %v5216 = vpop.f32.mrb[0].mxu0
    %v5217 = vadd.f32 %v5024, %v5216
    %v5218 = vpop.f32.mrb[0].mxu0
    %v5219 = vadd.f32 %v5026, %v5218
    %5220 = vmatprep.mubr.bf16.mxu0 %v1539
    %5221 = vmatmul.mubr.bf16.gmra.mrb[0].mxu0 %v1538
    %v5222 = vpop.f32.mrb[0].mxu0
    %v5223 = vadd.f32 %v5030, %v5222
    %v5224 = vpop.f32.mrb[0].mxu0
    %v5225 = vadd.f32 %v5032, %v5224
    %v5226 = vpop.f32.mrb[0].mxu0
    %v5227 = vadd.f32 %v5034, %v5226
    %v5228 = vpop.f32.mrb[0].mxu0
    %v5229 = vadd.f32 %v5036, %v5228
    %5230 = vmatprep.mubr.bf16.mxu0 %v1547
    %5231 = vmatmul.mubr.bf16.gmra.mrb[0].mxu0 %v1546
    %v5232 = vpop.f32.mrb[0].mxu0
    %v5233 = vadd.f32 %v5040, %v5232
    %v5234 = vpop.f32.mrb[0].mxu0
    %v5235 = vadd.f32 %v5042, %v5234
    %v5236 = vpop.f32.mrb[0].mxu0
    %v5237 = vadd.f32 %v5044, %v5236
    %v5238 = vpop.f32.mrb[0].mxu0
    %v5239 = vadd.f32 %v5046, %v5238
    %5240 = vmatprep.mubr.bf16.mxu0 %v1555
    %5241 = vmatmul.mubr.bf16.gmra.mrb[0].mxu0 %v1554
    %v5242 = vpop.f32.mrb[0].mxu0
    %v5243 = vadd.f32 %v5050, %v5242
    %v5244 = vpop.f32.mrb[0].mxu0
    %v5245 = vadd.f32 %v5052, %v5244
    %v5246 = vpop.f32.mrb[0].mxu0
    %v5247 = vadd.f32 %v5054, %v5246
    %v5248 = vpop.f32.mrb[0].mxu0
    %v5249 = vadd.f32 %v5056, %v5248
    %5250 = vdwg.mxu0
    %5251 = vmatprep.subr.bf16.mxu0 %v4033
    %5252 = vmatpush1.bf16.msra.mxu0 %v4032
    %5253 = vmatprep.subr.bf16.mxu0 %v4041
    %5254 = vmatpush1.bf16.msra.mxu0 %v4040
    %5255 = vmatprep.subr.bf16.mxu0 %v4049
    %5256 = vmatpush1.bf16.msra.mxu0 %v4048
    %5257 = vmatprep.subr.bf16.mxu0 %v4057
    %5258 = vmatpush1.bf16.msra.mxu0 %v4056
    %5259 = vmatprep.subr.bf16.mxu0 %v4065
    %5260 = vmatpush1.bf16.msra.mxu0 %v4064
    %5261 = vmatprep.subr.bf16.mxu0 %v4073
    %5262 = vmatpush1.bf16.msra.mxu0 %v4072
    %5263 = vmatprep.subr.bf16.mxu0 %v4081
    %5264 = vmatpush1.bf16.msra.mxu0 %v4080
    %5265 = vmatprep.subr.bf16.mxu0 %v4089
    %5266 = vmatpush1.bf16.msra.mxu0 %v4088
    %5267 = vmatprep.subr.bf16.mxu0 %v4097
    %5268 = vmatpush1.bf16.msra.mxu0 %v4096
    %5269 = vmatprep.subr.bf16.mxu0 %v4105
    %5270 = vmatpush1.bf16.msra.mxu0 %v4104
    %5271 = vmatprep.subr.bf16.mxu0 %v4113
    %5272 = vmatpush1.bf16.msra.mxu0 %v4112
    %5273 = vmatprep.subr.bf16.mxu0 %v4121
    %5274 = vmatpush1.bf16.msra.mxu0 %v4120
    %5275 = vmatprep.subr.bf16.mxu0 %v4129
    %5276 = vmatpush1.bf16.msra.mxu0 %v4128
    %5277 = vmatprep.subr.bf16.mxu0 %v4137
    %5278 = vmatpush1.bf16.msra.mxu0 %v4136
    %5279 = vmatprep.subr.bf16.mxu0 %v4145
    %5280 = vmatpush1.bf16.msra.mxu0 %v4144
    %5281 = vmatprep.subr.bf16.mxu0 %v4153
    %5282 = vmatpush1.bf16.msra.mxu0 %v4152
    %5283 = vmatprep.mubr.bf16.mxu0 %v1437
    %5284 = vmatmul.mubr.bf16.gmra.mrb[0].mxu0 %v1436
    %v5285 = vpop.f32.mrb[0].mxu0
    %v5286 = vadd.f32 %v5093, %v5285
    %v5287 = vpop.f32.mrb[0].mxu0
    %v5288 = vadd.f32 %v5095, %v5287
    %v5289 = vpop.f32.mrb[0].mxu0
    %v5290 = vadd.f32 %v5097, %v5289
    %v5291 = vpop.f32.mrb[0].mxu0
    %v5292 = vadd.f32 %v5099, %v5291
    %5293 = vmatprep.mubr.bf16.mxu0 %v1445
    %5294 = vmatmul.mubr.bf16.gmra.mrb[0].mxu0 %v1444
    %v5295 = vpop.f32.mrb[0].mxu0
    %v5296 = vadd.f32 %v5103, %v5295
    %v5297 = vpop.f32.mrb[0].mxu0
    %v5298 = vadd.f32 %v5105, %v5297
    %v5299 = vpop.f32.mrb[0].mxu0
    %v5300 = vadd.f32 %v5107, %v5299
    %v5301 = vpop.f32.mrb[0].mxu0
    %v5302 = vadd.f32 %v5109, %v5301
    %5303 = vmatprep.mubr.bf16.mxu0 %v1453
    %5304 = vmatmul.mubr.bf16.gmra.mrb[0].mxu0 %v1452
    %v5305 = vpop.f32.mrb[0].mxu0
    %v5306 = vadd.f32 %v5113, %v5305
    %v5307 = vpop.f32.mrb[0].mxu0
    %v5308 = vadd.f32 %v5115, %v5307
    %v5309 = vpop.f32.mrb[0].mxu0
    %v5310 = vadd.f32 %v5117, %v5309
    %v5311 = vpop.f32.mrb[0].mxu0
    %v5312 = vadd.f32 %v5119, %v5311
    %5313 = vmatprep.mubr.bf16.mxu0 %v1461
    %5314 = vmatmul.mubr.bf16.gmra.mrb[0].mxu0 %v1460
    %v5315 = vpop.f32.mrb[0].mxu0
    %v5316 = vadd.f32 %v5123, %v5315
    %v5317 = vpop.f32.mrb[0].mxu0
    %v5318 = vadd.f32 %v5125, %v5317
    %v5319 = vpop.f32.mrb[0].mxu0
    %v5320 = vadd.f32 %v5127, %v5319
    %v5321 = vpop.f32.mrb[0].mxu0
    %v5322 = vadd.f32 %v5129, %v5321
    %5323 = vmatprep.mubr.bf16.mxu0 %v1469
    %5324 = vmatmul.mubr.bf16.gmra.mrb[0].mxu0 %v1468
    %v5325 = vpop.f32.mrb[0].mxu0
    %v5326 = vadd.f32 %v5133, %v5325
    %v5327 = vpop.f32.mrb[0].mxu0
    %v5328 = vadd.f32 %v5135, %v5327
    %v5329 = vpop.f32.mrb[0].mxu0
    %v5330 = vadd.f32 %v5137, %v5329
    %v5331 = vpop.f32.mrb[0].mxu0
    %v5332 = vadd.f32 %v5139, %v5331
    %5333 = vmatprep.mubr.bf16.mxu0 %v1477
    %5334 = vmatmul.mubr.bf16.gmra.mrb[0].mxu0 %v1476
    %v5335 = vpop.f32.mrb[0].mxu0
    %v5336 = vadd.f32 %v5143, %v5335
    %v5337 = vpop.f32.mrb[0].mxu0
    %v5338 = vadd.f32 %v5145, %v5337
    %v5339 = vpop.f32.mrb[0].mxu0
    %v5340 = vadd.f32 %v5147, %v5339
    %v5341 = vpop.f32.mrb[0].mxu0
    %v5342 = vadd.f32 %v5149, %v5341
    %5343 = vmatprep.mubr.bf16.mxu0 %v1485
    %5344 = vmatmul.mubr.bf16.gmra.mrb[0].mxu0 %v1484
    %v5345 = vpop.f32.mrb[0].mxu0
    %v5346 = vadd.f32 %v5153, %v5345
    %v5347 = vpop.f32.mrb[0].mxu0
    %v5348 = vadd.f32 %v5155, %v5347
    %v5349 = vpop.f32.mrb[0].mxu0
    %v5350 = vadd.f32 %v5157, %v5349
    %v5351 = vpop.f32.mrb[0].mxu0
    %v5352 = vadd.f32 %v5159, %v5351
    %5353 = vmatprep.mubr.bf16.mxu0 %v1493
    %5354 = vmatmul.mubr.bf16.gmra.mrb[0].mxu0 %v1492
    %v5355 = vpop.f32.mrb[0].mxu0
    %v5356 = vadd.f32 %v5163, %v5355
    %v5357 = vpop.f32.mrb[0].mxu0
    %v5358 = vadd.f32 %v5165, %v5357
    %v5359 = vpop.f32.mrb[0].mxu0
    %v5360 = vadd.f32 %v5167, %v5359
    %v5361 = vpop.f32.mrb[0].mxu0
    %v5362 = vadd.f32 %v5169, %v5361
    %5363 = vmatprep.mubr.bf16.mxu0 %v1501
    %5364 = vmatmul.mubr.bf16.gmra.mrb[0].mxu0 %v1500
    %v5365 = vpop.f32.mrb[0].mxu0
    %v5366 = vadd.f32 %v5173, %v5365
    %v5367 = vpop.f32.mrb[0].mxu0
    %v5368 = vadd.f32 %v5175, %v5367
    %v5369 = vpop.f32.mrb[0].mxu0
    %v5370 = vadd.f32 %v5177, %v5369
    %v5371 = vpop.f32.mrb[0].mxu0
    %v5372 = vadd.f32 %v5179, %v5371
    %5373 = vmatprep.mubr.bf16.mxu0 %v1509
    %5374 = vmatmul.mubr.bf16.gmra.mrb[0].mxu0 %v1508
    %v5375 = vpop.f32.mrb[0].mxu0
    %v5376 = vadd.f32 %v5183, %v5375
    %v5377 = vpop.f32.mrb[0].mxu0
    %v5378 = vadd.f32 %v5185, %v5377
    %v5379 = vpop.f32.mrb[0].mxu0
    %v5380 = vadd.f32 %v5187, %v5379
    %v5381 = vpop.f32.mrb[0].mxu0
    %v5382 = vadd.f32 %v5189, %v5381
    %5383 = vmatprep.mubr.bf16.mxu0 %v1517
    %5384 = vmatmul.mubr.bf16.gmra.mrb[0].mxu0 %v1516
    %v5385 = vpop.f32.mrb[0].mxu0
    %v5386 = vadd.f32 %v5193, %v5385
    %v5387 = vpop.f32.mrb[0].mxu0
    %v5388 = vadd.f32 %v5195, %v5387
    %v5389 = vpop.f32.mrb[0].mxu0
    %v5390 = vadd.f32 %v5197, %v5389
    %v5391 = vpop.f32.mrb[0].mxu0
    %v5392 = vadd.f32 %v5199, %v5391
    %5393 = vmatprep.mubr.bf16.mxu0 %v1525
    %5394 = vmatmul.mubr.bf16.gmra.mrb[0].mxu0 %v1524
    %v5395 = vpop.f32.mrb[0].mxu0
    %v5396 = vadd.f32 %v5203, %v5395
    %v5397 = vpop.f32.mrb[0].mxu0
    %v5398 = vadd.f32 %v5205, %v5397
    %v5399 = vpop.f32.mrb[0].mxu0
    %v5400 = vadd.f32 %v5207, %v5399
    %v5401 = vpop.f32.mrb[0].mxu0
    %v5402 = vadd.f32 %v5209, %v5401
    %5403 = vmatprep.mubr.bf16.mxu0 %v1533
    %5404 = vmatmul.mubr.bf16.gmra.mrb[0].mxu0 %v1532
    %v5405 = vpop.f32.mrb[0].mxu0
    %v5406 = vadd.f32 %v5213, %v5405
    %v5407 = vpop.f32.mrb[0].mxu0
    %v5408 = vadd.f32 %v5215, %v5407
    %v5409 = vpop.f32.mrb[0].mxu0
    %v5410 = vadd.f32 %v5217, %v5409
    %v5411 = vpop.f32.mrb[0].mxu0
    %v5412 = vadd.f32 %v5219, %v5411
    %5413 = vmatprep.mubr.bf16.mxu0 %v1541
    %5414 = vmatmul.mubr.bf16.gmra.mrb[0].mxu0 %v1540
    %v5415 = vpop.f32.mrb[0].mxu0
    %v5416 = vadd.f32 %v5223, %v5415
    %v5417 = vpop.f32.mrb[0].mxu0
    %v5418 = vadd.f32 %v5225, %v5417
    %v5419 = vpop.f32.mrb[0].mxu0
    %v5420 = vadd.f32 %v5227, %v5419
    %v5421 = vpop.f32.mrb[0].mxu0
    %v5422 = vadd.f32 %v5229, %v5421
    %5423 = vmatprep.mubr.bf16.mxu0 %v1549
    %5424 = vmatmul.mubr.bf16.gmra.mrb[0].mxu0 %v1548
    %v5425 = vpop.f32.mrb[0].mxu0
    %v5426 = vadd.f32 %v5233, %v5425
    %v5427 = vpop.f32.mrb[0].mxu0
    %v5428 = vadd.f32 %v5235, %v5427
    %v5429 = vpop.f32.mrb[0].mxu0
    %v5430 = vadd.f32 %v5237, %v5429
    %v5431 = vpop.f32.mrb[0].mxu0
    %v5432 = vadd.f32 %v5239, %v5431
    %5433 = vmatprep.mubr.bf16.mxu0 %v1557
    %5434 = vmatmul.mubr.bf16.gmra.mrb[0].mxu0 %v1556
    %v5435 = vpop.f32.mrb[0].mxu0
    %v5436 = vadd.f32 %v5243, %v5435
    %v5437 = vpop.f32.mrb[0].mxu0
    %v5438 = vadd.f32 %v5245, %v5437
    %v5439 = vpop.f32.mrb[0].mxu0
    %v5440 = vadd.f32 %v5247, %v5439
    %v5441 = vpop.f32.mrb[0].mxu0
    %v5442 = vadd.f32 %v5249, %v5441
    %5443 = vdwg.mxu0
    %5444 = vmatprep.subr.bf16.mxu0 %v3651
    %5445 = vmatpush1.bf16.msra.mxu0 %v3650
    %5446 = vmatprep.subr.bf16.mxu0 %v3659
    %5447 = vmatpush1.bf16.msra.mxu0 %v3658
    %5448 = vmatprep.subr.bf16.mxu0 %v3667
    %5449 = vmatpush1.bf16.msra.mxu0 %v3666
    %5450 = vmatprep.subr.bf16.mxu0 %v3675
    %5451 = vmatpush1.bf16.msra.mxu0 %v3674
    %5452 = vmatprep.subr.bf16.mxu0 %v3683
    %5453 = vmatpush1.bf16.msra.mxu0 %v3682
    %5454 = vmatprep.subr.bf16.mxu0 %v3691
    %5455 = vmatpush1.bf16.msra.mxu0 %v3690
    %5456 = vmatprep.subr.bf16.mxu0 %v3699
    %5457 = vmatpush1.bf16.msra.mxu0 %v3698
    %5458 = vmatprep.subr.bf16.mxu0 %v3707
    %5459 = vmatpush1.bf16.msra.mxu0 %v3706
    %5460 = vmatprep.subr.bf16.mxu0 %v3715
    %5461 = vmatpush1.bf16.msra.mxu0 %v3714
    %5462 = vmatprep.subr.bf16.mxu0 %v3723
    %5463 = vmatpush1.bf16.msra.mxu0 %v3722
    %5464 = vmatprep.subr.bf16.mxu0 %v3731
    %5465 = vmatpush1.bf16.msra.mxu0 %v3730
    %5466 = vmatprep.subr.bf16.mxu0 %v3739
    %5467 = vmatpush1.bf16.msra.mxu0 %v3738
    %5468 = vmatprep.subr.bf16.mxu0 %v3747
    %5469 = vmatpush1.bf16.msra.mxu0 %v3746
    %5470 = vmatprep.subr.bf16.mxu0 %v3755
    %5471 = vmatpush1.bf16.msra.mxu0 %v3754
    %5472 = vmatprep.subr.bf16.mxu0 %v3763
    %5473 = vmatpush1.bf16.msra.mxu0 %v3762
    %5474 = vmatprep.subr.bf16.mxu0 %v3771
    %5475 = vmatpush1.bf16.msra.mxu0 %v3770
    %5476 = vmatprep.mubr.bf16.mxu0 %v1431
    %5477 = vmatmul.mubr.bf16.gmra.mrb[0].mxu0 %v1430
    %v5478 = vpop.f32.mrb[0].mxu0
    %v5479 = vadd.f32 %v2083, %v5478
    %v5480 = vpop.f32.mrb[0].mxu0
    %v5481 = vadd.f32 %v2087, %v5480
    %v5482 = vpop.f32.mrb[0].mxu0
    %v5483 = vadd.f32 %v2083, %v5482
    %v5484 = vpop.f32.mrb[0].mxu0
    %v5485 = vadd.f32 %v2087, %v5484
    %5486 = vmatprep.mubr.bf16.mxu0 %v1439
    %5487 = vmatmul.mubr.bf16.gmra.mrb[0].mxu0 %v1438
    %v5488 = vpop.f32.mrb[0].mxu0
    %v5489 = vadd.f32 %v2083, %v5488
    %v5490 = vpop.f32.mrb[0].mxu0
    %v5491 = vadd.f32 %v2087, %v5490
    %v5492 = vpop.f32.mrb[0].mxu0
    %v5493 = vadd.f32 %v2083, %v5492
    %v5494 = vpop.f32.mrb[0].mxu0
    %v5495 = vadd.f32 %v2087, %v5494
    %5496 = vmatprep.mubr.bf16.mxu0 %v1447
    %5497 = vmatmul.mubr.bf16.gmra.mrb[0].mxu0 %v1446
    %v5498 = vpop.f32.mrb[0].mxu0
    %v5499 = vadd.f32 %v2083, %v5498
    %v5500 = vpop.f32.mrb[0].mxu0
    %v5501 = vadd.f32 %v2087, %v5500
    %v5502 = vpop.f32.mrb[0].mxu0
    %v5503 = vadd.f32 %v2083, %v5502
    %v5504 = vpop.f32.mrb[0].mxu0
    %v5505 = vadd.f32 %v2087, %v5504
    %5506 = vmatprep.mubr.bf16.mxu0 %v1455
    %5507 = vmatmul.mubr.bf16.gmra.mrb[0].mxu0 %v1454
    %v5508 = vpop.f32.mrb[0].mxu0
    %v5509 = vadd.f32 %v2083, %v5508
    %v5510 = vpop.f32.mrb[0].mxu0
    %v5511 = vadd.f32 %v2087, %v5510
    %v5512 = vpop.f32.mrb[0].mxu0
    %v5513 = vadd.f32 %v2083, %v5512
    %v5514 = vpop.f32.mrb[0].mxu0
    %v5515 = vadd.f32 %v2087, %v5514
    %5516 = vmatprep.mubr.bf16.mxu0 %v1463
    %5517 = vmatmul.mubr.bf16.gmra.mrb[0].mxu0 %v1462
    %v5518 = vpop.f32.mrb[0].mxu0
    %v5519 = vadd.f32 %v2083, %v5518
    %v5520 = vpop.f32.mrb[0].mxu0
    %v5521 = vadd.f32 %v2087, %v5520
    %v5522 = vpop.f32.mrb[0].mxu0
    %v5523 = vadd.f32 %v2083, %v5522
    %v5524 = vpop.f32.mrb[0].mxu0
    %v5525 = vadd.f32 %v2087, %v5524
    %5526 = vmatprep.mubr.bf16.mxu0 %v1471
    %5527 = vmatmul.mubr.bf16.gmra.mrb[0].mxu0 %v1470
    %v5528 = vpop.f32.mrb[0].mxu0
    %v5529 = vadd.f32 %v2083, %v5528
    %v5530 = vpop.f32.mrb[0].mxu0
    %v5531 = vadd.f32 %v2087, %v5530
    %v5532 = vpop.f32.mrb[0].mxu0
    %v5533 = vadd.f32 %v2083, %v5532
    %v5534 = vpop.f32.mrb[0].mxu0
    %v5535 = vadd.f32 %v2087, %v5534
    %5536 = vmatprep.mubr.bf16.mxu0 %v1479
    %5537 = vmatmul.mubr.bf16.gmra.mrb[0].mxu0 %v1478
    %v5538 = vpop.f32.mrb[0].mxu0
    %v5539 = vadd.f32 %v2083, %v5538
    %v5540 = vpop.f32.mrb[0].mxu0
    %v5541 = vadd.f32 %v2087, %v5540
    %v5542 = vpop.f32.mrb[0].mxu0
    %v5543 = vadd.f32 %v2083, %v5542
    %v5544 = vpop.f32.mrb[0].mxu0
    %v5545 = vadd.f32 %v2087, %v5544
    %5546 = vmatprep.mubr.bf16.mxu0 %v1487
    %5547 = vmatmul.mubr.bf16.gmra.mrb[0].mxu0 %v1486
    %v5548 = vpop.f32.mrb[0].mxu0
    %v5549 = vadd.f32 %v2083, %v5548
    %v5550 = vpop.f32.mrb[0].mxu0
    %v5551 = vadd.f32 %v2087, %v5550
    %v5552 = vpop.f32.mrb[0].mxu0
    %v5553 = vadd.f32 %v2083, %v5552
    %v5554 = vpop.f32.mrb[0].mxu0
    %v5555 = vadd.f32 %v2087, %v5554
    %5556 = vmatprep.mubr.bf16.mxu0 %v1495
    %5557 = vmatmul.mubr.bf16.gmra.mrb[0].mxu0 %v1494
    %v5558 = vpop.f32.mrb[0].mxu0
    %v5559 = vadd.f32 %v2083, %v5558
    %v5560 = vpop.f32.mrb[0].mxu0
    %v5561 = vadd.f32 %v2087, %v5560
    %v5562 = vpop.f32.mrb[0].mxu0
    %v5563 = vadd.f32 %v2083, %v5562
    %v5564 = vpop.f32.mrb[0].mxu0
    %v5565 = vadd.f32 %v2087, %v5564
    %5566 = vmatprep.mubr.bf16.mxu0 %v1503
    %5567 = vmatmul.mubr.bf16.gmra.mrb[0].mxu0 %v1502
    %v5568 = vpop.f32.mrb[0].mxu0
    %v5569 = vadd.f32 %v2083, %v5568
    %v5570 = vpop.f32.mrb[0].mxu0
    %v5571 = vadd.f32 %v2087, %v5570
    %v5572 = vpop.f32.mrb[0].mxu0
    %v5573 = vadd.f32 %v2083, %v5572
    %v5574 = vpop.f32.mrb[0].mxu0
    %v5575 = vadd.f32 %v2087, %v5574
    %5576 = vmatprep.mubr.bf16.mxu0 %v1511
    %5577 = vmatmul.mubr.bf16.gmra.mrb[0].mxu0 %v1510
    %v5578 = vpop.f32.mrb[0].mxu0
    %v5579 = vadd.f32 %v2083, %v5578
    %v5580 = vpop.f32.mrb[0].mxu0
    %v5581 = vadd.f32 %v2087, %v5580
    %v5582 = vpop.f32.mrb[0].mxu0
    %v5583 = vadd.f32 %v2083, %v5582
    %v5584 = vpop.f32.mrb[0].mxu0
    %v5585 = vadd.f32 %v2087, %v5584
    %5586 = vmatprep.mubr.bf16.mxu0 %v1519
    %5587 = vmatmul.mubr.bf16.gmra.mrb[0].mxu0 %v1518
    %v5588 = vpop.f32.mrb[0].mxu0
    %v5589 = vadd.f32 %v2083, %v5588
    %v5590 = vpop.f32.mrb[0].mxu0
    %v5591 = vadd.f32 %v2087, %v5590
    %v5592 = vpop.f32.mrb[0].mxu0
    %v5593 = vadd.f32 %v2083, %v5592
    %v5594 = vpop.f32.mrb[0].mxu0
    %v5595 = vadd.f32 %v2087, %v5594
    %5596 = vmatprep.mubr.bf16.mxu0 %v1527
    %5597 = vmatmul.mubr.bf16.gmra.mrb[0].mxu0 %v1526
    %v5598 = vpop.f32.mrb[0].mxu0
    %v5599 = vadd.f32 %v2083, %v5598
    %v5600 = vpop.f32.mrb[0].mxu0
    %v5601 = vadd.f32 %v2087, %v5600
    %v5602 = vpop.f32.mrb[0].mxu0
    %v5603 = vadd.f32 %v2083, %v5602
    %v5604 = vpop.f32.mrb[0].mxu0
    %v5605 = vadd.f32 %v2087, %v5604
    %5606 = vmatprep.mubr.bf16.mxu0 %v1535
    %5607 = vmatmul.mubr.bf16.gmra.mrb[0].mxu0 %v1534
    %v5608 = vpop.f32.mrb[0].mxu0
    %v5609 = vadd.f32 %v2083, %v5608
    %v5610 = vpop.f32.mrb[0].mxu0
    %v5611 = vadd.f32 %v2087, %v5610
    %v5612 = vpop.f32.mrb[0].mxu0
    %v5613 = vadd.f32 %v2083, %v5612
    %v5614 = vpop.f32.mrb[0].mxu0
    %v5615 = vadd.f32 %v2087, %v5614
    %5616 = vmatprep.mubr.bf16.mxu0 %v1543
    %5617 = vmatmul.mubr.bf16.gmra.mrb[0].mxu0 %v1542
    %v5618 = vpop.f32.mrb[0].mxu0
    %v5619 = vadd.f32 %v2083, %v5618
    %v5620 = vpop.f32.mrb[0].mxu0
    %v5621 = vadd.f32 %v2087, %v5620
    %v5622 = vpop.f32.mrb[0].mxu0
    %v5623 = vadd.f32 %v2083, %v5622
    %v5624 = vpop.f32.mrb[0].mxu0
    %v5625 = vadd.f32 %v2087, %v5624
    %5626 = vmatprep.mubr.bf16.mxu0 %v1551
    %5627 = vmatmul.mubr.bf16.gmra.mrb[0].mxu0 %v1550
    %v5628 = vpop.f32.mrb[0].mxu0
    %v5629 = vadd.f32 %v2083, %v5628
    %v5630 = vpop.f32.mrb[0].mxu0
    %v5631 = vadd.f32 %v2087, %v5630
    %v5632 = vpop.f32.mrb[0].mxu0
    %v5633 = vadd.f32 %v2083, %v5632
    %v5634 = vpop.f32.mrb[0].mxu0
    %v5635 = vadd.f32 %v2087, %v5634
    %5636 = vdwg.mxu0
    %5637 = vmatprep.subr.bf16.mxu0 %v3779
    %5638 = vmatpush1.bf16.msra.mxu0 %v3778
    %5639 = vmatprep.subr.bf16.mxu0 %v3787
    %5640 = vmatpush1.bf16.msra.mxu0 %v3786
    %5641 = vmatprep.subr.bf16.mxu0 %v3795
    %5642 = vmatpush1.bf16.msra.mxu0 %v3794
    %5643 = vmatprep.subr.bf16.mxu0 %v3803
    %5644 = vmatpush1.bf16.msra.mxu0 %v3802
    %5645 = vmatprep.subr.bf16.mxu0 %v3811
    %5646 = vmatpush1.bf16.msra.mxu0 %v3810
    %5647 = vmatprep.subr.bf16.mxu0 %v3819
    %5648 = vmatpush1.bf16.msra.mxu0 %v3818
    %5649 = vmatprep.subr.bf16.mxu0 %v3827
    %5650 = vmatpush1.bf16.msra.mxu0 %v3826
    %5651 = vmatprep.subr.bf16.mxu0 %v3835
    %5652 = vmatpush1.bf16.msra.mxu0 %v3834
    %5653 = vmatprep.subr.bf16.mxu0 %v3843
    %5654 = vmatpush1.bf16.msra.mxu0 %v3842
    %5655 = vmatprep.subr.bf16.mxu0 %v3851
    %5656 = vmatpush1.bf16.msra.mxu0 %v3850
    %5657 = vmatprep.subr.bf16.mxu0 %v3859
    %5658 = vmatpush1.bf16.msra.mxu0 %v3858
    %5659 = vmatprep.subr.bf16.mxu0 %v3867
    %5660 = vmatpush1.bf16.msra.mxu0 %v3866
    %5661 = vmatprep.subr.bf16.mxu0 %v3875
    %5662 = vmatpush1.bf16.msra.mxu0 %v3874
    %5663 = vmatprep.subr.bf16.mxu0 %v3883
    %5664 = vmatpush1.bf16.msra.mxu0 %v3882
    %5665 = vmatprep.subr.bf16.mxu0 %v3891
    %5666 = vmatpush1.bf16.msra.mxu0 %v3890
    %5667 = vmatprep.subr.bf16.mxu0 %v3899
    %5668 = vmatpush1.bf16.msra.mxu0 %v3898
    %5669 = vmatprep.mubr.bf16.mxu0 %v1433
    %5670 = vmatmul.mubr.bf16.gmra.mrb[0].mxu0 %v1432
    %v5671 = vpop.f32.mrb[0].mxu0
    %v5672 = vadd.f32 %v5479, %v5671
    %v5673 = vpop.f32.mrb[0].mxu0
    %v5674 = vadd.f32 %v5481, %v5673
    %v5675 = vpop.f32.mrb[0].mxu0
    %v5676 = vadd.f32 %v5483, %v5675
    %v5677 = vpop.f32.mrb[0].mxu0
    %v5678 = vadd.f32 %v5485, %v5677
    %5679 = vmatprep.mubr.bf16.mxu0 %v1441
    %5680 = vmatmul.mubr.bf16.gmra.mrb[0].mxu0 %v1440
    %v5681 = vpop.f32.mrb[0].mxu0
    %v5682 = vadd.f32 %v5489, %v5681
    %v5683 = vpop.f32.mrb[0].mxu0
    %v5684 = vadd.f32 %v5491, %v5683
    %v5685 = vpop.f32.mrb[0].mxu0
    %v5686 = vadd.f32 %v5493, %v5685
    %v5687 = vpop.f32.mrb[0].mxu0
    %v5688 = vadd.f32 %v5495, %v5687
    %5689 = vmatprep.mubr.bf16.mxu0 %v1449
    %5690 = vmatmul.mubr.bf16.gmra.mrb[0].mxu0 %v1448
    %v5691 = vpop.f32.mrb[0].mxu0
    %v5692 = vadd.f32 %v5499, %v5691
    %v5693 = vpop.f32.mrb[0].mxu0
    %v5694 = vadd.f32 %v5501, %v5693
    %v5695 = vpop.f32.mrb[0].mxu0
    %v5696 = vadd.f32 %v5503, %v5695
    %v5697 = vpop.f32.mrb[0].mxu0
    %v5698 = vadd.f32 %v5505, %v5697
    %5699 = vmatprep.mubr.bf16.mxu0 %v1457
    %5700 = vmatmul.mubr.bf16.gmra.mrb[0].mxu0 %v1456
    %v5701 = vpop.f32.mrb[0].mxu0
    %v5702 = vadd.f32 %v5509, %v5701
    %v5703 = vpop.f32.mrb[0].mxu0
    %v5704 = vadd.f32 %v5511, %v5703
    %v5705 = vpop.f32.mrb[0].mxu0
    %v5706 = vadd.f32 %v5513, %v5705
    %v5707 = vpop.f32.mrb[0].mxu0
    %v5708 = vadd.f32 %v5515, %v5707
    %5709 = vmatprep.mubr.bf16.mxu0 %v1465
    %5710 = vmatmul.mubr.bf16.gmra.mrb[0].mxu0 %v1464
    %v5711 = vpop.f32.mrb[0].mxu0
    %v5712 = vadd.f32 %v5519, %v5711
    %v5713 = vpop.f32.mrb[0].mxu0
    %v5714 = vadd.f32 %v5521, %v5713
    %v5715 = vpop.f32.mrb[0].mxu0
    %v5716 = vadd.f32 %v5523, %v5715
    %v5717 = vpop.f32.mrb[0].mxu0
    %v5718 = vadd.f32 %v5525, %v5717
    %5719 = vmatprep.mubr.bf16.mxu0 %v1473
    %5720 = vmatmul.mubr.bf16.gmra.mrb[0].mxu0 %v1472
    %v5721 = vpop.f32.mrb[0].mxu0
    %v5722 = vadd.f32 %v5529, %v5721
    %v5723 = vpop.f32.mrb[0].mxu0
    %v5724 = vadd.f32 %v5531, %v5723
    %v5725 = vpop.f32.mrb[0].mxu0
    %v5726 = vadd.f32 %v5533, %v5725
    %v5727 = vpop.f32.mrb[0].mxu0
    %v5728 = vadd.f32 %v5535, %v5727
    %5729 = vmatprep.mubr.bf16.mxu0 %v1481
    %5730 = vmatmul.mubr.bf16.gmra.mrb[0].mxu0 %v1480
    %v5731 = vpop.f32.mrb[0].mxu0
    %v5732 = vadd.f32 %v5539, %v5731
    %v5733 = vpop.f32.mrb[0].mxu0
    %v5734 = vadd.f32 %v5541, %v5733
    %v5735 = vpop.f32.mrb[0].mxu0
    %v5736 = vadd.f32 %v5543, %v5735
    %v5737 = vpop.f32.mrb[0].mxu0
    %v5738 = vadd.f32 %v5545, %v5737
    %5739 = vmatprep.mubr.bf16.mxu0 %v1489
    %5740 = vmatmul.mubr.bf16.gmra.mrb[0].mxu0 %v1488
    %v5741 = vpop.f32.mrb[0].mxu0
    %v5742 = vadd.f32 %v5549, %v5741
    %v5743 = vpop.f32.mrb[0].mxu0
    %v5744 = vadd.f32 %v5551, %v5743
    %v5745 = vpop.f32.mrb[0].mxu0
    %v5746 = vadd.f32 %v5553, %v5745
    %v5747 = vpop.f32.mrb[0].mxu0
    %v5748 = vadd.f32 %v5555, %v5747
    %5749 = vmatprep.mubr.bf16.mxu0 %v1497
    %5750 = vmatmul.mubr.bf16.gmra.mrb[0].mxu0 %v1496
    %v5751 = vpop.f32.mrb[0].mxu0
    %v5752 = vadd.f32 %v5559, %v5751
    %v5753 = vpop.f32.mrb[0].mxu0
    %v5754 = vadd.f32 %v5561, %v5753
    %v5755 = vpop.f32.mrb[0].mxu0
    %v5756 = vadd.f32 %v5563, %v5755
    %v5757 = vpop.f32.mrb[0].mxu0
    %v5758 = vadd.f32 %v5565, %v5757
    %5759 = vmatprep.mubr.bf16.mxu0 %v1505
    %5760 = vmatmul.mubr.bf16.gmra.mrb[0].mxu0 %v1504
    %v5761 = vpop.f32.mrb[0].mxu0
    %v5762 = vadd.f32 %v5569, %v5761
    %v5763 = vpop.f32.mrb[0].mxu0
    %v5764 = vadd.f32 %v5571, %v5763
    %v5765 = vpop.f32.mrb[0].mxu0
    %v5766 = vadd.f32 %v5573, %v5765
    %v5767 = vpop.f32.mrb[0].mxu0
    %v5768 = vadd.f32 %v5575, %v5767
    %5769 = vmatprep.mubr.bf16.mxu0 %v1513
    %5770 = vmatmul.mubr.bf16.gmra.mrb[0].mxu0 %v1512
    %v5771 = vpop.f32.mrb[0].mxu0
    %v5772 = vadd.f32 %v5579, %v5771
    %v5773 = vpop.f32.mrb[0].mxu0
    %v5774 = vadd.f32 %v5581, %v5773
    %v5775 = vpop.f32.mrb[0].mxu0
    %v5776 = vadd.f32 %v5583, %v5775
    %v5777 = vpop.f32.mrb[0].mxu0
    %v5778 = vadd.f32 %v5585, %v5777
    %5779 = vmatprep.mubr.bf16.mxu0 %v1521
    %5780 = vmatmul.mubr.bf16.gmra.mrb[0].mxu0 %v1520
    %v5781 = vpop.f32.mrb[0].mxu0
    %v5782 = vadd.f32 %v5589, %v5781
    %v5783 = vpop.f32.mrb[0].mxu0
    %v5784 = vadd.f32 %v5591, %v5783
    %v5785 = vpop.f32.mrb[0].mxu0
    %v5786 = vadd.f32 %v5593, %v5785
    %v5787 = vpop.f32.mrb[0].mxu0
    %v5788 = vadd.f32 %v5595, %v5787
    %5789 = vmatprep.mubr.bf16.mxu0 %v1529
    %5790 = vmatmul.mubr.bf16.gmra.mrb[0].mxu0 %v1528
    %v5791 = vpop.f32.mrb[0].mxu0
    %v5792 = vadd.f32 %v5599, %v5791
    %v5793 = vpop.f32.mrb[0].mxu0
    %v5794 = vadd.f32 %v5601, %v5793
    %v5795 = vpop.f32.mrb[0].mxu0
    %v5796 = vadd.f32 %v5603, %v5795
    %v5797 = vpop.f32.mrb[0].mxu0
    %v5798 = vadd.f32 %v5605, %v5797
    %5799 = vmatprep.mubr.bf16.mxu0 %v1537
    %5800 = vmatmul.mubr.bf16.gmra.mrb[0].mxu0 %v1536
    %v5801 = vpop.f32.mrb[0].mxu0
    %v5802 = vadd.f32 %v5609, %v5801
    %v5803 = vpop.f32.mrb[0].mxu0
    %v5804 = vadd.f32 %v5611, %v5803
    %v5805 = vpop.f32.mrb[0].mxu0
    %v5806 = vadd.f32 %v5613, %v5805
    %v5807 = vpop.f32.mrb[0].mxu0
    %v5808 = vadd.f32 %v5615, %v5807
    %5809 = vmatprep.mubr.bf16.mxu0 %v1545
    %5810 = vmatmul.mubr.bf16.gmra.mrb[0].mxu0 %v1544
    %v5811 = vpop.f32.mrb[0].mxu0
    %v5812 = vadd.f32 %v5619, %v5811
    %v5813 = vpop.f32.mrb[0].mxu0
    %v5814 = vadd.f32 %v5621, %v5813
    %v5815 = vpop.f32.mrb[0].mxu0
    %v5816 = vadd.f32 %v5623, %v5815
    %v5817 = vpop.f32.mrb[0].mxu0
    %v5818 = vadd.f32 %v5625, %v5817
    %5819 = vmatprep.mubr.bf16.mxu0 %v1553
    %5820 = vmatmul.mubr.bf16.gmra.mrb[0].mxu0 %v1552
    %v5821 = vpop.f32.mrb[0].mxu0
    %v5822 = vadd.f32 %v5629, %v5821
    %v5823 = vpop.f32.mrb[0].mxu0
    %v5824 = vadd.f32 %v5631, %v5823
    %v5825 = vpop.f32.mrb[0].mxu0
    %v5826 = vadd.f32 %v5633, %v5825
    %v5827 = vpop.f32.mrb[0].mxu0
    %v5828 = vadd.f32 %v5635, %v5827
    %5829 = vdwg.mxu0
    %5830 = vmatprep.subr.bf16.mxu0 %v3907
    %5831 = vmatpush1.bf16.msra.mxu0 %v3906
    %5832 = vmatprep.subr.bf16.mxu0 %v3915
    %5833 = vmatpush1.bf16.msra.mxu0 %v3914
    %5834 = vmatprep.subr.bf16.mxu0 %v3923
    %5835 = vmatpush1.bf16.msra.mxu0 %v3922
    %5836 = vmatprep.subr.bf16.mxu0 %v3931
    %5837 = vmatpush1.bf16.msra.mxu0 %v3930
    %5838 = vmatprep.subr.bf16.mxu0 %v3939
    %5839 = vmatpush1.bf16.msra.mxu0 %v3938
    %5840 = vmatprep.subr.bf16.mxu0 %v3947
    %5841 = vmatpush1.bf16.msra.mxu0 %v3946
    %5842 = vmatprep.subr.bf16.mxu0 %v3955
    %5843 = vmatpush1.bf16.msra.mxu0 %v3954
    %5844 = vmatprep.subr.bf16.mxu0 %v3963
    %5845 = vmatpush1.bf16.msra.mxu0 %v3962
    %5846 = vmatprep.subr.bf16.mxu0 %v3971
    %5847 = vmatpush1.bf16.msra.mxu0 %v3970
    %5848 = vmatprep.subr.bf16.mxu0 %v3979
    %5849 = vmatpush1.bf16.msra.mxu0 %v3978
    %5850 = vmatprep.subr.bf16.mxu0 %v3987
    %5851 = vmatpush1.bf16.msra.mxu0 %v3986
    %5852 = vmatprep.subr.bf16.mxu0 %v3995
    %5853 = vmatpush1.bf16.msra.mxu0 %v3994
    %5854 = vmatprep.subr.bf16.mxu0 %v4003
    %5855 = vmatpush1.bf16.msra.mxu0 %v4002
    %5856 = vmatprep.subr.bf16.mxu0 %v4011
    %5857 = vmatpush1.bf16.msra.mxu0 %v4010
    %5858 = vmatprep.subr.bf16.mxu0 %v4019
    %5859 = vmatpush1.bf16.msra.mxu0 %v4018
    %5860 = vmatprep.subr.bf16.mxu0 %v4027
    %5861 = vmatpush1.bf16.msra.mxu0 %v4026
    %5862 = vmatprep.mubr.bf16.mxu0 %v1435
    %5863 = vmatmul.mubr.bf16.gmra.mrb[0].mxu0 %v1434
    %v5864 = vpop.f32.mrb[0].mxu0
    %v5865 = vadd.f32 %v5672, %v5864
    %v5866 = vpop.f32.mrb[0].mxu0
    %v5867 = vadd.f32 %v5674, %v5866
    %v5868 = vpop.f32.mrb[0].mxu0
    %v5869 = vadd.f32 %v5676, %v5868
    %v5870 = vpop.f32.mrb[0].mxu0
    %v5871 = vadd.f32 %v5678, %v5870
    %5872 = vmatprep.mubr.bf16.mxu0 %v1443
    %5873 = vmatmul.mubr.bf16.gmra.mrb[0].mxu0 %v1442
    %v5874 = vpop.f32.mrb[0].mxu0
    %v5875 = vadd.f32 %v5682, %v5874
    %v5876 = vpop.f32.mrb[0].mxu0
    %v5877 = vadd.f32 %v5684, %v5876
    %v5878 = vpop.f32.mrb[0].mxu0
    %v5879 = vadd.f32 %v5686, %v5878
    %v5880 = vpop.f32.mrb[0].mxu0
    %v5881 = vadd.f32 %v5688, %v5880
    %5882 = vmatprep.mubr.bf16.mxu0 %v1451
    %5883 = vmatmul.mubr.bf16.gmra.mrb[0].mxu0 %v1450
    %v5884 = vpop.f32.mrb[0].mxu0
    %v5885 = vadd.f32 %v5692, %v5884
    %v5886 = vpop.f32.mrb[0].mxu0
    %v5887 = vadd.f32 %v5694, %v5886
    %v5888 = vpop.f32.mrb[0].mxu0
    %v5889 = vadd.f32 %v5696, %v5888
    %v5890 = vpop.f32.mrb[0].mxu0
    %v5891 = vadd.f32 %v5698, %v5890
    %5892 = vmatprep.mubr.bf16.mxu0 %v1459
    %5893 = vmatmul.mubr.bf16.gmra.mrb[0].mxu0 %v1458
    %v5894 = vpop.f32.mrb[0].mxu0
    %v5895 = vadd.f32 %v5702, %v5894
    %v5896 = vpop.f32.mrb[0].mxu0
    %v5897 = vadd.f32 %v5704, %v5896
    %v5898 = vpop.f32.mrb[0].mxu0
    %v5899 = vadd.f32 %v5706, %v5898
    %v5900 = vpop.f32.mrb[0].mxu0
    %v5901 = vadd.f32 %v5708, %v5900
    %5902 = vmatprep.mubr.bf16.mxu0 %v1467
    %5903 = vmatmul.mubr.bf16.gmra.mrb[0].mxu0 %v1466
    %v5904 = vpop.f32.mrb[0].mxu0
    %v5905 = vadd.f32 %v5712, %v5904
    %v5906 = vpop.f32.mrb[0].mxu0
    %v5907 = vadd.f32 %v5714, %v5906
    %v5908 = vpop.f32.mrb[0].mxu0
    %v5909 = vadd.f32 %v5716, %v5908
    %v5910 = vpop.f32.mrb[0].mxu0
    %v5911 = vadd.f32 %v5718, %v5910
    %5912 = vmatprep.mubr.bf16.mxu0 %v1475
    %5913 = vmatmul.mubr.bf16.gmra.mrb[0].mxu0 %v1474
    %v5914 = vpop.f32.mrb[0].mxu0
    %v5915 = vadd.f32 %v5722, %v5914
    %v5916 = vpop.f32.mrb[0].mxu0
    %v5917 = vadd.f32 %v5724, %v5916
    %v5918 = vpop.f32.mrb[0].mxu0
    %v5919 = vadd.f32 %v5726, %v5918
    %v5920 = vpop.f32.mrb[0].mxu0
    %v5921 = vadd.f32 %v5728, %v5920
    %5922 = vmatprep.mubr.bf16.mxu0 %v1483
    %5923 = vmatmul.mubr.bf16.gmra.mrb[0].mxu0 %v1482
    %v5924 = vpop.f32.mrb[0].mxu0
    %v5925 = vadd.f32 %v5732, %v5924
    %v5926 = vpop.f32.mrb[0].mxu0
    %v5927 = vadd.f32 %v5734, %v5926
    %v5928 = vpop.f32.mrb[0].mxu0
    %v5929 = vadd.f32 %v5736, %v5928
    %v5930 = vpop.f32.mrb[0].mxu0
    %v5931 = vadd.f32 %v5738, %v5930
    %5932 = vmatprep.mubr.bf16.mxu0 %v1491
    %5933 = vmatmul.mubr.bf16.gmra.mrb[0].mxu0 %v1490
    %v5934 = vpop.f32.mrb[0].mxu0
    %v5935 = vadd.f32 %v5742, %v5934
    %v5936 = vpop.f32.mrb[0].mxu0
    %v5937 = vadd.f32 %v5744, %v5936
    %v5938 = vpop.f32.mrb[0].mxu0
    %v5939 = vadd.f32 %v5746, %v5938
    %v5940 = vpop.f32.mrb[0].mxu0
    %v5941 = vadd.f32 %v5748, %v5940
    %5942 = vmatprep.mubr.bf16.mxu0 %v1499
    %5943 = vmatmul.mubr.bf16.gmra.mrb[0].mxu0 %v1498
    %v5944 = vpop.f32.mrb[0].mxu0
    %v5945 = vadd.f32 %v5752, %v5944
    %v5946 = vpop.f32.mrb[0].mxu0
    %v5947 = vadd.f32 %v5754, %v5946
    %v5948 = vpop.f32.mrb[0].mxu0
    %v5949 = vadd.f32 %v5756, %v5948
    %v5950 = vpop.f32.mrb[0].mxu0
    %v5951 = vadd.f32 %v5758, %v5950
    %5952 = vmatprep.mubr.bf16.mxu0 %v1507
    %5953 = vmatmul.mubr.bf16.gmra.mrb[0].mxu0 %v1506
    %v5954 = vpop.f32.mrb[0].mxu0
    %v5955 = vadd.f32 %v5762, %v5954
    %v5956 = vpop.f32.mrb[0].mxu0
    %v5957 = vadd.f32 %v5764, %v5956
    %v5958 = vpop.f32.mrb[0].mxu0
    %v5959 = vadd.f32 %v5766, %v5958
    %v5960 = vpop.f32.mrb[0].mxu0
    %v5961 = vadd.f32 %v5768, %v5960
    %5962 = vmatprep.mubr.bf16.mxu0 %v1515
    %5963 = vmatmul.mubr.bf16.gmra.mrb[0].mxu0 %v1514
    %v5964 = vpop.f32.mrb[0].mxu0
    %v5965 = vadd.f32 %v5772, %v5964
    %v5966 = vpop.f32.mrb[0].mxu0
    %v5967 = vadd.f32 %v5774, %v5966
    %v5968 = vpop.f32.mrb[0].mxu0
    %v5969 = vadd.f32 %v5776, %v5968
    %v5970 = vpop.f32.mrb[0].mxu0
    %v5971 = vadd.f32 %v5778, %v5970
    %5972 = vmatprep.mubr.bf16.mxu0 %v1523
    %5973 = vmatmul.mubr.bf16.gmra.mrb[0].mxu0 %v1522
    %v5974 = vpop.f32.mrb[0].mxu0
    %v5975 = vadd.f32 %v5782, %v5974
    %v5976 = vpop.f32.mrb[0].mxu0
    %v5977 = vadd.f32 %v5784, %v5976
    %v5978 = vpop.f32.mrb[0].mxu0
    %v5979 = vadd.f32 %v5786, %v5978
    %v5980 = vpop.f32.mrb[0].mxu0
    %v5981 = vadd.f32 %v5788, %v5980
    %5982 = vmatprep.mubr.bf16.mxu0 %v1531
    %5983 = vmatmul.mubr.bf16.gmra.mrb[0].mxu0 %v1530
    %v5984 = vpop.f32.mrb[0].mxu0
    %v5985 = vadd.f32 %v5792, %v5984
    %v5986 = vpop.f32.mrb[0].mxu0
    %v5987 = vadd.f32 %v5794, %v5986
    %v5988 = vpop.f32.mrb[0].mxu0
    %v5989 = vadd.f32 %v5796, %v5988
    %v5990 = vpop.f32.mrb[0].mxu0
    %v5991 = vadd.f32 %v5798, %v5990
    %5992 = vmatprep.mubr.bf16.mxu0 %v1539
    %5993 = vmatmul.mubr.bf16.gmra.mrb[0].mxu0 %v1538
    %v5994 = vpop.f32.mrb[0].mxu0
    %v5995 = vadd.f32 %v5802, %v5994
    %v5996 = vpop.f32.mrb[0].mxu0
    %v5997 = vadd.f32 %v5804, %v5996
    %v5998 = vpop.f32.mrb[0].mxu0
    %v5999 = vadd.f32 %v5806, %v5998
    %v6000 = vpop.f32.mrb[0].mxu0
    %v6001 = vadd.f32 %v5808, %v6000
    %6002 = vmatprep.mubr.bf16.mxu0 %v1547
    %6003 = vmatmul.mubr.bf16.gmra.mrb[0].mxu0 %v1546
    %v6004 = vpop.f32.mrb[0].mxu0
    %v6005 = vadd.f32 %v5812, %v6004
    %v6006 = vpop.f32.mrb[0].mxu0
    %v6007 = vadd.f32 %v5814, %v6006
    %v6008 = vpop.f32.mrb[0].mxu0
    %v6009 = vadd.f32 %v5816, %v6008
    %v6010 = vpop.f32.mrb[0].mxu0
    %v6011 = vadd.f32 %v5818, %v6010
    %6012 = vmatprep.mubr.bf16.mxu0 %v1555
    %6013 = vmatmul.mubr.bf16.gmra.mrb[0].mxu0 %v1554
    %v6014 = vpop.f32.mrb[0].mxu0
    %v6015 = vadd.f32 %v5822, %v6014
    %v6016 = vpop.f32.mrb[0].mxu0
    %v6017 = vadd.f32 %v5824, %v6016
    %v6018 = vpop.f32.mrb[0].mxu0
    %v6019 = vadd.f32 %v5826, %v6018
    %v6020 = vpop.f32.mrb[0].mxu0
    %v6021 = vadd.f32 %v5828, %v6020
    %6022 = vdwg.mxu0
    %6023 = vmatprep.subr.bf16.mxu0 %v4035
    %6024 = vmatpush1.bf16.msra.mxu0 %v4034
    %6025 = vmatprep.subr.bf16.mxu0 %v4043
    %6026 = vmatpush1.bf16.msra.mxu0 %v4042
    %6027 = vmatprep.subr.bf16.mxu0 %v4051
    %6028 = vmatpush1.bf16.msra.mxu0 %v4050
    %6029 = vmatprep.subr.bf16.mxu0 %v4059
    %6030 = vmatpush1.bf16.msra.mxu0 %v4058
    %6031 = vmatprep.subr.bf16.mxu0 %v4067
    %6032 = vmatpush1.bf16.msra.mxu0 %v4066
    %6033 = vmatprep.subr.bf16.mxu0 %v4075
    %6034 = vmatpush1.bf16.msra.mxu0 %v4074
    %6035 = vmatprep.subr.bf16.mxu0 %v4083
    %6036 = vmatpush1.bf16.msra.mxu0 %v4082
    %6037 = vmatprep.subr.bf16.mxu0 %v4091
    %6038 = vmatpush1.bf16.msra.mxu0 %v4090
    %6039 = vmatprep.subr.bf16.mxu0 %v4099
    %6040 = vmatpush1.bf16.msra.mxu0 %v4098
    %6041 = vmatprep.subr.bf16.mxu0 %v4107
    %6042 = vmatpush1.bf16.msra.mxu0 %v4106
    %6043 = vmatprep.subr.bf16.mxu0 %v4115
    %6044 = vmatpush1.bf16.msra.mxu0 %v4114
    %6045 = vmatprep.subr.bf16.mxu0 %v4123
    %6046 = vmatpush1.bf16.msra.mxu0 %v4122
    %6047 = vmatprep.subr.bf16.mxu0 %v4131
    %6048 = vmatpush1.bf16.msra.mxu0 %v4130
    %6049 = vmatprep.subr.bf16.mxu0 %v4139
    %6050 = vmatpush1.bf16.msra.mxu0 %v4138
    %6051 = vmatprep.subr.bf16.mxu0 %v4147
    %6052 = vmatpush1.bf16.msra.mxu0 %v4146
    %6053 = vmatprep.subr.bf16.mxu0 %v4155
    %6054 = vmatpush1.bf16.msra.mxu0 %v4154
    %6055 = vmatprep.mubr.bf16.mxu0 %v1437
    %6056 = vmatmul.mubr.bf16.gmra.mrb[0].mxu0 %v1436
    %v6057 = vpop.f32.mrb[0].mxu0
    %v6058 = vadd.f32 %v5865, %v6057
    %v6059 = vpop.f32.mrb[0].mxu0
    %v6060 = vadd.f32 %v5867, %v6059
    %v6061 = vpop.f32.mrb[0].mxu0
    %v6062 = vadd.f32 %v5869, %v6061
    %v6063 = vpop.f32.mrb[0].mxu0
    %v6064 = vadd.f32 %v5871, %v6063
    %6065 = vmatprep.mubr.bf16.mxu0 %v1445
    %6066 = vmatmul.mubr.bf16.gmra.mrb[0].mxu0 %v1444
    %v6067 = vpop.f32.mrb[0].mxu0
    %v6068 = vadd.f32 %v5875, %v6067
    %v6069 = vpop.f32.mrb[0].mxu0
    %v6070 = vadd.f32 %v5877, %v6069
    %v6071 = vpop.f32.mrb[0].mxu0
    %v6072 = vadd.f32 %v5879, %v6071
    %v6073 = vpop.f32.mrb[0].mxu0
    %v6074 = vadd.f32 %v5881, %v6073
    %6075 = vmatprep.mubr.bf16.mxu0 %v1453
    %6076 = vmatmul.mubr.bf16.gmra.mrb[0].mxu0 %v1452
    %v6077 = vpop.f32.mrb[0].mxu0
    %v6078 = vadd.f32 %v5885, %v6077
    %v6079 = vpop.f32.mrb[0].mxu0
    %v6080 = vadd.f32 %v5887, %v6079
    %v6081 = vpop.f32.mrb[0].mxu0
    %v6082 = vadd.f32 %v5889, %v6081
    %v6083 = vpop.f32.mrb[0].mxu0
    %v6084 = vadd.f32 %v5891, %v6083
    %6085 = vmatprep.mubr.bf16.mxu0 %v1461
    %6086 = vmatmul.mubr.bf16.gmra.mrb[0].mxu0 %v1460
    %v6087 = vpop.f32.mrb[0].mxu0
    %v6088 = vadd.f32 %v5895, %v6087
    %v6089 = vpop.f32.mrb[0].mxu0
    %v6090 = vadd.f32 %v5897, %v6089
    %v6091 = vpop.f32.mrb[0].mxu0
    %v6092 = vadd.f32 %v5899, %v6091
    %v6093 = vpop.f32.mrb[0].mxu0
    %v6094 = vadd.f32 %v5901, %v6093
    %6095 = vmatprep.mubr.bf16.mxu0 %v1469
    %6096 = vmatmul.mubr.bf16.gmra.mrb[0].mxu0 %v1468
    %v6097 = vpop.f32.mrb[0].mxu0
    %v6098 = vadd.f32 %v5905, %v6097
    %v6099 = vpop.f32.mrb[0].mxu0
    %v6100 = vadd.f32 %v5907, %v6099
    %v6101 = vpop.f32.mrb[0].mxu0
    %v6102 = vadd.f32 %v5909, %v6101
    %v6103 = vpop.f32.mrb[0].mxu0
    %v6104 = vadd.f32 %v5911, %v6103
    %6105 = vmatprep.mubr.bf16.mxu0 %v1477
    %6106 = vmatmul.mubr.bf16.gmra.mrb[0].mxu0 %v1476
    %v6107 = vpop.f32.mrb[0].mxu0
    %v6108 = vadd.f32 %v5915, %v6107
    %v6109 = vpop.f32.mrb[0].mxu0
    %v6110 = vadd.f32 %v5917, %v6109
    %v6111 = vpop.f32.mrb[0].mxu0
    %v6112 = vadd.f32 %v5919, %v6111
    %v6113 = vpop.f32.mrb[0].mxu0
    %v6114 = vadd.f32 %v5921, %v6113
    %6115 = vmatprep.mubr.bf16.mxu0 %v1485
    %6116 = vmatmul.mubr.bf16.gmra.mrb[0].mxu0 %v1484
    %v6117 = vpop.f32.mrb[0].mxu0
    %v6118 = vadd.f32 %v5925, %v6117
    %v6119 = vpop.f32.mrb[0].mxu0
    %v6120 = vadd.f32 %v5927, %v6119
    %v6121 = vpop.f32.mrb[0].mxu0
    %v6122 = vadd.f32 %v5929, %v6121
    %v6123 = vpop.f32.mrb[0].mxu0
    %v6124 = vadd.f32 %v5931, %v6123
    %6125 = vmatprep.mubr.bf16.mxu0 %v1493
    %6126 = vmatmul.mubr.bf16.gmra.mrb[0].mxu0 %v1492
    %v6127 = vpop.f32.mrb[0].mxu0
    %v6128 = vadd.f32 %v5935, %v6127
    %v6129 = vpop.f32.mrb[0].mxu0
    %v6130 = vadd.f32 %v5937, %v6129
    %v6131 = vpop.f32.mrb[0].mxu0
    %v6132 = vadd.f32 %v5939, %v6131
    %v6133 = vpop.f32.mrb[0].mxu0
    %v6134 = vadd.f32 %v5941, %v6133
    %6135 = vmatprep.mubr.bf16.mxu0 %v1501
    %6136 = vmatmul.mubr.bf16.gmra.mrb[0].mxu0 %v1500
    %v6137 = vpop.f32.mrb[0].mxu0
    %v6138 = vadd.f32 %v5945, %v6137
    %v6139 = vpop.f32.mrb[0].mxu0
    %v6140 = vadd.f32 %v5947, %v6139
    %v6141 = vpop.f32.mrb[0].mxu0
    %v6142 = vadd.f32 %v5949, %v6141
    %v6143 = vpop.f32.mrb[0].mxu0
    %v6144 = vadd.f32 %v5951, %v6143
    %6145 = vmatprep.mubr.bf16.mxu0 %v1509
    %6146 = vmatmul.mubr.bf16.gmra.mrb[0].mxu0 %v1508
    %v6147 = vpop.f32.mrb[0].mxu0
    %v6148 = vadd.f32 %v5955, %v6147
    %v6149 = vpop.f32.mrb[0].mxu0
    %v6150 = vadd.f32 %v5957, %v6149
    %v6151 = vpop.f32.mrb[0].mxu0
    %v6152 = vadd.f32 %v5959, %v6151
    %v6153 = vpop.f32.mrb[0].mxu0
    %v6154 = vadd.f32 %v5961, %v6153
    %6155 = vmatprep.mubr.bf16.mxu0 %v1517
    %6156 = vmatmul.mubr.bf16.gmra.mrb[0].mxu0 %v1516
    %v6157 = vpop.f32.mrb[0].mxu0
    %v6158 = vadd.f32 %v5965, %v6157
    %v6159 = vpop.f32.mrb[0].mxu0
    %v6160 = vadd.f32 %v5967, %v6159
    %v6161 = vpop.f32.mrb[0].mxu0
    %v6162 = vadd.f32 %v5969, %v6161
    %v6163 = vpop.f32.mrb[0].mxu0
    %v6164 = vadd.f32 %v5971, %v6163
    %6165 = vmatprep.mubr.bf16.mxu0 %v1525
    %6166 = vmatmul.mubr.bf16.gmra.mrb[0].mxu0 %v1524
    %v6167 = vpop.f32.mrb[0].mxu0
    %v6168 = vadd.f32 %v5975, %v6167
    %v6169 = vpop.f32.mrb[0].mxu0
    %v6170 = vadd.f32 %v5977, %v6169
    %v6171 = vpop.f32.mrb[0].mxu0
    %v6172 = vadd.f32 %v5979, %v6171
    %v6173 = vpop.f32.mrb[0].mxu0
    %v6174 = vadd.f32 %v5981, %v6173
    %6175 = vmatprep.mubr.bf16.mxu0 %v1533
    %6176 = vmatmul.mubr.bf16.gmra.mrb[0].mxu0 %v1532
    %v6177 = vpop.f32.mrb[0].mxu0
    %v6178 = vadd.f32 %v5985, %v6177
    %v6179 = vpop.f32.mrb[0].mxu0
    %v6180 = vadd.f32 %v5987, %v6179
    %v6181 = vpop.f32.mrb[0].mxu0
    %v6182 = vadd.f32 %v5989, %v6181
    %v6183 = vpop.f32.mrb[0].mxu0
    %v6184 = vadd.f32 %v5991, %v6183
    %6185 = vmatprep.mubr.bf16.mxu0 %v1541
    %6186 = vmatmul.mubr.bf16.gmra.mrb[0].mxu0 %v1540
    %v6187 = vpop.f32.mrb[0].mxu0
    %v6188 = vadd.f32 %v5995, %v6187
    %v6189 = vpop.f32.mrb[0].mxu0
    %v6190 = vadd.f32 %v5997, %v6189
    %v6191 = vpop.f32.mrb[0].mxu0
    %v6192 = vadd.f32 %v5999, %v6191
    %v6193 = vpop.f32.mrb[0].mxu0
    %v6194 = vadd.f32 %v6001, %v6193
    %6195 = vmatprep.mubr.bf16.mxu0 %v1549
    %6196 = vmatmul.mubr.bf16.gmra.mrb[0].mxu0 %v1548
    %v6197 = vpop.f32.mrb[0].mxu0
    %v6198 = vadd.f32 %v6005, %v6197
    %v6199 = vpop.f32.mrb[0].mxu0
    %v6200 = vadd.f32 %v6007, %v6199
    %v6201 = vpop.f32.mrb[0].mxu0
    %v6202 = vadd.f32 %v6009, %v6201
    %v6203 = vpop.f32.mrb[0].mxu0
    %v6204 = vadd.f32 %v6011, %v6203
    %6205 = vmatprep.mubr.bf16.mxu0 %v1557
    %6206 = vmatmul.mubr.bf16.gmra.mrb[0].mxu0 %v1556
    %v6207 = vpop.f32.mrb[0].mxu0
    %v6208 = vadd.f32 %v6015, %v6207
    %v6209 = vpop.f32.mrb[0].mxu0
    %v6210 = vadd.f32 %v6017, %v6209
    %v6211 = vpop.f32.mrb[0].mxu0
    %v6212 = vadd.f32 %v6019, %v6211
    %v6213 = vpop.f32.mrb[0].mxu0
    %v6214 = vadd.f32 %v6021, %v6213
    %6215 = vdwg.mxu0
    %6216 = vmatprep.subr.bf16.mxu0 %v3653
    %6217 = vmatpush1.bf16.msra.mxu0 %v3652
    %6218 = vmatprep.subr.bf16.mxu0 %v3661
    %6219 = vmatpush1.bf16.msra.mxu0 %v3660
    %6220 = vmatprep.subr.bf16.mxu0 %v3669
    %6221 = vmatpush1.bf16.msra.mxu0 %v3668
    %6222 = vmatprep.subr.bf16.mxu0 %v3677
    %6223 = vmatpush1.bf16.msra.mxu0 %v3676
    %6224 = vmatprep.subr.bf16.mxu0 %v3685
    %6225 = vmatpush1.bf16.msra.mxu0 %v3684
    %6226 = vmatprep.subr.bf16.mxu0 %v3693
    %6227 = vmatpush1.bf16.msra.mxu0 %v3692
    %6228 = vmatprep.subr.bf16.mxu0 %v3701
    %6229 = vmatpush1.bf16.msra.mxu0 %v3700
    %6230 = vmatprep.subr.bf16.mxu0 %v3709
    %6231 = vmatpush1.bf16.msra.mxu0 %v3708
    %6232 = vmatprep.subr.bf16.mxu0 %v3717
    %6233 = vmatpush1.bf16.msra.mxu0 %v3716
    %6234 = vmatprep.subr.bf16.mxu0 %v3725
    %6235 = vmatpush1.bf16.msra.mxu0 %v3724
    %6236 = vmatprep.subr.bf16.mxu0 %v3733
    %6237 = vmatpush1.bf16.msra.mxu0 %v3732
    %6238 = vmatprep.subr.bf16.mxu0 %v3741
    %6239 = vmatpush1.bf16.msra.mxu0 %v3740
    %6240 = vmatprep.subr.bf16.mxu0 %v3749
    %6241 = vmatpush1.bf16.msra.mxu0 %v3748
    %6242 = vmatprep.subr.bf16.mxu0 %v3757
    %6243 = vmatpush1.bf16.msra.mxu0 %v3756
    %6244 = vmatprep.subr.bf16.mxu0 %v3765
    %6245 = vmatpush1.bf16.msra.mxu0 %v3764
    %6246 = vmatprep.subr.bf16.mxu0 %v3773
    %6247 = vmatpush1.bf16.msra.mxu0 %v3772
    %6248 = vmatprep.mubr.bf16.mxu0 %v1431
    %6249 = vmatmul.mubr.bf16.gmra.mrb[0].mxu0 %v1430
    %v6250 = vpop.f32.mrb[0].mxu0
    %v6251 = vadd.f32 %v2091, %v6250
    %v6252 = vpop.f32.mrb[0].mxu0
    %v6253 = vadd.f32 %v2095, %v6252
    %v6254 = vpop.f32.mrb[0].mxu0
    %v6255 = vadd.f32 %v2091, %v6254
    %v6256 = vpop.f32.mrb[0].mxu0
    %v6257 = vadd.f32 %v2095, %v6256
    %6258 = vmatprep.mubr.bf16.mxu0 %v1439
    %6259 = vmatmul.mubr.bf16.gmra.mrb[0].mxu0 %v1438
    %v6260 = vpop.f32.mrb[0].mxu0
    %v6261 = vadd.f32 %v2091, %v6260
    %v6262 = vpop.f32.mrb[0].mxu0
    %v6263 = vadd.f32 %v2095, %v6262
    %v6264 = vpop.f32.mrb[0].mxu0
    %v6265 = vadd.f32 %v2091, %v6264
    %v6266 = vpop.f32.mrb[0].mxu0
    %v6267 = vadd.f32 %v2095, %v6266
    %6268 = vmatprep.mubr.bf16.mxu0 %v1447
    %6269 = vmatmul.mubr.bf16.gmra.mrb[0].mxu0 %v1446
    %v6270 = vpop.f32.mrb[0].mxu0
    %v6271 = vadd.f32 %v2091, %v6270
    %v6272 = vpop.f32.mrb[0].mxu0
    %v6273 = vadd.f32 %v2095, %v6272
    %v6274 = vpop.f32.mrb[0].mxu0
    %v6275 = vadd.f32 %v2091, %v6274
    %v6276 = vpop.f32.mrb[0].mxu0
    %v6277 = vadd.f32 %v2095, %v6276
    %6278 = vmatprep.mubr.bf16.mxu0 %v1455
    %6279 = vmatmul.mubr.bf16.gmra.mrb[0].mxu0 %v1454
    %v6280 = vpop.f32.mrb[0].mxu0
    %v6281 = vadd.f32 %v2091, %v6280
    %v6282 = vpop.f32.mrb[0].mxu0
    %v6283 = vadd.f32 %v2095, %v6282
    %v6284 = vpop.f32.mrb[0].mxu0
    %v6285 = vadd.f32 %v2091, %v6284
    %v6286 = vpop.f32.mrb[0].mxu0
    %v6287 = vadd.f32 %v2095, %v6286
    %6288 = vmatprep.mubr.bf16.mxu0 %v1463
    %6289 = vmatmul.mubr.bf16.gmra.mrb[0].mxu0 %v1462
    %v6290 = vpop.f32.mrb[0].mxu0
    %v6291 = vadd.f32 %v2091, %v6290
    %v6292 = vpop.f32.mrb[0].mxu0
    %v6293 = vadd.f32 %v2095, %v6292
    %v6294 = vpop.f32.mrb[0].mxu0
    %v6295 = vadd.f32 %v2091, %v6294
    %v6296 = vpop.f32.mrb[0].mxu0
    %v6297 = vadd.f32 %v2095, %v6296
    %6298 = vmatprep.mubr.bf16.mxu0 %v1471
    %6299 = vmatmul.mubr.bf16.gmra.mrb[0].mxu0 %v1470
    %v6300 = vpop.f32.mrb[0].mxu0
    %v6301 = vadd.f32 %v2091, %v6300
    %v6302 = vpop.f32.mrb[0].mxu0
    %v6303 = vadd.f32 %v2095, %v6302
    %v6304 = vpop.f32.mrb[0].mxu0
    %v6305 = vadd.f32 %v2091, %v6304
    %v6306 = vpop.f32.mrb[0].mxu0
    %v6307 = vadd.f32 %v2095, %v6306
    %6308 = vmatprep.mubr.bf16.mxu0 %v1479
    %6309 = vmatmul.mubr.bf16.gmra.mrb[0].mxu0 %v1478
    %v6310 = vpop.f32.mrb[0].mxu0
    %v6311 = vadd.f32 %v2091, %v6310
    %v6312 = vpop.f32.mrb[0].mxu0
    %v6313 = vadd.f32 %v2095, %v6312
    %v6314 = vpop.f32.mrb[0].mxu0
    %v6315 = vadd.f32 %v2091, %v6314
    %v6316 = vpop.f32.mrb[0].mxu0
    %v6317 = vadd.f32 %v2095, %v6316
    %6318 = vmatprep.mubr.bf16.mxu0 %v1487
    %6319 = vmatmul.mubr.bf16.gmra.mrb[0].mxu0 %v1486
    %v6320 = vpop.f32.mrb[0].mxu0
    %v6321 = vadd.f32 %v2091, %v6320
    %v6322 = vpop.f32.mrb[0].mxu0
    %v6323 = vadd.f32 %v2095, %v6322
    %v6324 = vpop.f32.mrb[0].mxu0
    %v6325 = vadd.f32 %v2091, %v6324
    %v6326 = vpop.f32.mrb[0].mxu0
    %v6327 = vadd.f32 %v2095, %v6326
    %6328 = vmatprep.mubr.bf16.mxu0 %v1495
    %6329 = vmatmul.mubr.bf16.gmra.mrb[0].mxu0 %v1494
    %v6330 = vpop.f32.mrb[0].mxu0
    %v6331 = vadd.f32 %v2091, %v6330
    %v6332 = vpop.f32.mrb[0].mxu0
    %v6333 = vadd.f32 %v2095, %v6332
    %v6334 = vpop.f32.mrb[0].mxu0
    %v6335 = vadd.f32 %v2091, %v6334
    %v6336 = vpop.f32.mrb[0].mxu0
    %v6337 = vadd.f32 %v2095, %v6336
    %6338 = vmatprep.mubr.bf16.mxu0 %v1503
    %6339 = vmatmul.mubr.bf16.gmra.mrb[0].mxu0 %v1502
    %v6340 = vpop.f32.mrb[0].mxu0
    %v6341 = vadd.f32 %v2091, %v6340
    %v6342 = vpop.f32.mrb[0].mxu0
    %v6343 = vadd.f32 %v2095, %v6342
    %v6344 = vpop.f32.mrb[0].mxu0
    %v6345 = vadd.f32 %v2091, %v6344
    %v6346 = vpop.f32.mrb[0].mxu0
    %v6347 = vadd.f32 %v2095, %v6346
    %6348 = vmatprep.mubr.bf16.mxu0 %v1511
    %6349 = vmatmul.mubr.bf16.gmra.mrb[0].mxu0 %v1510
    %v6350 = vpop.f32.mrb[0].mxu0
    %v6351 = vadd.f32 %v2091, %v6350
    %v6352 = vpop.f32.mrb[0].mxu0
    %v6353 = vadd.f32 %v2095, %v6352
    %v6354 = vpop.f32.mrb[0].mxu0
    %v6355 = vadd.f32 %v2091, %v6354
    %v6356 = vpop.f32.mrb[0].mxu0
    %v6357 = vadd.f32 %v2095, %v6356
    %6358 = vmatprep.mubr.bf16.mxu0 %v1519
    %6359 = vmatmul.mubr.bf16.gmra.mrb[0].mxu0 %v1518
    %v6360 = vpop.f32.mrb[0].mxu0
    %v6361 = vadd.f32 %v2091, %v6360
    %v6362 = vpop.f32.mrb[0].mxu0
    %v6363 = vadd.f32 %v2095, %v6362
    %v6364 = vpop.f32.mrb[0].mxu0
    %v6365 = vadd.f32 %v2091, %v6364
    %v6366 = vpop.f32.mrb[0].mxu0
    %v6367 = vadd.f32 %v2095, %v6366
    %6368 = vmatprep.mubr.bf16.mxu0 %v1527
    %6369 = vmatmul.mubr.bf16.gmra.mrb[0].mxu0 %v1526
    %v6370 = vpop.f32.mrb[0].mxu0
    %v6371 = vadd.f32 %v2091, %v6370
    %v6372 = vpop.f32.mrb[0].mxu0
    %v6373 = vadd.f32 %v2095, %v6372
    %v6374 = vpop.f32.mrb[0].mxu0
    %v6375 = vadd.f32 %v2091, %v6374
    %v6376 = vpop.f32.mrb[0].mxu0
    %v6377 = vadd.f32 %v2095, %v6376
    %6378 = vmatprep.mubr.bf16.mxu0 %v1535
    %6379 = vmatmul.mubr.bf16.gmra.mrb[0].mxu0 %v1534
    %v6380 = vpop.f32.mrb[0].mxu0
    %v6381 = vadd.f32 %v2091, %v6380
    %v6382 = vpop.f32.mrb[0].mxu0
    %v6383 = vadd.f32 %v2095, %v6382
    %v6384 = vpop.f32.mrb[0].mxu0
    %v6385 = vadd.f32 %v2091, %v6384
    %v6386 = vpop.f32.mrb[0].mxu0
    %v6387 = vadd.f32 %v2095, %v6386
    %6388 = vmatprep.mubr.bf16.mxu0 %v1543
    %6389 = vmatmul.mubr.bf16.gmra.mrb[0].mxu0 %v1542
    %v6390 = vpop.f32.mrb[0].mxu0
    %v6391 = vadd.f32 %v2091, %v6390
    %v6392 = vpop.f32.mrb[0].mxu0
    %v6393 = vadd.f32 %v2095, %v6392
    %v6394 = vpop.f32.mrb[0].mxu0
    %v6395 = vadd.f32 %v2091, %v6394
    %v6396 = vpop.f32.mrb[0].mxu0
    %v6397 = vadd.f32 %v2095, %v6396
    %6398 = vmatprep.mubr.bf16.mxu0 %v1551
    %6399 = vmatmul.mubr.bf16.gmra.mrb[0].mxu0 %v1550
    %v6400 = vpop.f32.mrb[0].mxu0
    %v6401 = vadd.f32 %v2091, %v6400
    %v6402 = vpop.f32.mrb[0].mxu0
    %v6403 = vadd.f32 %v2095, %v6402
    %v6404 = vpop.f32.mrb[0].mxu0
    %v6405 = vadd.f32 %v2091, %v6404
    %v6406 = vpop.f32.mrb[0].mxu0
    %v6407 = vadd.f32 %v2095, %v6406
    %6408 = vdwg.mxu0
    %6409 = vmatprep.subr.bf16.mxu0 %v3781
    %6410 = vmatpush1.bf16.msra.mxu0 %v3780
    %6411 = vmatprep.subr.bf16.mxu0 %v3789
    %6412 = vmatpush1.bf16.msra.mxu0 %v3788
    %6413 = vmatprep.subr.bf16.mxu0 %v3797
    %6414 = vmatpush1.bf16.msra.mxu0 %v3796
    %6415 = vmatprep.subr.bf16.mxu0 %v3805
    %6416 = vmatpush1.bf16.msra.mxu0 %v3804
    %6417 = vmatprep.subr.bf16.mxu0 %v3813
    %6418 = vmatpush1.bf16.msra.mxu0 %v3812
    %6419 = vmatprep.subr.bf16.mxu0 %v3821
    %6420 = vmatpush1.bf16.msra.mxu0 %v3820
    %6421 = vmatprep.subr.bf16.mxu0 %v3829
    %6422 = vmatpush1.bf16.msra.mxu0 %v3828
    %6423 = vmatprep.subr.bf16.mxu0 %v3837
    %6424 = vmatpush1.bf16.msra.mxu0 %v3836
    %6425 = vmatprep.subr.bf16.mxu0 %v3845
    %6426 = vmatpush1.bf16.msra.mxu0 %v3844
    %6427 = vmatprep.subr.bf16.mxu0 %v3853
    %6428 = vmatpush1.bf16.msra.mxu0 %v3852
    %6429 = vmatprep.subr.bf16.mxu0 %v3861
    %6430 = vmatpush1.bf16.msra.mxu0 %v3860
    %6431 = vmatprep.subr.bf16.mxu0 %v3869
    %6432 = vmatpush1.bf16.msra.mxu0 %v3868
    %6433 = vmatprep.subr.bf16.mxu0 %v3877
    %6434 = vmatpush1.bf16.msra.mxu0 %v3876
    %6435 = vmatprep.subr.bf16.mxu0 %v3885
    %6436 = vmatpush1.bf16.msra.mxu0 %v3884
    %6437 = vmatprep.subr.bf16.mxu0 %v3893
    %6438 = vmatpush1.bf16.msra.mxu0 %v3892
    %6439 = vmatprep.subr.bf16.mxu0 %v3901
    %6440 = vmatpush1.bf16.msra.mxu0 %v3900
    %6441 = vmatprep.mubr.bf16.mxu0 %v1433
    %6442 = vmatmul.mubr.bf16.gmra.mrb[0].mxu0 %v1432
    %v6443 = vpop.f32.mrb[0].mxu0
    %v6444 = vadd.f32 %v6251, %v6443
    %v6445 = vpop.f32.mrb[0].mxu0
    %v6446 = vadd.f32 %v6253, %v6445
    %v6447 = vpop.f32.mrb[0].mxu0
    %v6448 = vadd.f32 %v6255, %v6447
    %v6449 = vpop.f32.mrb[0].mxu0
    %v6450 = vadd.f32 %v6257, %v6449
    %6451 = vmatprep.mubr.bf16.mxu0 %v1441
    %6452 = vmatmul.mubr.bf16.gmra.mrb[0].mxu0 %v1440
    %v6453 = vpop.f32.mrb[0].mxu0
    %v6454 = vadd.f32 %v6261, %v6453
    %v6455 = vpop.f32.mrb[0].mxu0
    %v6456 = vadd.f32 %v6263, %v6455
    %v6457 = vpop.f32.mrb[0].mxu0
    %v6458 = vadd.f32 %v6265, %v6457
    %v6459 = vpop.f32.mrb[0].mxu0
    %v6460 = vadd.f32 %v6267, %v6459
    %6461 = vmatprep.mubr.bf16.mxu0 %v1449
    %6462 = vmatmul.mubr.bf16.gmra.mrb[0].mxu0 %v1448
    %v6463 = vpop.f32.mrb[0].mxu0
    %v6464 = vadd.f32 %v6271, %v6463
    %v6465 = vpop.f32.mrb[0].mxu0
    %v6466 = vadd.f32 %v6273, %v6465
    %v6467 = vpop.f32.mrb[0].mxu0
    %v6468 = vadd.f32 %v6275, %v6467
    %v6469 = vpop.f32.mrb[0].mxu0
    %v6470 = vadd.f32 %v6277, %v6469
    %6471 = vmatprep.mubr.bf16.mxu0 %v1457
    %6472 = vmatmul.mubr.bf16.gmra.mrb[0].mxu0 %v1456
    %v6473 = vpop.f32.mrb[0].mxu0
    %v6474 = vadd.f32 %v6281, %v6473
    %v6475 = vpop.f32.mrb[0].mxu0
    %v6476 = vadd.f32 %v6283, %v6475
    %v6477 = vpop.f32.mrb[0].mxu0
    %v6478 = vadd.f32 %v6285, %v6477
    %v6479 = vpop.f32.mrb[0].mxu0
    %v6480 = vadd.f32 %v6287, %v6479
    %6481 = vmatprep.mubr.bf16.mxu0 %v1465
    %6482 = vmatmul.mubr.bf16.gmra.mrb[0].mxu0 %v1464
    %v6483 = vpop.f32.mrb[0].mxu0
    %v6484 = vadd.f32 %v6291, %v6483
    %v6485 = vpop.f32.mrb[0].mxu0
    %v6486 = vadd.f32 %v6293, %v6485
    %v6487 = vpop.f32.mrb[0].mxu0
    %v6488 = vadd.f32 %v6295, %v6487
    %v6489 = vpop.f32.mrb[0].mxu0
    %v6490 = vadd.f32 %v6297, %v6489
    %6491 = vmatprep.mubr.bf16.mxu0 %v1473
    %6492 = vmatmul.mubr.bf16.gmra.mrb[0].mxu0 %v1472
    %v6493 = vpop.f32.mrb[0].mxu0
    %v6494 = vadd.f32 %v6301, %v6493
    %v6495 = vpop.f32.mrb[0].mxu0
    %v6496 = vadd.f32 %v6303, %v6495
    %v6497 = vpop.f32.mrb[0].mxu0
    %v6498 = vadd.f32 %v6305, %v6497
    %v6499 = vpop.f32.mrb[0].mxu0
    %v6500 = vadd.f32 %v6307, %v6499
    %6501 = vmatprep.mubr.bf16.mxu0 %v1481
    %6502 = vmatmul.mubr.bf16.gmra.mrb[0].mxu0 %v1480
    %v6503 = vpop.f32.mrb[0].mxu0
    %v6504 = vadd.f32 %v6311, %v6503
    %v6505 = vpop.f32.mrb[0].mxu0
    %v6506 = vadd.f32 %v6313, %v6505
    %v6507 = vpop.f32.mrb[0].mxu0
    %v6508 = vadd.f32 %v6315, %v6507
    %v6509 = vpop.f32.mrb[0].mxu0
    %v6510 = vadd.f32 %v6317, %v6509
    %6511 = vmatprep.mubr.bf16.mxu0 %v1489
    %6512 = vmatmul.mubr.bf16.gmra.mrb[0].mxu0 %v1488
    %v6513 = vpop.f32.mrb[0].mxu0
    %v6514 = vadd.f32 %v6321, %v6513
    %v6515 = vpop.f32.mrb[0].mxu0
    %v6516 = vadd.f32 %v6323, %v6515
    %v6517 = vpop.f32.mrb[0].mxu0
    %v6518 = vadd.f32 %v6325, %v6517
    %v6519 = vpop.f32.mrb[0].mxu0
    %v6520 = vadd.f32 %v6327, %v6519
    %6521 = vmatprep.mubr.bf16.mxu0 %v1497
    %6522 = vmatmul.mubr.bf16.gmra.mrb[0].mxu0 %v1496
    %v6523 = vpop.f32.mrb[0].mxu0
    %v6524 = vadd.f32 %v6331, %v6523
    %v6525 = vpop.f32.mrb[0].mxu0
    %v6526 = vadd.f32 %v6333, %v6525
    %v6527 = vpop.f32.mrb[0].mxu0
    %v6528 = vadd.f32 %v6335, %v6527
    %v6529 = vpop.f32.mrb[0].mxu0
    %v6530 = vadd.f32 %v6337, %v6529
    %6531 = vmatprep.mubr.bf16.mxu0 %v1505
    %6532 = vmatmul.mubr.bf16.gmra.mrb[0].mxu0 %v1504
    %v6533 = vpop.f32.mrb[0].mxu0
    %v6534 = vadd.f32 %v6341, %v6533
    %v6535 = vpop.f32.mrb[0].mxu0
    %v6536 = vadd.f32 %v6343, %v6535
    %v6537 = vpop.f32.mrb[0].mxu0
    %v6538 = vadd.f32 %v6345, %v6537
    %v6539 = vpop.f32.mrb[0].mxu0
    %v6540 = vadd.f32 %v6347, %v6539
    %6541 = vmatprep.mubr.bf16.mxu0 %v1513
    %6542 = vmatmul.mubr.bf16.gmra.mrb[0].mxu0 %v1512
    %v6543 = vpop.f32.mrb[0].mxu0
    %v6544 = vadd.f32 %v6351, %v6543
    %v6545 = vpop.f32.mrb[0].mxu0
    %v6546 = vadd.f32 %v6353, %v6545
    %v6547 = vpop.f32.mrb[0].mxu0
    %v6548 = vadd.f32 %v6355, %v6547
    %v6549 = vpop.f32.mrb[0].mxu0
    %v6550 = vadd.f32 %v6357, %v6549
    %6551 = vmatprep.mubr.bf16.mxu0 %v1521
    %6552 = vmatmul.mubr.bf16.gmra.mrb[0].mxu0 %v1520
    %v6553 = vpop.f32.mrb[0].mxu0
    %v6554 = vadd.f32 %v6361, %v6553
    %v6555 = vpop.f32.mrb[0].mxu0
    %v6556 = vadd.f32 %v6363, %v6555
    %v6557 = vpop.f32.mrb[0].mxu0
    %v6558 = vadd.f32 %v6365, %v6557
    %v6559 = vpop.f32.mrb[0].mxu0
    %v6560 = vadd.f32 %v6367, %v6559
    %6561 = vmatprep.mubr.bf16.mxu0 %v1529
    %6562 = vmatmul.mubr.bf16.gmra.mrb[0].mxu0 %v1528
    %v6563 = vpop.f32.mrb[0].mxu0
    %v6564 = vadd.f32 %v6371, %v6563
    %v6565 = vpop.f32.mrb[0].mxu0
    %v6566 = vadd.f32 %v6373, %v6565
    %v6567 = vpop.f32.mrb[0].mxu0
    %v6568 = vadd.f32 %v6375, %v6567
    %v6569 = vpop.f32.mrb[0].mxu0
    %v6570 = vadd.f32 %v6377, %v6569
    %6571 = vmatprep.mubr.bf16.mxu0 %v1537
    %6572 = vmatmul.mubr.bf16.gmra.mrb[0].mxu0 %v1536
    %v6573 = vpop.f32.mrb[0].mxu0
    %v6574 = vadd.f32 %v6381, %v6573
    %v6575 = vpop.f32.mrb[0].mxu0
    %v6576 = vadd.f32 %v6383, %v6575
    %v6577 = vpop.f32.mrb[0].mxu0
    %v6578 = vadd.f32 %v6385, %v6577
    %v6579 = vpop.f32.mrb[0].mxu0
    %v6580 = vadd.f32 %v6387, %v6579
    %6581 = vmatprep.mubr.bf16.mxu0 %v1545
    %6582 = vmatmul.mubr.bf16.gmra.mrb[0].mxu0 %v1544
    %v6583 = vpop.f32.mrb[0].mxu0
    %v6584 = vadd.f32 %v6391, %v6583
    %v6585 = vpop.f32.mrb[0].mxu0
    %v6586 = vadd.f32 %v6393, %v6585
    %v6587 = vpop.f32.mrb[0].mxu0
    %v6588 = vadd.f32 %v6395, %v6587
    %v6589 = vpop.f32.mrb[0].mxu0
    %v6590 = vadd.f32 %v6397, %v6589
    %6591 = vmatprep.mubr.bf16.mxu0 %v1553
    %6592 = vmatmul.mubr.bf16.gmra.mrb[0].mxu0 %v1552
    %v6593 = vpop.f32.mrb[0].mxu0
    %v6594 = vadd.f32 %v6401, %v6593
    %v6595 = vpop.f32.mrb[0].mxu0
    %v6596 = vadd.f32 %v6403, %v6595
    %v6597 = vpop.f32.mrb[0].mxu0
    %v6598 = vadd.f32 %v6405, %v6597
    %v6599 = vpop.f32.mrb[0].mxu0
    %v6600 = vadd.f32 %v6407, %v6599
    %6601 = vdwg.mxu0
    %6602 = vmatprep.subr.bf16.mxu0 %v3909
    %6603 = vmatpush1.bf16.msra.mxu0 %v3908
    %6604 = vmatprep.subr.bf16.mxu0 %v3917
    %6605 = vmatpush1.bf16.msra.mxu0 %v3916
    %6606 = vmatprep.subr.bf16.mxu0 %v3925
    %6607 = vmatpush1.bf16.msra.mxu0 %v3924
    %6608 = vmatprep.subr.bf16.mxu0 %v3933
    %6609 = vmatpush1.bf16.msra.mxu0 %v3932
    %6610 = vmatprep.subr.bf16.mxu0 %v3941
    %6611 = vmatpush1.bf16.msra.mxu0 %v3940
    %6612 = vmatprep.subr.bf16.mxu0 %v3949
    %6613 = vmatpush1.bf16.msra.mxu0 %v3948
    %6614 = vmatprep.subr.bf16.mxu0 %v3957
    %6615 = vmatpush1.bf16.msra.mxu0 %v3956
    %6616 = vmatprep.subr.bf16.mxu0 %v3965
    %6617 = vmatpush1.bf16.msra.mxu0 %v3964
    %6618 = vmatprep.subr.bf16.mxu0 %v3973
    %6619 = vmatpush1.bf16.msra.mxu0 %v3972
    %6620 = vmatprep.subr.bf16.mxu0 %v3981
    %6621 = vmatpush1.bf16.msra.mxu0 %v3980
    %6622 = vmatprep.subr.bf16.mxu0 %v3989
    %6623 = vmatpush1.bf16.msra.mxu0 %v3988
    %6624 = vmatprep.subr.bf16.mxu0 %v3997
    %6625 = vmatpush1.bf16.msra.mxu0 %v3996
    %6626 = vmatprep.subr.bf16.mxu0 %v4005
    %6627 = vmatpush1.bf16.msra.mxu0 %v4004
    %6628 = vmatprep.subr.bf16.mxu0 %v4013
    %6629 = vmatpush1.bf16.msra.mxu0 %v4012
    %6630 = vmatprep.subr.bf16.mxu0 %v4021
    %6631 = vmatpush1.bf16.msra.mxu0 %v4020
    %6632 = vmatprep.subr.bf16.mxu0 %v4029
    %6633 = vmatpush1.bf16.msra.mxu0 %v4028
    %6634 = vmatprep.mubr.bf16.mxu0 %v1435
    %6635 = vmatmul.mubr.bf16.gmra.mrb[0].mxu0 %v1434
    %v6636 = vpop.f32.mrb[0].mxu0
    %v6637 = vadd.f32 %v6444, %v6636
    %v6638 = vpop.f32.mrb[0].mxu0
    %v6639 = vadd.f32 %v6446, %v6638
    %v6640 = vpop.f32.mrb[0].mxu0
    %v6641 = vadd.f32 %v6448, %v6640
    %v6642 = vpop.f32.mrb[0].mxu0
    %v6643 = vadd.f32 %v6450, %v6642
    %6644 = vmatprep.mubr.bf16.mxu0 %v1443
    %6645 = vmatmul.mubr.bf16.gmra.mrb[0].mxu0 %v1442
    %v6646 = vpop.f32.mrb[0].mxu0
    %v6647 = vadd.f32 %v6454, %v6646
    %v6648 = vpop.f32.mrb[0].mxu0
    %v6649 = vadd.f32 %v6456, %v6648
    %v6650 = vpop.f32.mrb[0].mxu0
    %v6651 = vadd.f32 %v6458, %v6650
    %v6652 = vpop.f32.mrb[0].mxu0
    %v6653 = vadd.f32 %v6460, %v6652
    %6654 = vmatprep.mubr.bf16.mxu0 %v1451
    %6655 = vmatmul.mubr.bf16.gmra.mrb[0].mxu0 %v1450
    %v6656 = vpop.f32.mrb[0].mxu0
    %v6657 = vadd.f32 %v6464, %v6656
    %v6658 = vpop.f32.mrb[0].mxu0
    %v6659 = vadd.f32 %v6466, %v6658
    %v6660 = vpop.f32.mrb[0].mxu0
    %v6661 = vadd.f32 %v6468, %v6660
    %v6662 = vpop.f32.mrb[0].mxu0
    %v6663 = vadd.f32 %v6470, %v6662
    %6664 = vmatprep.mubr.bf16.mxu0 %v1459
    %6665 = vmatmul.mubr.bf16.gmra.mrb[0].mxu0 %v1458
    %v6666 = vpop.f32.mrb[0].mxu0
    %v6667 = vadd.f32 %v6474, %v6666
    %v6668 = vpop.f32.mrb[0].mxu0
    %v6669 = vadd.f32 %v6476, %v6668
    %v6670 = vpop.f32.mrb[0].mxu0
    %v6671 = vadd.f32 %v6478, %v6670
    %v6672 = vpop.f32.mrb[0].mxu0
    %v6673 = vadd.f32 %v6480, %v6672
    %6674 = vmatprep.mubr.bf16.mxu0 %v1467
    %6675 = vmatmul.mubr.bf16.gmra.mrb[0].mxu0 %v1466
    %v6676 = vpop.f32.mrb[0].mxu0
    %v6677 = vadd.f32 %v6484, %v6676
    %v6678 = vpop.f32.mrb[0].mxu0
    %v6679 = vadd.f32 %v6486, %v6678
    %v6680 = vpop.f32.mrb[0].mxu0
    %v6681 = vadd.f32 %v6488, %v6680
    %v6682 = vpop.f32.mrb[0].mxu0
    %v6683 = vadd.f32 %v6490, %v6682
    %6684 = vmatprep.mubr.bf16.mxu0 %v1475
    %6685 = vmatmul.mubr.bf16.gmra.mrb[0].mxu0 %v1474
    %v6686 = vpop.f32.mrb[0].mxu0
    %v6687 = vadd.f32 %v6494, %v6686
    %v6688 = vpop.f32.mrb[0].mxu0
    %v6689 = vadd.f32 %v6496, %v6688
    %v6690 = vpop.f32.mrb[0].mxu0
    %v6691 = vadd.f32 %v6498, %v6690
    %v6692 = vpop.f32.mrb[0].mxu0
    %v6693 = vadd.f32 %v6500, %v6692
    %6694 = vmatprep.mubr.bf16.mxu0 %v1483
    %6695 = vmatmul.mubr.bf16.gmra.mrb[0].mxu0 %v1482
    %v6696 = vpop.f32.mrb[0].mxu0
    %v6697 = vadd.f32 %v6504, %v6696
    %v6698 = vpop.f32.mrb[0].mxu0
    %v6699 = vadd.f32 %v6506, %v6698
    %v6700 = vpop.f32.mrb[0].mxu0
    %v6701 = vadd.f32 %v6508, %v6700
    %v6702 = vpop.f32.mrb[0].mxu0
    %v6703 = vadd.f32 %v6510, %v6702
    %6704 = vmatprep.mubr.bf16.mxu0 %v1491
    %6705 = vmatmul.mubr.bf16.gmra.mrb[0].mxu0 %v1490
    %v6706 = vpop.f32.mrb[0].mxu0
    %v6707 = vadd.f32 %v6514, %v6706
    %v6708 = vpop.f32.mrb[0].mxu0
    %v6709 = vadd.f32 %v6516, %v6708
    %v6710 = vpop.f32.mrb[0].mxu0
    %v6711 = vadd.f32 %v6518, %v6710
    %v6712 = vpop.f32.mrb[0].mxu0
    %v6713 = vadd.f32 %v6520, %v6712
    %6714 = vmatprep.mubr.bf16.mxu0 %v1499
    %6715 = vmatmul.mubr.bf16.gmra.mrb[0].mxu0 %v1498
    %v6716 = vpop.f32.mrb[0].mxu0
    %v6717 = vadd.f32 %v6524, %v6716
    %v6718 = vpop.f32.mrb[0].mxu0
    %v6719 = vadd.f32 %v6526, %v6718
    %v6720 = vpop.f32.mrb[0].mxu0
    %v6721 = vadd.f32 %v6528, %v6720
    %v6722 = vpop.f32.mrb[0].mxu0
    %v6723 = vadd.f32 %v6530, %v6722
    %6724 = vmatprep.mubr.bf16.mxu0 %v1507
    %6725 = vmatmul.mubr.bf16.gmra.mrb[0].mxu0 %v1506
    %v6726 = vpop.f32.mrb[0].mxu0
    %v6727 = vadd.f32 %v6534, %v6726
    %v6728 = vpop.f32.mrb[0].mxu0
    %v6729 = vadd.f32 %v6536, %v6728
    %v6730 = vpop.f32.mrb[0].mxu0
    %v6731 = vadd.f32 %v6538, %v6730
    %v6732 = vpop.f32.mrb[0].mxu0
    %v6733 = vadd.f32 %v6540, %v6732
    %6734 = vmatprep.mubr.bf16.mxu0 %v1515
    %6735 = vmatmul.mubr.bf16.gmra.mrb[0].mxu0 %v1514
    %v6736 = vpop.f32.mrb[0].mxu0
    %v6737 = vadd.f32 %v6544, %v6736
    %v6738 = vpop.f32.mrb[0].mxu0
    %v6739 = vadd.f32 %v6546, %v6738
    %v6740 = vpop.f32.mrb[0].mxu0
    %v6741 = vadd.f32 %v6548, %v6740
    %v6742 = vpop.f32.mrb[0].mxu0
    %v6743 = vadd.f32 %v6550, %v6742
    %6744 = vmatprep.mubr.bf16.mxu0 %v1523
    %6745 = vmatmul.mubr.bf16.gmra.mrb[0].mxu0 %v1522
    %v6746 = vpop.f32.mrb[0].mxu0
    %v6747 = vadd.f32 %v6554, %v6746
    %v6748 = vpop.f32.mrb[0].mxu0
    %v6749 = vadd.f32 %v6556, %v6748
    %v6750 = vpop.f32.mrb[0].mxu0
    %v6751 = vadd.f32 %v6558, %v6750
    %v6752 = vpop.f32.mrb[0].mxu0
    %v6753 = vadd.f32 %v6560, %v6752
    %6754 = vmatprep.mubr.bf16.mxu0 %v1531
    %6755 = vmatmul.mubr.bf16.gmra.mrb[0].mxu0 %v1530
    %v6756 = vpop.f32.mrb[0].mxu0
    %v6757 = vadd.f32 %v6564, %v6756
    %v6758 = vpop.f32.mrb[0].mxu0
    %v6759 = vadd.f32 %v6566, %v6758
    %v6760 = vpop.f32.mrb[0].mxu0
    %v6761 = vadd.f32 %v6568, %v6760
    %v6762 = vpop.f32.mrb[0].mxu0
    %v6763 = vadd.f32 %v6570, %v6762
    %6764 = vmatprep.mubr.bf16.mxu0 %v1539
    %6765 = vmatmul.mubr.bf16.gmra.mrb[0].mxu0 %v1538
    %v6766 = vpop.f32.mrb[0].mxu0
    %v6767 = vadd.f32 %v6574, %v6766
    %v6768 = vpop.f32.mrb[0].mxu0
    %v6769 = vadd.f32 %v6576, %v6768
    %v6770 = vpop.f32.mrb[0].mxu0
    %v6771 = vadd.f32 %v6578, %v6770
    %v6772 = vpop.f32.mrb[0].mxu0
    %v6773 = vadd.f32 %v6580, %v6772
    %6774 = vmatprep.mubr.bf16.mxu0 %v1547
    %6775 = vmatmul.mubr.bf16.gmra.mrb[0].mxu0 %v1546
    %v6776 = vpop.f32.mrb[0].mxu0
    %v6777 = vadd.f32 %v6584, %v6776
    %v6778 = vpop.f32.mrb[0].mxu0
    %v6779 = vadd.f32 %v6586, %v6778
    %v6780 = vpop.f32.mrb[0].mxu0
    %v6781 = vadd.f32 %v6588, %v6780
    %v6782 = vpop.f32.mrb[0].mxu0
    %v6783 = vadd.f32 %v6590, %v6782
    %6784 = vmatprep.mubr.bf16.mxu0 %v1555
    %6785 = vmatmul.mubr.bf16.gmra.mrb[0].mxu0 %v1554
    %v6786 = vpop.f32.mrb[0].mxu0
    %v6787 = vadd.f32 %v6594, %v6786
    %v6788 = vpop.f32.mrb[0].mxu0
    %v6789 = vadd.f32 %v6596, %v6788
    %v6790 = vpop.f32.mrb[0].mxu0
    %v6791 = vadd.f32 %v6598, %v6790
    %v6792 = vpop.f32.mrb[0].mxu0
    %v6793 = vadd.f32 %v6600, %v6792
    %6794 = vdwg.mxu0
    %6795 = vmatprep.subr.bf16.mxu0 %v4037
    %6796 = vmatpush1.bf16.msra.mxu0 %v4036
    %6797 = vmatprep.subr.bf16.mxu0 %v4045
    %6798 = vmatpush1.bf16.msra.mxu0 %v4044
    %6799 = vmatprep.subr.bf16.mxu0 %v4053
    %6800 = vmatpush1.bf16.msra.mxu0 %v4052
    %6801 = vmatprep.subr.bf16.mxu0 %v4061
    %6802 = vmatpush1.bf16.msra.mxu0 %v4060
    %6803 = vmatprep.subr.bf16.mxu0 %v4069
    %6804 = vmatpush1.bf16.msra.mxu0 %v4068
    %6805 = vmatprep.subr.bf16.mxu0 %v4077
    %6806 = vmatpush1.bf16.msra.mxu0 %v4076
    %6807 = vmatprep.subr.bf16.mxu0 %v4085
    %6808 = vmatpush1.bf16.msra.mxu0 %v4084
    %6809 = vmatprep.subr.bf16.mxu0 %v4093
    %6810 = vmatpush1.bf16.msra.mxu0 %v4092
    %6811 = vmatprep.subr.bf16.mxu0 %v4101
    %6812 = vmatpush1.bf16.msra.mxu0 %v4100
    %6813 = vmatprep.subr.bf16.mxu0 %v4109
    %6814 = vmatpush1.bf16.msra.mxu0 %v4108
    %6815 = vmatprep.subr.bf16.mxu0 %v4117
    %6816 = vmatpush1.bf16.msra.mxu0 %v4116
    %6817 = vmatprep.subr.bf16.mxu0 %v4125
    %6818 = vmatpush1.bf16.msra.mxu0 %v4124
    %6819 = vmatprep.subr.bf16.mxu0 %v4133
    %6820 = vmatpush1.bf16.msra.mxu0 %v4132
    %6821 = vmatprep.subr.bf16.mxu0 %v4141
    %6822 = vmatpush1.bf16.msra.mxu0 %v4140
    %6823 = vmatprep.subr.bf16.mxu0 %v4149
    %6824 = vmatpush1.bf16.msra.mxu0 %v4148
    %6825 = vmatprep.subr.bf16.mxu0 %v4157
    %6826 = vmatpush1.bf16.msra.mxu0 %v4156
    %6827 = vmatprep.mubr.bf16.mxu0 %v1437
    %6828 = vmatmul.mubr.bf16.gmra.mrb[0].mxu0 %v1436
    %v6829 = vpop.f32.mrb[0].mxu0
    %v6830 = vadd.f32 %v6637, %v6829
    %v6831 = vpop.f32.mrb[0].mxu0
    %v6832 = vadd.f32 %v6639, %v6831
    %v6833 = vpop.f32.mrb[0].mxu0
    %v6834 = vadd.f32 %v6641, %v6833
    %v6835 = vpop.f32.mrb[0].mxu0
    %v6836 = vadd.f32 %v6643, %v6835
    %6837 = vmatprep.mubr.bf16.mxu0 %v1445
    %6838 = vmatmul.mubr.bf16.gmra.mrb[0].mxu0 %v1444
    %v6839 = vpop.f32.mrb[0].mxu0
    %v6840 = vadd.f32 %v6647, %v6839
    %v6841 = vpop.f32.mrb[0].mxu0
    %v6842 = vadd.f32 %v6649, %v6841
    %v6843 = vpop.f32.mrb[0].mxu0
    %v6844 = vadd.f32 %v6651, %v6843
    %v6845 = vpop.f32.mrb[0].mxu0
    %v6846 = vadd.f32 %v6653, %v6845
    %6847 = vmatprep.mubr.bf16.mxu0 %v1453
    %6848 = vmatmul.mubr.bf16.gmra.mrb[0].mxu0 %v1452
    %v6849 = vpop.f32.mrb[0].mxu0
    %v6850 = vadd.f32 %v6657, %v6849
    %v6851 = vpop.f32.mrb[0].mxu0
    %v6852 = vadd.f32 %v6659, %v6851
    %v6853 = vpop.f32.mrb[0].mxu0
    %v6854 = vadd.f32 %v6661, %v6853
    %v6855 = vpop.f32.mrb[0].mxu0
    %v6856 = vadd.f32 %v6663, %v6855
    %6857 = vmatprep.mubr.bf16.mxu0 %v1461
    %6858 = vmatmul.mubr.bf16.gmra.mrb[0].mxu0 %v1460
    %v6859 = vpop.f32.mrb[0].mxu0
    %v6860 = vadd.f32 %v6667, %v6859
    %v6861 = vpop.f32.mrb[0].mxu0
    %v6862 = vadd.f32 %v6669, %v6861
    %v6863 = vpop.f32.mrb[0].mxu0
    %v6864 = vadd.f32 %v6671, %v6863
    %v6865 = vpop.f32.mrb[0].mxu0
    %v6866 = vadd.f32 %v6673, %v6865
    %6867 = vmatprep.mubr.bf16.mxu0 %v1469
    %6868 = vmatmul.mubr.bf16.gmra.mrb[0].mxu0 %v1468
    %v6869 = vpop.f32.mrb[0].mxu0
    %v6870 = vadd.f32 %v6677, %v6869
    %v6871 = vpop.f32.mrb[0].mxu0
    %v6872 = vadd.f32 %v6679, %v6871
    %v6873 = vpop.f32.mrb[0].mxu0
    %v6874 = vadd.f32 %v6681, %v6873
    %v6875 = vpop.f32.mrb[0].mxu0
    %v6876 = vadd.f32 %v6683, %v6875
    %6877 = vmatprep.mubr.bf16.mxu0 %v1477
    %6878 = vmatmul.mubr.bf16.gmra.mrb[0].mxu0 %v1476
    %v6879 = vpop.f32.mrb[0].mxu0
    %v6880 = vadd.f32 %v6687, %v6879
    %v6881 = vpop.f32.mrb[0].mxu0
    %v6882 = vadd.f32 %v6689, %v6881
    %v6883 = vpop.f32.mrb[0].mxu0
    %v6884 = vadd.f32 %v6691, %v6883
    %v6885 = vpop.f32.mrb[0].mxu0
    %v6886 = vadd.f32 %v6693, %v6885
    %6887 = vmatprep.mubr.bf16.mxu0 %v1485
    %6888 = vmatmul.mubr.bf16.gmra.mrb[0].mxu0 %v1484
    %v6889 = vpop.f32.mrb[0].mxu0
    %v6890 = vadd.f32 %v6697, %v6889
    %v6891 = vpop.f32.mrb[0].mxu0
    %v6892 = vadd.f32 %v6699, %v6891
    %v6893 = vpop.f32.mrb[0].mxu0
    %v6894 = vadd.f32 %v6701, %v6893
    %v6895 = vpop.f32.mrb[0].mxu0
    %v6896 = vadd.f32 %v6703, %v6895
    %6897 = vmatprep.mubr.bf16.mxu0 %v1493
    %6898 = vmatmul.mubr.bf16.gmra.mrb[0].mxu0 %v1492
    %v6899 = vpop.f32.mrb[0].mxu0
    %v6900 = vadd.f32 %v6707, %v6899
    %v6901 = vpop.f32.mrb[0].mxu0
    %v6902 = vadd.f32 %v6709, %v6901
    %v6903 = vpop.f32.mrb[0].mxu0
    %v6904 = vadd.f32 %v6711, %v6903
    %v6905 = vpop.f32.mrb[0].mxu0
    %v6906 = vadd.f32 %v6713, %v6905
    %6907 = vmatprep.mubr.bf16.mxu0 %v1501
    %6908 = vmatmul.mubr.bf16.gmra.mrb[0].mxu0 %v1500
    %v6909 = vpop.f32.mrb[0].mxu0
    %v6910 = vadd.f32 %v6717, %v6909
    %v6911 = vpop.f32.mrb[0].mxu0
    %v6912 = vadd.f32 %v6719, %v6911
    %v6913 = vpop.f32.mrb[0].mxu0
    %v6914 = vadd.f32 %v6721, %v6913
    %v6915 = vpop.f32.mrb[0].mxu0
    %v6916 = vadd.f32 %v6723, %v6915
    %6917 = vmatprep.mubr.bf16.mxu0 %v1509
    %6918 = vmatmul.mubr.bf16.gmra.mrb[0].mxu0 %v1508
    %v6919 = vpop.f32.mrb[0].mxu0
    %v6920 = vadd.f32 %v6727, %v6919
    %v6921 = vpop.f32.mrb[0].mxu0
    %v6922 = vadd.f32 %v6729, %v6921
    %v6923 = vpop.f32.mrb[0].mxu0
    %v6924 = vadd.f32 %v6731, %v6923
    %v6925 = vpop.f32.mrb[0].mxu0
    %v6926 = vadd.f32 %v6733, %v6925
    %6927 = vmatprep.mubr.bf16.mxu0 %v1517
    %6928 = vmatmul.mubr.bf16.gmra.mrb[0].mxu0 %v1516
    %v6929 = vpop.f32.mrb[0].mxu0
    %v6930 = vadd.f32 %v6737, %v6929
    %v6931 = vpop.f32.mrb[0].mxu0
    %v6932 = vadd.f32 %v6739, %v6931
    %v6933 = vpop.f32.mrb[0].mxu0
    %v6934 = vadd.f32 %v6741, %v6933
    %v6935 = vpop.f32.mrb[0].mxu0
    %v6936 = vadd.f32 %v6743, %v6935
    %6937 = vmatprep.mubr.bf16.mxu0 %v1525
    %6938 = vmatmul.mubr.bf16.gmra.mrb[0].mxu0 %v1524
    %v6939 = vpop.f32.mrb[0].mxu0
    %v6940 = vadd.f32 %v6747, %v6939
    %v6941 = vpop.f32.mrb[0].mxu0
    %v6942 = vadd.f32 %v6749, %v6941
    %v6943 = vpop.f32.mrb[0].mxu0
    %v6944 = vadd.f32 %v6751, %v6943
    %v6945 = vpop.f32.mrb[0].mxu0
    %v6946 = vadd.f32 %v6753, %v6945
    %6947 = vmatprep.mubr.bf16.mxu0 %v1533
    %6948 = vmatmul.mubr.bf16.gmra.mrb[0].mxu0 %v1532
    %v6949 = vpop.f32.mrb[0].mxu0
    %v6950 = vadd.f32 %v6757, %v6949
    %v6951 = vpop.f32.mrb[0].mxu0
    %v6952 = vadd.f32 %v6759, %v6951
    %v6953 = vpop.f32.mrb[0].mxu0
    %v6954 = vadd.f32 %v6761, %v6953
    %v6955 = vpop.f32.mrb[0].mxu0
    %v6956 = vadd.f32 %v6763, %v6955
    %6957 = vmatprep.mubr.bf16.mxu0 %v1541
    %6958 = vmatmul.mubr.bf16.gmra.mrb[0].mxu0 %v1540
    %v6959 = vpop.f32.mrb[0].mxu0
    %v6960 = vadd.f32 %v6767, %v6959
    %v6961 = vpop.f32.mrb[0].mxu0
    %v6962 = vadd.f32 %v6769, %v6961
    %v6963 = vpop.f32.mrb[0].mxu0
    %v6964 = vadd.f32 %v6771, %v6963
    %v6965 = vpop.f32.mrb[0].mxu0
    %v6966 = vadd.f32 %v6773, %v6965
    %6967 = vmatprep.mubr.bf16.mxu0 %v1549
    %6968 = vmatmul.mubr.bf16.gmra.mrb[0].mxu0 %v1548
    %v6969 = vpop.f32.mrb[0].mxu0
    %v6970 = vadd.f32 %v6777, %v6969
    %v6971 = vpop.f32.mrb[0].mxu0
    %v6972 = vadd.f32 %v6779, %v6971
    %v6973 = vpop.f32.mrb[0].mxu0
    %v6974 = vadd.f32 %v6781, %v6973
    %v6975 = vpop.f32.mrb[0].mxu0
    %v6976 = vadd.f32 %v6783, %v6975
    %6977 = vmatprep.mubr.bf16.mxu0 %v1557
    %6978 = vmatmul.mubr.bf16.gmra.mrb[0].mxu0 %v1556
    %v6979 = vpop.f32.mrb[0].mxu0
    %v6980 = vadd.f32 %v6787, %v6979
    %v6981 = vpop.f32.mrb[0].mxu0
    %v6982 = vadd.f32 %v6789, %v6981
    %v6983 = vpop.f32.mrb[0].mxu0
    %v6984 = vadd.f32 %v6791, %v6983
    %v6985 = vpop.f32.mrb[0].mxu0
    %v6986 = vadd.f32 %v6793, %v6985
    %6987 = vdwg.mxu0
    %6988 = vmatprep.subr.bf16.mxu0 %v3655
    %6989 = vmatpush1.bf16.msra.mxu0 %v3654
    %6990 = vmatprep.subr.bf16.mxu0 %v3663
    %6991 = vmatpush1.bf16.msra.mxu0 %v3662
    %6992 = vmatprep.subr.bf16.mxu0 %v3671
    %6993 = vmatpush1.bf16.msra.mxu0 %v3670
    %6994 = vmatprep.subr.bf16.mxu0 %v3679
    %6995 = vmatpush1.bf16.msra.mxu0 %v3678
    %6996 = vmatprep.subr.bf16.mxu0 %v3687
    %6997 = vmatpush1.bf16.msra.mxu0 %v3686
    %6998 = vmatprep.subr.bf16.mxu0 %v3695
    %6999 = vmatpush1.bf16.msra.mxu0 %v3694
    %7000 = vmatprep.subr.bf16.mxu0 %v3703
    %7001 = vmatpush1.bf16.msra.mxu0 %v3702
    %7002 = vmatprep.subr.bf16.mxu0 %v3711
    %7003 = vmatpush1.bf16.msra.mxu0 %v3710
    %7004 = vmatprep.subr.bf16.mxu0 %v3719
    %7005 = vmatpush1.bf16.msra.mxu0 %v3718
    %7006 = vmatprep.subr.bf16.mxu0 %v3727
    %7007 = vmatpush1.bf16.msra.mxu0 %v3726
    %7008 = vmatprep.subr.bf16.mxu0 %v3735
    %7009 = vmatpush1.bf16.msra.mxu0 %v3734
    %7010 = vmatprep.subr.bf16.mxu0 %v3743
    %7011 = vmatpush1.bf16.msra.mxu0 %v3742
    %7012 = vmatprep.subr.bf16.mxu0 %v3751
    %7013 = vmatpush1.bf16.msra.mxu0 %v3750
    %7014 = vmatprep.subr.bf16.mxu0 %v3759
    %7015 = vmatpush1.bf16.msra.mxu0 %v3758
    %7016 = vmatprep.subr.bf16.mxu0 %v3767
    %7017 = vmatpush1.bf16.msra.mxu0 %v3766
    %7018 = vmatprep.subr.bf16.mxu0 %v3775
    %7019 = vmatpush1.bf16.msra.mxu0 %v3774
    %7020 = vmatprep.mubr.bf16.mxu0 %v1431
    %7021 = vmatmul.mubr.bf16.gmra.mrb[0].mxu0 %v1430
    %v7022 = vpop.f32.mrb[0].mxu0
    %v7023 = vadd.f32 %v2099, %v7022
    %v7024 = vpop.f32.mrb[0].mxu0
    %v7025 = vadd.f32 %v2103, %v7024
    %v7026 = vpop.f32.mrb[0].mxu0
    %v7027 = vadd.f32 %v2099, %v7026
    %v7028 = vpop.f32.mrb[0].mxu0
    %v7029 = vadd.f32 %v2103, %v7028
    %7030 = vmatprep.mubr.bf16.mxu0 %v1439
    %7031 = vmatmul.mubr.bf16.gmra.mrb[0].mxu0 %v1438
    %v7032 = vpop.f32.mrb[0].mxu0
    %v7033 = vadd.f32 %v2099, %v7032
    %v7034 = vpop.f32.mrb[0].mxu0
    %v7035 = vadd.f32 %v2103, %v7034
    %v7036 = vpop.f32.mrb[0].mxu0
    %v7037 = vadd.f32 %v2099, %v7036
    %v7038 = vpop.f32.mrb[0].mxu0
    %v7039 = vadd.f32 %v2103, %v7038
    %7040 = vmatprep.mubr.bf16.mxu0 %v1447
    %7041 = vmatmul.mubr.bf16.gmra.mrb[0].mxu0 %v1446
    %v7042 = vpop.f32.mrb[0].mxu0
    %v7043 = vadd.f32 %v2099, %v7042
    %v7044 = vpop.f32.mrb[0].mxu0
    %v7045 = vadd.f32 %v2103, %v7044
    %v7046 = vpop.f32.mrb[0].mxu0
    %v7047 = vadd.f32 %v2099, %v7046
    %v7048 = vpop.f32.mrb[0].mxu0
    %v7049 = vadd.f32 %v2103, %v7048
    %7050 = vmatprep.mubr.bf16.mxu0 %v1455
    %7051 = vmatmul.mubr.bf16.gmra.mrb[0].mxu0 %v1454
    %v7052 = vpop.f32.mrb[0].mxu0
    %v7053 = vadd.f32 %v2099, %v7052
    %v7054 = vpop.f32.mrb[0].mxu0
    %v7055 = vadd.f32 %v2103, %v7054
    %v7056 = vpop.f32.mrb[0].mxu0
    %v7057 = vadd.f32 %v2099, %v7056
    %v7058 = vpop.f32.mrb[0].mxu0
    %v7059 = vadd.f32 %v2103, %v7058
    %7060 = vmatprep.mubr.bf16.mxu0 %v1463
    %7061 = vmatmul.mubr.bf16.gmra.mrb[0].mxu0 %v1462
    %v7062 = vpop.f32.mrb[0].mxu0
    %v7063 = vadd.f32 %v2099, %v7062
    %v7064 = vpop.f32.mrb[0].mxu0
    %v7065 = vadd.f32 %v2103, %v7064
    %v7066 = vpop.f32.mrb[0].mxu0
    %v7067 = vadd.f32 %v2099, %v7066
    %v7068 = vpop.f32.mrb[0].mxu0
    %v7069 = vadd.f32 %v2103, %v7068
    %7070 = vmatprep.mubr.bf16.mxu0 %v1471
    %7071 = vmatmul.mubr.bf16.gmra.mrb[0].mxu0 %v1470
    %v7072 = vpop.f32.mrb[0].mxu0
    %v7073 = vadd.f32 %v2099, %v7072
    %v7074 = vpop.f32.mrb[0].mxu0
    %v7075 = vadd.f32 %v2103, %v7074
    %v7076 = vpop.f32.mrb[0].mxu0
    %v7077 = vadd.f32 %v2099, %v7076
    %v7078 = vpop.f32.mrb[0].mxu0
    %v7079 = vadd.f32 %v2103, %v7078
    %7080 = vmatprep.mubr.bf16.mxu0 %v1479
    %7081 = vmatmul.mubr.bf16.gmra.mrb[0].mxu0 %v1478
    %v7082 = vpop.f32.mrb[0].mxu0
    %v7083 = vadd.f32 %v2099, %v7082
    %v7084 = vpop.f32.mrb[0].mxu0
    %v7085 = vadd.f32 %v2103, %v7084
    %v7086 = vpop.f32.mrb[0].mxu0
    %v7087 = vadd.f32 %v2099, %v7086
    %v7088 = vpop.f32.mrb[0].mxu0
    %v7089 = vadd.f32 %v2103, %v7088
    %7090 = vmatprep.mubr.bf16.mxu0 %v1487
    %7091 = vmatmul.mubr.bf16.gmra.mrb[0].mxu0 %v1486
    %v7092 = vpop.f32.mrb[0].mxu0
    %v7093 = vadd.f32 %v2099, %v7092
    %v7094 = vpop.f32.mrb[0].mxu0
    %v7095 = vadd.f32 %v2103, %v7094
    %v7096 = vpop.f32.mrb[0].mxu0
    %v7097 = vadd.f32 %v2099, %v7096
    %v7098 = vpop.f32.mrb[0].mxu0
    %v7099 = vadd.f32 %v2103, %v7098
    %7100 = vmatprep.mubr.bf16.mxu0 %v1495
    %7101 = vmatmul.mubr.bf16.gmra.mrb[0].mxu0 %v1494
    %v7102 = vpop.f32.mrb[0].mxu0
    %v7103 = vadd.f32 %v2099, %v7102
    %v7104 = vpop.f32.mrb[0].mxu0
    %v7105 = vadd.f32 %v2103, %v7104
    %v7106 = vpop.f32.mrb[0].mxu0
    %v7107 = vadd.f32 %v2099, %v7106
    %v7108 = vpop.f32.mrb[0].mxu0
    %v7109 = vadd.f32 %v2103, %v7108
    %7110 = vmatprep.mubr.bf16.mxu0 %v1503
    %7111 = vmatmul.mubr.bf16.gmra.mrb[0].mxu0 %v1502
    %v7112 = vpop.f32.mrb[0].mxu0
    %v7113 = vadd.f32 %v2099, %v7112
    %v7114 = vpop.f32.mrb[0].mxu0
    %v7115 = vadd.f32 %v2103, %v7114
    %v7116 = vpop.f32.mrb[0].mxu0
    %v7117 = vadd.f32 %v2099, %v7116
    %v7118 = vpop.f32.mrb[0].mxu0
    %v7119 = vadd.f32 %v2103, %v7118
    %7120 = vmatprep.mubr.bf16.mxu0 %v1511
    %7121 = vmatmul.mubr.bf16.gmra.mrb[0].mxu0 %v1510
    %v7122 = vpop.f32.mrb[0].mxu0
    %v7123 = vadd.f32 %v2099, %v7122
    %v7124 = vpop.f32.mrb[0].mxu0
    %v7125 = vadd.f32 %v2103, %v7124
    %v7126 = vpop.f32.mrb[0].mxu0
    %v7127 = vadd.f32 %v2099, %v7126
    %v7128 = vpop.f32.mrb[0].mxu0
    %v7129 = vadd.f32 %v2103, %v7128
    %7130 = vmatprep.mubr.bf16.mxu0 %v1519
    %7131 = vmatmul.mubr.bf16.gmra.mrb[0].mxu0 %v1518
    %v7132 = vpop.f32.mrb[0].mxu0
    %v7133 = vadd.f32 %v2099, %v7132
    %v7134 = vpop.f32.mrb[0].mxu0
    %v7135 = vadd.f32 %v2103, %v7134
    %v7136 = vpop.f32.mrb[0].mxu0
    %v7137 = vadd.f32 %v2099, %v7136
    %v7138 = vpop.f32.mrb[0].mxu0
    %v7139 = vadd.f32 %v2103, %v7138
    %7140 = vmatprep.mubr.bf16.mxu0 %v1527
    %7141 = vmatmul.mubr.bf16.gmra.mrb[0].mxu0 %v1526
    %v7142 = vpop.f32.mrb[0].mxu0
    %v7143 = vadd.f32 %v2099, %v7142
    %v7144 = vpop.f32.mrb[0].mxu0
    %v7145 = vadd.f32 %v2103, %v7144
    %v7146 = vpop.f32.mrb[0].mxu0
    %v7147 = vadd.f32 %v2099, %v7146
    %v7148 = vpop.f32.mrb[0].mxu0
    %v7149 = vadd.f32 %v2103, %v7148
    %7150 = vmatprep.mubr.bf16.mxu0 %v1535
    %7151 = vmatmul.mubr.bf16.gmra.mrb[0].mxu0 %v1534
    %v7152 = vpop.f32.mrb[0].mxu0
    %v7153 = vadd.f32 %v2099, %v7152
    %v7154 = vpop.f32.mrb[0].mxu0
    %v7155 = vadd.f32 %v2103, %v7154
    %v7156 = vpop.f32.mrb[0].mxu0
    %v7157 = vadd.f32 %v2099, %v7156
    %v7158 = vpop.f32.mrb[0].mxu0
    %v7159 = vadd.f32 %v2103, %v7158
    %7160 = vmatprep.mubr.bf16.mxu0 %v1543
    %7161 = vmatmul.mubr.bf16.gmra.mrb[0].mxu0 %v1542
    %v7162 = vpop.f32.mrb[0].mxu0
    %v7163 = vadd.f32 %v2099, %v7162
    %v7164 = vpop.f32.mrb[0].mxu0
    %v7165 = vadd.f32 %v2103, %v7164
    %v7166 = vpop.f32.mrb[0].mxu0
    %v7167 = vadd.f32 %v2099, %v7166
    %v7168 = vpop.f32.mrb[0].mxu0
    %v7169 = vadd.f32 %v2103, %v7168
    %7170 = vmatprep.mubr.bf16.mxu0 %v1551
    %7171 = vmatmul.mubr.bf16.gmra.mrb[0].mxu0 %v1550
    %v7172 = vpop.f32.mrb[0].mxu0
    %v7173 = vadd.f32 %v2099, %v7172
    %v7174 = vpop.f32.mrb[0].mxu0
    %v7175 = vadd.f32 %v2103, %v7174
    %v7176 = vpop.f32.mrb[0].mxu0
    %v7177 = vadd.f32 %v2099, %v7176
    %v7178 = vpop.f32.mrb[0].mxu0
    %v7179 = vadd.f32 %v2103, %v7178
    %7180 = vdwg.mxu0
    %7181 = vmatprep.subr.bf16.mxu0 %v3783
    %7182 = vmatpush1.bf16.msra.mxu0 %v3782
    %7183 = vmatprep.subr.bf16.mxu0 %v3791
    %7184 = vmatpush1.bf16.msra.mxu0 %v3790
    %7185 = vmatprep.subr.bf16.mxu0 %v3799
    %7186 = vmatpush1.bf16.msra.mxu0 %v3798
    %7187 = vmatprep.subr.bf16.mxu0 %v3807
    %7188 = vmatpush1.bf16.msra.mxu0 %v3806
    %7189 = vmatprep.subr.bf16.mxu0 %v3815
    %7190 = vmatpush1.bf16.msra.mxu0 %v3814
    %7191 = vmatprep.subr.bf16.mxu0 %v3823
    %7192 = vmatpush1.bf16.msra.mxu0 %v3822
    %7193 = vmatprep.subr.bf16.mxu0 %v3831
    %7194 = vmatpush1.bf16.msra.mxu0 %v3830
    %7195 = vmatprep.subr.bf16.mxu0 %v3839
    %7196 = vmatpush1.bf16.msra.mxu0 %v3838
    %7197 = vmatprep.subr.bf16.mxu0 %v3847
    %7198 = vmatpush1.bf16.msra.mxu0 %v3846
    %7199 = vmatprep.subr.bf16.mxu0 %v3855
    %7200 = vmatpush1.bf16.msra.mxu0 %v3854
    %7201 = vmatprep.subr.bf16.mxu0 %v3863
    %7202 = vmatpush1.bf16.msra.mxu0 %v3862
    %7203 = vmatprep.subr.bf16.mxu0 %v3871
    %7204 = vmatpush1.bf16.msra.mxu0 %v3870
    %7205 = vmatprep.subr.bf16.mxu0 %v3879
    %7206 = vmatpush1.bf16.msra.mxu0 %v3878
    %7207 = vmatprep.subr.bf16.mxu0 %v3887
    %7208 = vmatpush1.bf16.msra.mxu0 %v3886
    %7209 = vmatprep.subr.bf16.mxu0 %v3895
    %7210 = vmatpush1.bf16.msra.mxu0 %v3894
    %7211 = vmatprep.subr.bf16.mxu0 %v3903
    %7212 = vmatpush1.bf16.msra.mxu0 %v3902
    %7213 = vmatprep.mubr.bf16.mxu0 %v1433
    %7214 = vmatmul.mubr.bf16.gmra.mrb[0].mxu0 %v1432
    %v7215 = vpop.f32.mrb[0].mxu0
    %v7216 = vadd.f32 %v7023, %v7215
    %v7217 = vpop.f32.mrb[0].mxu0
    %v7218 = vadd.f32 %v7025, %v7217
    %v7219 = vpop.f32.mrb[0].mxu0
    %v7220 = vadd.f32 %v7027, %v7219
    %v7221 = vpop.f32.mrb[0].mxu0
    %v7222 = vadd.f32 %v7029, %v7221
    %7223 = vmatprep.mubr.bf16.mxu0 %v1441
    %7224 = vmatmul.mubr.bf16.gmra.mrb[0].mxu0 %v1440
    %v7225 = vpop.f32.mrb[0].mxu0
    %v7226 = vadd.f32 %v7033, %v7225
    %v7227 = vpop.f32.mrb[0].mxu0
    %v7228 = vadd.f32 %v7035, %v7227
    %v7229 = vpop.f32.mrb[0].mxu0
    %v7230 = vadd.f32 %v7037, %v7229
    %v7231 = vpop.f32.mrb[0].mxu0
    %v7232 = vadd.f32 %v7039, %v7231
    %7233 = vmatprep.mubr.bf16.mxu0 %v1449
    %7234 = vmatmul.mubr.bf16.gmra.mrb[0].mxu0 %v1448
    %v7235 = vpop.f32.mrb[0].mxu0
    %v7236 = vadd.f32 %v7043, %v7235
    %v7237 = vpop.f32.mrb[0].mxu0
    %v7238 = vadd.f32 %v7045, %v7237
    %v7239 = vpop.f32.mrb[0].mxu0
    %v7240 = vadd.f32 %v7047, %v7239
    %v7241 = vpop.f32.mrb[0].mxu0
    %v7242 = vadd.f32 %v7049, %v7241
    %7243 = vmatprep.mubr.bf16.mxu0 %v1457
    %7244 = vmatmul.mubr.bf16.gmra.mrb[0].mxu0 %v1456
    %v7245 = vpop.f32.mrb[0].mxu0
    %v7246 = vadd.f32 %v7053, %v7245
    %v7247 = vpop.f32.mrb[0].mxu0
    %v7248 = vadd.f32 %v7055, %v7247
    %v7249 = vpop.f32.mrb[0].mxu0
    %v7250 = vadd.f32 %v7057, %v7249
    %v7251 = vpop.f32.mrb[0].mxu0
    %v7252 = vadd.f32 %v7059, %v7251
    %7253 = vmatprep.mubr.bf16.mxu0 %v1465
    %7254 = vmatmul.mubr.bf16.gmra.mrb[0].mxu0 %v1464
    %v7255 = vpop.f32.mrb[0].mxu0
    %v7256 = vadd.f32 %v7063, %v7255
    %v7257 = vpop.f32.mrb[0].mxu0
    %v7258 = vadd.f32 %v7065, %v7257
    %v7259 = vpop.f32.mrb[0].mxu0
    %v7260 = vadd.f32 %v7067, %v7259
    %v7261 = vpop.f32.mrb[0].mxu0
    %v7262 = vadd.f32 %v7069, %v7261
    %7263 = vmatprep.mubr.bf16.mxu0 %v1473
    %7264 = vmatmul.mubr.bf16.gmra.mrb[0].mxu0 %v1472
    %v7265 = vpop.f32.mrb[0].mxu0
    %v7266 = vadd.f32 %v7073, %v7265
    %v7267 = vpop.f32.mrb[0].mxu0
    %v7268 = vadd.f32 %v7075, %v7267
    %v7269 = vpop.f32.mrb[0].mxu0
    %v7270 = vadd.f32 %v7077, %v7269
    %v7271 = vpop.f32.mrb[0].mxu0
    %v7272 = vadd.f32 %v7079, %v7271
    %7273 = vmatprep.mubr.bf16.mxu0 %v1481
    %7274 = vmatmul.mubr.bf16.gmra.mrb[0].mxu0 %v1480
    %v7275 = vpop.f32.mrb[0].mxu0
    %v7276 = vadd.f32 %v7083, %v7275
    %v7277 = vpop.f32.mrb[0].mxu0
    %v7278 = vadd.f32 %v7085, %v7277
    %v7279 = vpop.f32.mrb[0].mxu0
    %v7280 = vadd.f32 %v7087, %v7279
    %v7281 = vpop.f32.mrb[0].mxu0
    %v7282 = vadd.f32 %v7089, %v7281
    %7283 = vmatprep.mubr.bf16.mxu0 %v1489
    %7284 = vmatmul.mubr.bf16.gmra.mrb[0].mxu0 %v1488
    %v7285 = vpop.f32.mrb[0].mxu0
    %v7286 = vadd.f32 %v7093, %v7285
    %v7287 = vpop.f32.mrb[0].mxu0
    %v7288 = vadd.f32 %v7095, %v7287
    %v7289 = vpop.f32.mrb[0].mxu0
    %v7290 = vadd.f32 %v7097, %v7289
    %v7291 = vpop.f32.mrb[0].mxu0
    %v7292 = vadd.f32 %v7099, %v7291
    %7293 = vmatprep.mubr.bf16.mxu0 %v1497
    %7294 = vmatmul.mubr.bf16.gmra.mrb[0].mxu0 %v1496
    %v7295 = vpop.f32.mrb[0].mxu0
    %v7296 = vadd.f32 %v7103, %v7295
    %v7297 = vpop.f32.mrb[0].mxu0
    %v7298 = vadd.f32 %v7105, %v7297
    %v7299 = vpop.f32.mrb[0].mxu0
    %v7300 = vadd.f32 %v7107, %v7299
    %v7301 = vpop.f32.mrb[0].mxu0
    %v7302 = vadd.f32 %v7109, %v7301
    %7303 = vmatprep.mubr.bf16.mxu0 %v1505
    %7304 = vmatmul.mubr.bf16.gmra.mrb[0].mxu0 %v1504
    %v7305 = vpop.f32.mrb[0].mxu0
    %v7306 = vadd.f32 %v7113, %v7305
    %v7307 = vpop.f32.mrb[0].mxu0
    %v7308 = vadd.f32 %v7115, %v7307
    %v7309 = vpop.f32.mrb[0].mxu0
    %v7310 = vadd.f32 %v7117, %v7309
    %v7311 = vpop.f32.mrb[0].mxu0
    %v7312 = vadd.f32 %v7119, %v7311
    %7313 = vmatprep.mubr.bf16.mxu0 %v1513
    %7314 = vmatmul.mubr.bf16.gmra.mrb[0].mxu0 %v1512
    %v7315 = vpop.f32.mrb[0].mxu0
    %v7316 = vadd.f32 %v7123, %v7315
    %v7317 = vpop.f32.mrb[0].mxu0
    %v7318 = vadd.f32 %v7125, %v7317
    %v7319 = vpop.f32.mrb[0].mxu0
    %v7320 = vadd.f32 %v7127, %v7319
    %v7321 = vpop.f32.mrb[0].mxu0
    %v7322 = vadd.f32 %v7129, %v7321
    %7323 = vmatprep.mubr.bf16.mxu0 %v1521
    %7324 = vmatmul.mubr.bf16.gmra.mrb[0].mxu0 %v1520
    %v7325 = vpop.f32.mrb[0].mxu0
    %v7326 = vadd.f32 %v7133, %v7325
    %v7327 = vpop.f32.mrb[0].mxu0
    %v7328 = vadd.f32 %v7135, %v7327
    %v7329 = vpop.f32.mrb[0].mxu0
    %v7330 = vadd.f32 %v7137, %v7329
    %v7331 = vpop.f32.mrb[0].mxu0
    %v7332 = vadd.f32 %v7139, %v7331
    %7333 = vmatprep.mubr.bf16.mxu0 %v1529
    %7334 = vmatmul.mubr.bf16.gmra.mrb[0].mxu0 %v1528
    %v7335 = vpop.f32.mrb[0].mxu0
    %v7336 = vadd.f32 %v7143, %v7335
    %v7337 = vpop.f32.mrb[0].mxu0
    %v7338 = vadd.f32 %v7145, %v7337
    %v7339 = vpop.f32.mrb[0].mxu0
    %v7340 = vadd.f32 %v7147, %v7339
    %v7341 = vpop.f32.mrb[0].mxu0
    %v7342 = vadd.f32 %v7149, %v7341
    %7343 = vmatprep.mubr.bf16.mxu0 %v1537
    %7344 = vmatmul.mubr.bf16.gmra.mrb[0].mxu0 %v1536
    %v7345 = vpop.f32.mrb[0].mxu0
    %v7346 = vadd.f32 %v7153, %v7345
    %v7347 = vpop.f32.mrb[0].mxu0
    %v7348 = vadd.f32 %v7155, %v7347
    %v7349 = vpop.f32.mrb[0].mxu0
    %v7350 = vadd.f32 %v7157, %v7349
    %v7351 = vpop.f32.mrb[0].mxu0
    %v7352 = vadd.f32 %v7159, %v7351
    %7353 = vmatprep.mubr.bf16.mxu0 %v1545
    %7354 = vmatmul.mubr.bf16.gmra.mrb[0].mxu0 %v1544
    %v7355 = vpop.f32.mrb[0].mxu0
    %v7356 = vadd.f32 %v7163, %v7355
    %v7357 = vpop.f32.mrb[0].mxu0
    %v7358 = vadd.f32 %v7165, %v7357
    %v7359 = vpop.f32.mrb[0].mxu0
    %v7360 = vadd.f32 %v7167, %v7359
    %v7361 = vpop.f32.mrb[0].mxu0
    %v7362 = vadd.f32 %v7169, %v7361
    %7363 = vmatprep.mubr.bf16.mxu0 %v1553
    %7364 = vmatmul.mubr.bf16.gmra.mrb[0].mxu0 %v1552
    %v7365 = vpop.f32.mrb[0].mxu0
    %v7366 = vadd.f32 %v7173, %v7365
    %v7367 = vpop.f32.mrb[0].mxu0
    %v7368 = vadd.f32 %v7175, %v7367
    %v7369 = vpop.f32.mrb[0].mxu0
    %v7370 = vadd.f32 %v7177, %v7369
    %v7371 = vpop.f32.mrb[0].mxu0
    %v7372 = vadd.f32 %v7179, %v7371
    %7373 = vdwg.mxu0
    %7374 = vmatprep.subr.bf16.mxu0 %v3911
    %7375 = vmatpush1.bf16.msra.mxu0 %v3910
    %7376 = vmatprep.subr.bf16.mxu0 %v3919
    %7377 = vmatpush1.bf16.msra.mxu0 %v3918
    %7378 = vmatprep.subr.bf16.mxu0 %v3927
    %7379 = vmatpush1.bf16.msra.mxu0 %v3926
    %7380 = vmatprep.subr.bf16.mxu0 %v3935
    %7381 = vmatpush1.bf16.msra.mxu0 %v3934
    %7382 = vmatprep.subr.bf16.mxu0 %v3943
    %7383 = vmatpush1.bf16.msra.mxu0 %v3942
    %7384 = vmatprep.subr.bf16.mxu0 %v3951
    %7385 = vmatpush1.bf16.msra.mxu0 %v3950
    %7386 = vmatprep.subr.bf16.mxu0 %v3959
    %7387 = vmatpush1.bf16.msra.mxu0 %v3958
    %7388 = vmatprep.subr.bf16.mxu0 %v3967
    %7389 = vmatpush1.bf16.msra.mxu0 %v3966
    %7390 = vmatprep.subr.bf16.mxu0 %v3975
    %7391 = vmatpush1.bf16.msra.mxu0 %v3974
    %7392 = vmatprep.subr.bf16.mxu0 %v3983
    %7393 = vmatpush1.bf16.msra.mxu0 %v3982
    %7394 = vmatprep.subr.bf16.mxu0 %v3991
    %7395 = vmatpush1.bf16.msra.mxu0 %v3990
    %7396 = vmatprep.subr.bf16.mxu0 %v3999
    %7397 = vmatpush1.bf16.msra.mxu0 %v3998
    %7398 = vmatprep.subr.bf16.mxu0 %v4007
    %7399 = vmatpush1.bf16.msra.mxu0 %v4006
    %7400 = vmatprep.subr.bf16.mxu0 %v4015
    %7401 = vmatpush1.bf16.msra.mxu0 %v4014
    %7402 = vmatprep.subr.bf16.mxu0 %v4023
    %7403 = vmatpush1.bf16.msra.mxu0 %v4022
    %7404 = vmatprep.subr.bf16.mxu0 %v4031
    %7405 = vmatpush1.bf16.msra.mxu0 %v4030
    %7406 = vmatprep.mubr.bf16.mxu0 %v1435
    %7407 = vmatmul.mubr.bf16.gmra.mrb[0].mxu0 %v1434
    %v7408 = vpop.f32.mrb[0].mxu0
    %v7409 = vadd.f32 %v7216, %v7408
    %v7410 = vpop.f32.mrb[0].mxu0
    %v7411 = vadd.f32 %v7218, %v7410
    %v7412 = vpop.f32.mrb[0].mxu0
    %v7413 = vadd.f32 %v7220, %v7412
    %v7414 = vpop.f32.mrb[0].mxu0
    %v7415 = vadd.f32 %v7222, %v7414
    %7416 = vmatprep.mubr.bf16.mxu0 %v1443
    %7417 = vmatmul.mubr.bf16.gmra.mrb[0].mxu0 %v1442
    %v7418 = vpop.f32.mrb[0].mxu0
    %v7419 = vadd.f32 %v7226, %v7418
    %v7420 = vpop.f32.mrb[0].mxu0
    %v7421 = vadd.f32 %v7228, %v7420
    %v7422 = vpop.f32.mrb[0].mxu0
    %v7423 = vadd.f32 %v7230, %v7422
    %v7424 = vpop.f32.mrb[0].mxu0
    %v7425 = vadd.f32 %v7232, %v7424
    %7426 = vmatprep.mubr.bf16.mxu0 %v1451
    %7427 = vmatmul.mubr.bf16.gmra.mrb[0].mxu0 %v1450
    %v7428 = vpop.f32.mrb[0].mxu0
    %v7429 = vadd.f32 %v7236, %v7428
    %v7430 = vpop.f32.mrb[0].mxu0
    %v7431 = vadd.f32 %v7238, %v7430
    %v7432 = vpop.f32.mrb[0].mxu0
    %v7433 = vadd.f32 %v7240, %v7432
    %v7434 = vpop.f32.mrb[0].mxu0
    %v7435 = vadd.f32 %v7242, %v7434
    %7436 = vmatprep.mubr.bf16.mxu0 %v1459
    %7437 = vmatmul.mubr.bf16.gmra.mrb[0].mxu0 %v1458
    %v7438 = vpop.f32.mrb[0].mxu0
    %v7439 = vadd.f32 %v7246, %v7438
    %v7440 = vpop.f32.mrb[0].mxu0
    %v7441 = vadd.f32 %v7248, %v7440
    %v7442 = vpop.f32.mrb[0].mxu0
    %v7443 = vadd.f32 %v7250, %v7442
    %v7444 = vpop.f32.mrb[0].mxu0
    %v7445 = vadd.f32 %v7252, %v7444
    %7446 = vmatprep.mubr.bf16.mxu0 %v1467
    %7447 = vmatmul.mubr.bf16.gmra.mrb[0].mxu0 %v1466
    %v7448 = vpop.f32.mrb[0].mxu0
    %v7449 = vadd.f32 %v7256, %v7448
    %v7450 = vpop.f32.mrb[0].mxu0
    %v7451 = vadd.f32 %v7258, %v7450
    %v7452 = vpop.f32.mrb[0].mxu0
    %v7453 = vadd.f32 %v7260, %v7452
    %v7454 = vpop.f32.mrb[0].mxu0
    %v7455 = vadd.f32 %v7262, %v7454
    %7456 = vmatprep.mubr.bf16.mxu0 %v1475
    %7457 = vmatmul.mubr.bf16.gmra.mrb[0].mxu0 %v1474
    %v7458 = vpop.f32.mrb[0].mxu0
    %v7459 = vadd.f32 %v7266, %v7458
    %v7460 = vpop.f32.mrb[0].mxu0
    %v7461 = vadd.f32 %v7268, %v7460
    %v7462 = vpop.f32.mrb[0].mxu0
    %v7463 = vadd.f32 %v7270, %v7462
    %v7464 = vpop.f32.mrb[0].mxu0
    %v7465 = vadd.f32 %v7272, %v7464
    %7466 = vmatprep.mubr.bf16.mxu0 %v1483
    %7467 = vmatmul.mubr.bf16.gmra.mrb[0].mxu0 %v1482
    %v7468 = vpop.f32.mrb[0].mxu0
    %v7469 = vadd.f32 %v7276, %v7468
    %v7470 = vpop.f32.mrb[0].mxu0
    %v7471 = vadd.f32 %v7278, %v7470
    %v7472 = vpop.f32.mrb[0].mxu0
    %v7473 = vadd.f32 %v7280, %v7472
    %v7474 = vpop.f32.mrb[0].mxu0
    %v7475 = vadd.f32 %v7282, %v7474
    %7476 = vmatprep.mubr.bf16.mxu0 %v1491
    %7477 = vmatmul.mubr.bf16.gmra.mrb[0].mxu0 %v1490
    %v7478 = vpop.f32.mrb[0].mxu0
    %v7479 = vadd.f32 %v7286, %v7478
    %v7480 = vpop.f32.mrb[0].mxu0
    %v7481 = vadd.f32 %v7288, %v7480
    %v7482 = vpop.f32.mrb[0].mxu0
    %v7483 = vadd.f32 %v7290, %v7482
    %v7484 = vpop.f32.mrb[0].mxu0
    %v7485 = vadd.f32 %v7292, %v7484
    %7486 = vmatprep.mubr.bf16.mxu0 %v1499
    %7487 = vmatmul.mubr.bf16.gmra.mrb[0].mxu0 %v1498
    %v7488 = vpop.f32.mrb[0].mxu0
    %v7489 = vadd.f32 %v7296, %v7488
    %v7490 = vpop.f32.mrb[0].mxu0
    %v7491 = vadd.f32 %v7298, %v7490
    %v7492 = vpop.f32.mrb[0].mxu0
    %v7493 = vadd.f32 %v7300, %v7492
    %v7494 = vpop.f32.mrb[0].mxu0
    %v7495 = vadd.f32 %v7302, %v7494
    %7496 = vmatprep.mubr.bf16.mxu0 %v1507
    %7497 = vmatmul.mubr.bf16.gmra.mrb[0].mxu0 %v1506
    %v7498 = vpop.f32.mrb[0].mxu0
    %v7499 = vadd.f32 %v7306, %v7498
    %v7500 = vpop.f32.mrb[0].mxu0
    %v7501 = vadd.f32 %v7308, %v7500
    %v7502 = vpop.f32.mrb[0].mxu0
    %v7503 = vadd.f32 %v7310, %v7502
    %v7504 = vpop.f32.mrb[0].mxu0
    %v7505 = vadd.f32 %v7312, %v7504
    %7506 = vmatprep.mubr.bf16.mxu0 %v1515
    %7507 = vmatmul.mubr.bf16.gmra.mrb[0].mxu0 %v1514
    %v7508 = vpop.f32.mrb[0].mxu0
    %v7509 = vadd.f32 %v7316, %v7508
    %v7510 = vpop.f32.mrb[0].mxu0
    %v7511 = vadd.f32 %v7318, %v7510
    %v7512 = vpop.f32.mrb[0].mxu0
    %v7513 = vadd.f32 %v7320, %v7512
    %v7514 = vpop.f32.mrb[0].mxu0
    %v7515 = vadd.f32 %v7322, %v7514
    %7516 = vmatprep.mubr.bf16.mxu0 %v1523
    %7517 = vmatmul.mubr.bf16.gmra.mrb[0].mxu0 %v1522
    %v7518 = vpop.f32.mrb[0].mxu0
    %v7519 = vadd.f32 %v7326, %v7518
    %v7520 = vpop.f32.mrb[0].mxu0
    %v7521 = vadd.f32 %v7328, %v7520
    %v7522 = vpop.f32.mrb[0].mxu0
    %v7523 = vadd.f32 %v7330, %v7522
    %v7524 = vpop.f32.mrb[0].mxu0
    %v7525 = vadd.f32 %v7332, %v7524
    %7526 = vmatprep.mubr.bf16.mxu0 %v1531
    %7527 = vmatmul.mubr.bf16.gmra.mrb[0].mxu0 %v1530
    %v7528 = vpop.f32.mrb[0].mxu0
    %v7529 = vadd.f32 %v7336, %v7528
    %v7530 = vpop.f32.mrb[0].mxu0
    %v7531 = vadd.f32 %v7338, %v7530
    %v7532 = vpop.f32.mrb[0].mxu0
    %v7533 = vadd.f32 %v7340, %v7532
    %v7534 = vpop.f32.mrb[0].mxu0
    %v7535 = vadd.f32 %v7342, %v7534
    %7536 = vmatprep.mubr.bf16.mxu0 %v1539
    %7537 = vmatmul.mubr.bf16.gmra.mrb[0].mxu0 %v1538
    %v7538 = vpop.f32.mrb[0].mxu0
    %v7539 = vadd.f32 %v7346, %v7538
    %v7540 = vpop.f32.mrb[0].mxu0
    %v7541 = vadd.f32 %v7348, %v7540
    %v7542 = vpop.f32.mrb[0].mxu0
    %v7543 = vadd.f32 %v7350, %v7542
    %v7544 = vpop.f32.mrb[0].mxu0
    %v7545 = vadd.f32 %v7352, %v7544
    %7546 = vmatprep.mubr.bf16.mxu0 %v1547
    %7547 = vmatmul.mubr.bf16.gmra.mrb[0].mxu0 %v1546
    %v7548 = vpop.f32.mrb[0].mxu0
    %v7549 = vadd.f32 %v7356, %v7548
    %v7550 = vpop.f32.mrb[0].mxu0
    %v7551 = vadd.f32 %v7358, %v7550
    %v7552 = vpop.f32.mrb[0].mxu0
    %v7553 = vadd.f32 %v7360, %v7552
    %v7554 = vpop.f32.mrb[0].mxu0
    %v7555 = vadd.f32 %v7362, %v7554
    %7556 = vmatprep.mubr.bf16.mxu0 %v1555
    %7557 = vmatmul.mubr.bf16.gmra.mrb[0].mxu0 %v1554
    %v7558 = vpop.f32.mrb[0].mxu0
    %v7559 = vadd.f32 %v7366, %v7558
    %v7560 = vpop.f32.mrb[0].mxu0
    %v7561 = vadd.f32 %v7368, %v7560
    %v7562 = vpop.f32.mrb[0].mxu0
    %v7563 = vadd.f32 %v7370, %v7562
    %v7564 = vpop.f32.mrb[0].mxu0
    %v7565 = vadd.f32 %v7372, %v7564
    %7566 = vdwg.mxu0
    %7567 = vmatprep.subr.bf16.mxu0 %v4039
    %7568 = vmatpush1.bf16.msra.mxu0 %v4038
    %7569 = vmatprep.subr.bf16.mxu0 %v4047
    %7570 = vmatpush1.bf16.msra.mxu0 %v4046
    %7571 = vmatprep.subr.bf16.mxu0 %v4055
    %7572 = vmatpush1.bf16.msra.mxu0 %v4054
    %7573 = vmatprep.subr.bf16.mxu0 %v4063
    %7574 = vmatpush1.bf16.msra.mxu0 %v4062
    %7575 = vmatprep.subr.bf16.mxu0 %v4071
    %7576 = vmatpush1.bf16.msra.mxu0 %v4070
    %7577 = vmatprep.subr.bf16.mxu0 %v4079
    %7578 = vmatpush1.bf16.msra.mxu0 %v4078
    %7579 = vmatprep.subr.bf16.mxu0 %v4087
    %7580 = vmatpush1.bf16.msra.mxu0 %v4086
    %7581 = vmatprep.subr.bf16.mxu0 %v4095
    %7582 = vmatpush1.bf16.msra.mxu0 %v4094
    %7583 = vmatprep.subr.bf16.mxu0 %v4103
    %7584 = vmatpush1.bf16.msra.mxu0 %v4102
    %7585 = vmatprep.subr.bf16.mxu0 %v4111
    %7586 = vmatpush1.bf16.msra.mxu0 %v4110
    %7587 = vmatprep.subr.bf16.mxu0 %v4119
    %7588 = vmatpush1.bf16.msra.mxu0 %v4118
    %7589 = vmatprep.subr.bf16.mxu0 %v4127
    %7590 = vmatpush1.bf16.msra.mxu0 %v4126
    %7591 = vmatprep.subr.bf16.mxu0 %v4135
    %7592 = vmatpush1.bf16.msra.mxu0 %v4134
    %7593 = vmatprep.subr.bf16.mxu0 %v4143
    %7594 = vmatpush1.bf16.msra.mxu0 %v4142
    %7595 = vmatprep.subr.bf16.mxu0 %v4151
    %7596 = vmatpush1.bf16.msra.mxu0 %v4150
    %7597 = vmatprep.subr.bf16.mxu0 %v4159
    %7598 = vmatpush1.bf16.msra.mxu0 %v4158
    %7599 = vmatprep.mubr.bf16.mxu0 %v1437
    %7600 = vmatmul.mubr.bf16.gmra.mrb[0].mxu0 %v1436
    %v7601 = vpop.f32.mrb[0].mxu0
    %v7602 = vadd.f32 %v7409, %v7601
    %v7603 = vpop.f32.mrb[0].mxu0
    %v7604 = vadd.f32 %v7411, %v7603
    %v7605 = vpop.f32.mrb[0].mxu0
    %v7606 = vadd.f32 %v7413, %v7605
    %v7607 = vpop.f32.mrb[0].mxu0
    %v7608 = vadd.f32 %v7415, %v7607
    %7609 = vmatprep.mubr.bf16.mxu0 %v1445
    %7610 = vmatmul.mubr.bf16.gmra.mrb[0].mxu0 %v1444
    %v7611 = vpop.f32.mrb[0].mxu0
    %v7612 = vadd.f32 %v7419, %v7611
    %v7613 = vpop.f32.mrb[0].mxu0
    %v7614 = vadd.f32 %v7421, %v7613
    %v7615 = vpop.f32.mrb[0].mxu0
    %v7616 = vadd.f32 %v7423, %v7615
    %v7617 = vpop.f32.mrb[0].mxu0
    %v7618 = vadd.f32 %v7425, %v7617
    %7619 = vmatprep.mubr.bf16.mxu0 %v1453
    %7620 = vmatmul.mubr.bf16.gmra.mrb[0].mxu0 %v1452
    %v7621 = vpop.f32.mrb[0].mxu0
    %v7622 = vadd.f32 %v7429, %v7621
    %v7623 = vpop.f32.mrb[0].mxu0
    %v7624 = vadd.f32 %v7431, %v7623
    %v7625 = vpop.f32.mrb[0].mxu0
    %v7626 = vadd.f32 %v7433, %v7625
    %v7627 = vpop.f32.mrb[0].mxu0
    %v7628 = vadd.f32 %v7435, %v7627
    %7629 = vmatprep.mubr.bf16.mxu0 %v1461
    %7630 = vmatmul.mubr.bf16.gmra.mrb[0].mxu0 %v1460
    %v7631 = vpop.f32.mrb[0].mxu0
    %v7632 = vadd.f32 %v7439, %v7631
    %v7633 = vpop.f32.mrb[0].mxu0
    %v7634 = vadd.f32 %v7441, %v7633
    %v7635 = vpop.f32.mrb[0].mxu0
    %v7636 = vadd.f32 %v7443, %v7635
    %v7637 = vpop.f32.mrb[0].mxu0
    %v7638 = vadd.f32 %v7445, %v7637
    %7639 = vmatprep.mubr.bf16.mxu0 %v1469
    %7640 = vmatmul.mubr.bf16.gmra.mrb[0].mxu0 %v1468
    %v7641 = vpop.f32.mrb[0].mxu0
    %v7642 = vadd.f32 %v7449, %v7641
    %v7643 = vpop.f32.mrb[0].mxu0
    %v7644 = vadd.f32 %v7451, %v7643
    %v7645 = vpop.f32.mrb[0].mxu0
    %v7646 = vadd.f32 %v7453, %v7645
    %v7647 = vpop.f32.mrb[0].mxu0
    %v7648 = vadd.f32 %v7455, %v7647
    %7649 = vmatprep.mubr.bf16.mxu0 %v1477
    %7650 = vmatmul.mubr.bf16.gmra.mrb[0].mxu0 %v1476
    %v7651 = vpop.f32.mrb[0].mxu0
    %v7652 = vadd.f32 %v7459, %v7651
    %v7653 = vpop.f32.mrb[0].mxu0
    %v7654 = vadd.f32 %v7461, %v7653
    %v7655 = vpop.f32.mrb[0].mxu0
    %v7656 = vadd.f32 %v7463, %v7655
    %v7657 = vpop.f32.mrb[0].mxu0
    %v7658 = vadd.f32 %v7465, %v7657
    %7659 = vmatprep.mubr.bf16.mxu0 %v1485
    %7660 = vmatmul.mubr.bf16.gmra.mrb[0].mxu0 %v1484
    %v7661 = vpop.f32.mrb[0].mxu0
    %v7662 = vadd.f32 %v7469, %v7661
    %v7663 = vpop.f32.mrb[0].mxu0
    %v7664 = vadd.f32 %v7471, %v7663
    %v7665 = vpop.f32.mrb[0].mxu0
    %v7666 = vadd.f32 %v7473, %v7665
    %v7667 = vpop.f32.mrb[0].mxu0
    %v7668 = vadd.f32 %v7475, %v7667
    %7669 = vmatprep.mubr.bf16.mxu0 %v1493
    %7670 = vmatmul.mubr.bf16.gmra.mrb[0].mxu0 %v1492
    %v7671 = vpop.f32.mrb[0].mxu0
    %v7672 = vadd.f32 %v7479, %v7671
    %v7673 = vpop.f32.mrb[0].mxu0
    %v7674 = vadd.f32 %v7481, %v7673
    %v7675 = vpop.f32.mrb[0].mxu0
    %v7676 = vadd.f32 %v7483, %v7675
    %v7677 = vpop.f32.mrb[0].mxu0
    %v7678 = vadd.f32 %v7485, %v7677
    %7679 = vmatprep.mubr.bf16.mxu0 %v1501
    %7680 = vmatmul.mubr.bf16.gmra.mrb[0].mxu0 %v1500
    %v7681 = vpop.f32.mrb[0].mxu0
    %v7682 = vadd.f32 %v7489, %v7681
    %v7683 = vpop.f32.mrb[0].mxu0
    %v7684 = vadd.f32 %v7491, %v7683
    %v7685 = vpop.f32.mrb[0].mxu0
    %v7686 = vadd.f32 %v7493, %v7685
    %v7687 = vpop.f32.mrb[0].mxu0
    %v7688 = vadd.f32 %v7495, %v7687
    %7689 = vmatprep.mubr.bf16.mxu0 %v1509
    %7690 = vmatmul.mubr.bf16.gmra.mrb[0].mxu0 %v1508
    %v7691 = vpop.f32.mrb[0].mxu0
    %v7692 = vadd.f32 %v7499, %v7691
    %v7693 = vpop.f32.mrb[0].mxu0
    %v7694 = vadd.f32 %v7501, %v7693
    %v7695 = vpop.f32.mrb[0].mxu0
    %v7696 = vadd.f32 %v7503, %v7695
    %v7697 = vpop.f32.mrb[0].mxu0
    %v7698 = vadd.f32 %v7505, %v7697
    %7699 = vmatprep.mubr.bf16.mxu0 %v1517
    %7700 = vmatmul.mubr.bf16.gmra.mrb[0].mxu0 %v1516
    %v7701 = vpop.f32.mrb[0].mxu0
    %v7702 = vadd.f32 %v7509, %v7701
    %v7703 = vpop.f32.mrb[0].mxu0
    %v7704 = vadd.f32 %v7511, %v7703
    %v7705 = vpop.f32.mrb[0].mxu0
    %v7706 = vadd.f32 %v7513, %v7705
    %v7707 = vpop.f32.mrb[0].mxu0
    %v7708 = vadd.f32 %v7515, %v7707
    %7709 = vmatprep.mubr.bf16.mxu0 %v1525
    %7710 = vmatmul.mubr.bf16.gmra.mrb[0].mxu0 %v1524
    %v7711 = vpop.f32.mrb[0].mxu0
    %v7712 = vadd.f32 %v7519, %v7711
    %v7713 = vpop.f32.mrb[0].mxu0
    %v7714 = vadd.f32 %v7521, %v7713
    %v7715 = vpop.f32.mrb[0].mxu0
    %v7716 = vadd.f32 %v7523, %v7715
    %v7717 = vpop.f32.mrb[0].mxu0
    %v7718 = vadd.f32 %v7525, %v7717
    %7719 = vmatprep.mubr.bf16.mxu0 %v1533
    %7720 = vmatmul.mubr.bf16.gmra.mrb[0].mxu0 %v1532
    %v7721 = vpop.f32.mrb[0].mxu0
    %v7722 = vadd.f32 %v7529, %v7721
    %v7723 = vpop.f32.mrb[0].mxu0
    %v7724 = vadd.f32 %v7531, %v7723
    %v7725 = vpop.f32.mrb[0].mxu0
    %v7726 = vadd.f32 %v7533, %v7725
    %v7727 = vpop.f32.mrb[0].mxu0
    %v7728 = vadd.f32 %v7535, %v7727
    %7729 = vmatprep.mubr.bf16.mxu0 %v1541
    %7730 = vmatmul.mubr.bf16.gmra.mrb[0].mxu0 %v1540
    %v7731 = vpop.f32.mrb[0].mxu0
    %v7732 = vadd.f32 %v7539, %v7731
    %v7733 = vpop.f32.mrb[0].mxu0
    %v7734 = vadd.f32 %v7541, %v7733
    %v7735 = vpop.f32.mrb[0].mxu0
    %v7736 = vadd.f32 %v7543, %v7735
    %v7737 = vpop.f32.mrb[0].mxu0
    %v7738 = vadd.f32 %v7545, %v7737
    %7739 = vmatprep.mubr.bf16.mxu0 %v1549
    %7740 = vmatmul.mubr.bf16.gmra.mrb[0].mxu0 %v1548
    %v7741 = vpop.f32.mrb[0].mxu0
    %v7742 = vadd.f32 %v7549, %v7741
    %v7743 = vpop.f32.mrb[0].mxu0
    %v7744 = vadd.f32 %v7551, %v7743
    %v7745 = vpop.f32.mrb[0].mxu0
    %v7746 = vadd.f32 %v7553, %v7745
    %v7747 = vpop.f32.mrb[0].mxu0
    %v7748 = vadd.f32 %v7555, %v7747
    %7749 = vmatprep.mubr.bf16.mxu0 %v1557
    %7750 = vmatmul.mubr.bf16.gmra.mrb[0].mxu0 %v1556
    %v7751 = vpop.f32.mrb[0].mxu0
    %v7752 = vadd.f32 %v7559, %v7751
    %v7753 = vpop.f32.mrb[0].mxu0
    %v7754 = vadd.f32 %v7561, %v7753
    %v7755 = vpop.f32.mrb[0].mxu0
    %v7756 = vadd.f32 %v7563, %v7755
    %v7757 = vpop.f32.mrb[0].mxu0
    %v7758 = vadd.f32 %v7565, %v7757
    %7759 = vdwg.mxu0
    %v7760 = vmax.f32 %v5286, 0.0
    %v7761 = vmax.f32 %v5288, 0.0
    %v7762 = vmax.f32 %v6058, 0.0
    %v7763 = vmax.f32 %v6060, 0.0
    %v7764 = vmax.f32 %v6830, 0.0
    %v7765 = vmax.f32 %v6832, 0.0
    %v7766 = vmax.f32 %v7602, 0.0
    %v7767 = vmax.f32 %v7604, 0.0
    %v7768 = vmax.f32 %v5290, 0.0
    %v7769 = vmax.f32 %v5292, 0.0
    %v7770 = vmax.f32 %v6062, 0.0
    %v7771 = vmax.f32 %v6064, 0.0
    %v7772 = vmax.f32 %v6834, 0.0
    %v7773 = vmax.f32 %v6836, 0.0
    %v7774 = vmax.f32 %v7606, 0.0
    %v7775 = vmax.f32 %v7608, 0.0
    %v7776 = vmax.f32 %v5296, 0.0
    %v7777 = vmax.f32 %v5298, 0.0
    %v7778 = vmax.f32 %v6068, 0.0
    %v7779 = vmax.f32 %v6070, 0.0
    %v7780 = vmax.f32 %v6840, 0.0
    %v7781 = vmax.f32 %v6842, 0.0
    %v7782 = vmax.f32 %v7612, 0.0
    %v7783 = vmax.f32 %v7614, 0.0
    %v7784 = vmax.f32 %v5300, 0.0
    %v7785 = vmax.f32 %v5302, 0.0
    %v7786 = vmax.f32 %v6072, 0.0
    %v7787 = vmax.f32 %v6074, 0.0
    %v7788 = vmax.f32 %v6844, 0.0
    %v7789 = vmax.f32 %v6846, 0.0
    %v7790 = vmax.f32 %v7616, 0.0
    %v7791 = vmax.f32 %v7618, 0.0
    %v7792 = vmax.f32 %v5306, 0.0
    %v7793 = vmax.f32 %v5308, 0.0
    %v7794 = vmax.f32 %v6078, 0.0
    %v7795 = vmax.f32 %v6080, 0.0
    %v7796 = vmax.f32 %v6850, 0.0
    %v7797 = vmax.f32 %v6852, 0.0
    %v7798 = vmax.f32 %v7622, 0.0
    %v7799 = vmax.f32 %v7624, 0.0
    %v7800 = vmax.f32 %v5310, 0.0
    %v7801 = vmax.f32 %v5312, 0.0
    %v7802 = vmax.f32 %v6082, 0.0
    %v7803 = vmax.f32 %v6084, 0.0
    %v7804 = vmax.f32 %v6854, 0.0
    %v7805 = vmax.f32 %v6856, 0.0
    %v7806 = vmax.f32 %v7626, 0.0
    %v7807 = vmax.f32 %v7628, 0.0
    %v7808 = vmax.f32 %v5316, 0.0
    %v7809 = vmax.f32 %v5318, 0.0
    %v7810 = vmax.f32 %v6088, 0.0
    %v7811 = vmax.f32 %v6090, 0.0
    %v7812 = vmax.f32 %v6860, 0.0
    %v7813 = vmax.f32 %v6862, 0.0
    %v7814 = vmax.f32 %v7632, 0.0
    %v7815 = vmax.f32 %v7634, 0.0
    %v7816 = vmax.f32 %v5320, 0.0
    %v7817 = vmax.f32 %v5322, 0.0
    %v7818 = vmax.f32 %v6092, 0.0
    %v7819 = vmax.f32 %v6094, 0.0
    %v7820 = vmax.f32 %v6864, 0.0
    %v7821 = vmax.f32 %v6866, 0.0
    %v7822 = vmax.f32 %v7636, 0.0
    %v7823 = vmax.f32 %v7638, 0.0
    %v7824 = vmax.f32 %v5326, 0.0
    %v7825 = vmax.f32 %v5328, 0.0
    %v7826 = vmax.f32 %v6098, 0.0
    %v7827 = vmax.f32 %v6100, 0.0
    %v7828 = vmax.f32 %v6870, 0.0
    %v7829 = vmax.f32 %v6872, 0.0
    %v7830 = vmax.f32 %v7642, 0.0
    %v7831 = vmax.f32 %v7644, 0.0
    %v7832 = vmax.f32 %v5330, 0.0
    %v7833 = vmax.f32 %v5332, 0.0
    %v7834 = vmax.f32 %v6102, 0.0
    %v7835 = vmax.f32 %v6104, 0.0
    %v7836 = vmax.f32 %v6874, 0.0
    %v7837 = vmax.f32 %v6876, 0.0
    %v7838 = vmax.f32 %v7646, 0.0
    %v7839 = vmax.f32 %v7648, 0.0
    %v7840 = vmax.f32 %v5336, 0.0
    %v7841 = vmax.f32 %v5338, 0.0
    %v7842 = vmax.f32 %v6108, 0.0
    %v7843 = vmax.f32 %v6110, 0.0
    %v7844 = vmax.f32 %v6880, 0.0
    %v7845 = vmax.f32 %v6882, 0.0
    %v7846 = vmax.f32 %v7652, 0.0
    %v7847 = vmax.f32 %v7654, 0.0
    %v7848 = vmax.f32 %v5340, 0.0
    %v7849 = vmax.f32 %v5342, 0.0
    %v7850 = vmax.f32 %v6112, 0.0
    %v7851 = vmax.f32 %v6114, 0.0
    %v7852 = vmax.f32 %v6884, 0.0
    %v7853 = vmax.f32 %v6886, 0.0
    %v7854 = vmax.f32 %v7656, 0.0
    %v7855 = vmax.f32 %v7658, 0.0
    %v7856 = vmax.f32 %v5346, 0.0
    %v7857 = vmax.f32 %v5348, 0.0
    %v7858 = vmax.f32 %v6118, 0.0
    %v7859 = vmax.f32 %v6120, 0.0
    %v7860 = vmax.f32 %v6890, 0.0
    %v7861 = vmax.f32 %v6892, 0.0
    %v7862 = vmax.f32 %v7662, 0.0
    %v7863 = vmax.f32 %v7664, 0.0
    %v7864 = vmax.f32 %v5350, 0.0
    %v7865 = vmax.f32 %v5352, 0.0
    %v7866 = vmax.f32 %v6122, 0.0
    %v7867 = vmax.f32 %v6124, 0.0
    %v7868 = vmax.f32 %v6894, 0.0
    %v7869 = vmax.f32 %v6896, 0.0
    %v7870 = vmax.f32 %v7666, 0.0
    %v7871 = vmax.f32 %v7668, 0.0
    %v7872 = vmax.f32 %v5356, 0.0
    %v7873 = vmax.f32 %v5358, 0.0
    %v7874 = vmax.f32 %v6128, 0.0
    %v7875 = vmax.f32 %v6130, 0.0
    %v7876 = vmax.f32 %v6900, 0.0
    %v7877 = vmax.f32 %v6902, 0.0
    %v7878 = vmax.f32 %v7672, 0.0
    %v7879 = vmax.f32 %v7674, 0.0
    %v7880 = vmax.f32 %v5360, 0.0
    %v7881 = vmax.f32 %v5362, 0.0
    %v7882 = vmax.f32 %v6132, 0.0
    %v7883 = vmax.f32 %v6134, 0.0
    %v7884 = vmax.f32 %v6904, 0.0
    %v7885 = vmax.f32 %v6906, 0.0
    %v7886 = vmax.f32 %v7676, 0.0
    %v7887 = vmax.f32 %v7678, 0.0
    %v7888 = vmax.f32 %v5366, 0.0
    %v7889 = vmax.f32 %v5368, 0.0
    %v7890 = vmax.f32 %v6138, 0.0
    %v7891 = vmax.f32 %v6140, 0.0
    %v7892 = vmax.f32 %v6910, 0.0
    %v7893 = vmax.f32 %v6912, 0.0
    %v7894 = vmax.f32 %v7682, 0.0
    %v7895 = vmax.f32 %v7684, 0.0
    %v7896 = vmax.f32 %v5370, 0.0
    %v7897 = vmax.f32 %v5372, 0.0
    %v7898 = vmax.f32 %v6142, 0.0
    %v7899 = vmax.f32 %v6144, 0.0
    %v7900 = vmax.f32 %v6914, 0.0
    %v7901 = vmax.f32 %v6916, 0.0
    %v7902 = vmax.f32 %v7686, 0.0
    %v7903 = vmax.f32 %v7688, 0.0
    %v7904 = vmax.f32 %v5376, 0.0
    %v7905 = vmax.f32 %v5378, 0.0
    %v7906 = vmax.f32 %v6148, 0.0
    %v7907 = vmax.f32 %v6150, 0.0
    %v7908 = vmax.f32 %v6920, 0.0
    %v7909 = vmax.f32 %v6922, 0.0
    %v7910 = vmax.f32 %v7692, 0.0
    %v7911 = vmax.f32 %v7694, 0.0
    %v7912 = vmax.f32 %v5380, 0.0
    %v7913 = vmax.f32 %v5382, 0.0
    %v7914 = vmax.f32 %v6152, 0.0
    %v7915 = vmax.f32 %v6154, 0.0
    %v7916 = vmax.f32 %v6924, 0.0
    %v7917 = vmax.f32 %v6926, 0.0
    %v7918 = vmax.f32 %v7696, 0.0
    %v7919 = vmax.f32 %v7698, 0.0
    %v7920 = vmax.f32 %v5386, 0.0
    %v7921 = vmax.f32 %v5388, 0.0
    %v7922 = vmax.f32 %v6158, 0.0
    %v7923 = vmax.f32 %v6160, 0.0
    %v7924 = vmax.f32 %v6930, 0.0
    %v7925 = vmax.f32 %v6932, 0.0
    %v7926 = vmax.f32 %v7702, 0.0
    %v7927 = vmax.f32 %v7704, 0.0
    %v7928 = vmax.f32 %v5390, 0.0
    %v7929 = vmax.f32 %v5392, 0.0
    %v7930 = vmax.f32 %v6162, 0.0
    %v7931 = vmax.f32 %v6164, 0.0
    %v7932 = vmax.f32 %v6934, 0.0
    %v7933 = vmax.f32 %v6936, 0.0
    %v7934 = vmax.f32 %v7706, 0.0
    %v7935 = vmax.f32 %v7708, 0.0
    %v7936 = vmax.f32 %v5396, 0.0
    %v7937 = vmax.f32 %v5398, 0.0
    %v7938 = vmax.f32 %v6168, 0.0
    %v7939 = vmax.f32 %v6170, 0.0
    %v7940 = vmax.f32 %v6940, 0.0
    %v7941 = vmax.f32 %v6942, 0.0
    %v7942 = vmax.f32 %v7712, 0.0
    %v7943 = vmax.f32 %v7714, 0.0
    %v7944 = vmax.f32 %v5400, 0.0
    %v7945 = vmax.f32 %v5402, 0.0
    %v7946 = vmax.f32 %v6172, 0.0
    %v7947 = vmax.f32 %v6174, 0.0
    %v7948 = vmax.f32 %v6944, 0.0
    %v7949 = vmax.f32 %v6946, 0.0
    %v7950 = vmax.f32 %v7716, 0.0
    %v7951 = vmax.f32 %v7718, 0.0
    %v7952 = vmax.f32 %v5406, 0.0
    %v7953 = vmax.f32 %v5408, 0.0
    %v7954 = vmax.f32 %v6178, 0.0
    %v7955 = vmax.f32 %v6180, 0.0
    %v7956 = vmax.f32 %v6950, 0.0
    %v7957 = vmax.f32 %v6952, 0.0
    %v7958 = vmax.f32 %v7722, 0.0
    %v7959 = vmax.f32 %v7724, 0.0
    %v7960 = vmax.f32 %v5410, 0.0
    %v7961 = vmax.f32 %v5412, 0.0
    %v7962 = vmax.f32 %v6182, 0.0
    %v7963 = vmax.f32 %v6184, 0.0
    %v7964 = vmax.f32 %v6954, 0.0
    %v7965 = vmax.f32 %v6956, 0.0
    %v7966 = vmax.f32 %v7726, 0.0
    %v7967 = vmax.f32 %v7728, 0.0
    %v7968 = vmax.f32 %v5416, 0.0
    %v7969 = vmax.f32 %v5418, 0.0
    %v7970 = vmax.f32 %v6188, 0.0
    %v7971 = vmax.f32 %v6190, 0.0
    %v7972 = vmax.f32 %v6960, 0.0
    %v7973 = vmax.f32 %v6962, 0.0
    %v7974 = vmax.f32 %v7732, 0.0
    %v7975 = vmax.f32 %v7734, 0.0
    %v7976 = vmax.f32 %v5420, 0.0
    %v7977 = vmax.f32 %v5422, 0.0
    %v7978 = vmax.f32 %v6192, 0.0
    %v7979 = vmax.f32 %v6194, 0.0
    %v7980 = vmax.f32 %v6964, 0.0
    %v7981 = vmax.f32 %v6966, 0.0
    %v7982 = vmax.f32 %v7736, 0.0
    %v7983 = vmax.f32 %v7738, 0.0
    %v7984 = vmax.f32 %v5426, 0.0
    %v7985 = vmax.f32 %v5428, 0.0
    %v7986 = vmax.f32 %v6198, 0.0
    %v7987 = vmax.f32 %v6200, 0.0
    %v7988 = vmax.f32 %v6970, 0.0
    %v7989 = vmax.f32 %v6972, 0.0
    %v7990 = vmax.f32 %v7742, 0.0
    %v7991 = vmax.f32 %v7744, 0.0
    %v7992 = vmax.f32 %v5430, 0.0
    %v7993 = vmax.f32 %v5432, 0.0
    %v7994 = vmax.f32 %v6202, 0.0
    %v7995 = vmax.f32 %v6204, 0.0
    %v7996 = vmax.f32 %v6974, 0.0
    %v7997 = vmax.f32 %v6976, 0.0
    %v7998 = vmax.f32 %v7746, 0.0
    %v7999 = vmax.f32 %v7748, 0.0
    %v8000 = vmax.f32 %v5436, 0.0
    %v8001 = vmax.f32 %v5438, 0.0
    %v8002 = vmax.f32 %v6208, 0.0
    %v8003 = vmax.f32 %v6210, 0.0
    %v8004 = vmax.f32 %v6980, 0.0
    %v8005 = vmax.f32 %v6982, 0.0
    %v8006 = vmax.f32 %v7752, 0.0
    %v8007 = vmax.f32 %v7754, 0.0
    %v8008 = vmax.f32 %v5440, 0.0
    %v8009 = vmax.f32 %v5442, 0.0
    %v8010 = vmax.f32 %v6212, 0.0
    %v8011 = vmax.f32 %v6214, 0.0
    %v8012 = vmax.f32 %v6984, 0.0
    %v8013 = vmax.f32 %v6986, 0.0
    %v8014 = vmax.f32 %v7756, 0.0
    %v8015 = vmax.f32 %v7758, 0.0
    %v8016 = vpack.c.bf16 %v7768, %v7760
    %v8017 = vpack.c.bf16 %v7769, %v7761
    %v8018 = vpack.c.bf16 %v7770, %v7762
    %v8019 = vpack.c.bf16 %v7771, %v7763
    %v8020 = vpack.c.bf16 %v7772, %v7764
    %v8021 = vpack.c.bf16 %v7773, %v7765
    %v8022 = vpack.c.bf16 %v7774, %v7766
    %v8023 = vpack.c.bf16 %v7775, %v7767
    %v8024 = vpack.c.bf16 %v7784, %v7776
    %v8025 = vpack.c.bf16 %v7785, %v7777
    %v8026 = vpack.c.bf16 %v7786, %v7778
    %v8027 = vpack.c.bf16 %v7787, %v7779
    %v8028 = vpack.c.bf16 %v7788, %v7780
    %v8029 = vpack.c.bf16 %v7789, %v7781
    %v8030 = vpack.c.bf16 %v7790, %v7782
    %v8031 = vpack.c.bf16 %v7791, %v7783
    %v8032 = vpack.c.bf16 %v7800, %v7792
    %v8033 = vpack.c.bf16 %v7801, %v7793
    %v8034 = vpack.c.bf16 %v7802, %v7794
    %v8035 = vpack.c.bf16 %v7803, %v7795
    %v8036 = vpack.c.bf16 %v7804, %v7796
    %v8037 = vpack.c.bf16 %v7805, %v7797
    %v8038 = vpack.c.bf16 %v7806, %v7798
    %v8039 = vpack.c.bf16 %v7807, %v7799
    %v8040 = vpack.c.bf16 %v7816, %v7808
    %v8041 = vpack.c.bf16 %v7817, %v7809
    %v8042 = vpack.c.bf16 %v7818, %v7810
    %v8043 = vpack.c.bf16 %v7819, %v7811
    %v8044 = vpack.c.bf16 %v7820, %v7812
    %v8045 = vpack.c.bf16 %v7821, %v7813
    %v8046 = vpack.c.bf16 %v7822, %v7814
    %v8047 = vpack.c.bf16 %v7823, %v7815
    %v8048 = vpack.c.bf16 %v7832, %v7824
    %v8049 = vpack.c.bf16 %v7833, %v7825
    %v8050 = vpack.c.bf16 %v7834, %v7826
    %v8051 = vpack.c.bf16 %v7835, %v7827
    %v8052 = vpack.c.bf16 %v7836, %v7828
    %v8053 = vpack.c.bf16 %v7837, %v7829
    %v8054 = vpack.c.bf16 %v7838, %v7830
    %v8055 = vpack.c.bf16 %v7839, %v7831
    %v8056 = vpack.c.bf16 %v7848, %v7840
    %v8057 = vpack.c.bf16 %v7849, %v7841
    %v8058 = vpack.c.bf16 %v7850, %v7842
    %v8059 = vpack.c.bf16 %v7851, %v7843
    %v8060 = vpack.c.bf16 %v7852, %v7844
    %v8061 = vpack.c.bf16 %v7853, %v7845
    %v8062 = vpack.c.bf16 %v7854, %v7846
    %v8063 = vpack.c.bf16 %v7855, %v7847
    %v8064 = vpack.c.bf16 %v7864, %v7856
    %v8065 = vpack.c.bf16 %v7865, %v7857
    %v8066 = vpack.c.bf16 %v7866, %v7858
    %v8067 = vpack.c.bf16 %v7867, %v7859
    %v8068 = vpack.c.bf16 %v7868, %v7860
    %v8069 = vpack.c.bf16 %v7869, %v7861
    %v8070 = vpack.c.bf16 %v7870, %v7862
    %v8071 = vpack.c.bf16 %v7871, %v7863
    %v8072 = vpack.c.bf16 %v7880, %v7872
    %v8073 = vpack.c.bf16 %v7881, %v7873
    %v8074 = vpack.c.bf16 %v7882, %v7874
    %v8075 = vpack.c.bf16 %v7883, %v7875
    %v8076 = vpack.c.bf16 %v7884, %v7876
    %v8077 = vpack.c.bf16 %v7885, %v7877
    %v8078 = vpack.c.bf16 %v7886, %v7878
    %v8079 = vpack.c.bf16 %v7887, %v7879
    %v8080 = vpack.c.bf16 %v7896, %v7888
    %v8081 = vpack.c.bf16 %v7897, %v7889
    %v8082 = vpack.c.bf16 %v7898, %v7890
    %v8083 = vpack.c.bf16 %v7899, %v7891
    %v8084 = vpack.c.bf16 %v7900, %v7892
    %v8085 = vpack.c.bf16 %v7901, %v7893
    %v8086 = vpack.c.bf16 %v7902, %v7894
    %v8087 = vpack.c.bf16 %v7903, %v7895
    %v8088 = vpack.c.bf16 %v7912, %v7904
    %v8089 = vpack.c.bf16 %v7913, %v7905
    %v8090 = vpack.c.bf16 %v7914, %v7906
    %v8091 = vpack.c.bf16 %v7915, %v7907
    %v8092 = vpack.c.bf16 %v7916, %v7908
    %v8093 = vpack.c.bf16 %v7917, %v7909
    %v8094 = vpack.c.bf16 %v7918, %v7910
    %v8095 = vpack.c.bf16 %v7919, %v7911
    %v8096 = vpack.c.bf16 %v7928, %v7920
    %v8097 = vpack.c.bf16 %v7929, %v7921
    %v8098 = vpack.c.bf16 %v7930, %v7922
    %v8099 = vpack.c.bf16 %v7931, %v7923
    %v8100 = vpack.c.bf16 %v7932, %v7924
    %v8101 = vpack.c.bf16 %v7933, %v7925
    %v8102 = vpack.c.bf16 %v7934, %v7926
    %v8103 = vpack.c.bf16 %v7935, %v7927
    %v8104 = vpack.c.bf16 %v7944, %v7936
    %v8105 = vpack.c.bf16 %v7945, %v7937
    %v8106 = vpack.c.bf16 %v7946, %v7938
    %v8107 = vpack.c.bf16 %v7947, %v7939
    %v8108 = vpack.c.bf16 %v7948, %v7940
    %v8109 = vpack.c.bf16 %v7949, %v7941
    %v8110 = vpack.c.bf16 %v7950, %v7942
    %v8111 = vpack.c.bf16 %v7951, %v7943
    %v8112 = vpack.c.bf16 %v7960, %v7952
    %v8113 = vpack.c.bf16 %v7961, %v7953
    %v8114 = vpack.c.bf16 %v7962, %v7954
    %v8115 = vpack.c.bf16 %v7963, %v7955
    %v8116 = vpack.c.bf16 %v7964, %v7956
    %v8117 = vpack.c.bf16 %v7965, %v7957
    %v8118 = vpack.c.bf16 %v7966, %v7958
    %v8119 = vpack.c.bf16 %v7967, %v7959
    %v8120 = vpack.c.bf16 %v7976, %v7968
    %v8121 = vpack.c.bf16 %v7977, %v7969
    %v8122 = vpack.c.bf16 %v7978, %v7970
    %v8123 = vpack.c.bf16 %v7979, %v7971
    %v8124 = vpack.c.bf16 %v7980, %v7972
    %v8125 = vpack.c.bf16 %v7981, %v7973
    %v8126 = vpack.c.bf16 %v7982, %v7974
    %v8127 = vpack.c.bf16 %v7983, %v7975
    %v8128 = vpack.c.bf16 %v7992, %v7984
    %v8129 = vpack.c.bf16 %v7993, %v7985
    %v8130 = vpack.c.bf16 %v7994, %v7986
    %v8131 = vpack.c.bf16 %v7995, %v7987
    %v8132 = vpack.c.bf16 %v7996, %v7988
    %v8133 = vpack.c.bf16 %v7997, %v7989
    %v8134 = vpack.c.bf16 %v7998, %v7990
    %v8135 = vpack.c.bf16 %v7999, %v7991
    %v8136 = vpack.c.bf16 %v8008, %v8000
    %v8137 = vpack.c.bf16 %v8009, %v8001
    %v8138 = vpack.c.bf16 %v8010, %v8002
    %v8139 = vpack.c.bf16 %v8011, %v8003
    %v8140 = vpack.c.bf16 %v8012, %v8004
    %v8141 = vpack.c.bf16 %v8013, %v8005
    %v8142 = vpack.c.bf16 %v8014, %v8006
    %v8143 = vpack.c.bf16 %v8015, %v8007
    %v8144 = vld [vmem:[#allocation9] sm:$0xf]
    %v8145 = vld [vmem:[#allocation9 + $0x4] sm:$0xf]
    %v8146 = vld [vmem:[#allocation9 + $0x8] sm:$0xf]
    %v8147 = vld [vmem:[#allocation9 + $0xc] sm:$0xf]
    %v8148 = vld [vmem:[#allocation9 + $0x10] sm:$0xf]
    %v8149 = vld [vmem:[#allocation9 + $0x14] sm:$0xf]
    %v8150 = vld [vmem:[#allocation9 + $0x18] sm:$0xf]
    %v8151 = vld [vmem:[#allocation9 + $0x1c] sm:$0xf]
    %v8152 = vld [vmem:[#allocation9 + $0x20] sm:$0xf]
    %v8153 = vld [vmem:[#allocation9 + $0x24] sm:$0xf]
    %v8154 = vld [vmem:[#allocation9 + $0x28] sm:$0xf]
    %v8155 = vld [vmem:[#allocation9 + $0x2c] sm:$0xf]
    %v8156 = vld [vmem:[#allocation9 + $0x30] sm:$0xf]
    %v8157 = vld [vmem:[#allocation9 + $0x34] sm:$0xf]
    %v8158 = vld [vmem:[#allocation9 + $0x38] sm:$0xf]
    %v8159 = vld [vmem:[#allocation9 + $0x3c] sm:$0xf]
    %v8160 = vld [vmem:[#allocation9 + $0x40] sm:$0xf]
    %v8161 = vld [vmem:[#allocation9 + $0x44] sm:$0xf]
    %v8162 = vld [vmem:[#allocation9 + $0x48] sm:$0xf]
    %v8163 = vld [vmem:[#allocation9 + $0x4c] sm:$0xf]
    %v8164 = vld [vmem:[#allocation9 + $0x50] sm:$0xf]
    %v8165 = vld [vmem:[#allocation9 + $0x54] sm:$0xf]
    %v8166 = vld [vmem:[#allocation9 + $0x58] sm:$0xf]
    %v8167 = vld [vmem:[#allocation9 + $0x5c] sm:$0xf]
    %v8168 = vld [vmem:[#allocation9 + $0x60] sm:$0xf]
    %v8169 = vld [vmem:[#allocation9 + $0x64] sm:$0xf]
    %v8170 = vld [vmem:[#allocation9 + $0x68] sm:$0xf]
    %v8171 = vld [vmem:[#allocation9 + $0x6c] sm:$0xf]
    %v8172 = vld [vmem:[#allocation9 + $0x70] sm:$0xf]
    %v8173 = vld [vmem:[#allocation9 + $0x74] sm:$0xf]
    %v8174 = vld [vmem:[#allocation9 + $0x78] sm:$0xf]
    %v8175 = vld [vmem:[#allocation9 + $0x7c] sm:$0xf]
    %v8176 = vld [vmem:[#allocation9 + $0x80] sm:$0xf]
    %v8177 = vld [vmem:[#allocation9 + $0x84] sm:$0xf]
    %v8178 = vld [vmem:[#allocation9 + $0x88] sm:$0xf]
    %v8179 = vld [vmem:[#allocation9 + $0x8c] sm:$0xf]
    %v8180 = vld [vmem:[#allocation9 + $0x90] sm:$0xf]
    %v8181 = vld [vmem:[#allocation9 + $0x94] sm:$0xf]
    %v8182 = vld [vmem:[#allocation9 + $0x98] sm:$0xf]
    %v8183 = vld [vmem:[#allocation9 + $0x9c] sm:$0xf]
    %v8184 = vld [vmem:[#allocation9 + $0xa0] sm:$0xf]
    %v8185 = vld [vmem:[#allocation9 + $0xa4] sm:$0xf]
    %v8186 = vld [vmem:[#allocation9 + $0xa8] sm:$0xf]
    %v8187 = vld [vmem:[#allocation9 + $0xac] sm:$0xf]
    %v8188 = vld [vmem:[#allocation9 + $0xb0] sm:$0xf]
    %v8189 = vld [vmem:[#allocation9 + $0xb4] sm:$0xf]
    %v8190 = vld [vmem:[#allocation9 + $0xb8] sm:$0xf]
    %v8191 = vld [vmem:[#allocation9 + $0xbc] sm:$0xf]
    %v8192 = vld [vmem:[#allocation9 + $0xc0] sm:$0xf]
    %v8193 = vld [vmem:[#allocation9 + $0xc4] sm:$0xf]
    %v8194 = vld [vmem:[#allocation9 + $0xc8] sm:$0xf]
    %v8195 = vld [vmem:[#allocation9 + $0xcc] sm:$0xf]
    %v8196 = vld [vmem:[#allocation9 + $0xd0] sm:$0xf]
    %v8197 = vld [vmem:[#allocation9 + $0xd4] sm:$0xf]
    %v8198 = vld [vmem:[#allocation9 + $0xd8] sm:$0xf]
    %v8199 = vld [vmem:[#allocation9 + $0xdc] sm:$0xf]
    %v8200 = vld [vmem:[#allocation9 + $0xe0] sm:$0xf]
    %v8201 = vld [vmem:[#allocation9 + $0xe4] sm:$0xf]
    %v8202 = vld [vmem:[#allocation9 + $0xe8] sm:$0xf]
    %v8203 = vld [vmem:[#allocation9 + $0xec] sm:$0xf]
    %v8204 = vld [vmem:[#allocation9 + $0xf0] sm:$0xf]
    %v8205 = vld [vmem:[#allocation9 + $0xf4] sm:$0xf]
    %v8206 = vld [vmem:[#allocation9 + $0xf8] sm:$0xf]
    %v8207 = vld [vmem:[#allocation9 + $0xfc] sm:$0xf]
    %v8208 = vld [vmem:[#allocation9 + $0x100] sm:$0xf]
    %v8209 = vld [vmem:[#allocation9 + $0x104] sm:$0xf]
    %v8210 = vld [vmem:[#allocation9 + $0x108] sm:$0xf]
    %v8211 = vld [vmem:[#allocation9 + $0x10c] sm:$0xf]
    %v8212 = vld [vmem:[#allocation9 + $0x110] sm:$0xf]
    %v8213 = vld [vmem:[#allocation9 + $0x114] sm:$0xf]
    %v8214 = vld [vmem:[#allocation9 + $0x118] sm:$0xf]
    %v8215 = vld [vmem:[#allocation9 + $0x11c] sm:$0xf]
    %v8216 = vld [vmem:[#allocation9 + $0x120] sm:$0xf]
    %v8217 = vld [vmem:[#allocation9 + $0x124] sm:$0xf]
    %v8218 = vld [vmem:[#allocation9 + $0x128] sm:$0xf]
    %v8219 = vld [vmem:[#allocation9 + $0x12c] sm:$0xf]
    %v8220 = vld [vmem:[#allocation9 + $0x130] sm:$0xf]
    %v8221 = vld [vmem:[#allocation9 + $0x134] sm:$0xf]
    %v8222 = vld [vmem:[#allocation9 + $0x138] sm:$0xf]
    %v8223 = vld [vmem:[#allocation9 + $0x13c] sm:$0xf]
    %v8224 = vld [vmem:[#allocation9 + $0x140] sm:$0xf]
    %v8225 = vld [vmem:[#allocation9 + $0x144] sm:$0xf]
    %v8226 = vld [vmem:[#allocation9 + $0x148] sm:$0xf]
    %v8227 = vld [vmem:[#allocation9 + $0x14c] sm:$0xf]
    %v8228 = vld [vmem:[#allocation9 + $0x150] sm:$0xf]
    %v8229 = vld [vmem:[#allocation9 + $0x154] sm:$0xf]
    %v8230 = vld [vmem:[#allocation9 + $0x158] sm:$0xf]
    %v8231 = vld [vmem:[#allocation9 + $0x15c] sm:$0xf]
    %v8232 = vld [vmem:[#allocation9 + $0x160] sm:$0xf]
    %v8233 = vld [vmem:[#allocation9 + $0x164] sm:$0xf]
    %v8234 = vld [vmem:[#allocation9 + $0x168] sm:$0xf]
    %v8235 = vld [vmem:[#allocation9 + $0x16c] sm:$0xf]
    %v8236 = vld [vmem:[#allocation9 + $0x170] sm:$0xf]
    %v8237 = vld [vmem:[#allocation9 + $0x174] sm:$0xf]
    %v8238 = vld [vmem:[#allocation9 + $0x178] sm:$0xf]
    %v8239 = vld [vmem:[#allocation9 + $0x17c] sm:$0xf]
    %v8240 = vld [vmem:[#allocation9 + $0x180] sm:$0xf]
    %v8241 = vld [vmem:[#allocation9 + $0x184] sm:$0xf]
    %v8242 = vld [vmem:[#allocation9 + $0x188] sm:$0xf]
    %v8243 = vld [vmem:[#allocation9 + $0x18c] sm:$0xf]
    %v8244 = vld [vmem:[#allocation9 + $0x190] sm:$0xf]
    %v8245 = vld [vmem:[#allocation9 + $0x194] sm:$0xf]
    %v8246 = vld [vmem:[#allocation9 + $0x198] sm:$0xf]
    %v8247 = vld [vmem:[#allocation9 + $0x19c] sm:$0xf]
    %v8248 = vld [vmem:[#allocation9 + $0x1a0] sm:$0xf]
    %v8249 = vld [vmem:[#allocation9 + $0x1a4] sm:$0xf]
    %v8250 = vld [vmem:[#allocation9 + $0x1a8] sm:$0xf]
    %v8251 = vld [vmem:[#allocation9 + $0x1ac] sm:$0xf]
    %v8252 = vld [vmem:[#allocation9 + $0x1b0] sm:$0xf]
    %v8253 = vld [vmem:[#allocation9 + $0x1b4] sm:$0xf]
    %v8254 = vld [vmem:[#allocation9 + $0x1b8] sm:$0xf]
    %v8255 = vld [vmem:[#allocation9 + $0x1bc] sm:$0xf]
    %v8256 = vld [vmem:[#allocation9 + $0x1c0] sm:$0xf]
    %v8257 = vld [vmem:[#allocation9 + $0x1c4] sm:$0xf]
    %v8258 = vld [vmem:[#allocation9 + $0x1c8] sm:$0xf]
    %v8259 = vld [vmem:[#allocation9 + $0x1cc] sm:$0xf]
    %v8260 = vld [vmem:[#allocation9 + $0x1d0] sm:$0xf]
    %v8261 = vld [vmem:[#allocation9 + $0x1d4] sm:$0xf]
    %v8262 = vld [vmem:[#allocation9 + $0x1d8] sm:$0xf]
    %v8263 = vld [vmem:[#allocation9 + $0x1dc] sm:$0xf]
    %v8264 = vld [vmem:[#allocation9 + $0x1e0] sm:$0xf]
    %v8265 = vld [vmem:[#allocation9 + $0x1e4] sm:$0xf]
    %v8266 = vld [vmem:[#allocation9 + $0x1e8] sm:$0xf]
    %v8267 = vld [vmem:[#allocation9 + $0x1ec] sm:$0xf]
    %v8268 = vld [vmem:[#allocation9 + $0x1f0] sm:$0xf]
    %v8269 = vld [vmem:[#allocation9 + $0x1f4] sm:$0xf]
    %v8270 = vld [vmem:[#allocation9 + $0x1f8] sm:$0xf]
    %v8271 = vld [vmem:[#allocation9 + $0x1fc] sm:$0xf]
    %v8272 = vld [vmem:[#allocation10] sm:$0x1]
    %v8274 = vlaneseq
    %v8275 = vshrl.u32 %v8274, 7
    %v8276 = vsub.s32 0, %v8275
    %v8277 = vrot.slane %v8272, %v8276
    %v8407 = vunpack.c.l.b16 %v8144
    %v8408 = vunpack.c.l.b16 %v8145
    %v8409 = vunpack.c.l.b16 %v8146
    %v8410 = vunpack.c.l.b16 %v8147
    %v8411 = vunpack.c.l.b16 %v8148
    %v8412 = vunpack.c.l.b16 %v8149
    %v8413 = vunpack.c.l.b16 %v8150
    %v8414 = vunpack.c.l.b16 %v8151
    %v8415 = vunpack.c.l.b16 %v8152
    %v8416 = vunpack.c.l.b16 %v8153
    %v8417 = vunpack.c.l.b16 %v8154
    %v8418 = vunpack.c.l.b16 %v8155
    %v8419 = vunpack.c.l.b16 %v8156
    %v8420 = vunpack.c.l.b16 %v8157
    %v8421 = vunpack.c.l.b16 %v8158
    %v8422 = vunpack.c.l.b16 %v8159
    %v8423 = vunpack.c.l.b16 %v8160
    %v8424 = vunpack.c.l.b16 %v8161
    %v8425 = vunpack.c.l.b16 %v8162
    %v8426 = vunpack.c.l.b16 %v8163
    %v8427 = vunpack.c.l.b16 %v8164
    %v8428 = vunpack.c.l.b16 %v8165
    %v8429 = vunpack.c.l.b16 %v8166
    %v8430 = vunpack.c.l.b16 %v8167
    %v8431 = vunpack.c.l.b16 %v8168
    %v8432 = vunpack.c.l.b16 %v8169
    %v8433 = vunpack.c.l.b16 %v8170
    %v8434 = vunpack.c.l.b16 %v8171
    %v8435 = vunpack.c.l.b16 %v8172
    %v8436 = vunpack.c.l.b16 %v8173
    %v8437 = vunpack.c.l.b16 %v8174
    %v8438 = vunpack.c.l.b16 %v8175
    %v8439 = vunpack.c.l.b16 %v8176
    %v8440 = vunpack.c.l.b16 %v8177
    %v8441 = vunpack.c.l.b16 %v8178
    %v8442 = vunpack.c.l.b16 %v8179
    %v8443 = vunpack.c.l.b16 %v8180
    %v8444 = vunpack.c.l.b16 %v8181
    %v8445 = vunpack.c.l.b16 %v8182
    %v8446 = vunpack.c.l.b16 %v8183
    %v8447 = vunpack.c.l.b16 %v8184
    %v8448 = vunpack.c.l.b16 %v8185
    %v8449 = vunpack.c.l.b16 %v8186
    %v8450 = vunpack.c.l.b16 %v8187
    %v8451 = vunpack.c.l.b16 %v8188
    %v8452 = vunpack.c.l.b16 %v8189
    %v8453 = vunpack.c.l.b16 %v8190
    %v8454 = vunpack.c.l.b16 %v8191
    %v8455 = vunpack.c.l.b16 %v8192
    %v8456 = vunpack.c.l.b16 %v8193
    %v8457 = vunpack.c.l.b16 %v8194
    %v8458 = vunpack.c.l.b16 %v8195
    %v8459 = vunpack.c.l.b16 %v8196
    %v8460 = vunpack.c.l.b16 %v8197
    %v8461 = vunpack.c.l.b16 %v8198
    %v8462 = vunpack.c.l.b16 %v8199
    %v8463 = vunpack.c.l.b16 %v8200
    %v8464 = vunpack.c.l.b16 %v8201
    %v8465 = vunpack.c.l.b16 %v8202
    %v8466 = vunpack.c.l.b16 %v8203
    %v8467 = vunpack.c.l.b16 %v8204
    %v8468 = vunpack.c.l.b16 %v8205
    %v8469 = vunpack.c.l.b16 %v8206
    %v8470 = vunpack.c.l.b16 %v8207
    %v8471 = vunpack.c.l.b16 %v8208
    %v8472 = vunpack.c.l.b16 %v8209
    %v8473 = vunpack.c.l.b16 %v8210
    %v8474 = vunpack.c.l.b16 %v8211
    %v8475 = vunpack.c.l.b16 %v8212
    %v8476 = vunpack.c.l.b16 %v8213
    %v8477 = vunpack.c.l.b16 %v8214
    %v8478 = vunpack.c.l.b16 %v8215
    %v8479 = vunpack.c.l.b16 %v8216
    %v8480 = vunpack.c.l.b16 %v8217
    %v8481 = vunpack.c.l.b16 %v8218
    %v8482 = vunpack.c.l.b16 %v8219
    %v8483 = vunpack.c.l.b16 %v8220
    %v8484 = vunpack.c.l.b16 %v8221
    %v8485 = vunpack.c.l.b16 %v8222
    %v8486 = vunpack.c.l.b16 %v8223
    %v8487 = vunpack.c.l.b16 %v8224
    %v8488 = vunpack.c.l.b16 %v8225
    %v8489 = vunpack.c.l.b16 %v8226
    %v8490 = vunpack.c.l.b16 %v8227
    %v8491 = vunpack.c.l.b16 %v8228
    %v8492 = vunpack.c.l.b16 %v8229
    %v8493 = vunpack.c.l.b16 %v8230
    %v8494 = vunpack.c.l.b16 %v8231
    %v8495 = vunpack.c.l.b16 %v8232
    %v8496 = vunpack.c.l.b16 %v8233
    %v8497 = vunpack.c.l.b16 %v8234
    %v8498 = vunpack.c.l.b16 %v8235
    %v8499 = vunpack.c.l.b16 %v8236
    %v8500 = vunpack.c.l.b16 %v8237
    %v8501 = vunpack.c.l.b16 %v8238
    %v8502 = vunpack.c.l.b16 %v8239
    %v8503 = vunpack.c.l.b16 %v8240
    %v8504 = vunpack.c.l.b16 %v8241
    %v8505 = vunpack.c.l.b16 %v8242
    %v8506 = vunpack.c.l.b16 %v8243
    %v8507 = vunpack.c.l.b16 %v8244
    %v8508 = vunpack.c.l.b16 %v8245
    %v8509 = vunpack.c.l.b16 %v8246
    %v8510 = vunpack.c.l.b16 %v8247
    %v8511 = vunpack.c.l.b16 %v8248
    %v8512 = vunpack.c.l.b16 %v8249
    %v8513 = vunpack.c.l.b16 %v8250
    %v8514 = vunpack.c.l.b16 %v8251
    %v8515 = vunpack.c.l.b16 %v8252
    %v8516 = vunpack.c.l.b16 %v8253
    %v8517 = vunpack.c.l.b16 %v8254
    %v8518 = vunpack.c.l.b16 %v8255
    %v8519 = vunpack.c.l.b16 %v8256
    %v8520 = vunpack.c.l.b16 %v8257
    %v8521 = vunpack.c.l.b16 %v8258
    %v8522 = vunpack.c.l.b16 %v8259
    %v8523 = vunpack.c.l.b16 %v8260
    %v8524 = vunpack.c.l.b16 %v8261
    %v8525 = vunpack.c.l.b16 %v8262
    %v8526 = vunpack.c.l.b16 %v8263
    %v8527 = vunpack.c.l.b16 %v8264
    %v8528 = vunpack.c.l.b16 %v8265
    %v8529 = vunpack.c.l.b16 %v8266
    %v8530 = vunpack.c.l.b16 %v8267
    %v8531 = vunpack.c.l.b16 %v8268
    %v8532 = vunpack.c.l.b16 %v8269
    %v8533 = vunpack.c.l.b16 %v8270
    %v8534 = vunpack.c.l.b16 %v8271
    %v8535 = vpack.c.b16 %v8408, %v8407
    %v8536 = vpack.c.b16 %v8410, %v8409
    %v8537 = vpack.c.b16 %v8412, %v8411
    %v8538 = vpack.c.b16 %v8414, %v8413
    %v8539 = vpack.c.b16 %v8416, %v8415
    %v8540 = vpack.c.b16 %v8418, %v8417
    %v8541 = vpack.c.b16 %v8420, %v8419
    %v8542 = vpack.c.b16 %v8422, %v8421
    %v8543 = vpack.c.b16 %v8424, %v8423
    %v8544 = vpack.c.b16 %v8426, %v8425
    %v8545 = vpack.c.b16 %v8428, %v8427
    %v8546 = vpack.c.b16 %v8430, %v8429
    %v8547 = vpack.c.b16 %v8432, %v8431
    %v8548 = vpack.c.b16 %v8434, %v8433
    %v8549 = vpack.c.b16 %v8436, %v8435
    %v8550 = vpack.c.b16 %v8438, %v8437
    %v8551 = vpack.c.b16 %v8440, %v8439
    %v8552 = vpack.c.b16 %v8442, %v8441
    %v8553 = vpack.c.b16 %v8444, %v8443
    %v8554 = vpack.c.b16 %v8446, %v8445
    %v8555 = vpack.c.b16 %v8448, %v8447
    %v8556 = vpack.c.b16 %v8450, %v8449
    %v8557 = vpack.c.b16 %v8452, %v8451
    %v8558 = vpack.c.b16 %v8454, %v8453
    %v8559 = vpack.c.b16 %v8456, %v8455
    %v8560 = vpack.c.b16 %v8458, %v8457
    %v8561 = vpack.c.b16 %v8460, %v8459
    %v8562 = vpack.c.b16 %v8462, %v8461
    %v8563 = vpack.c.b16 %v8464, %v8463
    %v8564 = vpack.c.b16 %v8466, %v8465
    %v8565 = vpack.c.b16 %v8468, %v8467
    %v8566 = vpack.c.b16 %v8470, %v8469
    %v8567 = vpack.c.b16 %v8472, %v8471
    %v8568 = vpack.c.b16 %v8474, %v8473
    %v8569 = vpack.c.b16 %v8476, %v8475
    %v8570 = vpack.c.b16 %v8478, %v8477
    %v8571 = vpack.c.b16 %v8480, %v8479
    %v8572 = vpack.c.b16 %v8482, %v8481
    %v8573 = vpack.c.b16 %v8484, %v8483
    %v8574 = vpack.c.b16 %v8486, %v8485
    %v8575 = vpack.c.b16 %v8488, %v8487
    %v8576 = vpack.c.b16 %v8490, %v8489
    %v8577 = vpack.c.b16 %v8492, %v8491
    %v8578 = vpack.c.b16 %v8494, %v8493
    %v8579 = vpack.c.b16 %v8496, %v8495
    %v8580 = vpack.c.b16 %v8498, %v8497
    %v8581 = vpack.c.b16 %v8500, %v8499
    %v8582 = vpack.c.b16 %v8502, %v8501
    %v8583 = vpack.c.b16 %v8504, %v8503
    %v8584 = vpack.c.b16 %v8506, %v8505
    %v8585 = vpack.c.b16 %v8508, %v8507
    %v8586 = vpack.c.b16 %v8510, %v8509
    %v8587 = vpack.c.b16 %v8512, %v8511
    %v8588 = vpack.c.b16 %v8514, %v8513
    %v8589 = vpack.c.b16 %v8516, %v8515
    %v8590 = vpack.c.b16 %v8518, %v8517
    %v8591 = vpack.c.b16 %v8520, %v8519
    %v8592 = vpack.c.b16 %v8522, %v8521
    %v8593 = vpack.c.b16 %v8524, %v8523
    %v8594 = vpack.c.b16 %v8526, %v8525
    %v8595 = vpack.c.b16 %v8528, %v8527
    %v8596 = vpack.c.b16 %v8530, %v8529
    %v8597 = vpack.c.b16 %v8532, %v8531
    %v8598 = vpack.c.b16 %v8534, %v8533
    %8663 = vmatprep.subr.bf16.mxu0 0
    %8664 = vmatpush1.bf16.msra.mxu0 %v8535
    %8665 = vmatprep.subr.bf16.mxu0 0
    %8666 = vmatpush1.bf16.msra.mxu0 %v8536
    %8667 = vmatprep.subr.bf16.mxu0 0
    %8668 = vmatpush1.bf16.msra.mxu0 %v8537
    %8669 = vmatprep.subr.bf16.mxu0 0
    %8670 = vmatpush1.bf16.msra.mxu0 %v8538
    %8671 = vmatprep.subr.bf16.mxu0 0
    %8672 = vmatpush1.bf16.msra.mxu0 %v8539
    %8673 = vmatprep.subr.bf16.mxu0 0
    %8674 = vmatpush1.bf16.msra.mxu0 %v8540
    %8675 = vmatprep.subr.bf16.mxu0 0
    %8676 = vmatpush1.bf16.msra.mxu0 %v8541
    %8677 = vmatprep.subr.bf16.mxu0 0
    %8678 = vmatpush1.bf16.msra.mxu0 %v8542
    %8679 = vmatprep.subr.bf16.mxu0 0
    %8680 = vmatpush1.bf16.msra.mxu0 %v8543
    %8681 = vmatprep.subr.bf16.mxu0 0
    %8682 = vmatpush1.bf16.msra.mxu0 %v8544
    %8683 = vmatprep.subr.bf16.mxu0 0
    %8684 = vmatpush1.bf16.msra.mxu0 %v8545
    %8685 = vmatprep.subr.bf16.mxu0 0
    %8686 = vmatpush1.bf16.msra.mxu0 %v8546
    %8687 = vmatprep.subr.bf16.mxu0 0
    %8688 = vmatpush1.bf16.msra.mxu0 %v8547
    %8689 = vmatprep.subr.bf16.mxu0 0
    %8690 = vmatpush1.bf16.msra.mxu0 %v8548
    %8691 = vmatprep.subr.bf16.mxu0 0
    %8692 = vmatpush1.bf16.msra.mxu0 %v8549
    %8693 = vmatprep.subr.bf16.mxu0 0
    %8694 = vmatpush1.bf16.msra.mxu0 %v8550
    %8695 = vmatprep.mubr.bf16.mxu0 %v8017
    %8696 = vmatmul.mubr.bf16.gmra.mrb[0].mxu0 %v8016
    %v8697 = vpop.f32.mrb[0].mxu0
    %v8698 = vadd.f32 %v8277, %v8697
    %v8699 = vpop.f32.mrb[0].mxu0
    %v8700 = vpop.f32.mrb[0].mxu0
    %v8701 = vadd.f32 %v8277, %v8700
    %v8702 = vpop.f32.mrb[0].mxu0
    %8703 = vmatprep.mubr.bf16.mxu0 %v8025
    %8704 = vmatmul.mubr.bf16.gmra.mrb[0].mxu0 %v8024
    %v8705 = vpop.f32.mrb[0].mxu0
    %v8706 = vadd.f32 %v8277, %v8705
    %v8707 = vpop.f32.mrb[0].mxu0
    %v8708 = vpop.f32.mrb[0].mxu0
    %v8709 = vadd.f32 %v8277, %v8708
    %v8710 = vpop.f32.mrb[0].mxu0
    %8711 = vmatprep.mubr.bf16.mxu0 %v8033
    %8712 = vmatmul.mubr.bf16.gmra.mrb[0].mxu0 %v8032
    %v8713 = vpop.f32.mrb[0].mxu0
    %v8714 = vadd.f32 %v8277, %v8713
    %v8715 = vpop.f32.mrb[0].mxu0
    %v8716 = vpop.f32.mrb[0].mxu0
    %v8717 = vadd.f32 %v8277, %v8716
    %v8718 = vpop.f32.mrb[0].mxu0
    %8719 = vmatprep.mubr.bf16.mxu0 %v8041
    %8720 = vmatmul.mubr.bf16.gmra.mrb[0].mxu0 %v8040
    %v8721 = vpop.f32.mrb[0].mxu0
    %v8722 = vadd.f32 %v8277, %v8721
    %v8723 = vpop.f32.mrb[0].mxu0
    %v8724 = vpop.f32.mrb[0].mxu0
    %v8725 = vadd.f32 %v8277, %v8724
    %v8726 = vpop.f32.mrb[0].mxu0
    %8727 = vmatprep.mubr.bf16.mxu0 %v8049
    %8728 = vmatmul.mubr.bf16.gmra.mrb[0].mxu0 %v8048
    %v8729 = vpop.f32.mrb[0].mxu0
    %v8730 = vadd.f32 %v8277, %v8729
    %v8731 = vpop.f32.mrb[0].mxu0
    %v8732 = vpop.f32.mrb[0].mxu0
    %v8733 = vadd.f32 %v8277, %v8732
    %v8734 = vpop.f32.mrb[0].mxu0
    %8735 = vmatprep.mubr.bf16.mxu0 %v8057
    %8736 = vmatmul.mubr.bf16.gmra.mrb[0].mxu0 %v8056
    %v8737 = vpop.f32.mrb[0].mxu0
    %v8738 = vadd.f32 %v8277, %v8737
    %v8739 = vpop.f32.mrb[0].mxu0
    %v8740 = vpop.f32.mrb[0].mxu0
    %v8741 = vadd.f32 %v8277, %v8740
    %v8742 = vpop.f32.mrb[0].mxu0
    %8743 = vmatprep.mubr.bf16.mxu0 %v8065
    %8744 = vmatmul.mubr.bf16.gmra.mrb[0].mxu0 %v8064
    %v8745 = vpop.f32.mrb[0].mxu0
    %v8746 = vadd.f32 %v8277, %v8745
    %v8747 = vpop.f32.mrb[0].mxu0
    %v8748 = vpop.f32.mrb[0].mxu0
    %v8749 = vadd.f32 %v8277, %v8748
    %v8750 = vpop.f32.mrb[0].mxu0
    %8751 = vmatprep.mubr.bf16.mxu0 %v8073
    %8752 = vmatmul.mubr.bf16.gmra.mrb[0].mxu0 %v8072
    %v8753 = vpop.f32.mrb[0].mxu0
    %v8754 = vadd.f32 %v8277, %v8753
    %v8755 = vpop.f32.mrb[0].mxu0
    %v8756 = vpop.f32.mrb[0].mxu0
    %v8757 = vadd.f32 %v8277, %v8756
    %v8758 = vpop.f32.mrb[0].mxu0
    %8759 = vmatprep.mubr.bf16.mxu0 %v8081
    %8760 = vmatmul.mubr.bf16.gmra.mrb[0].mxu0 %v8080
    %v8761 = vpop.f32.mrb[0].mxu0
    %v8762 = vadd.f32 %v8277, %v8761
    %v8763 = vpop.f32.mrb[0].mxu0
    %v8764 = vpop.f32.mrb[0].mxu0
    %v8765 = vadd.f32 %v8277, %v8764
    %v8766 = vpop.f32.mrb[0].mxu0
    %8767 = vmatprep.mubr.bf16.mxu0 %v8089
    %8768 = vmatmul.mubr.bf16.gmra.mrb[0].mxu0 %v8088
    %v8769 = vpop.f32.mrb[0].mxu0
    %v8770 = vadd.f32 %v8277, %v8769
    %v8771 = vpop.f32.mrb[0].mxu0
    %v8772 = vpop.f32.mrb[0].mxu0
    %v8773 = vadd.f32 %v8277, %v8772
    %v8774 = vpop.f32.mrb[0].mxu0
    %8775 = vmatprep.mubr.bf16.mxu0 %v8097
    %8776 = vmatmul.mubr.bf16.gmra.mrb[0].mxu0 %v8096
    %v8777 = vpop.f32.mrb[0].mxu0
    %v8778 = vadd.f32 %v8277, %v8777
    %v8779 = vpop.f32.mrb[0].mxu0
    %v8780 = vpop.f32.mrb[0].mxu0
    %v8781 = vadd.f32 %v8277, %v8780
    %v8782 = vpop.f32.mrb[0].mxu0
    %8783 = vmatprep.mubr.bf16.mxu0 %v8105
    %8784 = vmatmul.mubr.bf16.gmra.mrb[0].mxu0 %v8104
    %v8785 = vpop.f32.mrb[0].mxu0
    %v8786 = vadd.f32 %v8277, %v8785
    %v8787 = vpop.f32.mrb[0].mxu0
    %v8788 = vpop.f32.mrb[0].mxu0
    %v8789 = vadd.f32 %v8277, %v8788
    %v8790 = vpop.f32.mrb[0].mxu0
    %8791 = vmatprep.mubr.bf16.mxu0 %v8113
    %8792 = vmatmul.mubr.bf16.gmra.mrb[0].mxu0 %v8112
    %v8793 = vpop.f32.mrb[0].mxu0
    %v8794 = vadd.f32 %v8277, %v8793
    %v8795 = vpop.f32.mrb[0].mxu0
    %v8796 = vpop.f32.mrb[0].mxu0
    %v8797 = vadd.f32 %v8277, %v8796
    %v8798 = vpop.f32.mrb[0].mxu0
    %8799 = vmatprep.mubr.bf16.mxu0 %v8121
    %8800 = vmatmul.mubr.bf16.gmra.mrb[0].mxu0 %v8120
    %v8801 = vpop.f32.mrb[0].mxu0
    %v8802 = vadd.f32 %v8277, %v8801
    %v8803 = vpop.f32.mrb[0].mxu0
    %v8804 = vpop.f32.mrb[0].mxu0
    %v8805 = vadd.f32 %v8277, %v8804
    %v8806 = vpop.f32.mrb[0].mxu0
    %8807 = vmatprep.mubr.bf16.mxu0 %v8129
    %8808 = vmatmul.mubr.bf16.gmra.mrb[0].mxu0 %v8128
    %v8809 = vpop.f32.mrb[0].mxu0
    %v8810 = vadd.f32 %v8277, %v8809
    %v8811 = vpop.f32.mrb[0].mxu0
    %v8812 = vpop.f32.mrb[0].mxu0
    %v8813 = vadd.f32 %v8277, %v8812
    %v8814 = vpop.f32.mrb[0].mxu0
    %8815 = vmatprep.mubr.bf16.mxu0 %v8137
    %8816 = vmatmul.mubr.bf16.gmra.mrb[0].mxu0 %v8136
    %v8817 = vpop.f32.mrb[0].mxu0
    %v8818 = vadd.f32 %v8277, %v8817
    %v8819 = vpop.f32.mrb[0].mxu0
    %v8820 = vpop.f32.mrb[0].mxu0
    %v8821 = vadd.f32 %v8277, %v8820
    %v8822 = vpop.f32.mrb[0].mxu0
    %8823 = vdwg.mxu0
    %8824 = vmatprep.subr.bf16.mxu0 0
    %8825 = vmatpush1.bf16.msra.mxu0 %v8551
    %8826 = vmatprep.subr.bf16.mxu0 0
    %8827 = vmatpush1.bf16.msra.mxu0 %v8552
    %8828 = vmatprep.subr.bf16.mxu0 0
    %8829 = vmatpush1.bf16.msra.mxu0 %v8553
    %8830 = vmatprep.subr.bf16.mxu0 0
    %8831 = vmatpush1.bf16.msra.mxu0 %v8554
    %8832 = vmatprep.subr.bf16.mxu0 0
    %8833 = vmatpush1.bf16.msra.mxu0 %v8555
    %8834 = vmatprep.subr.bf16.mxu0 0
    %8835 = vmatpush1.bf16.msra.mxu0 %v8556
    %8836 = vmatprep.subr.bf16.mxu0 0
    %8837 = vmatpush1.bf16.msra.mxu0 %v8557
    %8838 = vmatprep.subr.bf16.mxu0 0
    %8839 = vmatpush1.bf16.msra.mxu0 %v8558
    %8840 = vmatprep.subr.bf16.mxu0 0
    %8841 = vmatpush1.bf16.msra.mxu0 %v8559
    %8842 = vmatprep.subr.bf16.mxu0 0
    %8843 = vmatpush1.bf16.msra.mxu0 %v8560
    %8844 = vmatprep.subr.bf16.mxu0 0
    %8845 = vmatpush1.bf16.msra.mxu0 %v8561
    %8846 = vmatprep.subr.bf16.mxu0 0
    %8847 = vmatpush1.bf16.msra.mxu0 %v8562
    %8848 = vmatprep.subr.bf16.mxu0 0
    %8849 = vmatpush1.bf16.msra.mxu0 %v8563
    %8850 = vmatprep.subr.bf16.mxu0 0
    %8851 = vmatpush1.bf16.msra.mxu0 %v8564
    %8852 = vmatprep.subr.bf16.mxu0 0
    %8853 = vmatpush1.bf16.msra.mxu0 %v8565
    %8854 = vmatprep.subr.bf16.mxu0 0
    %8855 = vmatpush1.bf16.msra.mxu0 %v8566
    %8856 = vmatprep.mubr.bf16.mxu0 %v8019
    %8857 = vmatmul.mubr.bf16.gmra.mrb[0].mxu0 %v8018
    %v8858 = vpop.f32.mrb[0].mxu0
    %v8859 = vadd.f32 %v8698, %v8858
    %v8860 = vpop.f32.mrb[0].mxu0
    %v8861 = vpop.f32.mrb[0].mxu0
    %v8862 = vadd.f32 %v8701, %v8861
    %v8863 = vpop.f32.mrb[0].mxu0
    %8864 = vmatprep.mubr.bf16.mxu0 %v8027
    %8865 = vmatmul.mubr.bf16.gmra.mrb[0].mxu0 %v8026
    %v8866 = vpop.f32.mrb[0].mxu0
    %v8867 = vadd.f32 %v8706, %v8866
    %v8868 = vpop.f32.mrb[0].mxu0
    %v8869 = vpop.f32.mrb[0].mxu0
    %v8870 = vadd.f32 %v8709, %v8869
    %v8871 = vpop.f32.mrb[0].mxu0
    %8872 = vmatprep.mubr.bf16.mxu0 %v8035
    %8873 = vmatmul.mubr.bf16.gmra.mrb[0].mxu0 %v8034
    %v8874 = vpop.f32.mrb[0].mxu0
    %v8875 = vadd.f32 %v8714, %v8874
    %v8876 = vpop.f32.mrb[0].mxu0
    %v8877 = vpop.f32.mrb[0].mxu0
    %v8878 = vadd.f32 %v8717, %v8877
    %v8879 = vpop.f32.mrb[0].mxu0
    %8880 = vmatprep.mubr.bf16.mxu0 %v8043
    %8881 = vmatmul.mubr.bf16.gmra.mrb[0].mxu0 %v8042
    %v8882 = vpop.f32.mrb[0].mxu0
    %v8883 = vadd.f32 %v8722, %v8882
    %v8884 = vpop.f32.mrb[0].mxu0
    %v8885 = vpop.f32.mrb[0].mxu0
    %v8886 = vadd.f32 %v8725, %v8885
    %v8887 = vpop.f32.mrb[0].mxu0
    %8888 = vmatprep.mubr.bf16.mxu0 %v8051
    %8889 = vmatmul.mubr.bf16.gmra.mrb[0].mxu0 %v8050
    %v8890 = vpop.f32.mrb[0].mxu0
    %v8891 = vadd.f32 %v8730, %v8890
    %v8892 = vpop.f32.mrb[0].mxu0
    %v8893 = vpop.f32.mrb[0].mxu0
    %v8894 = vadd.f32 %v8733, %v8893
    %v8895 = vpop.f32.mrb[0].mxu0
    %8896 = vmatprep.mubr.bf16.mxu0 %v8059
    %8897 = vmatmul.mubr.bf16.gmra.mrb[0].mxu0 %v8058
    %v8898 = vpop.f32.mrb[0].mxu0
    %v8899 = vadd.f32 %v8738, %v8898
    %v8900 = vpop.f32.mrb[0].mxu0
    %v8901 = vpop.f32.mrb[0].mxu0
    %v8902 = vadd.f32 %v8741, %v8901
    %v8903 = vpop.f32.mrb[0].mxu0
    %8904 = vmatprep.mubr.bf16.mxu0 %v8067
    %8905 = vmatmul.mubr.bf16.gmra.mrb[0].mxu0 %v8066
    %v8906 = vpop.f32.mrb[0].mxu0
    %v8907 = vadd.f32 %v8746, %v8906
    %v8908 = vpop.f32.mrb[0].mxu0
    %v8909 = vpop.f32.mrb[0].mxu0
    %v8910 = vadd.f32 %v8749, %v8909
    %v8911 = vpop.f32.mrb[0].mxu0
    %8912 = vmatprep.mubr.bf16.mxu0 %v8075
    %8913 = vmatmul.mubr.bf16.gmra.mrb[0].mxu0 %v8074
    %v8914 = vpop.f32.mrb[0].mxu0
    %v8915 = vadd.f32 %v8754, %v8914
    %v8916 = vpop.f32.mrb[0].mxu0
    %v8917 = vpop.f32.mrb[0].mxu0
    %v8918 = vadd.f32 %v8757, %v8917
    %v8919 = vpop.f32.mrb[0].mxu0
    %8920 = vmatprep.mubr.bf16.mxu0 %v8083
    %8921 = vmatmul.mubr.bf16.gmra.mrb[0].mxu0 %v8082
    %v8922 = vpop.f32.mrb[0].mxu0
    %v8923 = vadd.f32 %v8762, %v8922
    %v8924 = vpop.f32.mrb[0].mxu0
    %v8925 = vpop.f32.mrb[0].mxu0
    %v8926 = vadd.f32 %v8765, %v8925
    %v8927 = vpop.f32.mrb[0].mxu0
    %8928 = vmatprep.mubr.bf16.mxu0 %v8091
    %8929 = vmatmul.mubr.bf16.gmra.mrb[0].mxu0 %v8090
    %v8930 = vpop.f32.mrb[0].mxu0
    %v8931 = vadd.f32 %v8770, %v8930
    %v8932 = vpop.f32.mrb[0].mxu0
    %v8933 = vpop.f32.mrb[0].mxu0
    %v8934 = vadd.f32 %v8773, %v8933
    %v8935 = vpop.f32.mrb[0].mxu0
    %8936 = vmatprep.mubr.bf16.mxu0 %v8099
    %8937 = vmatmul.mubr.bf16.gmra.mrb[0].mxu0 %v8098
    %v8938 = vpop.f32.mrb[0].mxu0
    %v8939 = vadd.f32 %v8778, %v8938
    %v8940 = vpop.f32.mrb[0].mxu0
    %v8941 = vpop.f32.mrb[0].mxu0
    %v8942 = vadd.f32 %v8781, %v8941
    %v8943 = vpop.f32.mrb[0].mxu0
    %8944 = vmatprep.mubr.bf16.mxu0 %v8107
    %8945 = vmatmul.mubr.bf16.gmra.mrb[0].mxu0 %v8106
    %v8946 = vpop.f32.mrb[0].mxu0
    %v8947 = vadd.f32 %v8786, %v8946
    %v8948 = vpop.f32.mrb[0].mxu0
    %v8949 = vpop.f32.mrb[0].mxu0
    %v8950 = vadd.f32 %v8789, %v8949
    %v8951 = vpop.f32.mrb[0].mxu0
    %8952 = vmatprep.mubr.bf16.mxu0 %v8115
    %8953 = vmatmul.mubr.bf16.gmra.mrb[0].mxu0 %v8114
    %v8954 = vpop.f32.mrb[0].mxu0
    %v8955 = vadd.f32 %v8794, %v8954
    %v8956 = vpop.f32.mrb[0].mxu0
    %v8957 = vpop.f32.mrb[0].mxu0
    %v8958 = vadd.f32 %v8797, %v8957
    %v8959 = vpop.f32.mrb[0].mxu0
    %8960 = vmatprep.mubr.bf16.mxu0 %v8123
    %8961 = vmatmul.mubr.bf16.gmra.mrb[0].mxu0 %v8122
    %v8962 = vpop.f32.mrb[0].mxu0
    %v8963 = vadd.f32 %v8802, %v8962
    %v8964 = vpop.f32.mrb[0].mxu0
    %v8965 = vpop.f32.mrb[0].mxu0
    %v8966 = vadd.f32 %v8805, %v8965
    %v8967 = vpop.f32.mrb[0].mxu0
    %8968 = vmatprep.mubr.bf16.mxu0 %v8131
    %8969 = vmatmul.mubr.bf16.gmra.mrb[0].mxu0 %v8130
    %v8970 = vpop.f32.mrb[0].mxu0
    %v8971 = vadd.f32 %v8810, %v8970
    %v8972 = vpop.f32.mrb[0].mxu0
    %v8973 = vpop.f32.mrb[0].mxu0
    %v8974 = vadd.f32 %v8813, %v8973
    %v8975 = vpop.f32.mrb[0].mxu0
    %8976 = vmatprep.mubr.bf16.mxu0 %v8139
    %8977 = vmatmul.mubr.bf16.gmra.mrb[0].mxu0 %v8138
    %v8978 = vpop.f32.mrb[0].mxu0
    %v8979 = vadd.f32 %v8818, %v8978
    %v8980 = vpop.f32.mrb[0].mxu0
    %v8981 = vpop.f32.mrb[0].mxu0
    %v8982 = vadd.f32 %v8821, %v8981
    %v8983 = vpop.f32.mrb[0].mxu0
    %8984 = vdwg.mxu0
    %8985 = vmatprep.subr.bf16.mxu0 0
    %8986 = vmatpush1.bf16.msra.mxu0 %v8567
    %8987 = vmatprep.subr.bf16.mxu0 0
    %8988 = vmatpush1.bf16.msra.mxu0 %v8568
    %8989 = vmatprep.subr.bf16.mxu0 0
    %8990 = vmatpush1.bf16.msra.mxu0 %v8569
    %8991 = vmatprep.subr.bf16.mxu0 0
    %8992 = vmatpush1.bf16.msra.mxu0 %v8570
    %8993 = vmatprep.subr.bf16.mxu0 0
    %8994 = vmatpush1.bf16.msra.mxu0 %v8571
    %8995 = vmatprep.subr.bf16.mxu0 0
    %8996 = vmatpush1.bf16.msra.mxu0 %v8572
    %8997 = vmatprep.subr.bf16.mxu0 0
    %8998 = vmatpush1.bf16.msra.mxu0 %v8573
    %8999 = vmatprep.subr.bf16.mxu0 0
    %9000 = vmatpush1.bf16.msra.mxu0 %v8574
    %9001 = vmatprep.subr.bf16.mxu0 0
    %9002 = vmatpush1.bf16.msra.mxu0 %v8575
    %9003 = vmatprep.subr.bf16.mxu0 0
    %9004 = vmatpush1.bf16.msra.mxu0 %v8576
    %9005 = vmatprep.subr.bf16.mxu0 0
    %9006 = vmatpush1.bf16.msra.mxu0 %v8577
    %9007 = vmatprep.subr.bf16.mxu0 0
    %9008 = vmatpush1.bf16.msra.mxu0 %v8578
    %9009 = vmatprep.subr.bf16.mxu0 0
    %9010 = vmatpush1.bf16.msra.mxu0 %v8579
    %9011 = vmatprep.subr.bf16.mxu0 0
    %9012 = vmatpush1.bf16.msra.mxu0 %v8580
    %9013 = vmatprep.subr.bf16.mxu0 0
    %9014 = vmatpush1.bf16.msra.mxu0 %v8581
    %9015 = vmatprep.subr.bf16.mxu0 0
    %9016 = vmatpush1.bf16.msra.mxu0 %v8582
    %9017 = vmatprep.mubr.bf16.mxu0 %v8021
    %9018 = vmatmul.mubr.bf16.gmra.mrb[0].mxu0 %v8020
    %v9019 = vpop.f32.mrb[0].mxu0
    %v9020 = vadd.f32 %v8859, %v9019
    %v9021 = vpop.f32.mrb[0].mxu0
    %v9022 = vpop.f32.mrb[0].mxu0
    %v9023 = vadd.f32 %v8862, %v9022
    %v9024 = vpop.f32.mrb[0].mxu0
    %9025 = vmatprep.mubr.bf16.mxu0 %v8029
    %9026 = vmatmul.mubr.bf16.gmra.mrb[0].mxu0 %v8028
    %v9027 = vpop.f32.mrb[0].mxu0
    %v9028 = vadd.f32 %v8867, %v9027
    %v9029 = vpop.f32.mrb[0].mxu0
    %v9030 = vpop.f32.mrb[0].mxu0
    %v9031 = vadd.f32 %v8870, %v9030
    %v9032 = vpop.f32.mrb[0].mxu0
    %9033 = vmatprep.mubr.bf16.mxu0 %v8037
    %9034 = vmatmul.mubr.bf16.gmra.mrb[0].mxu0 %v8036
    %v9035 = vpop.f32.mrb[0].mxu0
    %v9036 = vadd.f32 %v8875, %v9035
    %v9037 = vpop.f32.mrb[0].mxu0
    %v9038 = vpop.f32.mrb[0].mxu0
    %v9039 = vadd.f32 %v8878, %v9038
    %v9040 = vpop.f32.mrb[0].mxu0
    %9041 = vmatprep.mubr.bf16.mxu0 %v8045
    %9042 = vmatmul.mubr.bf16.gmra.mrb[0].mxu0 %v8044
    %v9043 = vpop.f32.mrb[0].mxu0
    %v9044 = vadd.f32 %v8883, %v9043
    %v9045 = vpop.f32.mrb[0].mxu0
    %v9046 = vpop.f32.mrb[0].mxu0
    %v9047 = vadd.f32 %v8886, %v9046
    %v9048 = vpop.f32.mrb[0].mxu0
    %9049 = vmatprep.mubr.bf16.mxu0 %v8053
    %9050 = vmatmul.mubr.bf16.gmra.mrb[0].mxu0 %v8052
    %v9051 = vpop.f32.mrb[0].mxu0
    %v9052 = vadd.f32 %v8891, %v9051
    %v9053 = vpop.f32.mrb[0].mxu0
    %v9054 = vpop.f32.mrb[0].mxu0
    %v9055 = vadd.f32 %v8894, %v9054
    %v9056 = vpop.f32.mrb[0].mxu0
    %9057 = vmatprep.mubr.bf16.mxu0 %v8061
    %9058 = vmatmul.mubr.bf16.gmra.mrb[0].mxu0 %v8060
    %v9059 = vpop.f32.mrb[0].mxu0
    %v9060 = vadd.f32 %v8899, %v9059
    %v9061 = vpop.f32.mrb[0].mxu0
    %v9062 = vpop.f32.mrb[0].mxu0
    %v9063 = vadd.f32 %v8902, %v9062
    %v9064 = vpop.f32.mrb[0].mxu0
    %9065 = vmatprep.mubr.bf16.mxu0 %v8069
    %9066 = vmatmul.mubr.bf16.gmra.mrb[0].mxu0 %v8068
    %v9067 = vpop.f32.mrb[0].mxu0
    %v9068 = vadd.f32 %v8907, %v9067
    %v9069 = vpop.f32.mrb[0].mxu0
    %v9070 = vpop.f32.mrb[0].mxu0
    %v9071 = vadd.f32 %v8910, %v9070
    %v9072 = vpop.f32.mrb[0].mxu0
    %9073 = vmatprep.mubr.bf16.mxu0 %v8077
    %9074 = vmatmul.mubr.bf16.gmra.mrb[0].mxu0 %v8076
    %v9075 = vpop.f32.mrb[0].mxu0
    %v9076 = vadd.f32 %v8915, %v9075
    %v9077 = vpop.f32.mrb[0].mxu0
    %v9078 = vpop.f32.mrb[0].mxu0
    %v9079 = vadd.f32 %v8918, %v9078
    %v9080 = vpop.f32.mrb[0].mxu0
    %9081 = vmatprep.mubr.bf16.mxu0 %v8085
    %9082 = vmatmul.mubr.bf16.gmra.mrb[0].mxu0 %v8084
    %v9083 = vpop.f32.mrb[0].mxu0
    %v9084 = vadd.f32 %v8923, %v9083
    %v9085 = vpop.f32.mrb[0].mxu0
    %v9086 = vpop.f32.mrb[0].mxu0
    %v9087 = vadd.f32 %v8926, %v9086
    %v9088 = vpop.f32.mrb[0].mxu0
    %9089 = vmatprep.mubr.bf16.mxu0 %v8093
    %9090 = vmatmul.mubr.bf16.gmra.mrb[0].mxu0 %v8092
    %v9091 = vpop.f32.mrb[0].mxu0
    %v9092 = vadd.f32 %v8931, %v9091
    %v9093 = vpop.f32.mrb[0].mxu0
    %v9094 = vpop.f32.mrb[0].mxu0
    %v9095 = vadd.f32 %v8934, %v9094
    %v9096 = vpop.f32.mrb[0].mxu0
    %9097 = vmatprep.mubr.bf16.mxu0 %v8101
    %9098 = vmatmul.mubr.bf16.gmra.mrb[0].mxu0 %v8100
    %v9099 = vpop.f32.mrb[0].mxu0
    %v9100 = vadd.f32 %v8939, %v9099
    %v9101 = vpop.f32.mrb[0].mxu0
    %v9102 = vpop.f32.mrb[0].mxu0
    %v9103 = vadd.f32 %v8942, %v9102
    %v9104 = vpop.f32.mrb[0].mxu0
    %9105 = vmatprep.mubr.bf16.mxu0 %v8109
    %9106 = vmatmul.mubr.bf16.gmra.mrb[0].mxu0 %v8108
    %v9107 = vpop.f32.mrb[0].mxu0
    %v9108 = vadd.f32 %v8947, %v9107
    %v9109 = vpop.f32.mrb[0].mxu0
    %v9110 = vpop.f32.mrb[0].mxu0
    %v9111 = vadd.f32 %v8950, %v9110
    %v9112 = vpop.f32.mrb[0].mxu0
    %9113 = vmatprep.mubr.bf16.mxu0 %v8117
    %9114 = vmatmul.mubr.bf16.gmra.mrb[0].mxu0 %v8116
    %v9115 = vpop.f32.mrb[0].mxu0
    %v9116 = vadd.f32 %v8955, %v9115
    %v9117 = vpop.f32.mrb[0].mxu0
    %v9118 = vpop.f32.mrb[0].mxu0
    %v9119 = vadd.f32 %v8958, %v9118
    %v9120 = vpop.f32.mrb[0].mxu0
    %9121 = vmatprep.mubr.bf16.mxu0 %v8125
    %9122 = vmatmul.mubr.bf16.gmra.mrb[0].mxu0 %v8124
    %v9123 = vpop.f32.mrb[0].mxu0
    %v9124 = vadd.f32 %v8963, %v9123
    %v9125 = vpop.f32.mrb[0].mxu0
    %v9126 = vpop.f32.mrb[0].mxu0
    %v9127 = vadd.f32 %v8966, %v9126
    %v9128 = vpop.f32.mrb[0].mxu0
    %9129 = vmatprep.mubr.bf16.mxu0 %v8133
    %9130 = vmatmul.mubr.bf16.gmra.mrb[0].mxu0 %v8132
    %v9131 = vpop.f32.mrb[0].mxu0
    %v9132 = vadd.f32 %v8971, %v9131
    %v9133 = vpop.f32.mrb[0].mxu0
    %v9134 = vpop.f32.mrb[0].mxu0
    %v9135 = vadd.f32 %v8974, %v9134
    %v9136 = vpop.f32.mrb[0].mxu0
    %9137 = vmatprep.mubr.bf16.mxu0 %v8141
    %9138 = vmatmul.mubr.bf16.gmra.mrb[0].mxu0 %v8140
    %v9139 = vpop.f32.mrb[0].mxu0
    %v9140 = vadd.f32 %v8979, %v9139
    %v9141 = vpop.f32.mrb[0].mxu0
    %v9142 = vpop.f32.mrb[0].mxu0
    %v9143 = vadd.f32 %v8982, %v9142
    %v9144 = vpop.f32.mrb[0].mxu0
    %9145 = vdwg.mxu0
    %9146 = vmatprep.subr.bf16.mxu0 0
    %9147 = vmatpush1.bf16.msra.mxu0 %v8583
    %9148 = vmatprep.subr.bf16.mxu0 0
    %9149 = vmatpush1.bf16.msra.mxu0 %v8584
    %9150 = vmatprep.subr.bf16.mxu0 0
    %9151 = vmatpush1.bf16.msra.mxu0 %v8585
    %9152 = vmatprep.subr.bf16.mxu0 0
    %9153 = vmatpush1.bf16.msra.mxu0 %v8586
    %9154 = vmatprep.subr.bf16.mxu0 0
    %9155 = vmatpush1.bf16.msra.mxu0 %v8587
    %9156 = vmatprep.subr.bf16.mxu0 0
    %9157 = vmatpush1.bf16.msra.mxu0 %v8588
    %9158 = vmatprep.subr.bf16.mxu0 0
    %9159 = vmatpush1.bf16.msra.mxu0 %v8589
    %9160 = vmatprep.subr.bf16.mxu0 0
    %9161 = vmatpush1.bf16.msra.mxu0 %v8590
    %9162 = vmatprep.subr.bf16.mxu0 0
    %9163 = vmatpush1.bf16.msra.mxu0 %v8591
    %9164 = vmatprep.subr.bf16.mxu0 0
    %9165 = vmatpush1.bf16.msra.mxu0 %v8592
    %9166 = vmatprep.subr.bf16.mxu0 0
    %9167 = vmatpush1.bf16.msra.mxu0 %v8593
    %9168 = vmatprep.subr.bf16.mxu0 0
    %9169 = vmatpush1.bf16.msra.mxu0 %v8594
    %9170 = vmatprep.subr.bf16.mxu0 0
    %9171 = vmatpush1.bf16.msra.mxu0 %v8595
    %9172 = vmatprep.subr.bf16.mxu0 0
    %9173 = vmatpush1.bf16.msra.mxu0 %v8596
    %9174 = vmatprep.subr.bf16.mxu0 0
    %9175 = vmatpush1.bf16.msra.mxu0 %v8597
    %9176 = vmatprep.subr.bf16.mxu0 0
    %9177 = vmatpush1.bf16.msra.mxu0 %v8598
    %9178 = vmatprep.mubr.bf16.mxu0 %v8023
    %9179 = vmatmul.mubr.bf16.gmra.mrb[0].mxu0 %v8022
    %v9180 = vpop.f32.mrb[0].mxu0
    %v9181 = vadd.f32 %v9020, %v9180
    %v9182 = vpop.f32.mrb[0].mxu0
    %v9183 = vpop.f32.mrb[0].mxu0
    %v9184 = vadd.f32 %v9023, %v9183
    %v9185 = vpop.f32.mrb[0].mxu0
    %9186 = vmatprep.mubr.bf16.mxu0 %v8031
    %9187 = vmatmul.mubr.bf16.gmra.mrb[0].mxu0 %v8030
    %v9188 = vpop.f32.mrb[0].mxu0
    %v9189 = vadd.f32 %v9028, %v9188
    %v9190 = vpop.f32.mrb[0].mxu0
    %v9191 = vpop.f32.mrb[0].mxu0
    %v9192 = vadd.f32 %v9031, %v9191
    %v9193 = vpop.f32.mrb[0].mxu0
    %9194 = vmatprep.mubr.bf16.mxu0 %v8039
    %9195 = vmatmul.mubr.bf16.gmra.mrb[0].mxu0 %v8038
    %v9196 = vpop.f32.mrb[0].mxu0
    %v9197 = vadd.f32 %v9036, %v9196
    %v9198 = vpop.f32.mrb[0].mxu0
    %v9199 = vpop.f32.mrb[0].mxu0
    %v9200 = vadd.f32 %v9039, %v9199
    %v9201 = vpop.f32.mrb[0].mxu0
    %9202 = vmatprep.mubr.bf16.mxu0 %v8047
    %9203 = vmatmul.mubr.bf16.gmra.mrb[0].mxu0 %v8046
    %v9204 = vpop.f32.mrb[0].mxu0
    %v9205 = vadd.f32 %v9044, %v9204
    %v9206 = vpop.f32.mrb[0].mxu0
    %v9207 = vpop.f32.mrb[0].mxu0
    %v9208 = vadd.f32 %v9047, %v9207
    %v9209 = vpop.f32.mrb[0].mxu0
    %9210 = vmatprep.mubr.bf16.mxu0 %v8055
    %9211 = vmatmul.mubr.bf16.gmra.mrb[0].mxu0 %v8054
    %v9212 = vpop.f32.mrb[0].mxu0
    %v9213 = vadd.f32 %v9052, %v9212
    %v9214 = vpop.f32.mrb[0].mxu0
    %v9215 = vpop.f32.mrb[0].mxu0
    %v9216 = vadd.f32 %v9055, %v9215
    %v9217 = vpop.f32.mrb[0].mxu0
    %9218 = vmatprep.mubr.bf16.mxu0 %v8063
    %9219 = vmatmul.mubr.bf16.gmra.mrb[0].mxu0 %v8062
    %v9220 = vpop.f32.mrb[0].mxu0
    %v9221 = vadd.f32 %v9060, %v9220
    %v9222 = vpop.f32.mrb[0].mxu0
    %v9223 = vpop.f32.mrb[0].mxu0
    %v9224 = vadd.f32 %v9063, %v9223
    %v9225 = vpop.f32.mrb[0].mxu0
    %9226 = vmatprep.mubr.bf16.mxu0 %v8071
    %9227 = vmatmul.mubr.bf16.gmra.mrb[0].mxu0 %v8070
    %v9228 = vpop.f32.mrb[0].mxu0
    %v9229 = vadd.f32 %v9068, %v9228
    %v9230 = vpop.f32.mrb[0].mxu0
    %v9231 = vpop.f32.mrb[0].mxu0
    %v9232 = vadd.f32 %v9071, %v9231
    %v9233 = vpop.f32.mrb[0].mxu0
    %9234 = vmatprep.mubr.bf16.mxu0 %v8079
    %9235 = vmatmul.mubr.bf16.gmra.mrb[0].mxu0 %v8078
    %v9236 = vpop.f32.mrb[0].mxu0
    %v9237 = vadd.f32 %v9076, %v9236
    %v9238 = vpop.f32.mrb[0].mxu0
    %v9239 = vpop.f32.mrb[0].mxu0
    %v9240 = vadd.f32 %v9079, %v9239
    %v9241 = vpop.f32.mrb[0].mxu0
    %9242 = vmatprep.mubr.bf16.mxu0 %v8087
    %9243 = vmatmul.mubr.bf16.gmra.mrb[0].mxu0 %v8086
    %v9244 = vpop.f32.mrb[0].mxu0
    %v9245 = vadd.f32 %v9084, %v9244
    %v9246 = vpop.f32.mrb[0].mxu0
    %v9247 = vpop.f32.mrb[0].mxu0
    %v9248 = vadd.f32 %v9087, %v9247
    %v9249 = vpop.f32.mrb[0].mxu0
    %9250 = vmatprep.mubr.bf16.mxu0 %v8095
    %9251 = vmatmul.mubr.bf16.gmra.mrb[0].mxu0 %v8094
    %v9252 = vpop.f32.mrb[0].mxu0
    %v9253 = vadd.f32 %v9092, %v9252
    %v9254 = vpop.f32.mrb[0].mxu0
    %v9255 = vpop.f32.mrb[0].mxu0
    %v9256 = vadd.f32 %v9095, %v9255
    %v9257 = vpop.f32.mrb[0].mxu0
    %9258 = vmatprep.mubr.bf16.mxu0 %v8103
    %9259 = vmatmul.mubr.bf16.gmra.mrb[0].mxu0 %v8102
    %v9260 = vpop.f32.mrb[0].mxu0
    %v9261 = vadd.f32 %v9100, %v9260
    %v9262 = vpop.f32.mrb[0].mxu0
    %v9263 = vpop.f32.mrb[0].mxu0
    %v9264 = vadd.f32 %v9103, %v9263
    %v9265 = vpop.f32.mrb[0].mxu0
    %9266 = vmatprep.mubr.bf16.mxu0 %v8111
    %9267 = vmatmul.mubr.bf16.gmra.mrb[0].mxu0 %v8110
    %v9268 = vpop.f32.mrb[0].mxu0
    %v9269 = vadd.f32 %v9108, %v9268
    %v9270 = vpop.f32.mrb[0].mxu0
    %v9271 = vpop.f32.mrb[0].mxu0
    %v9272 = vadd.f32 %v9111, %v9271
    %v9273 = vpop.f32.mrb[0].mxu0
    %9274 = vmatprep.mubr.bf16.mxu0 %v8119
    %9275 = vmatmul.mubr.bf16.gmra.mrb[0].mxu0 %v8118
    %v9276 = vpop.f32.mrb[0].mxu0
    %v9277 = vadd.f32 %v9116, %v9276
    %v9278 = vpop.f32.mrb[0].mxu0
    %v9279 = vpop.f32.mrb[0].mxu0
    %v9280 = vadd.f32 %v9119, %v9279
    %v9281 = vpop.f32.mrb[0].mxu0
    %9282 = vmatprep.mubr.bf16.mxu0 %v8127
    %9283 = vmatmul.mubr.bf16.gmra.mrb[0].mxu0 %v8126
    %v9284 = vpop.f32.mrb[0].mxu0
    %v9285 = vadd.f32 %v9124, %v9284
    %v9286 = vpop.f32.mrb[0].mxu0
    %v9287 = vpop.f32.mrb[0].mxu0
    %v9288 = vadd.f32 %v9127, %v9287
    %v9289 = vpop.f32.mrb[0].mxu0
    %9290 = vmatprep.mubr.bf16.mxu0 %v8135
    %9291 = vmatmul.mubr.bf16.gmra.mrb[0].mxu0 %v8134
    %v9292 = vpop.f32.mrb[0].mxu0
    %v9293 = vadd.f32 %v9132, %v9292
    %v9294 = vpop.f32.mrb[0].mxu0
    %v9295 = vpop.f32.mrb[0].mxu0
    %v9296 = vadd.f32 %v9135, %v9295
    %v9297 = vpop.f32.mrb[0].mxu0
    %9298 = vmatprep.mubr.bf16.mxu0 %v8143
    %9299 = vmatmul.mubr.bf16.gmra.mrb[0].mxu0 %v8142
    %v9300 = vpop.f32.mrb[0].mxu0
    %v9301 = vadd.f32 %v9140, %v9300
    %v9302 = vpop.f32.mrb[0].mxu0
    %v9303 = vpop.f32.mrb[0].mxu0
    %v9304 = vadd.f32 %v9143, %v9303
    %v9305 = vpop.f32.mrb[0].mxu0
    %9306 = vdwg.mxu0
    %9307 = vst [vmem:[%s7] sm:$0xff] %v9181
    %9308 = vst [vmem:[%s7 + $0x8] sm:$0xff] %v9184
    %9309 = vst [vmem:[%s7 + $0x10] sm:$0xff] %v9189
    %9310 = vst [vmem:[%s7 + $0x18] sm:$0xff] %v9192
    %9311 = vst [vmem:[%s7 + $0x20] sm:$0xff] %v9197
    %9312 = vst [vmem:[%s7 + $0x28] sm:$0xff] %v9200
    %9313 = vst [vmem:[%s7 + $0x30] sm:$0xff] %v9205
    %9314 = vst [vmem:[%s7 + $0x38] sm:$0xff] %v9208
    %9315 = vst [vmem:[%s7 + $0x40] sm:$0xff] %v9213
    %9316 = vst [vmem:[%s7 + $0x48] sm:$0xff] %v9216
    %9317 = vst [vmem:[%s7 + $0x50] sm:$0xff] %v9221
    %9318 = vst [vmem:[%s7 + $0x58] sm:$0xff] %v9224
    %9319 = vst [vmem:[%s7 + $0x60] sm:$0xff] %v9229
    %9320 = vst [vmem:[%s7 + $0x68] sm:$0xff] %v9232
    %9321 = vst [vmem:[%s7 + $0x70] sm:$0xff] %v9237
    %9322 = vst [vmem:[%s7 + $0x78] sm:$0xff] %v9240
    %9323 = vst [vmem:[%s7 + $0x80] sm:$0xff] %v9245
    %9324 = vst [vmem:[%s7 + $0x88] sm:$0xff] %v9248
    %9325 = vst [vmem:[%s7 + $0x90] sm:$0xff] %v9253
    %9326 = vst [vmem:[%s7 + $0x98] sm:$0xff] %v9256
    %9327 = vst [vmem:[%s7 + $0xa0] sm:$0xff] %v9261
    %9328 = vst [vmem:[%s7 + $0xa8] sm:$0xff] %v9264
    %9329 = vst [vmem:[%s7 + $0xb0] sm:$0xff] %v9269
    %9330 = vst [vmem:[%s7 + $0xb8] sm:$0xff] %v9272
    %9331 = vst [vmem:[%s7 + $0xc0] sm:$0xff] %v9277
    %9332 = vst [vmem:[%s7 + $0xc8] sm:$0xff] %v9280
    %9333 = vst [vmem:[%s7 + $0xd0] sm:$0xff] %v9285
    %9334 = vst [vmem:[%s7 + $0xd8] sm:$0xff] %v9288
    %9335 = vst [vmem:[%s7 + $0xe0] sm:$0xff] %v9293
    %9336 = vst [vmem:[%s7 + $0xe8] sm:$0xff] %v9296
    %9337 = vst [vmem:[%s7 + $0xf0] sm:$0xff] %v9301
    %9338 = vst [vmem:[%s7 + $0xf8] sm:$0xff] %v9304
    // Predicated region
    $region54: #{ck_classifier_forward.1} parent=1 // pred_check
      _
    $region55: #{ck_classifier_forward.1} parent=1 // pred_check_branch
      %9340 = sbr.rel (0) target = $region57
    $region56: #{ck_classifier_forward.1} parent=1 // pred_region
      _
    $region57: #{ck_classifier_forward.1} parent=1 // pred_fallthru
      _
    // Predicated region
    $region58: #{ck_classifier_forward.1} parent=1 // pred_check
      _
    $region59: #{ck_classifier_forward.1} parent=1 // pred_check_branch
      %9342 = sbr.rel (0) target = $region61
    $region60: #{ck_classifier_forward.1} parent=1 // pred_region
      _
    $region61: #{ck_classifier_forward.1} parent=1 // pred_fallthru
      _
    %9343 = vsyncpa [#allocation3], 1
    %9344 = vsyncpa [#allocation5], 1
    %9345 = vsyncpa [#allocation8], 1
    %9346 = vsyncpa [#allocation11], 1

</llo_original>
